<compile_context>
chip_gen: v7x
topology: tpu7x:2x2x1
jax: 0.10.0
libtpu: 0.0.40
codegen_flags: <defaults>
</compile_context>

<pallas_src>
import numpy as np
import jax
import jax.numpy as jnp
from jax.experimental import pallas as pl
from jax.experimental.pallas import tpu as pltpu


# ---------------------------------------------------------------------------
# Host-side constants: per-tap 0/1 gather matrices (pure functions of shapes).
# They fold padding, stride-2 windowing and transposed-conv zero-dilation into
# plain dense MXU matmuls, so the kernel has no strided/gather memory access.
# ---------------------------------------------------------------------------
def _gather_T_conv(hin, win, k, stride, pad):
    """G_t (k*k, hin*win, ho*wo) for a forward conv (stride, symmetric pad)."""
    ho = (hin + 2 * pad - k) // stride + 1
    wo = (win + 2 * pad - k) // stride + 1
    gt = np.zeros((k * k, hin * win, ho * wo), np.float32)
    for a in range(k):
        for b in range(k):
            t = a * k + b
            for i in range(ho):
                r = stride * i + a - pad
                if r < 0 or r >= hin:
                    continue
                for j in range(wo):
                    c = stride * j + b - pad
                    if c < 0 or c >= win:
                        continue
                    gt[t, r * win + c, i * wo + j] = 1.0
    return gt, ho, wo


def _gather_T_convT(hin, win, k, stride, pad, out_pad):
    """G_t for ConvTranspose2d as a stride-1 conv on the zero-dilated,
    asymmetrically padded input (pad_lo=k-1-pad, pad_hi=k-1-pad+out_pad).
    Kernel flipping is handled in the weight prep."""
    ho = (hin - 1) * stride - 2 * pad + k + out_pad
    wo = (win - 1) * stride - 2 * pad + k + out_pad
    pad_lo = k - 1 - pad
    gt = np.zeros((k * k, hin * win, ho * wo), np.float32)
    for a in range(k):
        for b in range(k):
            t = a * k + b
            for i in range(ho):
                dr = i + a - pad_lo
                if dr < 0 or dr % stride != 0 or dr // stride >= hin:
                    continue
                r = dr // stride
                for j in range(wo):
                    dc = j + b - pad_lo
                    if dc < 0 or dc % stride != 0 or dc // stride >= win:
                        continue
                    c = dc // stride
                    gt[t, r * win + c, i * wo + j] = 1.0
    return gt, ho, wo


# ---------------------------------------------------------------------------
# The fused Pallas kernel: all 4 layers, whole batch, one grid step.
# ---------------------------------------------------------------------------
def _autoencoder_kernel(x_ref,
                        w1_ref, b1_ref, g1_ref,
                        w2_ref, b2_ref, g2_ref,
                        w3_ref, b3_ref, g3_ref,
                        w4_ref, b4_ref, g4_ref,
                        o_ref,
                        s1_ref, s2_ref, s3_ref, s4_ref):
    f32 = jnp.float32
    bf16 = jnp.bfloat16
    batch = x_ref.shape[0]

    def layer(act, w_ref, g_ref, b_ref, s_ref, relu):
        # act: (Cin, Min) f32.  g_ref: (9, Min, Mout) bf16 0/1 selections.
        # w_ref: (Cout, 9*Cin) bf16.  b_ref: (Cout, 1) f32.
        # s_ref: (9*Cin, Mout) f32 VMEM scratch (im2col-style tap staging).
        cin = act.shape[0]
        act_bf = act.astype(bf16)
        # 9 independent gather GEMMs -> disjoint sublane blocks of the scratch
        # (no serial accumulation chain; results are exact copies of act_bf).
        for t in range(9):
            s_ref[t * cin:(t + 1) * cin, :] = jnp.dot(
                act_bf, g_ref[t], preferred_element_type=f32)
        # ONE stacked-K weight GEMM: (Cout, 9*Cin) @ (9*Cin, Mout), K = 9..576.
        out = jnp.dot(w_ref[...], s_ref[...].astype(bf16),
                      preferred_element_type=f32)
        out = out + b_ref[...]
        return jnp.maximum(out, 0.0) if relu else out

    for b in range(batch):          # static unroll: whole batch in one step
        x = x_ref[b]                                                # (1, 256)
        h = layer(x, w1_ref, g1_ref, b1_ref, s1_ref, relu=True)    # (32, 64)
        h = layer(h, w2_ref, g2_ref, b2_ref, s2_ref, relu=True)    # (64, 16)
        h = layer(h, w3_ref, g3_ref, b3_ref, s3_ref, relu=True)    # (32, 64)
        y = layer(h, w4_ref, g4_ref, b4_ref, s4_ref, relu=False)   # (1, 256)
        # Exact sigmoid epilogue (EUP exp + one tiny divide on a (1,256) row).
        o_ref[b] = 1.0 / (1.0 + jnp.exp(-y))


# ---------------------------------------------------------------------------
# Wrapper: builds the constant operands once, returns the jit-able forward fn.
# ---------------------------------------------------------------------------
def build_autoencoder_forward(params, height=16, width=16):
    k = 3
    g1, h1, w1 = _gather_T_conv(height, width, k, 2, 1)        # 16 -> 8
    g2, h2, w2 = _gather_T_conv(h1, w1, k, 2, 1)               # 8  -> 4
    g3, h3, w3 = _gather_T_convT(h2, w2, k, 2, 1, 1)           # 4  -> 8
    g4, h4, w4 = _gather_T_convT(h3, w3, k, 2, 1, 1)           # 8  -> 16
    assert (h4, w4) == (height, width)

    bf16 = jnp.bfloat16
    f32 = jnp.float32

    def conv_wcat(w):
        # Conv2d weight (Cout, Cin, 3, 3) -> lane-dense (Cout, 9*Cin), tap-major
        # columns: column t*Cin + c holds W[o, c, a, b] with t = a*3 + b.
        co, ci = int(w.shape[0]), int(w.shape[1])
        return jnp.asarray(w).transpose(0, 2, 3, 1).reshape(co, 9 * ci).astype(bf16)

    def convT_wcat(w):
        # ConvTranspose2d weight (Cin, Cout, 3, 3): the equivalent forward conv
        # on the zero-dilated input uses the channel-swapped, spatially flipped
        # kernel; then the same tap-major lane-dense layout as conv_wcat.
        w_conv = jnp.flip(jnp.asarray(w), (2, 3)).transpose(1, 0, 2, 3)
        co, ci = int(w_conv.shape[0]), int(w_conv.shape[1])
        return w_conv.transpose(0, 2, 3, 1).reshape(co, 9 * ci).astype(bf16)

    wc1 = conv_wcat(params["enc1_w"]);  b1 = params["enc1_b"].reshape(-1, 1).astype(f32)
    wc2 = conv_wcat(params["enc2_w"]);  b2 = params["enc2_b"].reshape(-1, 1).astype(f32)
    wc3 = convT_wcat(params["dec1_w"]); b3 = params["dec1_b"].reshape(-1, 1).astype(f32)
    wc4 = convT_wcat(params["dec2_w"]); b4 = params["dec2_b"].reshape(-1, 1).astype(f32)

    consts = (wc1, b1, jnp.asarray(g1, bf16),
              wc2, b2, jnp.asarray(g2, bf16),
              wc3, b3, jnp.asarray(g3, bf16),
              wc4, b4, jnp.asarray(g4, bf16))

    m0 = height * width
    m1, m2, m3, m4 = h1 * w1, h2 * w2, h3 * w3, h4 * w4
    # (Cin, Cout, Min, Mout) per layer
    layer_dims = ((1, 32, m0, m1), (32, 64, m1, m2),
                  (64, 32, m2, m3), (32, 1, m3, m4))

    def _whole(shape):
        zeros = (0,) * len(shape)
        return pl.BlockSpec(tuple(int(d) for d in shape), lambda i, z=zeros: z)

    def forward(kernel_consts, x):
        batch = x.shape[0]
        x_flat = x.reshape(batch, 1, m0).astype(f32)      # boundary reshape only

        flops = 0
        for cin, cout, mi, mo in layer_dims:
            flops += 2 * 9 * cin * mi * mo        # gather GEMMs
            flops += 2 * cout * 9 * cin * mo      # stacked-K weight GEMM
        flops *= batch
        bytes_accessed = (x_flat.size * 4 + batch * m4 * 4
                          + sum(int(c.size) * c.dtype.itemsize
                                for c in kernel_consts))

        in_specs = [_whole((batch, 1, m0))]
        in_specs += [_whole(c.shape) for c in kernel_consts]

        y = pl.pallas_call(
            _autoencoder_kernel,
            out_shape=jax.ShapeDtypeStruct((batch, 1, m4), f32),
            grid=(1,),                      # single step: batch handled in-kernel
            in_specs=in_specs,
            out_specs=_whole((batch, 1, m4)),
            scratch_shapes=[pltpu.VMEM((9 * cin, mo), f32)
                            for (cin, _cout, _mi, mo) in layer_dims],
            cost_estimate=pl.CostEstimate(flops=flops,
                                          transcendentals=batch * m4,
                                          bytes_accessed=bytes_accessed),
        )(x_flat, *kernel_consts)
        return y.reshape(batch, 1, height, width)

    return consts, forward


# ---------------------------------------------------------------------------
# Deterministic PyTorch-shaped parameters and a pure-XLA reference.
# ---------------------------------------------------------------------------
def init_params(key):
    ks = jax.random.split(key, 8)

    def u(k, shape, fan_in):
        bound = 1.0 / (fan_in ** 0.5)
        return jax.random.uniform(k, shape, jnp.float32, -bound, bound)

    return {
        # encoder: Conv2d(1,32,3,s2,p1), Conv2d(32,64,3,s2,p1)
        "enc1_w": u(ks[0], (32, 1, 3, 3), 1 * 9),
        "enc1_b": u(ks[1], (32,), 1 * 9),
        "enc2_w": u(ks[2], (64, 32, 3, 3), 32 * 9),
        "enc2_b": u(ks[3], (64,), 32 * 9),
        # decoder: ConvTranspose2d(64,32,3,s2,p1,op1), ConvTranspose2d(32,1,...)
        "dec1_w": u(ks[4], (64, 32, 3, 3), 32 * 9),   # (in_ch, out_ch, k, k)
        "dec1_b": u(ks[5], (32,), 32 * 9),
        "dec2_w": u(ks[6], (32, 1, 3, 3), 1 * 9),     # (in_ch, out_ch, k, k)
        "dec2_b": u(ks[7], (1,), 1 * 9),
    }


def reference_forward(params, x):
    """Pure-XLA reference with PyTorch Conv2d / ConvTranspose2d semantics."""
    dn = ("NCHW", "OIHW", "NCHW")
    hi = jax.lax.Precision.HIGHEST

    def conv(y, w, b, stride, pad):
        y = jax.lax.conv_general_dilated(
            y, w, window_strides=(stride, stride),
            padding=((pad, pad), (pad, pad)),
            dimension_numbers=dn, precision=hi)
        return y + b.reshape(1, -1, 1, 1)

    def convT(y, w, b):
        w_conv = jnp.flip(w, (2, 3)).transpose(1, 0, 2, 3)
        y = jax.lax.conv_general_dilated(
            y, w_conv, window_strides=(1, 1),
            padding=((1, 2), (1, 2)), lhs_dilation=(2, 2),
            dimension_numbers=dn, precision=hi)
        return y + b.reshape(1, -1, 1, 1)

    y = jax.nn.relu(conv(x, params["enc1_w"], params["enc1_b"], 2, 1))
    y = jax.nn.relu(conv(y, params["enc2_w"], params["enc2_b"], 2, 1))
    y = jax.nn.relu(convT(y, params["dec1_w"], params["dec1_b"]))
    y = jax.nn.sigmoid(convT(y, params["dec2_w"], params["dec2_b"]))
    return y


if __name__ == "__main__":
    key = jax.random.PRNGKey(0)
    pkey, xkey = jax.random.split(key)
    params = init_params(pkey)

    # Small MNIST-like input: batch=2, 1 channel, 16x16 spatial (NCHW).
    x = jax.random.uniform(xkey, (2, 1, 16, 16), jnp.float32)

    consts, forward = build_autoencoder_forward(params, height=16, width=16)
    y = jax.block_until_ready(jax.jit(forward)(consts, x))

    assert y.shape == (2, 1, 16, 16), y.shape
    assert bool(jnp.all(jnp.isfinite(y)))

    # Check against the f32 pure-XLA reference.  Tolerance covers the bf16 MXU
    # operands (weight/activation rounding, ~1e-3-level on (0,1) outputs).
    y_ref = reference_forward(params, x)
    np.testing.assert_allclose(np.asarray(y), np.asarray(y_ref), rtol=0.0, atol=1e-2)

    print("KERNEL_OK")
</pallas_src>

<mosaic_0001>
module attributes {stable_mosaic.version = 11 : i64} {
  func.func @_autoencoder_kernel(%arg0: i32, %arg1: memref<2x1x256xf32, #tpu.memory_space<vmem>>, %arg2: memref<32x9xbf16, #tpu.memory_space<vmem>>, %arg3: memref<32x1xf32, #tpu.memory_space<vmem>>, %arg4: memref<9x256x64xbf16, #tpu.memory_space<vmem>>, %arg5: memref<64x288xbf16, #tpu.memory_space<vmem>>, %arg6: memref<64x1xf32, #tpu.memory_space<vmem>>, %arg7: memref<9x64x16xbf16, #tpu.memory_space<vmem>>, %arg8: memref<32x576xbf16, #tpu.memory_space<vmem>>, %arg9: memref<32x1xf32, #tpu.memory_space<vmem>>, %arg10: memref<9x16x64xbf16, #tpu.memory_space<vmem>>, %arg11: memref<1x288xbf16, #tpu.memory_space<vmem>>, %arg12: memref<1x1xf32, #tpu.memory_space<vmem>>, %arg13: memref<9x64x256xbf16, #tpu.memory_space<vmem>>, %arg14: memref<2x1x256xf32, #tpu.memory_space<vmem>>, %arg15: memref<9x64xf32, #tpu.memory_space<vmem>>, %arg16: memref<288x16xf32, #tpu.memory_space<vmem>>, %arg17: memref<576x64xf32, #tpu.memory_space<vmem>>, %arg18: memref<288x256xf32, #tpu.memory_space<vmem>>) attributes {dimension_semantics = [#tpu.dimension_semantics<arbitrary>], iteration_bounds = array<i64: 1>, scalar_prefetch = 0 : i64, scratch_operands = 4 : i64, tpu.core_type = #tpu.core_type<tc>, window_params = [{pipeline_mode = #tpu.pipeline_mode<synchronous>, transform_indices = @transform_0, window_bounds = array<i64: 2, 1, 256>}, {pipeline_mode = #tpu.pipeline_mode<synchronous>, transform_indices = @transform_1, window_bounds = array<i64: 32, 9>}, {pipeline_mode = #tpu.pipeline_mode<synchronous>, transform_indices = @transform_2, window_bounds = array<i64: 32, 1>}, {pipeline_mode = #tpu.pipeline_mode<synchronous>, transform_indices = @transform_3, window_bounds = array<i64: 9, 256, 64>}, {pipeline_mode = #tpu.pipeline_mode<synchronous>, transform_indices = @transform_4, window_bounds = array<i64: 64, 288>}, {pipeline_mode = #tpu.pipeline_mode<synchronous>, transform_indices = @transform_5, window_bounds = array<i64: 64, 1>}, {pipeline_mode = #tpu.pipeline_mode<synchronous>, transform_indices = @transform_6, window_bounds = array<i64: 9, 64, 16>}, {pipeline_mode = #tpu.pipeline_mode<synchronous>, transform_indices = @transform_7, window_bounds = array<i64: 32, 576>}, {pipeline_mode = #tpu.pipeline_mode<synchronous>, transform_indices = @transform_8, window_bounds = array<i64: 32, 1>}, {pipeline_mode = #tpu.pipeline_mode<synchronous>, transform_indices = @transform_9, window_bounds = array<i64: 9, 16, 64>}, {pipeline_mode = #tpu.pipeline_mode<synchronous>, transform_indices = @transform_10, window_bounds = array<i64: 1, 288>}, {pipeline_mode = #tpu.pipeline_mode<synchronous>, transform_indices = @transform_11, window_bounds = array<i64: 1, 1>}, {pipeline_mode = #tpu.pipeline_mode<synchronous>, transform_indices = @transform_12, window_bounds = array<i64: 9, 64, 256>}, {pipeline_mode = #tpu.pipeline_mode<synchronous>, transform_indices = @transform_13, window_bounds = array<i64: 2, 1, 256>}]} {
    %c0 = arith.constant 0 : index
    %c0_0 = arith.constant 0 : index
    %c0_1 = arith.constant 0 : index
    %0 = vector.load %arg1[%c0, %c0_0, %c0_1] : memref<2x1x256xf32, #tpu.memory_space<vmem>>, vector<1x1x256xf32>
    %1 = vector.shape_cast %0 : vector<1x1x256xf32> to vector<1x256xf32>
    %2 = arith.truncf %1 : vector<1x256xf32> to vector<1x256xbf16>
    %c0_2 = arith.constant 0 : index
    %c0_3 = arith.constant 0 : index
    %c0_4 = arith.constant 0 : index
    %3 = vector.load %arg4[%c0_2, %c0_3, %c0_4] : memref<9x256x64xbf16, #tpu.memory_space<vmem>>, vector<1x256x64xbf16>
    %4 = vector.shape_cast %3 : vector<1x256x64xbf16> to vector<256x64xbf16>
    %cst = arith.constant dense<0.000000e+00> : vector<1x64xf32>
    %5 = tpu.matmul %2, %4, %cst {dimension_numbers = #tpu.dot_dimension_numbers<[1], [0], [0], [1], [0, 0, 1, 1], [], []>} : vector<1x256xbf16>, vector<256x64xbf16>, vector<1x64xf32> -> vector<1x64xf32>
    %c0_5 = arith.constant 0 : index
    %c0_6 = arith.constant 0 : index
    %6 = vector.load %arg15[%c0_5, %c0_6] : memref<9x64xf32, #tpu.memory_space<vmem>>, vector<1x64xf32>
    tpu.vector_store %arg15[%c0_5, %c0_6], %5 {strides = array<i32>} : memref<9x64xf32, #tpu.memory_space<vmem>>, vector<1x64xf32>,
    %c1 = arith.constant 1 : index
    %c0_7 = arith.constant 0 : index
    %c0_8 = arith.constant 0 : index
    %7 = vector.load %arg4[%c1, %c0_7, %c0_8] : memref<9x256x64xbf16, #tpu.memory_space<vmem>>, vector<1x256x64xbf16>
    %8 = vector.shape_cast %7 : vector<1x256x64xbf16> to vector<256x64xbf16>
    %cst_9 = arith.constant dense<0.000000e+00> : vector<1x64xf32>
    %9 = tpu.matmul %2, %8, %cst_9 {dimension_numbers = #tpu.dot_dimension_numbers<[1], [0], [0], [1], [0, 0, 1, 1], [], []>} : vector<1x256xbf16>, vector<256x64xbf16>, vector<1x64xf32> -> vector<1x64xf32>
    %c1_10 = arith.constant 1 : index
    %c0_11 = arith.constant 0 : index
    %10 = vector.load %arg15[%c1_10, %c0_11] : memref<9x64xf32, #tpu.memory_space<vmem>>, vector<1x64xf32>
    tpu.vector_store %arg15[%c1_10, %c0_11], %9 {strides = array<i32>} : memref<9x64xf32, #tpu.memory_space<vmem>>, vector<1x64xf32>,
    %c2 = arith.constant 2 : index
    %c0_12 = arith.constant 0 : index
    %c0_13 = arith.constant 0 : index
    %11 = vector.load %arg4[%c2, %c0_12, %c0_13] : memref<9x256x64xbf16, #tpu.memory_space<vmem>>, vector<1x256x64xbf16>
    %12 = vector.shape_cast %11 : vector<1x256x64xbf16> to vector<256x64xbf16>
    %cst_14 = arith.constant dense<0.000000e+00> : vector<1x64xf32>
    %13 = tpu.matmul %2, %12, %cst_14 {dimension_numbers = #tpu.dot_dimension_numbers<[1], [0], [0], [1], [0, 0, 1, 1], [], []>} : vector<1x256xbf16>, vector<256x64xbf16>, vector<1x64xf32> -> vector<1x64xf32>
    %c2_15 = arith.constant 2 : index
    %c0_16 = arith.constant 0 : index
    %14 = vector.load %arg15[%c2_15, %c0_16] : memref<9x64xf32, #tpu.memory_space<vmem>>, vector<1x64xf32>
    tpu.vector_store %arg15[%c2_15, %c0_16], %13 {strides = array<i32>} : memref<9x64xf32, #tpu.memory_space<vmem>>, vector<1x64xf32>,
    %c3 = arith.constant 3 : index
    %c0_17 = arith.constant 0 : index
    %c0_18 = arith.constant 0 : index
    %15 = vector.load %arg4[%c3, %c0_17, %c0_18] : memref<9x256x64xbf16, #tpu.memory_space<vmem>>, vector<1x256x64xbf16>
    %16 = vector.shape_cast %15 : vector<1x256x64xbf16> to vector<256x64xbf16>
    %cst_19 = arith.constant dense<0.000000e+00> : vector<1x64xf32>
    %17 = tpu.matmul %2, %16, %cst_19 {dimension_numbers = #tpu.dot_dimension_numbers<[1], [0], [0], [1], [0, 0, 1, 1], [], []>} : vector<1x256xbf16>, vector<256x64xbf16>, vector<1x64xf32> -> vector<1x64xf32>
    %c3_20 = arith.constant 3 : index
    %c0_21 = arith.constant 0 : index
    %18 = vector.load %arg15[%c3_20, %c0_21] : memref<9x64xf32, #tpu.memory_space<vmem>>, vector<1x64xf32>
    tpu.vector_store %arg15[%c3_20, %c0_21], %17 {strides = array<i32>} : memref<9x64xf32, #tpu.memory_space<vmem>>, vector<1x64xf32>,
    %c4 = arith.constant 4 : index
    %c0_22 = arith.constant 0 : index
    %c0_23 = arith.constant 0 : index
    %19 = vector.load %arg4[%c4, %c0_22, %c0_23] : memref<9x256x64xbf16, #tpu.memory_space<vmem>>, vector<1x256x64xbf16>
    %20 = vector.shape_cast %19 : vector<1x256x64xbf16> to vector<256x64xbf16>
    %cst_24 = arith.constant dense<0.000000e+00> : vector<1x64xf32>
    %21 = tpu.matmul %2, %20, %cst_24 {dimension_numbers = #tpu.dot_dimension_numbers<[1], [0], [0], [1], [0, 0, 1, 1], [], []>} : vector<1x256xbf16>, vector<256x64xbf16>, vector<1x64xf32> -> vector<1x64xf32>
    %c4_25 = arith.constant 4 : index
    %c0_26 = arith.constant 0 : index
    %22 = vector.load %arg15[%c4_25, %c0_26] : memref<9x64xf32, #tpu.memory_space<vmem>>, vector<1x64xf32>
    tpu.vector_store %arg15[%c4_25, %c0_26], %21 {strides = array<i32>} : memref<9x64xf32, #tpu.memory_space<vmem>>, vector<1x64xf32>,
    %c5 = arith.constant 5 : index
    %c0_27 = arith.constant 0 : index
    %c0_28 = arith.constant 0 : index
    %23 = vector.load %arg4[%c5, %c0_27, %c0_28] : memref<9x256x64xbf16, #tpu.memory_space<vmem>>, vector<1x256x64xbf16>
    %24 = vector.shape_cast %23 : vector<1x256x64xbf16> to vector<256x64xbf16>
    %cst_29 = arith.constant dense<0.000000e+00> : vector<1x64xf32>
    %25 = tpu.matmul %2, %24, %cst_29 {dimension_numbers = #tpu.dot_dimension_numbers<[1], [0], [0], [1], [0, 0, 1, 1], [], []>} : vector<1x256xbf16>, vector<256x64xbf16>, vector<1x64xf32> -> vector<1x64xf32>
    %c5_30 = arith.constant 5 : index
    %c0_31 = arith.constant 0 : index
    %26 = vector.load %arg15[%c5_30, %c0_31] : memref<9x64xf32, #tpu.memory_space<vmem>>, vector<1x64xf32>
    tpu.vector_store %arg15[%c5_30, %c0_31], %25 {strides = array<i32>} : memref<9x64xf32, #tpu.memory_space<vmem>>, vector<1x64xf32>,
    %c6 = arith.constant 6 : index
    %c0_32 = arith.constant 0 : index
    %c0_33 = arith.constant 0 : index
    %27 = vector.load %arg4[%c6, %c0_32, %c0_33] : memref<9x256x64xbf16, #tpu.memory_space<vmem>>, vector<1x256x64xbf16>
    %28 = vector.shape_cast %27 : vector<1x256x64xbf16> to vector<256x64xbf16>
    %cst_34 = arith.constant dense<0.000000e+00> : vector<1x64xf32>
    %29 = tpu.matmul %2, %28, %cst_34 {dimension_numbers = #tpu.dot_dimension_numbers<[1], [0], [0], [1], [0, 0, 1, 1], [], []>} : vector<1x256xbf16>, vector<256x64xbf16>, vector<1x64xf32> -> vector<1x64xf32>
    %c6_35 = arith.constant 6 : index
    %c0_36 = arith.constant 0 : index
    %30 = vector.load %arg15[%c6_35, %c0_36] : memref<9x64xf32, #tpu.memory_space<vmem>>, vector<1x64xf32>
    tpu.vector_store %arg15[%c6_35, %c0_36], %29 {strides = array<i32>} : memref<9x64xf32, #tpu.memory_space<vmem>>, vector<1x64xf32>,
    %c7 = arith.constant 7 : index
    %c0_37 = arith.constant 0 : index
    %c0_38 = arith.constant 0 : index
    %31 = vector.load %arg4[%c7, %c0_37, %c0_38] : memref<9x256x64xbf16, #tpu.memory_space<vmem>>, vector<1x256x64xbf16>
    %32 = vector.shape_cast %31 : vector<1x256x64xbf16> to vector<256x64xbf16>
    %cst_39 = arith.constant dense<0.000000e+00> : vector<1x64xf32>
    %33 = tpu.matmul %2, %32, %cst_39 {dimension_numbers = #tpu.dot_dimension_numbers<[1], [0], [0], [1], [0, 0, 1, 1], [], []>} : vector<1x256xbf16>, vector<256x64xbf16>, vector<1x64xf32> -> vector<1x64xf32>
    %c7_40 = arith.constant 7 : index
    %c0_41 = arith.constant 0 : index
    %34 = vector.load %arg15[%c7_40, %c0_41] : memref<9x64xf32, #tpu.memory_space<vmem>>, vector<1x64xf32>
    tpu.vector_store %arg15[%c7_40, %c0_41], %33 {strides = array<i32>} : memref<9x64xf32, #tpu.memory_space<vmem>>, vector<1x64xf32>,
    %c8 = arith.constant 8 : index
    %c0_42 = arith.constant 0 : index
    %c0_43 = arith.constant 0 : index
    %35 = vector.load %arg4[%c8, %c0_42, %c0_43] : memref<9x256x64xbf16, #tpu.memory_space<vmem>>, vector<1x256x64xbf16>
    %36 = vector.shape_cast %35 : vector<1x256x64xbf16> to vector<256x64xbf16>
    %cst_44 = arith.constant dense<0.000000e+00> : vector<1x64xf32>
    %37 = tpu.matmul %2, %36, %cst_44 {dimension_numbers = #tpu.dot_dimension_numbers<[1], [0], [0], [1], [0, 0, 1, 1], [], []>} : vector<1x256xbf16>, vector<256x64xbf16>, vector<1x64xf32> -> vector<1x64xf32>
    %c8_45 = arith.constant 8 : index
    %c0_46 = arith.constant 0 : index
    %38 = vector.load %arg15[%c8_45, %c0_46] : memref<9x64xf32, #tpu.memory_space<vmem>>, vector<1x64xf32>
    tpu.vector_store %arg15[%c8_45, %c0_46], %37 {strides = array<i32>} : memref<9x64xf32, #tpu.memory_space<vmem>>, vector<1x64xf32>,
    %c0_47 = arith.constant 0 : index
    %c0_48 = arith.constant 0 : index
    %39 = vector.load %arg2[%c0_47, %c0_48] : memref<32x9xbf16, #tpu.memory_space<vmem>>, vector<32x9xbf16>
    %c0_49 = arith.constant 0 : index
    %c0_50 = arith.constant 0 : index
    %40 = vector.load %arg15[%c0_49, %c0_50] : memref<9x64xf32, #tpu.memory_space<vmem>>, vector<9x64xf32>
    %41 = arith.truncf %40 : vector<9x64xf32> to vector<9x64xbf16>
    %cst_51 = arith.constant dense<0.000000e+00> : vector<32x64xf32>
    %42 = tpu.matmul %39, %41, %cst_51 {dimension_numbers = #tpu.dot_dimension_numbers<[1], [0], [0], [1], [0, 0, 1, 1], [], []>} : vector<32x9xbf16>, vector<9x64xbf16>, vector<32x64xf32> -> vector<32x64xf32>
    %c0_52 = arith.constant 0 : index
    %c0_53 = arith.constant 0 : index
    %43 = vector.load %arg3[%c0_52, %c0_53] : memref<32x1xf32, #tpu.memory_space<vmem>>, vector<32x1xf32>
    %44 = vector.broadcast %43 : vector<32x1xf32> to vector<32x64xf32>
    %45 = arith.addf %42, %44 : vector<32x64xf32>
    %cst_54 = arith.constant 0.000000e+00 : f32
    %46 = vector.broadcast %cst_54 : f32 to vector<32x64xf32>
    %47 = arith.maximumf %45, %46 : vector<32x64xf32>
    %48 = arith.truncf %47 : vector<32x64xf32> to vector<32x64xbf16>
    %c0_55 = arith.constant 0 : index
    %c0_56 = arith.constant 0 : index
    %c0_57 = arith.constant 0 : index
    %49 = vector.load %arg7[%c0_55, %c0_56, %c0_57] : memref<9x64x16xbf16, #tpu.memory_space<vmem>>, vector<1x64x16xbf16>
    %50 = vector.shape_cast %49 : vector<1x64x16xbf16> to vector<64x16xbf16>
    %cst_58 = arith.constant dense<0.000000e+00> : vector<32x16xf32>
    %51 = tpu.matmul %48, %50, %cst_58 {dimension_numbers = #tpu.dot_dimension_numbers<[1], [0], [0], [1], [0, 0, 1, 1], [], []>} : vector<32x64xbf16>, vector<64x16xbf16>, vector<32x16xf32> -> vector<32x16xf32>
    %c0_59 = arith.constant 0 : index
    %c0_60 = arith.constant 0 : index
    %52 = vector.load %arg16[%c0_59, %c0_60] : memref<288x16xf32, #tpu.memory_space<vmem>>, vector<32x16xf32>
    tpu.vector_store %arg16[%c0_59, %c0_60], %51 {strides = array<i32>} : memref<288x16xf32, #tpu.memory_space<vmem>>, vector<32x16xf32>,
    %c1_61 = arith.constant 1 : index
    %c0_62 = arith.constant 0 : index
    %c0_63 = arith.constant 0 : index
    %53 = vector.load %arg7[%c1_61, %c0_62, %c0_63] : memref<9x64x16xbf16, #tpu.memory_space<vmem>>, vector<1x64x16xbf16>
    %54 = vector.shape_cast %53 : vector<1x64x16xbf16> to vector<64x16xbf16>
    %cst_64 = arith.constant dense<0.000000e+00> : vector<32x16xf32>
    %55 = tpu.matmul %48, %54, %cst_64 {dimension_numbers = #tpu.dot_dimension_numbers<[1], [0], [0], [1], [0, 0, 1, 1], [], []>} : vector<32x64xbf16>, vector<64x16xbf16>, vector<32x16xf32> -> vector<32x16xf32>
    %c32 = arith.constant 32 : index
    %c0_65 = arith.constant 0 : index
    %56 = vector.load %arg16[%c32, %c0_65] : memref<288x16xf32, #tpu.memory_space<vmem>>, vector<32x16xf32>
    tpu.vector_store %arg16[%c32, %c0_65], %55 {strides = array<i32>} : memref<288x16xf32, #tpu.memory_space<vmem>>, vector<32x16xf32>,
    %c2_66 = arith.constant 2 : index
    %c0_67 = arith.constant 0 : index
    %c0_68 = arith.constant 0 : index
    %57 = vector.load %arg7[%c2_66, %c0_67, %c0_68] : memref<9x64x16xbf16, #tpu.memory_space<vmem>>, vector<1x64x16xbf16>
    %58 = vector.shape_cast %57 : vector<1x64x16xbf16> to vector<64x16xbf16>
    %cst_69 = arith.constant dense<0.000000e+00> : vector<32x16xf32>
    %59 = tpu.matmul %48, %58, %cst_69 {dimension_numbers = #tpu.dot_dimension_numbers<[1], [0], [0], [1], [0, 0, 1, 1], [], []>} : vector<32x64xbf16>, vector<64x16xbf16>, vector<32x16xf32> -> vector<32x16xf32>
    %c64 = arith.constant 64 : index
    %c0_70 = arith.constant 0 : index
    %60 = vector.load %arg16[%c64, %c0_70] : memref<288x16xf32, #tpu.memory_space<vmem>>, vector<32x16xf32>
    tpu.vector_store %arg16[%c64, %c0_70], %59 {strides = array<i32>} : memref<288x16xf32, #tpu.memory_space<vmem>>, vector<32x16xf32>,
    %c3_71 = arith.constant 3 : index
    %c0_72 = arith.constant 0 : index
    %c0_73 = arith.constant 0 : index
    %61 = vector.load %arg7[%c3_71, %c0_72, %c0_73] : memref<9x64x16xbf16, #tpu.memory_space<vmem>>, vector<1x64x16xbf16>
    %62 = vector.shape_cast %61 : vector<1x64x16xbf16> to vector<64x16xbf16>
    %cst_74 = arith.constant dense<0.000000e+00> : vector<32x16xf32>
    %63 = tpu.matmul %48, %62, %cst_74 {dimension_numbers = #tpu.dot_dimension_numbers<[1], [0], [0], [1], [0, 0, 1, 1], [], []>} : vector<32x64xbf16>, vector<64x16xbf16>, vector<32x16xf32> -> vector<32x16xf32>
    %c96 = arith.constant 96 : index
    %c0_75 = arith.constant 0 : index
    %64 = vector.load %arg16[%c96, %c0_75] : memref<288x16xf32, #tpu.memory_space<vmem>>, vector<32x16xf32>
    tpu.vector_store %arg16[%c96, %c0_75], %63 {strides = array<i32>} : memref<288x16xf32, #tpu.memory_space<vmem>>, vector<32x16xf32>,
    %c4_76 = arith.constant 4 : index
    %c0_77 = arith.constant 0 : index
    %c0_78 = arith.constant 0 : index
    %65 = vector.load %arg7[%c4_76, %c0_77, %c0_78] : memref<9x64x16xbf16, #tpu.memory_space<vmem>>, vector<1x64x16xbf16>
    %66 = vector.shape_cast %65 : vector<1x64x16xbf16> to vector<64x16xbf16>
    %cst_79 = arith.constant dense<0.000000e+00> : vector<32x16xf32>
    %67 = tpu.matmul %48, %66, %cst_79 {dimension_numbers = #tpu.dot_dimension_numbers<[1], [0], [0], [1], [0, 0, 1, 1], [], []>} : vector<32x64xbf16>, vector<64x16xbf16>, vector<32x16xf32> -> vector<32x16xf32>
    %c128 = arith.constant 128 : index
    %c0_80 = arith.constant 0 : index
    %68 = vector.load %arg16[%c128, %c0_80] : memref<288x16xf32, #tpu.memory_space<vmem>>, vector<32x16xf32>
    tpu.vector_store %arg16[%c128, %c0_80], %67 {strides = array<i32>} : memref<288x16xf32, #tpu.memory_space<vmem>>, vector<32x16xf32>,
    %c5_81 = arith.constant 5 : index
    %c0_82 = arith.constant 0 : index
    %c0_83 = arith.constant 0 : index
    %69 = vector.load %arg7[%c5_81, %c0_82, %c0_83] : memref<9x64x16xbf16, #tpu.memory_space<vmem>>, vector<1x64x16xbf16>
    %70 = vector.shape_cast %69 : vector<1x64x16xbf16> to vector<64x16xbf16>
    %cst_84 = arith.constant dense<0.000000e+00> : vector<32x16xf32>
    %71 = tpu.matmul %48, %70, %cst_84 {dimension_numbers = #tpu.dot_dimension_numbers<[1], [0], [0], [1], [0, 0, 1, 1], [], []>} : vector<32x64xbf16>, vector<64x16xbf16>, vector<32x16xf32> -> vector<32x16xf32>
    %c160 = arith.constant 160 : index
    %c0_85 = arith.constant 0 : index
    %72 = vector.load %arg16[%c160, %c0_85] : memref<288x16xf32, #tpu.memory_space<vmem>>, vector<32x16xf32>
    tpu.vector_store %arg16[%c160, %c0_85], %71 {strides = array<i32>} : memref<288x16xf32, #tpu.memory_space<vmem>>, vector<32x16xf32>,
    %c6_86 = arith.constant 6 : index
    %c0_87 = arith.constant 0 : index
    %c0_88 = arith.constant 0 : index
    %73 = vector.load %arg7[%c6_86, %c0_87, %c0_88] : memref<9x64x16xbf16, #tpu.memory_space<vmem>>, vector<1x64x16xbf16>
    %74 = vector.shape_cast %73 : vector<1x64x16xbf16> to vector<64x16xbf16>
    %cst_89 = arith.constant dense<0.000000e+00> : vector<32x16xf32>
    %75 = tpu.matmul %48, %74, %cst_89 {dimension_numbers = #tpu.dot_dimension_numbers<[1], [0], [0], [1], [0, 0, 1, 1], [], []>} : vector<32x64xbf16>, vector<64x16xbf16>, vector<32x16xf32> -> vector<32x16xf32>
    %c192 = arith.constant 192 : index
    %c0_90 = arith.constant 0 : index
    %76 = vector.load %arg16[%c192, %c0_90] : memref<288x16xf32, #tpu.memory_space<vmem>>, vector<32x16xf32>
    tpu.vector_store %arg16[%c192, %c0_90], %75 {strides = array<i32>} : memref<288x16xf32, #tpu.memory_space<vmem>>, vector<32x16xf32>,
    %c7_91 = arith.constant 7 : index
    %c0_92 = arith.constant 0 : index
    %c0_93 = arith.constant 0 : index
    %77 = vector.load %arg7[%c7_91, %c0_92, %c0_93] : memref<9x64x16xbf16, #tpu.memory_space<vmem>>, vector<1x64x16xbf16>
    %78 = vector.shape_cast %77 : vector<1x64x16xbf16> to vector<64x16xbf16>
    %cst_94 = arith.constant dense<0.000000e+00> : vector<32x16xf32>
    %79 = tpu.matmul %48, %78, %cst_94 {dimension_numbers = #tpu.dot_dimension_numbers<[1], [0], [0], [1], [0, 0, 1, 1], [], []>} : vector<32x64xbf16>, vector<64x16xbf16>, vector<32x16xf32> -> vector<32x16xf32>
    %c224 = arith.constant 224 : index
    %c0_95 = arith.constant 0 : index
    %80 = vector.load %arg16[%c224, %c0_95] : memref<288x16xf32, #tpu.memory_space<vmem>>, vector<32x16xf32>
    tpu.vector_store %arg16[%c224, %c0_95], %79 {strides = array<i32>} : memref<288x16xf32, #tpu.memory_space<vmem>>, vector<32x16xf32>,
    %c8_96 = arith.constant 8 : index
    %c0_97 = arith.constant 0 : index
    %c0_98 = arith.constant 0 : index
    %81 = vector.load %arg7[%c8_96, %c0_97, %c0_98] : memref<9x64x16xbf16, #tpu.memory_space<vmem>>, vector<1x64x16xbf16>
    %82 = vector.shape_cast %81 : vector<1x64x16xbf16> to vector<64x16xbf16>
    %cst_99 = arith.constant dense<0.000000e+00> : vector<32x16xf32>
    %83 = tpu.matmul %48, %82, %cst_99 {dimension_numbers = #tpu.dot_dimension_numbers<[1], [0], [0], [1], [0, 0, 1, 1], [], []>} : vector<32x64xbf16>, vector<64x16xbf16>, vector<32x16xf32> -> vector<32x16xf32>
    %c256 = arith.constant 256 : index
    %c0_100 = arith.constant 0 : index
    %84 = vector.load %arg16[%c256, %c0_100] : memref<288x16xf32, #tpu.memory_space<vmem>>, vector<32x16xf32>
    tpu.vector_store %arg16[%c256, %c0_100], %83 {strides = array<i32>} : memref<288x16xf32, #tpu.memory_space<vmem>>, vector<32x16xf32>,
    %c0_101 = arith.constant 0 : index
    %c0_102 = arith.constant 0 : index
    %85 = vector.load %arg5[%c0_101, %c0_102] : memref<64x288xbf16, #tpu.memory_space<vmem>>, vector<64x288xbf16>
    %c0_103 = arith.constant 0 : index
    %c0_104 = arith.constant 0 : index
    %86 = vector.load %arg16[%c0_103, %c0_104] : memref<288x16xf32, #tpu.memory_space<vmem>>, vector<288x16xf32>
    %87 = arith.truncf %86 : vector<288x16xf32> to vector<288x16xbf16>
    %cst_105 = arith.constant dense<0.000000e+00> : vector<64x16xf32>
    %88 = tpu.matmul %85, %87, %cst_105 {dimension_numbers = #tpu.dot_dimension_numbers<[1], [0], [0], [1], [0, 0, 1, 1], [], []>} : vector<64x288xbf16>, vector<288x16xbf16>, vector<64x16xf32> -> vector<64x16xf32>
    %c0_106 = arith.constant 0 : index
    %c0_107 = arith.constant 0 : index
    %89 = vector.load %arg6[%c0_106, %c0_107] : memref<64x1xf32, #tpu.memory_space<vmem>>, vector<64x1xf32>
    %90 = vector.broadcast %89 : vector<64x1xf32> to vector<64x16xf32>
    %91 = arith.addf %88, %90 : vector<64x16xf32>
    %cst_108 = arith.constant 0.000000e+00 : f32
    %92 = vector.broadcast %cst_108 : f32 to vector<64x16xf32>
    %93 = arith.maximumf %91, %92 : vector<64x16xf32>
    %94 = arith.truncf %93 : vector<64x16xf32> to vector<64x16xbf16>
    %c0_109 = arith.constant 0 : index
    %c0_110 = arith.constant 0 : index
    %c0_111 = arith.constant 0 : index
    %95 = vector.load %arg10[%c0_109, %c0_110, %c0_111] : memref<9x16x64xbf16, #tpu.memory_space<vmem>>, vector<1x16x64xbf16>
    %96 = vector.shape_cast %95 : vector<1x16x64xbf16> to vector<16x64xbf16>
    %cst_112 = arith.constant dense<0.000000e+00> : vector<64x64xf32>
    %97 = tpu.matmul %94, %96, %cst_112 {dimension_numbers = #tpu.dot_dimension_numbers<[1], [0], [0], [1], [0, 0, 1, 1], [], []>} : vector<64x16xbf16>, vector<16x64xbf16>, vector<64x64xf32> -> vector<64x64xf32>
    %c0_113 = arith.constant 0 : index
    %c0_114 = arith.constant 0 : index
    %98 = vector.load %arg17[%c0_113, %c0_114] : memref<576x64xf32, #tpu.memory_space<vmem>>, vector<64x64xf32>
    tpu.vector_store %arg17[%c0_113, %c0_114], %97 {strides = array<i32>} : memref<576x64xf32, #tpu.memory_space<vmem>>, vector<64x64xf32>,
    %c1_115 = arith.constant 1 : index
    %c0_116 = arith.constant 0 : index
    %c0_117 = arith.constant 0 : index
    %99 = vector.load %arg10[%c1_115, %c0_116, %c0_117] : memref<9x16x64xbf16, #tpu.memory_space<vmem>>, vector<1x16x64xbf16>
    %100 = vector.shape_cast %99 : vector<1x16x64xbf16> to vector<16x64xbf16>
    %cst_118 = arith.constant dense<0.000000e+00> : vector<64x64xf32>
    %101 = tpu.matmul %94, %100, %cst_118 {dimension_numbers = #tpu.dot_dimension_numbers<[1], [0], [0], [1], [0, 0, 1, 1], [], []>} : vector<64x16xbf16>, vector<16x64xbf16>, vector<64x64xf32> -> vector<64x64xf32>
    %c64_119 = arith.constant 64 : index
    %c0_120 = arith.constant 0 : index
    %102 = vector.load %arg17[%c64_119, %c0_120] : memref<576x64xf32, #tpu.memory_space<vmem>>, vector<64x64xf32>
    tpu.vector_store %arg17[%c64_119, %c0_120], %101 {strides = array<i32>} : memref<576x64xf32, #tpu.memory_space<vmem>>, vector<64x64xf32>,
    %c2_121 = arith.constant 2 : index
    %c0_122 = arith.constant 0 : index
    %c0_123 = arith.constant 0 : index
    %103 = vector.load %arg10[%c2_121, %c0_122, %c0_123] : memref<9x16x64xbf16, #tpu.memory_space<vmem>>, vector<1x16x64xbf16>
    %104 = vector.shape_cast %103 : vector<1x16x64xbf16> to vector<16x64xbf16>
    %cst_124 = arith.constant dense<0.000000e+00> : vector<64x64xf32>
    %105 = tpu.matmul %94, %104, %cst_124 {dimension_numbers = #tpu.dot_dimension_numbers<[1], [0], [0], [1], [0, 0, 1, 1], [], []>} : vector<64x16xbf16>, vector<16x64xbf16>, vector<64x64xf32> -> vector<64x64xf32>
    %c128_125 = arith.constant 128 : index
    %c0_126 = arith.constant 0 : index
    %106 = vector.load %arg17[%c128_125, %c0_126] : memref<576x64xf32, #tpu.memory_space<vmem>>, vector<64x64xf32>
    tpu.vector_store %arg17[%c128_125, %c0_126], %105 {strides = array<i32>} : memref<576x64xf32, #tpu.memory_space<vmem>>, vector<64x64xf32>,
    %c3_127 = arith.constant 3 : index
    %c0_128 = arith.constant 0 : index
    %c0_129 = arith.constant 0 : index
    %107 = vector.load %arg10[%c3_127, %c0_128, %c0_129] : memref<9x16x64xbf16, #tpu.memory_space<vmem>>, vector<1x16x64xbf16>
    %108 = vector.shape_cast %107 : vector<1x16x64xbf16> to vector<16x64xbf16>
    %cst_130 = arith.constant dense<0.000000e+00> : vector<64x64xf32>
    %109 = tpu.matmul %94, %108, %cst_130 {dimension_numbers = #tpu.dot_dimension_numbers<[1], [0], [0], [1], [0, 0, 1, 1], [], []>} : vector<64x16xbf16>, vector<16x64xbf16>, vector<64x64xf32> -> vector<64x64xf32>
    %c192_131 = arith.constant 192 : index
    %c0_132 = arith.constant 0 : index
    %110 = vector.load %arg17[%c192_131, %c0_132] : memref<576x64xf32, #tpu.memory_space<vmem>>, vector<64x64xf32>
    tpu.vector_store %arg17[%c192_131, %c0_132], %109 {strides = array<i32>} : memref<576x64xf32, #tpu.memory_space<vmem>>, vector<64x64xf32>,
    %c4_133 = arith.constant 4 : index
    %c0_134 = arith.constant 0 : index
    %c0_135 = arith.constant 0 : index
    %111 = vector.load %arg10[%c4_133, %c0_134, %c0_135] : memref<9x16x64xbf16, #tpu.memory_space<vmem>>, vector<1x16x64xbf16>
    %112 = vector.shape_cast %111 : vector<1x16x64xbf16> to vector<16x64xbf16>
    %cst_136 = arith.constant dense<0.000000e+00> : vector<64x64xf32>
    %113 = tpu.matmul %94, %112, %cst_136 {dimension_numbers = #tpu.dot_dimension_numbers<[1], [0], [0], [1], [0, 0, 1, 1], [], []>} : vector<64x16xbf16>, vector<16x64xbf16>, vector<64x64xf32> -> vector<64x64xf32>
    %c256_137 = arith.constant 256 : index
    %c0_138 = arith.constant 0 : index
    %114 = vector.load %arg17[%c256_137, %c0_138] : memref<576x64xf32, #tpu.memory_space<vmem>>, vector<64x64xf32>
    tpu.vector_store %arg17[%c256_137, %c0_138], %113 {strides = array<i32>} : memref<576x64xf32, #tpu.memory_space<vmem>>, vector<64x64xf32>,
    %c5_139 = arith.constant 5 : index
    %c0_140 = arith.constant 0 : index
    %c0_141 = arith.constant 0 : index
    %115 = vector.load %arg10[%c5_139, %c0_140, %c0_141] : memref<9x16x64xbf16, #tpu.memory_space<vmem>>, vector<1x16x64xbf16>
    %116 = vector.shape_cast %115 : vector<1x16x64xbf16> to vector<16x64xbf16>
    %cst_142 = arith.constant dense<0.000000e+00> : vector<64x64xf32>
    %117 = tpu.matmul %94, %116, %cst_142 {dimension_numbers = #tpu.dot_dimension_numbers<[1], [0], [0], [1], [0, 0, 1, 1], [], []>} : vector<64x16xbf16>, vector<16x64xbf16>, vector<64x64xf32> -> vector<64x64xf32>
    %c320 = arith.constant 320 : index
    %c0_143 = arith.constant 0 : index
    %118 = vector.load %arg17[%c320, %c0_143] : memref<576x64xf32, #tpu.memory_space<vmem>>, vector<64x64xf32>
    tpu.vector_store %arg17[%c320, %c0_143], %117 {strides = array<i32>} : memref<576x64xf32, #tpu.memory_space<vmem>>, vector<64x64xf32>,
    %c6_144 = arith.constant 6 : index
    %c0_145 = arith.constant 0 : index
    %c0_146 = arith.constant 0 : index
    %119 = vector.load %arg10[%c6_144, %c0_145, %c0_146] : memref<9x16x64xbf16, #tpu.memory_space<vmem>>, vector<1x16x64xbf16>
    %120 = vector.shape_cast %119 : vector<1x16x64xbf16> to vector<16x64xbf16>
    %cst_147 = arith.constant dense<0.000000e+00> : vector<64x64xf32>
    %121 = tpu.matmul %94, %120, %cst_147 {dimension_numbers = #tpu.dot_dimension_numbers<[1], [0], [0], [1], [0, 0, 1, 1], [], []>} : vector<64x16xbf16>, vector<16x64xbf16>, vector<64x64xf32> -> vector<64x64xf32>
    %c384 = arith.constant 384 : index
    %c0_148 = arith.constant 0 : index
    %122 = vector.load %arg17[%c384, %c0_148] : memref<576x64xf32, #tpu.memory_space<vmem>>, vector<64x64xf32>
    tpu.vector_store %arg17[%c384, %c0_148], %121 {strides = array<i32>} : memref<576x64xf32, #tpu.memory_space<vmem>>, vector<64x64xf32>,
    %c7_149 = arith.constant 7 : index
    %c0_150 = arith.constant 0 : index
    %c0_151 = arith.constant 0 : index
    %123 = vector.load %arg10[%c7_149, %c0_150, %c0_151] : memref<9x16x64xbf16, #tpu.memory_space<vmem>>, vector<1x16x64xbf16>
    %124 = vector.shape_cast %123 : vector<1x16x64xbf16> to vector<16x64xbf16>
    %cst_152 = arith.constant dense<0.000000e+00> : vector<64x64xf32>
    %125 = tpu.matmul %94, %124, %cst_152 {dimension_numbers = #tpu.dot_dimension_numbers<[1], [0], [0], [1], [0, 0, 1, 1], [], []>} : vector<64x16xbf16>, vector<16x64xbf16>, vector<64x64xf32> -> vector<64x64xf32>
    %c448 = arith.constant 448 : index
    %c0_153 = arith.constant 0 : index
    %126 = vector.load %arg17[%c448, %c0_153] : memref<576x64xf32, #tpu.memory_space<vmem>>, vector<64x64xf32>
    tpu.vector_store %arg17[%c448, %c0_153], %125 {strides = array<i32>} : memref<576x64xf32, #tpu.memory_space<vmem>>, vector<64x64xf32>,
    %c8_154 = arith.constant 8 : index
    %c0_155 = arith.constant 0 : index
    %c0_156 = arith.constant 0 : index
    %127 = vector.load %arg10[%c8_154, %c0_155, %c0_156] : memref<9x16x64xbf16, #tpu.memory_space<vmem>>, vector<1x16x64xbf16>
    %128 = vector.shape_cast %127 : vector<1x16x64xbf16> to vector<16x64xbf16>
    %cst_157 = arith.constant dense<0.000000e+00> : vector<64x64xf32>
    %129 = tpu.matmul %94, %128, %cst_157 {dimension_numbers = #tpu.dot_dimension_numbers<[1], [0], [0], [1], [0, 0, 1, 1], [], []>} : vector<64x16xbf16>, vector<16x64xbf16>, vector<64x64xf32> -> vector<64x64xf32>
    %c512 = arith.constant 512 : index
    %c0_158 = arith.constant 0 : index
    %130 = vector.load %arg17[%c512, %c0_158] : memref<576x64xf32, #tpu.memory_space<vmem>>, vector<64x64xf32>
    tpu.vector_store %arg17[%c512, %c0_158], %129 {strides = array<i32>} : memref<576x64xf32, #tpu.memory_space<vmem>>, vector<64x64xf32>,
    %c0_159 = arith.constant 0 : index
    %c0_160 = arith.constant 0 : index
    %131 = vector.load %arg8[%c0_159, %c0_160] : memref<32x576xbf16, #tpu.memory_space<vmem>>, vector<32x576xbf16>
    %c0_161 = arith.constant 0 : index
    %c0_162 = arith.constant 0 : index
    %132 = vector.load %arg17[%c0_161, %c0_162] : memref<576x64xf32, #tpu.memory_space<vmem>>, vector<576x64xf32>
    %133 = arith.truncf %132 : vector<576x64xf32> to vector<576x64xbf16>
    %cst_163 = arith.constant dense<0.000000e+00> : vector<32x64xf32>
    %134 = tpu.matmul %131, %133, %cst_163 {dimension_numbers = #tpu.dot_dimension_numbers<[1], [0], [0], [1], [0, 0, 1, 1], [], []>} : vector<32x576xbf16>, vector<576x64xbf16>, vector<32x64xf32> -> vector<32x64xf32>
    %c0_164 = arith.constant 0 : index
    %c0_165 = arith.constant 0 : index
    %135 = vector.load %arg9[%c0_164, %c0_165] : memref<32x1xf32, #tpu.memory_space<vmem>>, vector<32x1xf32>
    %136 = vector.broadcast %135 : vector<32x1xf32> to vector<32x64xf32>
    %137 = arith.addf %134, %136 : vector<32x64xf32>
    %cst_166 = arith.constant 0.000000e+00 : f32
    %138 = vector.broadcast %cst_166 : f32 to vector<32x64xf32>
    %139 = arith.maximumf %137, %138 : vector<32x64xf32>
    %140 = arith.truncf %139 : vector<32x64xf32> to vector<32x64xbf16>
    %c0_167 = arith.constant 0 : index
    %c0_168 = arith.constant 0 : index
    %c0_169 = arith.constant 0 : index
    %141 = vector.load %arg13[%c0_167, %c0_168, %c0_169] : memref<9x64x256xbf16, #tpu.memory_space<vmem>>, vector<1x64x256xbf16>
    %142 = vector.shape_cast %141 : vector<1x64x256xbf16> to vector<64x256xbf16>
    %cst_170 = arith.constant dense<0.000000e+00> : vector<32x256xf32>
    %143 = tpu.matmul %140, %142, %cst_170 {dimension_numbers = #tpu.dot_dimension_numbers<[1], [0], [0], [1], [0, 0, 1, 1], [], []>} : vector<32x64xbf16>, vector<64x256xbf16>, vector<32x256xf32> -> vector<32x256xf32>
    %c0_171 = arith.constant 0 : index
    %c0_172 = arith.constant 0 : index
    %144 = vector.load %arg18[%c0_171, %c0_172] : memref<288x256xf32, #tpu.memory_space<vmem>>, vector<32x256xf32>
    tpu.vector_store %arg18[%c0_171, %c0_172], %143 {strides = array<i32>} : memref<288x256xf32, #tpu.memory_space<vmem>>, vector<32x256xf32>,
    %c1_173 = arith.constant 1 : index
    %c0_174 = arith.constant 0 : index
    %c0_175 = arith.constant 0 : index
    %145 = vector.load %arg13[%c1_173, %c0_174, %c0_175] : memref<9x64x256xbf16, #tpu.memory_space<vmem>>, vector<1x64x256xbf16>
    %146 = vector.shape_cast %145 : vector<1x64x256xbf16> to vector<64x256xbf16>
    %cst_176 = arith.constant dense<0.000000e+00> : vector<32x256xf32>
    %147 = tpu.matmul %140, %146, %cst_176 {dimension_numbers = #tpu.dot_dimension_numbers<[1], [0], [0], [1], [0, 0, 1, 1], [], []>} : vector<32x64xbf16>, vector<64x256xbf16>, vector<32x256xf32> -> vector<32x256xf32>
    %c32_177 = arith.constant 32 : index
    %c0_178 = arith.constant 0 : index
    %148 = vector.load %arg18[%c32_177, %c0_178] : memref<288x256xf32, #tpu.memory_space<vmem>>, vector<32x256xf32>
    tpu.vector_store %arg18[%c32_177, %c0_178], %147 {strides = array<i32>} : memref<288x256xf32, #tpu.memory_space<vmem>>, vector<32x256xf32>,
    %c2_179 = arith.constant 2 : index
    %c0_180 = arith.constant 0 : index
    %c0_181 = arith.constant 0 : index
    %149 = vector.load %arg13[%c2_179, %c0_180, %c0_181] : memref<9x64x256xbf16, #tpu.memory_space<vmem>>, vector<1x64x256xbf16>
    %150 = vector.shape_cast %149 : vector<1x64x256xbf16> to vector<64x256xbf16>
    %cst_182 = arith.constant dense<0.000000e+00> : vector<32x256xf32>
    %151 = tpu.matmul %140, %150, %cst_182 {dimension_numbers = #tpu.dot_dimension_numbers<[1], [0], [0], [1], [0, 0, 1, 1], [], []>} : vector<32x64xbf16>, vector<64x256xbf16>, vector<32x256xf32> -> vector<32x256xf32>
    %c64_183 = arith.constant 64 : index
    %c0_184 = arith.constant 0 : index
    %152 = vector.load %arg18[%c64_183, %c0_184] : memref<288x256xf32, #tpu.memory_space<vmem>>, vector<32x256xf32>
    tpu.vector_store %arg18[%c64_183, %c0_184], %151 {strides = array<i32>} : memref<288x256xf32, #tpu.memory_space<vmem>>, vector<32x256xf32>,
    %c3_185 = arith.constant 3 : index
    %c0_186 = arith.constant 0 : index
    %c0_187 = arith.constant 0 : index
    %153 = vector.load %arg13[%c3_185, %c0_186, %c0_187] : memref<9x64x256xbf16, #tpu.memory_space<vmem>>, vector<1x64x256xbf16>
    %154 = vector.shape_cast %153 : vector<1x64x256xbf16> to vector<64x256xbf16>
    %cst_188 = arith.constant dense<0.000000e+00> : vector<32x256xf32>
    %155 = tpu.matmul %140, %154, %cst_188 {dimension_numbers = #tpu.dot_dimension_numbers<[1], [0], [0], [1], [0, 0, 1, 1], [], []>} : vector<32x64xbf16>, vector<64x256xbf16>, vector<32x256xf32> -> vector<32x256xf32>
    %c96_189 = arith.constant 96 : index
    %c0_190 = arith.constant 0 : index
    %156 = vector.load %arg18[%c96_189, %c0_190] : memref<288x256xf32, #tpu.memory_space<vmem>>, vector<32x256xf32>
    tpu.vector_store %arg18[%c96_189, %c0_190], %155 {strides = array<i32>} : memref<288x256xf32, #tpu.memory_space<vmem>>, vector<32x256xf32>,
    %c4_191 = arith.constant 4 : index
    %c0_192 = arith.constant 0 : index
    %c0_193 = arith.constant 0 : index
    %157 = vector.load %arg13[%c4_191, %c0_192, %c0_193] : memref<9x64x256xbf16, #tpu.memory_space<vmem>>, vector<1x64x256xbf16>
    %158 = vector.shape_cast %157 : vector<1x64x256xbf16> to vector<64x256xbf16>
    %cst_194 = arith.constant dense<0.000000e+00> : vector<32x256xf32>
    %159 = tpu.matmul %140, %158, %cst_194 {dimension_numbers = #tpu.dot_dimension_numbers<[1], [0], [0], [1], [0, 0, 1, 1], [], []>} : vector<32x64xbf16>, vector<64x256xbf16>, vector<32x256xf32> -> vector<32x256xf32>
    %c128_195 = arith.constant 128 : index
    %c0_196 = arith.constant 0 : index
    %160 = vector.load %arg18[%c128_195, %c0_196] : memref<288x256xf32, #tpu.memory_space<vmem>>, vector<32x256xf32>
    tpu.vector_store %arg18[%c128_195, %c0_196], %159 {strides = array<i32>} : memref<288x256xf32, #tpu.memory_space<vmem>>, vector<32x256xf32>,
    %c5_197 = arith.constant 5 : index
    %c0_198 = arith.constant 0 : index
    %c0_199 = arith.constant 0 : index
    %161 = vector.load %arg13[%c5_197, %c0_198, %c0_199] : memref<9x64x256xbf16, #tpu.memory_space<vmem>>, vector<1x64x256xbf16>
    %162 = vector.shape_cast %161 : vector<1x64x256xbf16> to vector<64x256xbf16>
    %cst_200 = arith.constant dense<0.000000e+00> : vector<32x256xf32>
    %163 = tpu.matmul %140, %162, %cst_200 {dimension_numbers = #tpu.dot_dimension_numbers<[1], [0], [0], [1], [0, 0, 1, 1], [], []>} : vector<32x64xbf16>, vector<64x256xbf16>, vector<32x256xf32> -> vector<32x256xf32>
    %c160_201 = arith.constant 160 : index
    %c0_202 = arith.constant 0 : index
    %164 = vector.load %arg18[%c160_201, %c0_202] : memref<288x256xf32, #tpu.memory_space<vmem>>, vector<32x256xf32>
    tpu.vector_store %arg18[%c160_201, %c0_202], %163 {strides = array<i32>} : memref<288x256xf32, #tpu.memory_space<vmem>>, vector<32x256xf32>,
    %c6_203 = arith.constant 6 : index
    %c0_204 = arith.constant 0 : index
    %c0_205 = arith.constant 0 : index
    %165 = vector.load %arg13[%c6_203, %c0_204, %c0_205] : memref<9x64x256xbf16, #tpu.memory_space<vmem>>, vector<1x64x256xbf16>
    %166 = vector.shape_cast %165 : vector<1x64x256xbf16> to vector<64x256xbf16>
    %cst_206 = arith.constant dense<0.000000e+00> : vector<32x256xf32>
    %167 = tpu.matmul %140, %166, %cst_206 {dimension_numbers = #tpu.dot_dimension_numbers<[1], [0], [0], [1], [0, 0, 1, 1], [], []>} : vector<32x64xbf16>, vector<64x256xbf16>, vector<32x256xf32> -> vector<32x256xf32>
    %c192_207 = arith.constant 192 : index
    %c0_208 = arith.constant 0 : index
    %168 = vector.load %arg18[%c192_207, %c0_208] : memref<288x256xf32, #tpu.memory_space<vmem>>, vector<32x256xf32>
    tpu.vector_store %arg18[%c192_207, %c0_208], %167 {strides = array<i32>} : memref<288x256xf32, #tpu.memory_space<vmem>>, vector<32x256xf32>,
    %c7_209 = arith.constant 7 : index
    %c0_210 = arith.constant 0 : index
    %c0_211 = arith.constant 0 : index
    %169 = vector.load %arg13[%c7_209, %c0_210, %c0_211] : memref<9x64x256xbf16, #tpu.memory_space<vmem>>, vector<1x64x256xbf16>
    %170 = vector.shape_cast %169 : vector<1x64x256xbf16> to vector<64x256xbf16>
    %cst_212 = arith.constant dense<0.000000e+00> : vector<32x256xf32>
    %171 = tpu.matmul %140, %170, %cst_212 {dimension_numbers = #tpu.dot_dimension_numbers<[1], [0], [0], [1], [0, 0, 1, 1], [], []>} : vector<32x64xbf16>, vector<64x256xbf16>, vector<32x256xf32> -> vector<32x256xf32>
    %c224_213 = arith.constant 224 : index
    %c0_214 = arith.constant 0 : index
    %172 = vector.load %arg18[%c224_213, %c0_214] : memref<288x256xf32, #tpu.memory_space<vmem>>, vector<32x256xf32>
    tpu.vector_store %arg18[%c224_213, %c0_214], %171 {strides = array<i32>} : memref<288x256xf32, #tpu.memory_space<vmem>>, vector<32x256xf32>,
    %c8_215 = arith.constant 8 : index
    %c0_216 = arith.constant 0 : index
    %c0_217 = arith.constant 0 : index
    %173 = vector.load %arg13[%c8_215, %c0_216, %c0_217] : memref<9x64x256xbf16, #tpu.memory_space<vmem>>, vector<1x64x256xbf16>
    %174 = vector.shape_cast %173 : vector<1x64x256xbf16> to vector<64x256xbf16>
    %cst_218 = arith.constant dense<0.000000e+00> : vector<32x256xf32>
    %175 = tpu.matmul %140, %174, %cst_218 {dimension_numbers = #tpu.dot_dimension_numbers<[1], [0], [0], [1], [0, 0, 1, 1], [], []>} : vector<32x64xbf16>, vector<64x256xbf16>, vector<32x256xf32> -> vector<32x256xf32>
    %c256_219 = arith.constant 256 : index
    %c0_220 = arith.constant 0 : index
    %176 = vector.load %arg18[%c256_219, %c0_220] : memref<288x256xf32, #tpu.memory_space<vmem>>, vector<32x256xf32>
    tpu.vector_store %arg18[%c256_219, %c0_220], %175 {strides = array<i32>} : memref<288x256xf32, #tpu.memory_space<vmem>>, vector<32x256xf32>,
    %c0_221 = arith.constant 0 : index
    %c0_222 = arith.constant 0 : index
    %177 = vector.load %arg11[%c0_221, %c0_222] : memref<1x288xbf16, #tpu.memory_space<vmem>>, vector<1x288xbf16>
    %c0_223 = arith.constant 0 : index
    %c0_224 = arith.constant 0 : index
    %178 = vector.load %arg18[%c0_223, %c0_224] : memref<288x256xf32, #tpu.memory_space<vmem>>, vector<288x256xf32>
    %179 = arith.truncf %178 : vector<288x256xf32> to vector<288x256xbf16>
    %cst_225 = arith.constant dense<0.000000e+00> : vector<1x256xf32>
    %180 = tpu.matmul %177, %179, %cst_225 {dimension_numbers = #tpu.dot_dimension_numbers<[1], [0], [0], [1], [0, 0, 1, 1], [], []>} : vector<1x288xbf16>, vector<288x256xbf16>, vector<1x256xf32> -> vector<1x256xf32>
    %c0_226 = arith.constant 0 : index
    %c0_227 = arith.constant 0 : index
    %181 = vector.load %arg12[%c0_226, %c0_227] : memref<1x1xf32, #tpu.memory_space<vmem>>, vector<1x1xf32>
    %182 = vector.broadcast %181 : vector<1x1xf32> to vector<1x256xf32>
    %183 = arith.addf %180, %182 : vector<1x256xf32>
    %cst_228 = arith.constant 0.000000e+00 : f32
    %184 = vector.broadcast %cst_228 : f32 to vector<1x256xf32>
    %185 = arith.subf %184, %183 : vector<1x256xf32>
    %186 = math.exp %185 : vector<1x256xf32>
    %cst_229 = arith.constant 1.000000e+00 : f32
    %187 = vector.broadcast %cst_229 : f32 to vector<1x256xf32>
    %188 = arith.addf %187, %186 : vector<1x256xf32>
    %cst_230 = arith.constant 1.000000e+00 : f32
    %189 = vector.broadcast %cst_230 : f32 to vector<1x256xf32>
    %190 = arith.divf %189, %188 : vector<1x256xf32>
    %c0_231 = arith.constant 0 : index
    %c0_232 = arith.constant 0 : index
    %c0_233 = arith.constant 0 : index
    %191 = vector.load %arg14[%c0_231, %c0_232, %c0_233] : memref<2x1x256xf32, #tpu.memory_space<vmem>>, vector<1x1x256xf32>
    %192 = vector.shape_cast %191 : vector<1x1x256xf32> to vector<1x256xf32>
    %193 = vector.shape_cast %190 : vector<1x256xf32> to vector<1x1x256xf32>
    tpu.vector_store %arg14[%c0_231, %c0_232, %c0_233], %193 {strides = array<i32>} : memref<2x1x256xf32, #tpu.memory_space<vmem>>, vector<1x1x256xf32>,
    %c1_234 = arith.constant 1 : index
    %c0_235 = arith.constant 0 : index
    %c0_236 = arith.constant 0 : index
    %194 = vector.load %arg1[%c1_234, %c0_235, %c0_236] : memref<2x1x256xf32, #tpu.memory_space<vmem>>, vector<1x1x256xf32>
    %195 = vector.shape_cast %194 : vector<1x1x256xf32> to vector<1x256xf32>
    %196 = arith.truncf %195 : vector<1x256xf32> to vector<1x256xbf16>
    %c0_237 = arith.constant 0 : index
    %c0_238 = arith.constant 0 : index
    %c0_239 = arith.constant 0 : index
    %197 = vector.load %arg4[%c0_237, %c0_238, %c0_239] : memref<9x256x64xbf16, #tpu.memory_space<vmem>>, vector<1x256x64xbf16>
    %198 = vector.shape_cast %197 : vector<1x256x64xbf16> to vector<256x64xbf16>
    %cst_240 = arith.constant dense<0.000000e+00> : vector<1x64xf32>
    %199 = tpu.matmul %196, %198, %cst_240 {dimension_numbers = #tpu.dot_dimension_numbers<[1], [0], [0], [1], [0, 0, 1, 1], [], []>} : vector<1x256xbf16>, vector<256x64xbf16>, vector<1x64xf32> -> vector<1x64xf32>
    %c0_241 = arith.constant 0 : index
    %c0_242 = arith.constant 0 : index
    %200 = vector.load %arg15[%c0_241, %c0_242] : memref<9x64xf32, #tpu.memory_space<vmem>>, vector<1x64xf32>
    tpu.vector_store %arg15[%c0_241, %c0_242], %199 {strides = array<i32>} : memref<9x64xf32, #tpu.memory_space<vmem>>, vector<1x64xf32>,
    %c1_243 = arith.constant 1 : index
    %c0_244 = arith.constant 0 : index
    %c0_245 = arith.constant 0 : index
    %201 = vector.load %arg4[%c1_243, %c0_244, %c0_245] : memref<9x256x64xbf16, #tpu.memory_space<vmem>>, vector<1x256x64xbf16>
    %202 = vector.shape_cast %201 : vector<1x256x64xbf16> to vector<256x64xbf16>
    %cst_246 = arith.constant dense<0.000000e+00> : vector<1x64xf32>
    %203 = tpu.matmul %196, %202, %cst_246 {dimension_numbers = #tpu.dot_dimension_numbers<[1], [0], [0], [1], [0, 0, 1, 1], [], []>} : vector<1x256xbf16>, vector<256x64xbf16>, vector<1x64xf32> -> vector<1x64xf32>
    %c1_247 = arith.constant 1 : index
    %c0_248 = arith.constant 0 : index
    %204 = vector.load %arg15[%c1_247, %c0_248] : memref<9x64xf32, #tpu.memory_space<vmem>>, vector<1x64xf32>
    tpu.vector_store %arg15[%c1_247, %c0_248], %203 {strides = array<i32>} : memref<9x64xf32, #tpu.memory_space<vmem>>, vector<1x64xf32>,
    %c2_249 = arith.constant 2 : index
    %c0_250 = arith.constant 0 : index
    %c0_251 = arith.constant 0 : index
    %205 = vector.load %arg4[%c2_249, %c0_250, %c0_251] : memref<9x256x64xbf16, #tpu.memory_space<vmem>>, vector<1x256x64xbf16>
    %206 = vector.shape_cast %205 : vector<1x256x64xbf16> to vector<256x64xbf16>
    %cst_252 = arith.constant dense<0.000000e+00> : vector<1x64xf32>
    %207 = tpu.matmul %196, %206, %cst_252 {dimension_numbers = #tpu.dot_dimension_numbers<[1], [0], [0], [1], [0, 0, 1, 1], [], []>} : vector<1x256xbf16>, vector<256x64xbf16>, vector<1x64xf32> -> vector<1x64xf32>
    %c2_253 = arith.constant 2 : index
    %c0_254 = arith.constant 0 : index
    %208 = vector.load %arg15[%c2_253, %c0_254] : memref<9x64xf32, #tpu.memory_space<vmem>>, vector<1x64xf32>
    tpu.vector_store %arg15[%c2_253, %c0_254], %207 {strides = array<i32>} : memref<9x64xf32, #tpu.memory_space<vmem>>, vector<1x64xf32>,
    %c3_255 = arith.constant 3 : index
    %c0_256 = arith.constant 0 : index
    %c0_257 = arith.constant 0 : index
    %209 = vector.load %arg4[%c3_255, %c0_256, %c0_257] : memref<9x256x64xbf16, #tpu.memory_space<vmem>>, vector<1x256x64xbf16>
    %210 = vector.shape_cast %209 : vector<1x256x64xbf16> to vector<256x64xbf16>
    %cst_258 = arith.constant dense<0.000000e+00> : vector<1x64xf32>
    %211 = tpu.matmul %196, %210, %cst_258 {dimension_numbers = #tpu.dot_dimension_numbers<[1], [0], [0], [1], [0, 0, 1, 1], [], []>} : vector<1x256xbf16>, vector<256x64xbf16>, vector<1x64xf32> -> vector<1x64xf32>
    %c3_259 = arith.constant 3 : index
    %c0_260 = arith.constant 0 : index
    %212 = vector.load %arg15[%c3_259, %c0_260] : memref<9x64xf32, #tpu.memory_space<vmem>>, vector<1x64xf32>
    tpu.vector_store %arg15[%c3_259, %c0_260], %211 {strides = array<i32>} : memref<9x64xf32, #tpu.memory_space<vmem>>, vector<1x64xf32>,
    %c4_261 = arith.constant 4 : index
    %c0_262 = arith.constant 0 : index
    %c0_263 = arith.constant 0 : index
    %213 = vector.load %arg4[%c4_261, %c0_262, %c0_263] : memref<9x256x64xbf16, #tpu.memory_space<vmem>>, vector<1x256x64xbf16>
    %214 = vector.shape_cast %213 : vector<1x256x64xbf16> to vector<256x64xbf16>
    %cst_264 = arith.constant dense<0.000000e+00> : vector<1x64xf32>
    %215 = tpu.matmul %196, %214, %cst_264 {dimension_numbers = #tpu.dot_dimension_numbers<[1], [0], [0], [1], [0, 0, 1, 1], [], []>} : vector<1x256xbf16>, vector<256x64xbf16>, vector<1x64xf32> -> vector<1x64xf32>
    %c4_265 = arith.constant 4 : index
    %c0_266 = arith.constant 0 : index
    %216 = vector.load %arg15[%c4_265, %c0_266] : memref<9x64xf32, #tpu.memory_space<vmem>>, vector<1x64xf32>
    tpu.vector_store %arg15[%c4_265, %c0_266], %215 {strides = array<i32>} : memref<9x64xf32, #tpu.memory_space<vmem>>, vector<1x64xf32>,
    %c5_267 = arith.constant 5 : index
    %c0_268 = arith.constant 0 : index
    %c0_269 = arith.constant 0 : index
    %217 = vector.load %arg4[%c5_267, %c0_268, %c0_269] : memref<9x256x64xbf16, #tpu.memory_space<vmem>>, vector<1x256x64xbf16>
    %218 = vector.shape_cast %217 : vector<1x256x64xbf16> to vector<256x64xbf16>
    %cst_270 = arith.constant dense<0.000000e+00> : vector<1x64xf32>
    %219 = tpu.matmul %196, %218, %cst_270 {dimension_numbers = #tpu.dot_dimension_numbers<[1], [0], [0], [1], [0, 0, 1, 1], [], []>} : vector<1x256xbf16>, vector<256x64xbf16>, vector<1x64xf32> -> vector<1x64xf32>
    %c5_271 = arith.constant 5 : index
    %c0_272 = arith.constant 0 : index
    %220 = vector.load %arg15[%c5_271, %c0_272] : memref<9x64xf32, #tpu.memory_space<vmem>>, vector<1x64xf32>
    tpu.vector_store %arg15[%c5_271, %c0_272], %219 {strides = array<i32>} : memref<9x64xf32, #tpu.memory_space<vmem>>, vector<1x64xf32>,
    %c6_273 = arith.constant 6 : index
    %c0_274 = arith.constant 0 : index
    %c0_275 = arith.constant 0 : index
    %221 = vector.load %arg4[%c6_273, %c0_274, %c0_275] : memref<9x256x64xbf16, #tpu.memory_space<vmem>>, vector<1x256x64xbf16>
    %222 = vector.shape_cast %221 : vector<1x256x64xbf16> to vector<256x64xbf16>
    %cst_276 = arith.constant dense<0.000000e+00> : vector<1x64xf32>
    %223 = tpu.matmul %196, %222, %cst_276 {dimension_numbers = #tpu.dot_dimension_numbers<[1], [0], [0], [1], [0, 0, 1, 1], [], []>} : vector<1x256xbf16>, vector<256x64xbf16>, vector<1x64xf32> -> vector<1x64xf32>
    %c6_277 = arith.constant 6 : index
    %c0_278 = arith.constant 0 : index
    %224 = vector.load %arg15[%c6_277, %c0_278] : memref<9x64xf32, #tpu.memory_space<vmem>>, vector<1x64xf32>
    tpu.vector_store %arg15[%c6_277, %c0_278], %223 {strides = array<i32>} : memref<9x64xf32, #tpu.memory_space<vmem>>, vector<1x64xf32>,
    %c7_279 = arith.constant 7 : index
    %c0_280 = arith.constant 0 : index
    %c0_281 = arith.constant 0 : index
    %225 = vector.load %arg4[%c7_279, %c0_280, %c0_281] : memref<9x256x64xbf16, #tpu.memory_space<vmem>>, vector<1x256x64xbf16>
    %226 = vector.shape_cast %225 : vector<1x256x64xbf16> to vector<256x64xbf16>
    %cst_282 = arith.constant dense<0.000000e+00> : vector<1x64xf32>
    %227 = tpu.matmul %196, %226, %cst_282 {dimension_numbers = #tpu.dot_dimension_numbers<[1], [0], [0], [1], [0, 0, 1, 1], [], []>} : vector<1x256xbf16>, vector<256x64xbf16>, vector<1x64xf32> -> vector<1x64xf32>
    %c7_283 = arith.constant 7 : index
    %c0_284 = arith.constant 0 : index
    %228 = vector.load %arg15[%c7_283, %c0_284] : memref<9x64xf32, #tpu.memory_space<vmem>>, vector<1x64xf32>
    tpu.vector_store %arg15[%c7_283, %c0_284], %227 {strides = array<i32>} : memref<9x64xf32, #tpu.memory_space<vmem>>, vector<1x64xf32>,
    %c8_285 = arith.constant 8 : index
    %c0_286 = arith.constant 0 : index
    %c0_287 = arith.constant 0 : index
    %229 = vector.load %arg4[%c8_285, %c0_286, %c0_287] : memref<9x256x64xbf16, #tpu.memory_space<vmem>>, vector<1x256x64xbf16>
    %230 = vector.shape_cast %229 : vector<1x256x64xbf16> to vector<256x64xbf16>
    %cst_288 = arith.constant dense<0.000000e+00> : vector<1x64xf32>
    %231 = tpu.matmul %196, %230, %cst_288 {dimension_numbers = #tpu.dot_dimension_numbers<[1], [0], [0], [1], [0, 0, 1, 1], [], []>} : vector<1x256xbf16>, vector<256x64xbf16>, vector<1x64xf32> -> vector<1x64xf32>
    %c8_289 = arith.constant 8 : index
    %c0_290 = arith.constant 0 : index
    %232 = vector.load %arg15[%c8_289, %c0_290] : memref<9x64xf32, #tpu.memory_space<vmem>>, vector<1x64xf32>
    tpu.vector_store %arg15[%c8_289, %c0_290], %231 {strides = array<i32>} : memref<9x64xf32, #tpu.memory_space<vmem>>, vector<1x64xf32>,
    %c0_291 = arith.constant 0 : index
    %c0_292 = arith.constant 0 : index
    %233 = vector.load %arg2[%c0_291, %c0_292] : memref<32x9xbf16, #tpu.memory_space<vmem>>, vector<32x9xbf16>
    %c0_293 = arith.constant 0 : index
    %c0_294 = arith.constant 0 : index
    %234 = vector.load %arg15[%c0_293, %c0_294] : memref<9x64xf32, #tpu.memory_space<vmem>>, vector<9x64xf32>
    %235 = arith.truncf %234 : vector<9x64xf32> to vector<9x64xbf16>
    %cst_295 = arith.constant dense<0.000000e+00> : vector<32x64xf32>
    %236 = tpu.matmul %233, %235, %cst_295 {dimension_numbers = #tpu.dot_dimension_numbers<[1], [0], [0], [1], [0, 0, 1, 1], [], []>} : vector<32x9xbf16>, vector<9x64xbf16>, vector<32x64xf32> -> vector<32x64xf32>
    %c0_296 = arith.constant 0 : index
    %c0_297 = arith.constant 0 : index
    %237 = vector.load %arg3[%c0_296, %c0_297] : memref<32x1xf32, #tpu.memory_space<vmem>>, vector<32x1xf32>
    %238 = vector.broadcast %237 : vector<32x1xf32> to vector<32x64xf32>
    %239 = arith.addf %236, %238 : vector<32x64xf32>
    %cst_298 = arith.constant 0.000000e+00 : f32
    %240 = vector.broadcast %cst_298 : f32 to vector<32x64xf32>
    %241 = arith.maximumf %239, %240 : vector<32x64xf32>
    %242 = arith.truncf %241 : vector<32x64xf32> to vector<32x64xbf16>
    %c0_299 = arith.constant 0 : index
    %c0_300 = arith.constant 0 : index
    %c0_301 = arith.constant 0 : index
    %243 = vector.load %arg7[%c0_299, %c0_300, %c0_301] : memref<9x64x16xbf16, #tpu.memory_space<vmem>>, vector<1x64x16xbf16>
    %244 = vector.shape_cast %243 : vector<1x64x16xbf16> to vector<64x16xbf16>
    %cst_302 = arith.constant dense<0.000000e+00> : vector<32x16xf32>
    %245 = tpu.matmul %242, %244, %cst_302 {dimension_numbers = #tpu.dot_dimension_numbers<[1], [0], [0], [1], [0, 0, 1, 1], [], []>} : vector<32x64xbf16>, vector<64x16xbf16>, vector<32x16xf32> -> vector<32x16xf32>
    %c0_303 = arith.constant 0 : index
    %c0_304 = arith.constant 0 : index
    %246 = vector.load %arg16[%c0_303, %c0_304] : memref<288x16xf32, #tpu.memory_space<vmem>>, vector<32x16xf32>
    tpu.vector_store %arg16[%c0_303, %c0_304], %245 {strides = array<i32>} : memref<288x16xf32, #tpu.memory_space<vmem>>, vector<32x16xf32>,
    %c1_305 = arith.constant 1 : index
    %c0_306 = arith.constant 0 : index
    %c0_307 = arith.constant 0 : index
    %247 = vector.load %arg7[%c1_305, %c0_306, %c0_307] : memref<9x64x16xbf16, #tpu.memory_space<vmem>>, vector<1x64x16xbf16>
    %248 = vector.shape_cast %247 : vector<1x64x16xbf16> to vector<64x16xbf16>
    %cst_308 = arith.constant dense<0.000000e+00> : vector<32x16xf32>
    %249 = tpu.matmul %242, %248, %cst_308 {dimension_numbers = #tpu.dot_dimension_numbers<[1], [0], [0], [1], [0, 0, 1, 1], [], []>} : vector<32x64xbf16>, vector<64x16xbf16>, vector<32x16xf32> -> vector<32x16xf32>
    %c32_309 = arith.constant 32 : index
    %c0_310 = arith.constant 0 : index
    %250 = vector.load %arg16[%c32_309, %c0_310] : memref<288x16xf32, #tpu.memory_space<vmem>>, vector<32x16xf32>
    tpu.vector_store %arg16[%c32_309, %c0_310], %249 {strides = array<i32>} : memref<288x16xf32, #tpu.memory_space<vmem>>, vector<32x16xf32>,
    %c2_311 = arith.constant 2 : index
    %c0_312 = arith.constant 0 : index
    %c0_313 = arith.constant 0 : index
    %251 = vector.load %arg7[%c2_311, %c0_312, %c0_313] : memref<9x64x16xbf16, #tpu.memory_space<vmem>>, vector<1x64x16xbf16>
    %252 = vector.shape_cast %251 : vector<1x64x16xbf16> to vector<64x16xbf16>
    %cst_314 = arith.constant dense<0.000000e+00> : vector<32x16xf32>
    %253 = tpu.matmul %242, %252, %cst_314 {dimension_numbers = #tpu.dot_dimension_numbers<[1], [0], [0], [1], [0, 0, 1, 1], [], []>} : vector<32x64xbf16>, vector<64x16xbf16>, vector<32x16xf32> -> vector<32x16xf32>
    %c64_315 = arith.constant 64 : index
    %c0_316 = arith.constant 0 : index
    %254 = vector.load %arg16[%c64_315, %c0_316] : memref<288x16xf32, #tpu.memory_space<vmem>>, vector<32x16xf32>
    tpu.vector_store %arg16[%c64_315, %c0_316], %253 {strides = array<i32>} : memref<288x16xf32, #tpu.memory_space<vmem>>, vector<32x16xf32>,
    %c3_317 = arith.constant 3 : index
    %c0_318 = arith.constant 0 : index
    %c0_319 = arith.constant 0 : index
    %255 = vector.load %arg7[%c3_317, %c0_318, %c0_319] : memref<9x64x16xbf16, #tpu.memory_space<vmem>>, vector<1x64x16xbf16>
    %256 = vector.shape_cast %255 : vector<1x64x16xbf16> to vector<64x16xbf16>
    %cst_320 = arith.constant dense<0.000000e+00> : vector<32x16xf32>
    %257 = tpu.matmul %242, %256, %cst_320 {dimension_numbers = #tpu.dot_dimension_numbers<[1], [0], [0], [1], [0, 0, 1, 1], [], []>} : vector<32x64xbf16>, vector<64x16xbf16>, vector<32x16xf32> -> vector<32x16xf32>
    %c96_321 = arith.constant 96 : index
    %c0_322 = arith.constant 0 : index
    %258 = vector.load %arg16[%c96_321, %c0_322] : memref<288x16xf32, #tpu.memory_space<vmem>>, vector<32x16xf32>
    tpu.vector_store %arg16[%c96_321, %c0_322], %257 {strides = array<i32>} : memref<288x16xf32, #tpu.memory_space<vmem>>, vector<32x16xf32>,
    %c4_323 = arith.constant 4 : index
    %c0_324 = arith.constant 0 : index
    %c0_325 = arith.constant 0 : index
    %259 = vector.load %arg7[%c4_323, %c0_324, %c0_325] : memref<9x64x16xbf16, #tpu.memory_space<vmem>>, vector<1x64x16xbf16>
    %260 = vector.shape_cast %259 : vector<1x64x16xbf16> to vector<64x16xbf16>
    %cst_326 = arith.constant dense<0.000000e+00> : vector<32x16xf32>
    %261 = tpu.matmul %242, %260, %cst_326 {dimension_numbers = #tpu.dot_dimension_numbers<[1], [0], [0], [1], [0, 0, 1, 1], [], []>} : vector<32x64xbf16>, vector<64x16xbf16>, vector<32x16xf32> -> vector<32x16xf32>
    %c128_327 = arith.constant 128 : index
    %c0_328 = arith.constant 0 : index
    %262 = vector.load %arg16[%c128_327, %c0_328] : memref<288x16xf32, #tpu.memory_space<vmem>>, vector<32x16xf32>
    tpu.vector_store %arg16[%c128_327, %c0_328], %261 {strides = array<i32>} : memref<288x16xf32, #tpu.memory_space<vmem>>, vector<32x16xf32>,
    %c5_329 = arith.constant 5 : index
    %c0_330 = arith.constant 0 : index
    %c0_331 = arith.constant 0 : index
    %263 = vector.load %arg7[%c5_329, %c0_330, %c0_331] : memref<9x64x16xbf16, #tpu.memory_space<vmem>>, vector<1x64x16xbf16>
    %264 = vector.shape_cast %263 : vector<1x64x16xbf16> to vector<64x16xbf16>
    %cst_332 = arith.constant dense<0.000000e+00> : vector<32x16xf32>
    %265 = tpu.matmul %242, %264, %cst_332 {dimension_numbers = #tpu.dot_dimension_numbers<[1], [0], [0], [1], [0, 0, 1, 1], [], []>} : vector<32x64xbf16>, vector<64x16xbf16>, vector<32x16xf32> -> vector<32x16xf32>
    %c160_333 = arith.constant 160 : index
    %c0_334 = arith.constant 0 : index
    %266 = vector.load %arg16[%c160_333, %c0_334] : memref<288x16xf32, #tpu.memory_space<vmem>>, vector<32x16xf32>
    tpu.vector_store %arg16[%c160_333, %c0_334], %265 {strides = array<i32>} : memref<288x16xf32, #tpu.memory_space<vmem>>, vector<32x16xf32>,
    %c6_335 = arith.constant 6 : index
    %c0_336 = arith.constant 0 : index
    %c0_337 = arith.constant 0 : index
    %267 = vector.load %arg7[%c6_335, %c0_336, %c0_337] : memref<9x64x16xbf16, #tpu.memory_space<vmem>>, vector<1x64x16xbf16>
    %268 = vector.shape_cast %267 : vector<1x64x16xbf16> to vector<64x16xbf16>
    %cst_338 = arith.constant dense<0.000000e+00> : vector<32x16xf32>
    %269 = tpu.matmul %242, %268, %cst_338 {dimension_numbers = #tpu.dot_dimension_numbers<[1], [0], [0], [1], [0, 0, 1, 1], [], []>} : vector<32x64xbf16>, vector<64x16xbf16>, vector<32x16xf32> -> vector<32x16xf32>
    %c192_339 = arith.constant 192 : index
    %c0_340 = arith.constant 0 : index
    %270 = vector.load %arg16[%c192_339, %c0_340] : memref<288x16xf32, #tpu.memory_space<vmem>>, vector<32x16xf32>
    tpu.vector_store %arg16[%c192_339, %c0_340], %269 {strides = array<i32>} : memref<288x16xf32, #tpu.memory_space<vmem>>, vector<32x16xf32>,
    %c7_341 = arith.constant 7 : index
    %c0_342 = arith.constant 0 : index
    %c0_343 = arith.constant 0 : index
    %271 = vector.load %arg7[%c7_341, %c0_342, %c0_343] : memref<9x64x16xbf16, #tpu.memory_space<vmem>>, vector<1x64x16xbf16>
    %272 = vector.shape_cast %271 : vector<1x64x16xbf16> to vector<64x16xbf16>
    %cst_344 = arith.constant dense<0.000000e+00> : vector<32x16xf32>
    %273 = tpu.matmul %242, %272, %cst_344 {dimension_numbers = #tpu.dot_dimension_numbers<[1], [0], [0], [1], [0, 0, 1, 1], [], []>} : vector<32x64xbf16>, vector<64x16xbf16>, vector<32x16xf32> -> vector<32x16xf32>
    %c224_345 = arith.constant 224 : index
    %c0_346 = arith.constant 0 : index
    %274 = vector.load %arg16[%c224_345, %c0_346] : memref<288x16xf32, #tpu.memory_space<vmem>>, vector<32x16xf32>
    tpu.vector_store %arg16[%c224_345, %c0_346], %273 {strides = array<i32>} : memref<288x16xf32, #tpu.memory_space<vmem>>, vector<32x16xf32>,
    %c8_347 = arith.constant 8 : index
    %c0_348 = arith.constant 0 : index
    %c0_349 = arith.constant 0 : index
    %275 = vector.load %arg7[%c8_347, %c0_348, %c0_349] : memref<9x64x16xbf16, #tpu.memory_space<vmem>>, vector<1x64x16xbf16>
    %276 = vector.shape_cast %275 : vector<1x64x16xbf16> to vector<64x16xbf16>
    %cst_350 = arith.constant dense<0.000000e+00> : vector<32x16xf32>
    %277 = tpu.matmul %242, %276, %cst_350 {dimension_numbers = #tpu.dot_dimension_numbers<[1], [0], [0], [1], [0, 0, 1, 1], [], []>} : vector<32x64xbf16>, vector<64x16xbf16>, vector<32x16xf32> -> vector<32x16xf32>
    %c256_351 = arith.constant 256 : index
    %c0_352 = arith.constant 0 : index
    %278 = vector.load %arg16[%c256_351, %c0_352] : memref<288x16xf32, #tpu.memory_space<vmem>>, vector<32x16xf32>
    tpu.vector_store %arg16[%c256_351, %c0_352], %277 {strides = array<i32>} : memref<288x16xf32, #tpu.memory_space<vmem>>, vector<32x16xf32>,
    %c0_353 = arith.constant 0 : index
    %c0_354 = arith.constant 0 : index
    %279 = vector.load %arg5[%c0_353, %c0_354] : memref<64x288xbf16, #tpu.memory_space<vmem>>, vector<64x288xbf16>
    %c0_355 = arith.constant 0 : index
    %c0_356 = arith.constant 0 : index
    %280 = vector.load %arg16[%c0_355, %c0_356] : memref<288x16xf32, #tpu.memory_space<vmem>>, vector<288x16xf32>
    %281 = arith.truncf %280 : vector<288x16xf32> to vector<288x16xbf16>
    %cst_357 = arith.constant dense<0.000000e+00> : vector<64x16xf32>
    %282 = tpu.matmul %279, %281, %cst_357 {dimension_numbers = #tpu.dot_dimension_numbers<[1], [0], [0], [1], [0, 0, 1, 1], [], []>} : vector<64x288xbf16>, vector<288x16xbf16>, vector<64x16xf32> -> vector<64x16xf32>
    %c0_358 = arith.constant 0 : index
    %c0_359 = arith.constant 0 : index
    %283 = vector.load %arg6[%c0_358, %c0_359] : memref<64x1xf32, #tpu.memory_space<vmem>>, vector<64x1xf32>
    %284 = vector.broadcast %283 : vector<64x1xf32> to vector<64x16xf32>
    %285 = arith.addf %282, %284 : vector<64x16xf32>
    %cst_360 = arith.constant 0.000000e+00 : f32
    %286 = vector.broadcast %cst_360 : f32 to vector<64x16xf32>
    %287 = arith.maximumf %285, %286 : vector<64x16xf32>
    %288 = arith.truncf %287 : vector<64x16xf32> to vector<64x16xbf16>
    %c0_361 = arith.constant 0 : index
    %c0_362 = arith.constant 0 : index
    %c0_363 = arith.constant 0 : index
    %289 = vector.load %arg10[%c0_361, %c0_362, %c0_363] : memref<9x16x64xbf16, #tpu.memory_space<vmem>>, vector<1x16x64xbf16>
    %290 = vector.shape_cast %289 : vector<1x16x64xbf16> to vector<16x64xbf16>
    %cst_364 = arith.constant dense<0.000000e+00> : vector<64x64xf32>
    %291 = tpu.matmul %288, %290, %cst_364 {dimension_numbers = #tpu.dot_dimension_numbers<[1], [0], [0], [1], [0, 0, 1, 1], [], []>} : vector<64x16xbf16>, vector<16x64xbf16>, vector<64x64xf32> -> vector<64x64xf32>
    %c0_365 = arith.constant 0 : index
    %c0_366 = arith.constant 0 : index
    %292 = vector.load %arg17[%c0_365, %c0_366] : memref<576x64xf32, #tpu.memory_space<vmem>>, vector<64x64xf32>
    tpu.vector_store %arg17[%c0_365, %c0_366], %291 {strides = array<i32>} : memref<576x64xf32, #tpu.memory_space<vmem>>, vector<64x64xf32>,
    %c1_367 = arith.constant 1 : index
    %c0_368 = arith.constant 0 : index
    %c0_369 = arith.constant 0 : index
    %293 = vector.load %arg10[%c1_367, %c0_368, %c0_369] : memref<9x16x64xbf16, #tpu.memory_space<vmem>>, vector<1x16x64xbf16>
    %294 = vector.shape_cast %293 : vector<1x16x64xbf16> to vector<16x64xbf16>
    %cst_370 = arith.constant dense<0.000000e+00> : vector<64x64xf32>
    %295 = tpu.matmul %288, %294, %cst_370 {dimension_numbers = #tpu.dot_dimension_numbers<[1], [0], [0], [1], [0, 0, 1, 1], [], []>} : vector<64x16xbf16>, vector<16x64xbf16>, vector<64x64xf32> -> vector<64x64xf32>
    %c64_371 = arith.constant 64 : index
    %c0_372 = arith.constant 0 : index
    %296 = vector.load %arg17[%c64_371, %c0_372] : memref<576x64xf32, #tpu.memory_space<vmem>>, vector<64x64xf32>
    tpu.vector_store %arg17[%c64_371, %c0_372], %295 {strides = array<i32>} : memref<576x64xf32, #tpu.memory_space<vmem>>, vector<64x64xf32>,
    %c2_373 = arith.constant 2 : index
    %c0_374 = arith.constant 0 : index
    %c0_375 = arith.constant 0 : index
    %297 = vector.load %arg10[%c2_373, %c0_374, %c0_375] : memref<9x16x64xbf16, #tpu.memory_space<vmem>>, vector<1x16x64xbf16>
    %298 = vector.shape_cast %297 : vector<1x16x64xbf16> to vector<16x64xbf16>
    %cst_376 = arith.constant dense<0.000000e+00> : vector<64x64xf32>
    %299 = tpu.matmul %288, %298, %cst_376 {dimension_numbers = #tpu.dot_dimension_numbers<[1], [0], [0], [1], [0, 0, 1, 1], [], []>} : vector<64x16xbf16>, vector<16x64xbf16>, vector<64x64xf32> -> vector<64x64xf32>
    %c128_377 = arith.constant 128 : index
    %c0_378 = arith.constant 0 : index
    %300 = vector.load %arg17[%c128_377, %c0_378] : memref<576x64xf32, #tpu.memory_space<vmem>>, vector<64x64xf32>
    tpu.vector_store %arg17[%c128_377, %c0_378], %299 {strides = array<i32>} : memref<576x64xf32, #tpu.memory_space<vmem>>, vector<64x64xf32>,
    %c3_379 = arith.constant 3 : index
    %c0_380 = arith.constant 0 : index
    %c0_381 = arith.constant 0 : index
    %301 = vector.load %arg10[%c3_379, %c0_380, %c0_381] : memref<9x16x64xbf16, #tpu.memory_space<vmem>>, vector<1x16x64xbf16>
    %302 = vector.shape_cast %301 : vector<1x16x64xbf16> to vector<16x64xbf16>
    %cst_382 = arith.constant dense<0.000000e+00> : vector<64x64xf32>
    %303 = tpu.matmul %288, %302, %cst_382 {dimension_numbers = #tpu.dot_dimension_numbers<[1], [0], [0], [1], [0, 0, 1, 1], [], []>} : vector<64x16xbf16>, vector<16x64xbf16>, vector<64x64xf32> -> vector<64x64xf32>
    %c192_383 = arith.constant 192 : index
    %c0_384 = arith.constant 0 : index
    %304 = vector.load %arg17[%c192_383, %c0_384] : memref<576x64xf32, #tpu.memory_space<vmem>>, vector<64x64xf32>
    tpu.vector_store %arg17[%c192_383, %c0_384], %303 {strides = array<i32>} : memref<576x64xf32, #tpu.memory_space<vmem>>, vector<64x64xf32>,
    %c4_385 = arith.constant 4 : index
    %c0_386 = arith.constant 0 : index
    %c0_387 = arith.constant 0 : index
    %305 = vector.load %arg10[%c4_385, %c0_386, %c0_387] : memref<9x16x64xbf16, #tpu.memory_space<vmem>>, vector<1x16x64xbf16>
    %306 = vector.shape_cast %305 : vector<1x16x64xbf16> to vector<16x64xbf16>
    %cst_388 = arith.constant dense<0.000000e+00> : vector<64x64xf32>
    %307 = tpu.matmul %288, %306, %cst_388 {dimension_numbers = #tpu.dot_dimension_numbers<[1], [0], [0], [1], [0, 0, 1, 1], [], []>} : vector<64x16xbf16>, vector<16x64xbf16>, vector<64x64xf32> -> vector<64x64xf32>
    %c256_389 = arith.constant 256 : index
    %c0_390 = arith.constant 0 : index
    %308 = vector.load %arg17[%c256_389, %c0_390] : memref<576x64xf32, #tpu.memory_space<vmem>>, vector<64x64xf32>
    tpu.vector_store %arg17[%c256_389, %c0_390], %307 {strides = array<i32>} : memref<576x64xf32, #tpu.memory_space<vmem>>, vector<64x64xf32>,
    %c5_391 = arith.constant 5 : index
    %c0_392 = arith.constant 0 : index
    %c0_393 = arith.constant 0 : index
    %309 = vector.load %arg10[%c5_391, %c0_392, %c0_393] : memref<9x16x64xbf16, #tpu.memory_space<vmem>>, vector<1x16x64xbf16>
    %310 = vector.shape_cast %309 : vector<1x16x64xbf16> to vector<16x64xbf16>
    %cst_394 = arith.constant dense<0.000000e+00> : vector<64x64xf32>
    %311 = tpu.matmul %288, %310, %cst_394 {dimension_numbers = #tpu.dot_dimension_numbers<[1], [0], [0], [1], [0, 0, 1, 1], [], []>} : vector<64x16xbf16>, vector<16x64xbf16>, vector<64x64xf32> -> vector<64x64xf32>
    %c320_395 = arith.constant 320 : index
    %c0_396 = arith.constant 0 : index
    %312 = vector.load %arg17[%c320_395, %c0_396] : memref<576x64xf32, #tpu.memory_space<vmem>>, vector<64x64xf32>
    tpu.vector_store %arg17[%c320_395, %c0_396], %311 {strides = array<i32>} : memref<576x64xf32, #tpu.memory_space<vmem>>, vector<64x64xf32>,
    %c6_397 = arith.constant 6 : index
    %c0_398 = arith.constant 0 : index
    %c0_399 = arith.constant 0 : index
    %313 = vector.load %arg10[%c6_397, %c0_398, %c0_399] : memref<9x16x64xbf16, #tpu.memory_space<vmem>>, vector<1x16x64xbf16>
    %314 = vector.shape_cast %313 : vector<1x16x64xbf16> to vector<16x64xbf16>
    %cst_400 = arith.constant dense<0.000000e+00> : vector<64x64xf32>
    %315 = tpu.matmul %288, %314, %cst_400 {dimension_numbers = #tpu.dot_dimension_numbers<[1], [0], [0], [1], [0, 0, 1, 1], [], []>} : vector<64x16xbf16>, vector<16x64xbf16>, vector<64x64xf32> -> vector<64x64xf32>
    %c384_401 = arith.constant 384 : index
    %c0_402 = arith.constant 0 : index
    %316 = vector.load %arg17[%c384_401, %c0_402] : memref<576x64xf32, #tpu.memory_space<vmem>>, vector<64x64xf32>
    tpu.vector_store %arg17[%c384_401, %c0_402], %315 {strides = array<i32>} : memref<576x64xf32, #tpu.memory_space<vmem>>, vector<64x64xf32>,
    %c7_403 = arith.constant 7 : index
    %c0_404 = arith.constant 0 : index
    %c0_405 = arith.constant 0 : index
    %317 = vector.load %arg10[%c7_403, %c0_404, %c0_405] : memref<9x16x64xbf16, #tpu.memory_space<vmem>>, vector<1x16x64xbf16>
    %318 = vector.shape_cast %317 : vector<1x16x64xbf16> to vector<16x64xbf16>
    %cst_406 = arith.constant dense<0.000000e+00> : vector<64x64xf32>
    %319 = tpu.matmul %288, %318, %cst_406 {dimension_numbers = #tpu.dot_dimension_numbers<[1], [0], [0], [1], [0, 0, 1, 1], [], []>} : vector<64x16xbf16>, vector<16x64xbf16>, vector<64x64xf32> -> vector<64x64xf32>
    %c448_407 = arith.constant 448 : index
    %c0_408 = arith.constant 0 : index
    %320 = vector.load %arg17[%c448_407, %c0_408] : memref<576x64xf32, #tpu.memory_space<vmem>>, vector<64x64xf32>
    tpu.vector_store %arg17[%c448_407, %c0_408], %319 {strides = array<i32>} : memref<576x64xf32, #tpu.memory_space<vmem>>, vector<64x64xf32>,
    %c8_409 = arith.constant 8 : index
    %c0_410 = arith.constant 0 : index
    %c0_411 = arith.constant 0 : index
    %321 = vector.load %arg10[%c8_409, %c0_410, %c0_411] : memref<9x16x64xbf16, #tpu.memory_space<vmem>>, vector<1x16x64xbf16>
    %322 = vector.shape_cast %321 : vector<1x16x64xbf16> to vector<16x64xbf16>
    %cst_412 = arith.constant dense<0.000000e+00> : vector<64x64xf32>
    %323 = tpu.matmul %288, %322, %cst_412 {dimension_numbers = #tpu.dot_dimension_numbers<[1], [0], [0], [1], [0, 0, 1, 1], [], []>} : vector<64x16xbf16>, vector<16x64xbf16>, vector<64x64xf32> -> vector<64x64xf32>
    %c512_413 = arith.constant 512 : index
    %c0_414 = arith.constant 0 : index
    %324 = vector.load %arg17[%c512_413, %c0_414] : memref<576x64xf32, #tpu.memory_space<vmem>>, vector<64x64xf32>
    tpu.vector_store %arg17[%c512_413, %c0_414], %323 {strides = array<i32>} : memref<576x64xf32, #tpu.memory_space<vmem>>, vector<64x64xf32>,
    %c0_415 = arith.constant 0 : index
    %c0_416 = arith.constant 0 : index
    %325 = vector.load %arg8[%c0_415, %c0_416] : memref<32x576xbf16, #tpu.memory_space<vmem>>, vector<32x576xbf16>
    %c0_417 = arith.constant 0 : index
    %c0_418 = arith.constant 0 : index
    %326 = vector.load %arg17[%c0_417, %c0_418] : memref<576x64xf32, #tpu.memory_space<vmem>>, vector<576x64xf32>
    %327 = arith.truncf %326 : vector<576x64xf32> to vector<576x64xbf16>
    %cst_419 = arith.constant dense<0.000000e+00> : vector<32x64xf32>
    %328 = tpu.matmul %325, %327, %cst_419 {dimension_numbers = #tpu.dot_dimension_numbers<[1], [0], [0], [1], [0, 0, 1, 1], [], []>} : vector<32x576xbf16>, vector<576x64xbf16>, vector<32x64xf32> -> vector<32x64xf32>
    %c0_420 = arith.constant 0 : index
    %c0_421 = arith.constant 0 : index
    %329 = vector.load %arg9[%c0_420, %c0_421] : memref<32x1xf32, #tpu.memory_space<vmem>>, vector<32x1xf32>
    %330 = vector.broadcast %329 : vector<32x1xf32> to vector<32x64xf32>
    %331 = arith.addf %328, %330 : vector<32x64xf32>
    %cst_422 = arith.constant 0.000000e+00 : f32
    %332 = vector.broadcast %cst_422 : f32 to vector<32x64xf32>
    %333 = arith.maximumf %331, %332 : vector<32x64xf32>
    %334 = arith.truncf %333 : vector<32x64xf32> to vector<32x64xbf16>
    %c0_423 = arith.constant 0 : index
    %c0_424 = arith.constant 0 : index
    %c0_425 = arith.constant 0 : index
    %335 = vector.load %arg13[%c0_423, %c0_424, %c0_425] : memref<9x64x256xbf16, #tpu.memory_space<vmem>>, vector<1x64x256xbf16>
    %336 = vector.shape_cast %335 : vector<1x64x256xbf16> to vector<64x256xbf16>
    %cst_426 = arith.constant dense<0.000000e+00> : vector<32x256xf32>
    %337 = tpu.matmul %334, %336, %cst_426 {dimension_numbers = #tpu.dot_dimension_numbers<[1], [0], [0], [1], [0, 0, 1, 1], [], []>} : vector<32x64xbf16>, vector<64x256xbf16>, vector<32x256xf32> -> vector<32x256xf32>
    %c0_427 = arith.constant 0 : index
    %c0_428 = arith.constant 0 : index
    %338 = vector.load %arg18[%c0_427, %c0_428] : memref<288x256xf32, #tpu.memory_space<vmem>>, vector<32x256xf32>
    tpu.vector_store %arg18[%c0_427, %c0_428], %337 {strides = array<i32>} : memref<288x256xf32, #tpu.memory_space<vmem>>, vector<32x256xf32>,
    %c1_429 = arith.constant 1 : index
    %c0_430 = arith.constant 0 : index
    %c0_431 = arith.constant 0 : index
    %339 = vector.load %arg13[%c1_429, %c0_430, %c0_431] : memref<9x64x256xbf16, #tpu.memory_space<vmem>>, vector<1x64x256xbf16>
    %340 = vector.shape_cast %339 : vector<1x64x256xbf16> to vector<64x256xbf16>
    %cst_432 = arith.constant dense<0.000000e+00> : vector<32x256xf32>
    %341 = tpu.matmul %334, %340, %cst_432 {dimension_numbers = #tpu.dot_dimension_numbers<[1], [0], [0], [1], [0, 0, 1, 1], [], []>} : vector<32x64xbf16>, vector<64x256xbf16>, vector<32x256xf32> -> vector<32x256xf32>
    %c32_433 = arith.constant 32 : index
    %c0_434 = arith.constant 0 : index
    %342 = vector.load %arg18[%c32_433, %c0_434] : memref<288x256xf32, #tpu.memory_space<vmem>>, vector<32x256xf32>
    tpu.vector_store %arg18[%c32_433, %c0_434], %341 {strides = array<i32>} : memref<288x256xf32, #tpu.memory_space<vmem>>, vector<32x256xf32>,
    %c2_435 = arith.constant 2 : index
    %c0_436 = arith.constant 0 : index
    %c0_437 = arith.constant 0 : index
    %343 = vector.load %arg13[%c2_435, %c0_436, %c0_437] : memref<9x64x256xbf16, #tpu.memory_space<vmem>>, vector<1x64x256xbf16>
    %344 = vector.shape_cast %343 : vector<1x64x256xbf16> to vector<64x256xbf16>
    %cst_438 = arith.constant dense<0.000000e+00> : vector<32x256xf32>
    %345 = tpu.matmul %334, %344, %cst_438 {dimension_numbers = #tpu.dot_dimension_numbers<[1], [0], [0], [1], [0, 0, 1, 1], [], []>} : vector<32x64xbf16>, vector<64x256xbf16>, vector<32x256xf32> -> vector<32x256xf32>
    %c64_439 = arith.constant 64 : index
    %c0_440 = arith.constant 0 : index
    %346 = vector.load %arg18[%c64_439, %c0_440] : memref<288x256xf32, #tpu.memory_space<vmem>>, vector<32x256xf32>
    tpu.vector_store %arg18[%c64_439, %c0_440], %345 {strides = array<i32>} : memref<288x256xf32, #tpu.memory_space<vmem>>, vector<32x256xf32>,
    %c3_441 = arith.constant 3 : index
    %c0_442 = arith.constant 0 : index
    %c0_443 = arith.constant 0 : index
    %347 = vector.load %arg13[%c3_441, %c0_442, %c0_443] : memref<9x64x256xbf16, #tpu.memory_space<vmem>>, vector<1x64x256xbf16>
    %348 = vector.shape_cast %347 : vector<1x64x256xbf16> to vector<64x256xbf16>
    %cst_444 = arith.constant dense<0.000000e+00> : vector<32x256xf32>
    %349 = tpu.matmul %334, %348, %cst_444 {dimension_numbers = #tpu.dot_dimension_numbers<[1], [0], [0], [1], [0, 0, 1, 1], [], []>} : vector<32x64xbf16>, vector<64x256xbf16>, vector<32x256xf32> -> vector<32x256xf32>
    %c96_445 = arith.constant 96 : index
    %c0_446 = arith.constant 0 : index
    %350 = vector.load %arg18[%c96_445, %c0_446] : memref<288x256xf32, #tpu.memory_space<vmem>>, vector<32x256xf32>
    tpu.vector_store %arg18[%c96_445, %c0_446], %349 {strides = array<i32>} : memref<288x256xf32, #tpu.memory_space<vmem>>, vector<32x256xf32>,
    %c4_447 = arith.constant 4 : index
    %c0_448 = arith.constant 0 : index
    %c0_449 = arith.constant 0 : index
    %351 = vector.load %arg13[%c4_447, %c0_448, %c0_449] : memref<9x64x256xbf16, #tpu.memory_space<vmem>>, vector<1x64x256xbf16>
    %352 = vector.shape_cast %351 : vector<1x64x256xbf16> to vector<64x256xbf16>
    %cst_450 = arith.constant dense<0.000000e+00> : vector<32x256xf32>
    %353 = tpu.matmul %334, %352, %cst_450 {dimension_numbers = #tpu.dot_dimension_numbers<[1], [0], [0], [1], [0, 0, 1, 1], [], []>} : vector<32x64xbf16>, vector<64x256xbf16>, vector<32x256xf32> -> vector<32x256xf32>
    %c128_451 = arith.constant 128 : index
    %c0_452 = arith.constant 0 : index
    %354 = vector.load %arg18[%c128_451, %c0_452] : memref<288x256xf32, #tpu.memory_space<vmem>>, vector<32x256xf32>
    tpu.vector_store %arg18[%c128_451, %c0_452], %353 {strides = array<i32>} : memref<288x256xf32, #tpu.memory_space<vmem>>, vector<32x256xf32>,
    %c5_453 = arith.constant 5 : index
    %c0_454 = arith.constant 0 : index
    %c0_455 = arith.constant 0 : index
    %355 = vector.load %arg13[%c5_453, %c0_454, %c0_455] : memref<9x64x256xbf16, #tpu.memory_space<vmem>>, vector<1x64x256xbf16>
    %356 = vector.shape_cast %355 : vector<1x64x256xbf16> to vector<64x256xbf16>
    %cst_456 = arith.constant dense<0.000000e+00> : vector<32x256xf32>
    %357 = tpu.matmul %334, %356, %cst_456 {dimension_numbers = #tpu.dot_dimension_numbers<[1], [0], [0], [1], [0, 0, 1, 1], [], []>} : vector<32x64xbf16>, vector<64x256xbf16>, vector<32x256xf32> -> vector<32x256xf32>
    %c160_457 = arith.constant 160 : index
    %c0_458 = arith.constant 0 : index
    %358 = vector.load %arg18[%c160_457, %c0_458] : memref<288x256xf32, #tpu.memory_space<vmem>>, vector<32x256xf32>
    tpu.vector_store %arg18[%c160_457, %c0_458], %357 {strides = array<i32>} : memref<288x256xf32, #tpu.memory_space<vmem>>, vector<32x256xf32>,
    %c6_459 = arith.constant 6 : index
    %c0_460 = arith.constant 0 : index
    %c0_461 = arith.constant 0 : index
    %359 = vector.load %arg13[%c6_459, %c0_460, %c0_461] : memref<9x64x256xbf16, #tpu.memory_space<vmem>>, vector<1x64x256xbf16>
    %360 = vector.shape_cast %359 : vector<1x64x256xbf16> to vector<64x256xbf16>
    %cst_462 = arith.constant dense<0.000000e+00> : vector<32x256xf32>
    %361 = tpu.matmul %334, %360, %cst_462 {dimension_numbers = #tpu.dot_dimension_numbers<[1], [0], [0], [1], [0, 0, 1, 1], [], []>} : vector<32x64xbf16>, vector<64x256xbf16>, vector<32x256xf32> -> vector<32x256xf32>
    %c192_463 = arith.constant 192 : index
    %c0_464 = arith.constant 0 : index
    %362 = vector.load %arg18[%c192_463, %c0_464] : memref<288x256xf32, #tpu.memory_space<vmem>>, vector<32x256xf32>
    tpu.vector_store %arg18[%c192_463, %c0_464], %361 {strides = array<i32>} : memref<288x256xf32, #tpu.memory_space<vmem>>, vector<32x256xf32>,
    %c7_465 = arith.constant 7 : index
    %c0_466 = arith.constant 0 : index
    %c0_467 = arith.constant 0 : index
    %363 = vector.load %arg13[%c7_465, %c0_466, %c0_467] : memref<9x64x256xbf16, #tpu.memory_space<vmem>>, vector<1x64x256xbf16>
    %364 = vector.shape_cast %363 : vector<1x64x256xbf16> to vector<64x256xbf16>
    %cst_468 = arith.constant dense<0.000000e+00> : vector<32x256xf32>
    %365 = tpu.matmul %334, %364, %cst_468 {dimension_numbers = #tpu.dot_dimension_numbers<[1], [0], [0], [1], [0, 0, 1, 1], [], []>} : vector<32x64xbf16>, vector<64x256xbf16>, vector<32x256xf32> -> vector<32x256xf32>
    %c224_469 = arith.constant 224 : index
    %c0_470 = arith.constant 0 : index
    %366 = vector.load %arg18[%c224_469, %c0_470] : memref<288x256xf32, #tpu.memory_space<vmem>>, vector<32x256xf32>
    tpu.vector_store %arg18[%c224_469, %c0_470], %365 {strides = array<i32>} : memref<288x256xf32, #tpu.memory_space<vmem>>, vector<32x256xf32>,
    %c8_471 = arith.constant 8 : index
    %c0_472 = arith.constant 0 : index
    %c0_473 = arith.constant 0 : index
    %367 = vector.load %arg13[%c8_471, %c0_472, %c0_473] : memref<9x64x256xbf16, #tpu.memory_space<vmem>>, vector<1x64x256xbf16>
    %368 = vector.shape_cast %367 : vector<1x64x256xbf16> to vector<64x256xbf16>
    %cst_474 = arith.constant dense<0.000000e+00> : vector<32x256xf32>
    %369 = tpu.matmul %334, %368, %cst_474 {dimension_numbers = #tpu.dot_dimension_numbers<[1], [0], [0], [1], [0, 0, 1, 1], [], []>} : vector<32x64xbf16>, vector<64x256xbf16>, vector<32x256xf32> -> vector<32x256xf32>
    %c256_475 = arith.constant 256 : index
    %c0_476 = arith.constant 0 : index
    %370 = vector.load %arg18[%c256_475, %c0_476] : memref<288x256xf32, #tpu.memory_space<vmem>>, vector<32x256xf32>
    tpu.vector_store %arg18[%c256_475, %c0_476], %369 {strides = array<i32>} : memref<288x256xf32, #tpu.memory_space<vmem>>, vector<32x256xf32>,
    %c0_477 = arith.constant 0 : index
    %c0_478 = arith.constant 0 : index
    %371 = vector.load %arg11[%c0_477, %c0_478] : memref<1x288xbf16, #tpu.memory_space<vmem>>, vector<1x288xbf16>
    %c0_479 = arith.constant 0 : index
    %c0_480 = arith.constant 0 : index
    %372 = vector.load %arg18[%c0_479, %c0_480] : memref<288x256xf32, #tpu.memory_space<vmem>>, vector<288x256xf32>
    %373 = arith.truncf %372 : vector<288x256xf32> to vector<288x256xbf16>
    %cst_481 = arith.constant dense<0.000000e+00> : vector<1x256xf32>
    %374 = tpu.matmul %371, %373, %cst_481 {dimension_numbers = #tpu.dot_dimension_numbers<[1], [0], [0], [1], [0, 0, 1, 1], [], []>} : vector<1x288xbf16>, vector<288x256xbf16>, vector<1x256xf32> -> vector<1x256xf32>
    %c0_482 = arith.constant 0 : index
    %c0_483 = arith.constant 0 : index
    %375 = vector.load %arg12[%c0_482, %c0_483] : memref<1x1xf32, #tpu.memory_space<vmem>>, vector<1x1xf32>
    %376 = vector.broadcast %375 : vector<1x1xf32> to vector<1x256xf32>
    %377 = arith.addf %374, %376 : vector<1x256xf32>
    %cst_484 = arith.constant 0.000000e+00 : f32
    %378 = vector.broadcast %cst_484 : f32 to vector<1x256xf32>
    %379 = arith.subf %378, %377 : vector<1x256xf32>
    %380 = math.exp %379 : vector<1x256xf32>
    %cst_485 = arith.constant 1.000000e+00 : f32
    %381 = vector.broadcast %cst_485 : f32 to vector<1x256xf32>
    %382 = arith.addf %381, %380 : vector<1x256xf32>
    %cst_486 = arith.constant 1.000000e+00 : f32
    %383 = vector.broadcast %cst_486 : f32 to vector<1x256xf32>
    %384 = arith.divf %383, %382 : vector<1x256xf32>
    %c1_487 = arith.constant 1 : index
    %c0_488 = arith.constant 0 : index
    %c0_489 = arith.constant 0 : index
    %385 = vector.load %arg14[%c1_487, %c0_488, %c0_489] : memref<2x1x256xf32, #tpu.memory_space<vmem>>, vector<1x1x256xf32>
    %386 = vector.shape_cast %385 : vector<1x1x256xf32> to vector<1x256xf32>
    %387 = vector.shape_cast %384 : vector<1x256xf32> to vector<1x1x256xf32>
    tpu.vector_store %arg14[%c1_487, %c0_488, %c0_489], %387 {strides = array<i32>} : memref<2x1x256xf32, #tpu.memory_space<vmem>>, vector<1x1x256xf32>,
    return
  }
  func.func @transform_0(%arg0: i32) -> (i32, i32, i32) {
    %c0_i32 = arith.constant 0 : i32
    %c0_i32_0 = arith.constant 0 : i32
    %c0_i32_1 = arith.constant 0 : i32
    %c0_i32_2 = arith.constant 0 : i32
    return %c0_i32, %c0_i32_0, %c0_i32_1 : i32, i32, i32
  }
  func.func @transform_1(%arg0: i32) -> (i32, i32) {
    %c0_i32 = arith.constant 0 : i32
    %c0_i32_0 = arith.constant 0 : i32
    %c0_i32_1 = arith.constant 0 : i32
    return %c0_i32, %c0_i32_0 : i32, i32
  }
  func.func @transform_2(%arg0: i32) -> (i32, i32) {
    %c0_i32 = arith.constant 0 : i32
    %c0_i32_0 = arith.constant 0 : i32
    %c0_i32_1 = arith.constant 0 : i32
    return %c0_i32, %c0_i32_0 : i32, i32
  }
  func.func @transform_3(%arg0: i32) -> (i32, i32, i32) {
    %c0_i32 = arith.constant 0 : i32
    %c0_i32_0 = arith.constant 0 : i32
    %c0_i32_1 = arith.constant 0 : i32
    %c0_i32_2 = arith.constant 0 : i32
    return %c0_i32, %c0_i32_0, %c0_i32_1 : i32, i32, i32
  }
  func.func @transform_4(%arg0: i32) -> (i32, i32) {
    %c0_i32 = arith.constant 0 : i32
    %c0_i32_0 = arith.constant 0 : i32
    %c0_i32_1 = arith.constant 0 : i32
    return %c0_i32, %c0_i32_0 : i32, i32
  }
  func.func @transform_5(%arg0: i32) -> (i32, i32) {
    %c0_i32 = arith.constant 0 : i32
    %c0_i32_0 = arith.constant 0 : i32
    %c0_i32_1 = arith.constant 0 : i32
    return %c0_i32, %c0_i32_0 : i32, i32
  }
  func.func @transform_6(%arg0: i32) -> (i32, i32, i32) {
    %c0_i32 = arith.constant 0 : i32
    %c0_i32_0 = arith.constant 0 : i32
    %c0_i32_1 = arith.constant 0 : i32
    %c0_i32_2 = arith.constant 0 : i32
    return %c0_i32, %c0_i32_0, %c0_i32_1 : i32, i32, i32
  }
  func.func @transform_7(%arg0: i32) -> (i32, i32) {
    %c0_i32 = arith.constant 0 : i32
    %c0_i32_0 = arith.constant 0 : i32
    %c0_i32_1 = arith.constant 0 : i32
    return %c0_i32, %c0_i32_0 : i32, i32
  }
  func.func @transform_8(%arg0: i32) -> (i32, i32) {
    %c0_i32 = arith.constant 0 : i32
    %c0_i32_0 = arith.constant 0 : i32
    %c0_i32_1 = arith.constant 0 : i32
    return %c0_i32, %c0_i32_0 : i32, i32
  }
  func.func @transform_9(%arg0: i32) -> (i32, i32, i32) {
    %c0_i32 = arith.constant 0 : i32
    %c0_i32_0 = arith.constant 0 : i32
    %c0_i32_1 = arith.constant 0 : i32
    %c0_i32_2 = arith.constant 0 : i32
    return %c0_i32, %c0_i32_0, %c0_i32_1 : i32, i32, i32
  }
  func.func @transform_10(%arg0: i32) -> (i32, i32) {
    %c0_i32 = arith.constant 0 : i32
    %c0_i32_0 = arith.constant 0 : i32
    %c0_i32_1 = arith.constant 0 : i32
    return %c0_i32, %c0_i32_0 : i32, i32
  }
  func.func @transform_11(%arg0: i32) -> (i32, i32) {
    %c0_i32 = arith.constant 0 : i32
    %c0_i32_0 = arith.constant 0 : i32
    %c0_i32_1 = arith.constant 0 : i32
    return %c0_i32, %c0_i32_0 : i32, i32
  }
  func.func @transform_12(%arg0: i32) -> (i32, i32, i32) {
    %c0_i32 = arith.constant 0 : i32
    %c0_i32_0 = arith.constant 0 : i32
    %c0_i32_1 = arith.constant 0 : i32
    %c0_i32_2 = arith.constant 0 : i32
    return %c0_i32, %c0_i32_0, %c0_i32_1 : i32, i32, i32
  }
  func.func @transform_13(%arg0: i32) -> (i32, i32, i32) {
    %c0_i32 = arith.constant 0 : i32
    %c0_i32_0 = arith.constant 0 : i32
    %c0_i32_1 = arith.constant 0 : i32
    %c0_i32_2 = arith.constant 0 : i32
    return %c0_i32, %c0_i32_0, %c0_i32_1 : i32, i32, i32
  }
}

</mosaic_0001>

<llo_original>
// kernel: forward.1
$region0: #{forward.1}
  #allocation0 [shape = 'u32[]', space=smem, size = 0x4, offset = 0x4, fixed_abs, tag = 'smem constant byte address 0x4 - core index']
  #allocation1 [shape = 'u32[144,128]{1,0:T(1,128)}', space=vmem, size = 0x12000, scoped, tag = 'internal scratch']
  #allocation2 [shape = 'f32[9,64]{1,0:T(8,128)}', space=vmem, size = 0x2000, scoped, tag = 'scratch operand']
  #allocation3 [shape = 'f32[288,16]{1,0:T(8,128)}', space=vmem, size = 0x24000, scoped, tag = 'scratch operand']
  #allocation4 [shape = 'f32[576,64]{1,0:T(8,128)}', space=vmem, size = 0x48000, scoped, tag = 'scratch operand']
  #allocation5 [shape = 'f32[288,256]{1,0:T(8,128)}', space=vmem, size = 0x48000, scoped, tag = 'scratch operand']
  #allocation6 [shape = 'f32[1,1]{1,0:T(1,128)S(1)}', space=vmem, size = 0x200, scoped, tag = 'scoped memory for forward.1']
  %s0 = inlined_call_operand.vmem [shape: f32[2,1,256], index: 0, kind: input, shape index: {}]
  %s1 = inlined_call_operand.vmem [shape: bf16[32,9], index: 1, kind: input, shape index: {}]
  %s2 = inlined_call_operand.vmem [shape: f32[32,1], index: 2, kind: input, shape index: {}]
  %s3 = inlined_call_operand.vmem [shape: bf16[9,256,64], index: 3, kind: input, shape index: {}]
  %s4 = inlined_call_operand.vmem [shape: bf16[64,288], index: 4, kind: input, shape index: {}]
  %s5 = inlined_call_operand.vmem [shape: f32[64,1], index: 5, kind: input, shape index: {}]
  %s6 = inlined_call_operand.vmem [shape: bf16[9,64,16], index: 6, kind: input, shape index: {}]
  %s7 = inlined_call_operand.vmem [shape: bf16[32,576], index: 7, kind: input, shape index: {}]
  %s8 = inlined_call_operand.vmem [shape: f32[32,1], index: 8, kind: input, shape index: {}]
  %s9 = inlined_call_operand.vmem [shape: bf16[9,16,64], index: 9, kind: input, shape index: {}]
  %s10 = inlined_call_operand.vmem [shape: bf16[1,288], index: 10, kind: input, shape index: {}]
  %s11 = inlined_call_operand.<no memory space> [shape: f32[1,1], index: 11, kind: input, shape index: {}]
  %s12 = inlined_call_operand.vmem [shape: bf16[9,64,256], index: 12, kind: input, shape index: {}]
  %s13 = inlined_call_operand.vmem [shape: f32[2,1,256], index: 13, kind: output, shape index: {}]
  %s14 = sld [smem:[#allocation0]]
  $region62: #{forward.1} parent=0
    _
  %s16 = ssub.s32 1, %s14
  %s17 = scalar_select 0, %s16, %s14
  %v18 = vstv %s11
  %19 = vst [vmem:[#allocation6] sm:$0x1] %v18
  // Predicated region
  $region2: #{forward.1} parent=0 // pred_check
    _
  $region3: #{forward.1} parent=0 // pred_check_branch
    %21 = sbr.rel (0) target = $region5
  $region4: #{forward.1} parent=0 // pred_region
    _
  $region5: #{forward.1} parent=0 // pred_fallthru
    _
  // Predicated region
  $region6: #{forward.1} parent=0 // pred_check
    _
  $region7: #{forward.1} parent=0 // pred_check_branch
    %23 = sbr.rel (0) target = $region9
  $region8: #{forward.1} parent=0 // pred_region
    _
  $region9: #{forward.1} parent=0 // pred_fallthru
    _
  // Predicated region
  $region10: #{forward.1} parent=0 // pred_check
    _
  $region11: #{forward.1} parent=0 // pred_check_branch
    %25 = sbr.rel (0) target = $region13
  $region12: #{forward.1} parent=0 // pred_region
    _
  $region13: #{forward.1} parent=0 // pred_fallthru
    _
  // Predicated region
  $region14: #{forward.1} parent=0 // pred_check
    _
  $region15: #{forward.1} parent=0 // pred_check_branch
    %27 = sbr.rel (0) target = $region17
  $region16: #{forward.1} parent=0 // pred_region
    _
  $region17: #{forward.1} parent=0 // pred_fallthru
    _
  // Predicated region
  $region18: #{forward.1} parent=0 // pred_check
    _
  $region19: #{forward.1} parent=0 // pred_check_branch
    %29 = sbr.rel (0) target = $region21
  $region20: #{forward.1} parent=0 // pred_region
    _
  $region21: #{forward.1} parent=0 // pred_fallthru
    _
  // Predicated region
  $region22: #{forward.1} parent=0 // pred_check
    _
  $region23: #{forward.1} parent=0 // pred_check_branch
    %31 = sbr.rel (0) target = $region25
  $region24: #{forward.1} parent=0 // pred_region
    _
  $region25: #{forward.1} parent=0 // pred_fallthru
    _
  // Predicated region
  $region26: #{forward.1} parent=0 // pred_check
    _
  $region27: #{forward.1} parent=0 // pred_check_branch
    %33 = sbr.rel (0) target = $region29
  $region28: #{forward.1} parent=0 // pred_region
    _
  $region29: #{forward.1} parent=0 // pred_fallthru
    _
  // Predicated region
  $region30: #{forward.1} parent=0 // pred_check
    _
  $region31: #{forward.1} parent=0 // pred_check_branch
    %35 = sbr.rel (0) target = $region33
  $region32: #{forward.1} parent=0 // pred_region
    _
  $region33: #{forward.1} parent=0 // pred_fallthru
    _
  // Predicated region
  $region34: #{forward.1} parent=0 // pred_check
    _
  $region35: #{forward.1} parent=0 // pred_check_branch
    %37 = sbr.rel (0) target = $region37
  $region36: #{forward.1} parent=0 // pred_region
    _
  $region37: #{forward.1} parent=0 // pred_fallthru
    _
  // Predicated region
  $region38: #{forward.1} parent=0 // pred_check
    _
  $region39: #{forward.1} parent=0 // pred_check_branch
    %39 = sbr.rel (0) target = $region41
  $region40: #{forward.1} parent=0 // pred_region
    _
  $region41: #{forward.1} parent=0 // pred_fallthru
    _
  // Predicated region
  $region42: #{forward.1} parent=0 // pred_check
    _
  $region43: #{forward.1} parent=0 // pred_check_branch
    %41 = sbr.rel (0) target = $region45
  $region44: #{forward.1} parent=0 // pred_region
    _
  $region45: #{forward.1} parent=0 // pred_fallthru
    _
  // Predicated region
  $region46: #{forward.1} parent=0 // pred_check
    _
  $region47: #{forward.1} parent=0 // pred_check_branch
    %43 = sbr.rel (0) target = $region49
  $region48: #{forward.1} parent=0 // pred_region
    _
  $region49: #{forward.1} parent=0 // pred_fallthru
    _
  // Predicated region
  $region50: #{forward.1} parent=0 // pred_check
    _
  $region51: #{forward.1} parent=0 // pred_check_branch
    %45 = sbr.rel (0) target = $region53
  $region52: #{forward.1} parent=0 // pred_region
    _
  $region53: #{forward.1} parent=0 // pred_fallthru
    _
  %v47 = vld [vmem:[%s0] sm:$0x3]
  %v49 = vlaneseq
  %v50 = vshrl.u32 %v49, 7
  %v51 = vsub.s32 0, %v50
  %v52 = vrot.slane %v47, %v51
  %v53 = vlaneseq
  %v54 = vshrl.u32 %v53, 7
  %v55 = vsub.s32 1, %v54
  %v56 = vrot.slane %v47, %v55
  %v59 = vpack.c.bf16 %v52, %v52
  %v60 = vpack.c.bf16 %v56, %v56
  %v61 = vld [vmem:[%s3] sm:$0xf]
  %v62 = vld [vmem:[%s3 + $0x4] sm:$0xf]
  %v63 = vld [vmem:[%s3 + $0x8] sm:$0xf]
  %v64 = vld [vmem:[%s3 + $0xc] sm:$0xf]
  %v65 = vld [vmem:[%s3 + $0x10] sm:$0xf]
  %v66 = vld [vmem:[%s3 + $0x14] sm:$0xf]
  %v67 = vld [vmem:[%s3 + $0x18] sm:$0xf]
  %v68 = vld [vmem:[%s3 + $0x1c] sm:$0xf]
  %v69 = vld [vmem:[%s3 + $0x20] sm:$0xf]
  %v70 = vld [vmem:[%s3 + $0x24] sm:$0xf]
  %v71 = vld [vmem:[%s3 + $0x28] sm:$0xf]
  %v72 = vld [vmem:[%s3 + $0x2c] sm:$0xf]
  %v73 = vld [vmem:[%s3 + $0x30] sm:$0xf]
  %v74 = vld [vmem:[%s3 + $0x34] sm:$0xf]
  %v75 = vld [vmem:[%s3 + $0x38] sm:$0xf]
  %v76 = vld [vmem:[%s3 + $0x3c] sm:$0xf]
  %v77 = vld [vmem:[%s3 + $0x40] sm:$0xf]
  %v78 = vld [vmem:[%s3 + $0x44] sm:$0xf]
  %v79 = vld [vmem:[%s3 + $0x48] sm:$0xf]
  %v80 = vld [vmem:[%s3 + $0x4c] sm:$0xf]
  %v81 = vld [vmem:[%s3 + $0x50] sm:$0xf]
  %v82 = vld [vmem:[%s3 + $0x54] sm:$0xf]
  %v83 = vld [vmem:[%s3 + $0x58] sm:$0xf]
  %v84 = vld [vmem:[%s3 + $0x5c] sm:$0xf]
  %v85 = vld [vmem:[%s3 + $0x60] sm:$0xf]
  %v86 = vld [vmem:[%s3 + $0x64] sm:$0xf]
  %v87 = vld [vmem:[%s3 + $0x68] sm:$0xf]
  %v88 = vld [vmem:[%s3 + $0x6c] sm:$0xf]
  %v89 = vld [vmem:[%s3 + $0x70] sm:$0xf]
  %v90 = vld [vmem:[%s3 + $0x74] sm:$0xf]
  %v91 = vld [vmem:[%s3 + $0x78] sm:$0xf]
  %v92 = vld [vmem:[%s3 + $0x7c] sm:$0xf]
  %v125 = vunpack.c.l.b16 %v61
  %v126 = vunpack.c.l.b16 %v62
  %v127 = vunpack.c.l.b16 %v63
  %v128 = vunpack.c.l.b16 %v64
  %v129 = vunpack.c.l.b16 %v65
  %v130 = vunpack.c.l.b16 %v66
  %v131 = vunpack.c.l.b16 %v67
  %v132 = vunpack.c.l.b16 %v68
  %v133 = vunpack.c.l.b16 %v69
  %v134 = vunpack.c.l.b16 %v70
  %v135 = vunpack.c.l.b16 %v71
  %v136 = vunpack.c.l.b16 %v72
  %v137 = vunpack.c.l.b16 %v73
  %v138 = vunpack.c.l.b16 %v74
  %v139 = vunpack.c.l.b16 %v75
  %v140 = vunpack.c.l.b16 %v76
  %v141 = vunpack.c.l.b16 %v77
  %v142 = vunpack.c.l.b16 %v78
  %v143 = vunpack.c.l.b16 %v79
  %v144 = vunpack.c.l.b16 %v80
  %v145 = vunpack.c.l.b16 %v81
  %v146 = vunpack.c.l.b16 %v82
  %v147 = vunpack.c.l.b16 %v83
  %v148 = vunpack.c.l.b16 %v84
  %v149 = vunpack.c.l.b16 %v85
  %v150 = vunpack.c.l.b16 %v86
  %v151 = vunpack.c.l.b16 %v87
  %v152 = vunpack.c.l.b16 %v88
  %v153 = vunpack.c.l.b16 %v89
  %v154 = vunpack.c.l.b16 %v90
  %v155 = vunpack.c.l.b16 %v91
  %v156 = vunpack.c.l.b16 %v92
  %v157 = vpack.c.b16 %v126, %v125
  %v158 = vpack.c.b16 %v128, %v127
  %v159 = vpack.c.b16 %v130, %v129
  %v160 = vpack.c.b16 %v132, %v131
  %v161 = vpack.c.b16 %v134, %v133
  %v162 = vpack.c.b16 %v136, %v135
  %v163 = vpack.c.b16 %v138, %v137
  %v164 = vpack.c.b16 %v140, %v139
  %v165 = vpack.c.b16 %v142, %v141
  %v166 = vpack.c.b16 %v144, %v143
  %v167 = vpack.c.b16 %v146, %v145
  %v168 = vpack.c.b16 %v148, %v147
  %v169 = vpack.c.b16 %v150, %v149
  %v170 = vpack.c.b16 %v152, %v151
  %v171 = vpack.c.b16 %v154, %v153
  %v172 = vpack.c.b16 %v156, %v155
  %189 = vmatprep.subr.bf16.mxu0 0
  %190 = vmatpush1.bf16.msra.mxu0 %v157
  %191 = vmatprep.subr.bf16.mxu0 0
  %192 = vmatpush1.bf16.msra.mxu0 %v158
  %193 = vmatprep.subr.bf16.mxu0 0
  %194 = vmatpush1.bf16.msra.mxu0 %v159
  %195 = vmatprep.subr.bf16.mxu0 0
  %196 = vmatpush1.bf16.msra.mxu0 %v160
  %197 = vmatprep.subr.bf16.mxu0 0
  %198 = vmatpush1.bf16.msra.mxu0 %v161
  %199 = vmatprep.subr.bf16.mxu0 0
  %200 = vmatpush1.bf16.msra.mxu0 %v162
  %201 = vmatprep.subr.bf16.mxu0 0
  %202 = vmatpush1.bf16.msra.mxu0 %v163
  %203 = vmatprep.subr.bf16.mxu0 0
  %204 = vmatpush1.bf16.msra.mxu0 %v164
  %205 = vmatprep.subr.bf16.mxu0 0
  %206 = vmatpush1.bf16.msra.mxu0 %v165
  %207 = vmatprep.subr.bf16.mxu0 0
  %208 = vmatpush1.bf16.msra.mxu0 %v166
  %209 = vmatprep.subr.bf16.mxu0 0
  %210 = vmatpush1.bf16.msra.mxu0 %v167
  %211 = vmatprep.subr.bf16.mxu0 0
  %212 = vmatpush1.bf16.msra.mxu0 %v168
  %213 = vmatprep.subr.bf16.mxu0 0
  %214 = vmatpush1.bf16.msra.mxu0 %v169
  %215 = vmatprep.subr.bf16.mxu0 0
  %216 = vmatpush1.bf16.msra.mxu0 %v170
  %217 = vmatprep.subr.bf16.mxu0 0
  %218 = vmatpush1.bf16.msra.mxu0 %v171
  %219 = vmatprep.subr.bf16.mxu0 0
  %220 = vmatpush1.bf16.msra.mxu0 %v172
  %221 = vmatprep.mubr.bf16.mxu0 %v60
  %222 = vmatmul.mubr.bf16.gmra.mrb[0].mxu0 %v59
  %v223 = vpop.f32.mrb[0].mxu0
  %v224 = vadd.f32 0.0, %v223
  %v225 = vpop.f32.mrb[0].mxu0
  %v226 = vpop.f32.mrb[0].mxu0
  %v227 = vpop.f32.mrb[0].mxu0
  %228 = vdwg.mxu0
  %vm229 = vcmask 516096
  %230 = vst.msk [vmem:[#allocation2] sm:$0x1] %vm229, %v224
  %s231 = scalar_lea.vmem %s3, 128
  %v232 = vld [vmem:[%s231] sm:$0xf]
  %v233 = vld [vmem:[%s231 + $0x4] sm:$0xf]
  %v234 = vld [vmem:[%s231 + $0x8] sm:$0xf]
  %v235 = vld [vmem:[%s231 + $0xc] sm:$0xf]
  %v236 = vld [vmem:[%s231 + $0x10] sm:$0xf]
  %v237 = vld [vmem:[%s231 + $0x14] sm:$0xf]
  %v238 = vld [vmem:[%s231 + $0x18] sm:$0xf]
  %v239 = vld [vmem:[%s231 + $0x1c] sm:$0xf]
  %v240 = vld [vmem:[%s231 + $0x20] sm:$0xf]
  %v241 = vld [vmem:[%s231 + $0x24] sm:$0xf]
  %v242 = vld [vmem:[%s231 + $0x28] sm:$0xf]
  %v243 = vld [vmem:[%s231 + $0x2c] sm:$0xf]
  %v244 = vld [vmem:[%s231 + $0x30] sm:$0xf]
  %v245 = vld [vmem:[%s231 + $0x34] sm:$0xf]
  %v246 = vld [vmem:[%s231 + $0x38] sm:$0xf]
  %v247 = vld [vmem:[%s231 + $0x3c] sm:$0xf]
  %v248 = vld [vmem:[%s231 + $0x40] sm:$0xf]
  %v249 = vld [vmem:[%s231 + $0x44] sm:$0xf]
  %v250 = vld [vmem:[%s231 + $0x48] sm:$0xf]
  %v251 = vld [vmem:[%s231 + $0x4c] sm:$0xf]
  %v252 = vld [vmem:[%s231 + $0x50] sm:$0xf]
  %v253 = vld [vmem:[%s231 + $0x54] sm:$0xf]
  %v254 = vld [vmem:[%s231 + $0x58] sm:$0xf]
  %v255 = vld [vmem:[%s231 + $0x5c] sm:$0xf]
  %v256 = vld [vmem:[%s231 + $0x60] sm:$0xf]
  %v257 = vld [vmem:[%s231 + $0x64] sm:$0xf]
  %v258 = vld [vmem:[%s231 + $0x68] sm:$0xf]
  %v259 = vld [vmem:[%s231 + $0x6c] sm:$0xf]
  %v260 = vld [vmem:[%s231 + $0x70] sm:$0xf]
  %v261 = vld [vmem:[%s231 + $0x74] sm:$0xf]
  %v262 = vld [vmem:[%s231 + $0x78] sm:$0xf]
  %v263 = vld [vmem:[%s231 + $0x7c] sm:$0xf]
  %v296 = vunpack.c.l.b16 %v232
  %v297 = vunpack.c.l.b16 %v233
  %v298 = vunpack.c.l.b16 %v234
  %v299 = vunpack.c.l.b16 %v235
  %v300 = vunpack.c.l.b16 %v236
  %v301 = vunpack.c.l.b16 %v237
  %v302 = vunpack.c.l.b16 %v238
  %v303 = vunpack.c.l.b16 %v239
  %v304 = vunpack.c.l.b16 %v240
  %v305 = vunpack.c.l.b16 %v241
  %v306 = vunpack.c.l.b16 %v242
  %v307 = vunpack.c.l.b16 %v243
  %v308 = vunpack.c.l.b16 %v244
  %v309 = vunpack.c.l.b16 %v245
  %v310 = vunpack.c.l.b16 %v246
  %v311 = vunpack.c.l.b16 %v247
  %v312 = vunpack.c.l.b16 %v248
  %v313 = vunpack.c.l.b16 %v249
  %v314 = vunpack.c.l.b16 %v250
  %v315 = vunpack.c.l.b16 %v251
  %v316 = vunpack.c.l.b16 %v252
  %v317 = vunpack.c.l.b16 %v253
  %v318 = vunpack.c.l.b16 %v254
  %v319 = vunpack.c.l.b16 %v255
  %v320 = vunpack.c.l.b16 %v256
  %v321 = vunpack.c.l.b16 %v257
  %v322 = vunpack.c.l.b16 %v258
  %v323 = vunpack.c.l.b16 %v259
  %v324 = vunpack.c.l.b16 %v260
  %v325 = vunpack.c.l.b16 %v261
  %v326 = vunpack.c.l.b16 %v262
  %v327 = vunpack.c.l.b16 %v263
  %v328 = vpack.c.b16 %v297, %v296
  %v329 = vpack.c.b16 %v299, %v298
  %v330 = vpack.c.b16 %v301, %v300
  %v331 = vpack.c.b16 %v303, %v302
  %v332 = vpack.c.b16 %v305, %v304
  %v333 = vpack.c.b16 %v307, %v306
  %v334 = vpack.c.b16 %v309, %v308
  %v335 = vpack.c.b16 %v311, %v310
  %v336 = vpack.c.b16 %v313, %v312
  %v337 = vpack.c.b16 %v315, %v314
  %v338 = vpack.c.b16 %v317, %v316
  %v339 = vpack.c.b16 %v319, %v318
  %v340 = vpack.c.b16 %v321, %v320
  %v341 = vpack.c.b16 %v323, %v322
  %v342 = vpack.c.b16 %v325, %v324
  %v343 = vpack.c.b16 %v327, %v326
  %360 = vmatprep.subr.bf16.mxu0 0
  %361 = vmatpush1.bf16.msra.mxu0 %v328
  %362 = vmatprep.subr.bf16.mxu0 0
  %363 = vmatpush1.bf16.msra.mxu0 %v329
  %364 = vmatprep.subr.bf16.mxu0 0
  %365 = vmatpush1.bf16.msra.mxu0 %v330
  %366 = vmatprep.subr.bf16.mxu0 0
  %367 = vmatpush1.bf16.msra.mxu0 %v331
  %368 = vmatprep.subr.bf16.mxu0 0
  %369 = vmatpush1.bf16.msra.mxu0 %v332
  %370 = vmatprep.subr.bf16.mxu0 0
  %371 = vmatpush1.bf16.msra.mxu0 %v333
  %372 = vmatprep.subr.bf16.mxu0 0
  %373 = vmatpush1.bf16.msra.mxu0 %v334
  %374 = vmatprep.subr.bf16.mxu0 0
  %375 = vmatpush1.bf16.msra.mxu0 %v335
  %376 = vmatprep.subr.bf16.mxu0 0
  %377 = vmatpush1.bf16.msra.mxu0 %v336
  %378 = vmatprep.subr.bf16.mxu0 0
  %379 = vmatpush1.bf16.msra.mxu0 %v337
  %380 = vmatprep.subr.bf16.mxu0 0
  %381 = vmatpush1.bf16.msra.mxu0 %v338
  %382 = vmatprep.subr.bf16.mxu0 0
  %383 = vmatpush1.bf16.msra.mxu0 %v339
  %384 = vmatprep.subr.bf16.mxu0 0
  %385 = vmatpush1.bf16.msra.mxu0 %v340
  %386 = vmatprep.subr.bf16.mxu0 0
  %387 = vmatpush1.bf16.msra.mxu0 %v341
  %388 = vmatprep.subr.bf16.mxu0 0
  %389 = vmatpush1.bf16.msra.mxu0 %v342
  %390 = vmatprep.subr.bf16.mxu0 0
  %391 = vmatpush1.bf16.msra.mxu0 %v343
  %392 = vmatprep.mubr.bf16.mxu0 %v60
  %393 = vmatmul.mubr.bf16.gmra.mrb[0].mxu0 %v59
  %v394 = vpop.f32.mrb[0].mxu0
  %v395 = vadd.f32 0.0, %v394
  %v396 = vpop.f32.mrb[0].mxu0
  %v397 = vpop.f32.mrb[0].mxu0
  %v398 = vpop.f32.mrb[0].mxu0
  %399 = vdwg.mxu0
  %400 = vst.msk [vmem:[#allocation2 + $0x1] sm:$0x1] %vm229, %v395
  %s401 = scalar_lea.vmem %s3, 256
  %v402 = vld [vmem:[%s401] sm:$0xf]
  %v403 = vld [vmem:[%s401 + $0x4] sm:$0xf]
  %v404 = vld [vmem:[%s401 + $0x8] sm:$0xf]
  %v405 = vld [vmem:[%s401 + $0xc] sm:$0xf]
  %v406 = vld [vmem:[%s401 + $0x10] sm:$0xf]
  %v407 = vld [vmem:[%s401 + $0x14] sm:$0xf]
  %v408 = vld [vmem:[%s401 + $0x18] sm:$0xf]
  %v409 = vld [vmem:[%s401 + $0x1c] sm:$0xf]
  %v410 = vld [vmem:[%s401 + $0x20] sm:$0xf]
  %v411 = vld [vmem:[%s401 + $0x24] sm:$0xf]
  %v412 = vld [vmem:[%s401 + $0x28] sm:$0xf]
  %v413 = vld [vmem:[%s401 + $0x2c] sm:$0xf]
  %v414 = vld [vmem:[%s401 + $0x30] sm:$0xf]
  %v415 = vld [vmem:[%s401 + $0x34] sm:$0xf]
  %v416 = vld [vmem:[%s401 + $0x38] sm:$0xf]
  %v417 = vld [vmem:[%s401 + $0x3c] sm:$0xf]
  %v418 = vld [vmem:[%s401 + $0x40] sm:$0xf]
  %v419 = vld [vmem:[%s401 + $0x44] sm:$0xf]
  %v420 = vld [vmem:[%s401 + $0x48] sm:$0xf]
  %v421 = vld [vmem:[%s401 + $0x4c] sm:$0xf]
  %v422 = vld [vmem:[%s401 + $0x50] sm:$0xf]
  %v423 = vld [vmem:[%s401 + $0x54] sm:$0xf]
  %v424 = vld [vmem:[%s401 + $0x58] sm:$0xf]
  %v425 = vld [vmem:[%s401 + $0x5c] sm:$0xf]
  %v426 = vld [vmem:[%s401 + $0x60] sm:$0xf]
  %v427 = vld [vmem:[%s401 + $0x64] sm:$0xf]
  %v428 = vld [vmem:[%s401 + $0x68] sm:$0xf]
  %v429 = vld [vmem:[%s401 + $0x6c] sm:$0xf]
  %v430 = vld [vmem:[%s401 + $0x70] sm:$0xf]
  %v431 = vld [vmem:[%s401 + $0x74] sm:$0xf]
  %v432 = vld [vmem:[%s401 + $0x78] sm:$0xf]
  %v433 = vld [vmem:[%s401 + $0x7c] sm:$0xf]
  %v466 = vunpack.c.l.b16 %v402
  %v467 = vunpack.c.l.b16 %v403
  %v468 = vunpack.c.l.b16 %v404
  %v469 = vunpack.c.l.b16 %v405
  %v470 = vunpack.c.l.b16 %v406
  %v471 = vunpack.c.l.b16 %v407
  %v472 = vunpack.c.l.b16 %v408
  %v473 = vunpack.c.l.b16 %v409
  %v474 = vunpack.c.l.b16 %v410
  %v475 = vunpack.c.l.b16 %v411
  %v476 = vunpack.c.l.b16 %v412
  %v477 = vunpack.c.l.b16 %v413
  %v478 = vunpack.c.l.b16 %v414
  %v479 = vunpack.c.l.b16 %v415
  %v480 = vunpack.c.l.b16 %v416
  %v481 = vunpack.c.l.b16 %v417
  %v482 = vunpack.c.l.b16 %v418
  %v483 = vunpack.c.l.b16 %v419
  %v484 = vunpack.c.l.b16 %v420
  %v485 = vunpack.c.l.b16 %v421
  %v486 = vunpack.c.l.b16 %v422
  %v487 = vunpack.c.l.b16 %v423
  %v488 = vunpack.c.l.b16 %v424
  %v489 = vunpack.c.l.b16 %v425
  %v490 = vunpack.c.l.b16 %v426
  %v491 = vunpack.c.l.b16 %v427
  %v492 = vunpack.c.l.b16 %v428
  %v493 = vunpack.c.l.b16 %v429
  %v494 = vunpack.c.l.b16 %v430
  %v495 = vunpack.c.l.b16 %v431
  %v496 = vunpack.c.l.b16 %v432
  %v497 = vunpack.c.l.b16 %v433
  %v498 = vpack.c.b16 %v467, %v466
  %v499 = vpack.c.b16 %v469, %v468
  %v500 = vpack.c.b16 %v471, %v470
  %v501 = vpack.c.b16 %v473, %v472
  %v502 = vpack.c.b16 %v475, %v474
  %v503 = vpack.c.b16 %v477, %v476
  %v504 = vpack.c.b16 %v479, %v478
  %v505 = vpack.c.b16 %v481, %v480
  %v506 = vpack.c.b16 %v483, %v482
  %v507 = vpack.c.b16 %v485, %v484
  %v508 = vpack.c.b16 %v487, %v486
  %v509 = vpack.c.b16 %v489, %v488
  %v510 = vpack.c.b16 %v491, %v490
  %v511 = vpack.c.b16 %v493, %v492
  %v512 = vpack.c.b16 %v495, %v494
  %v513 = vpack.c.b16 %v497, %v496
  %530 = vmatprep.subr.bf16.mxu0 0
  %531 = vmatpush1.bf16.msra.mxu0 %v498
  %532 = vmatprep.subr.bf16.mxu0 0
  %533 = vmatpush1.bf16.msra.mxu0 %v499
  %534 = vmatprep.subr.bf16.mxu0 0
  %535 = vmatpush1.bf16.msra.mxu0 %v500
  %536 = vmatprep.subr.bf16.mxu0 0
  %537 = vmatpush1.bf16.msra.mxu0 %v501
  %538 = vmatprep.subr.bf16.mxu0 0
  %539 = vmatpush1.bf16.msra.mxu0 %v502
  %540 = vmatprep.subr.bf16.mxu0 0
  %541 = vmatpush1.bf16.msra.mxu0 %v503
  %542 = vmatprep.subr.bf16.mxu0 0
  %543 = vmatpush1.bf16.msra.mxu0 %v504
  %544 = vmatprep.subr.bf16.mxu0 0
  %545 = vmatpush1.bf16.msra.mxu0 %v505
  %546 = vmatprep.subr.bf16.mxu0 0
  %547 = vmatpush1.bf16.msra.mxu0 %v506
  %548 = vmatprep.subr.bf16.mxu0 0
  %549 = vmatpush1.bf16.msra.mxu0 %v507
  %550 = vmatprep.subr.bf16.mxu0 0
  %551 = vmatpush1.bf16.msra.mxu0 %v508
  %552 = vmatprep.subr.bf16.mxu0 0
  %553 = vmatpush1.bf16.msra.mxu0 %v509
  %554 = vmatprep.subr.bf16.mxu0 0
  %555 = vmatpush1.bf16.msra.mxu0 %v510
  %556 = vmatprep.subr.bf16.mxu0 0
  %557 = vmatpush1.bf16.msra.mxu0 %v511
  %558 = vmatprep.subr.bf16.mxu0 0
  %559 = vmatpush1.bf16.msra.mxu0 %v512
  %560 = vmatprep.subr.bf16.mxu0 0
  %561 = vmatpush1.bf16.msra.mxu0 %v513
  %562 = vmatprep.mubr.bf16.mxu0 %v60
  %563 = vmatmul.mubr.bf16.gmra.mrb[0].mxu0 %v59
  %v564 = vpop.f32.mrb[0].mxu0
  %v565 = vadd.f32 0.0, %v564
  %v566 = vpop.f32.mrb[0].mxu0
  %v567 = vpop.f32.mrb[0].mxu0
  %v568 = vpop.f32.mrb[0].mxu0
  %569 = vdwg.mxu0
  %570 = vst.msk [vmem:[#allocation2 + $0x2] sm:$0x1] %vm229, %v565
  %s571 = scalar_lea.vmem %s3, 384
  %v572 = vld [vmem:[%s571] sm:$0xf]
  %v573 = vld [vmem:[%s571 + $0x4] sm:$0xf]
  %v574 = vld [vmem:[%s571 + $0x8] sm:$0xf]
  %v575 = vld [vmem:[%s571 + $0xc] sm:$0xf]
  %v576 = vld [vmem:[%s571 + $0x10] sm:$0xf]
  %v577 = vld [vmem:[%s571 + $0x14] sm:$0xf]
  %v578 = vld [vmem:[%s571 + $0x18] sm:$0xf]
  %v579 = vld [vmem:[%s571 + $0x1c] sm:$0xf]
  %v580 = vld [vmem:[%s571 + $0x20] sm:$0xf]
  %v581 = vld [vmem:[%s571 + $0x24] sm:$0xf]
  %v582 = vld [vmem:[%s571 + $0x28] sm:$0xf]
  %v583 = vld [vmem:[%s571 + $0x2c] sm:$0xf]
  %v584 = vld [vmem:[%s571 + $0x30] sm:$0xf]
  %v585 = vld [vmem:[%s571 + $0x34] sm:$0xf]
  %v586 = vld [vmem:[%s571 + $0x38] sm:$0xf]
  %v587 = vld [vmem:[%s571 + $0x3c] sm:$0xf]
  %v588 = vld [vmem:[%s571 + $0x40] sm:$0xf]
  %v589 = vld [vmem:[%s571 + $0x44] sm:$0xf]
  %v590 = vld [vmem:[%s571 + $0x48] sm:$0xf]
  %v591 = vld [vmem:[%s571 + $0x4c] sm:$0xf]
  %v592 = vld [vmem:[%s571 + $0x50] sm:$0xf]
  %v593 = vld [vmem:[%s571 + $0x54] sm:$0xf]
  %v594 = vld [vmem:[%s571 + $0x58] sm:$0xf]
  %v595 = vld [vmem:[%s571 + $0x5c] sm:$0xf]
  %v596 = vld [vmem:[%s571 + $0x60] sm:$0xf]
  %v597 = vld [vmem:[%s571 + $0x64] sm:$0xf]
  %v598 = vld [vmem:[%s571 + $0x68] sm:$0xf]
  %v599 = vld [vmem:[%s571 + $0x6c] sm:$0xf]
  %v600 = vld [vmem:[%s571 + $0x70] sm:$0xf]
  %v601 = vld [vmem:[%s571 + $0x74] sm:$0xf]
  %v602 = vld [vmem:[%s571 + $0x78] sm:$0xf]
  %v603 = vld [vmem:[%s571 + $0x7c] sm:$0xf]
  %v636 = vunpack.c.l.b16 %v572
  %v637 = vunpack.c.l.b16 %v573
  %v638 = vunpack.c.l.b16 %v574
  %v639 = vunpack.c.l.b16 %v575
  %v640 = vunpack.c.l.b16 %v576
  %v641 = vunpack.c.l.b16 %v577
  %v642 = vunpack.c.l.b16 %v578
  %v643 = vunpack.c.l.b16 %v579
  %v644 = vunpack.c.l.b16 %v580
  %v645 = vunpack.c.l.b16 %v581
  %v646 = vunpack.c.l.b16 %v582
  %v647 = vunpack.c.l.b16 %v583
  %v648 = vunpack.c.l.b16 %v584
  %v649 = vunpack.c.l.b16 %v585
  %v650 = vunpack.c.l.b16 %v586
  %v651 = vunpack.c.l.b16 %v587
  %v652 = vunpack.c.l.b16 %v588
  %v653 = vunpack.c.l.b16 %v589
  %v654 = vunpack.c.l.b16 %v590
  %v655 = vunpack.c.l.b16 %v591
  %v656 = vunpack.c.l.b16 %v592
  %v657 = vunpack.c.l.b16 %v593
  %v658 = vunpack.c.l.b16 %v594
  %v659 = vunpack.c.l.b16 %v595
  %v660 = vunpack.c.l.b16 %v596
  %v661 = vunpack.c.l.b16 %v597
  %v662 = vunpack.c.l.b16 %v598
  %v663 = vunpack.c.l.b16 %v599
  %v664 = vunpack.c.l.b16 %v600
  %v665 = vunpack.c.l.b16 %v601
  %v666 = vunpack.c.l.b16 %v602
  %v667 = vunpack.c.l.b16 %v603
  %v668 = vpack.c.b16 %v637, %v636
  %v669 = vpack.c.b16 %v639, %v638
  %v670 = vpack.c.b16 %v641, %v640
  %v671 = vpack.c.b16 %v643, %v642
  %v672 = vpack.c.b16 %v645, %v644
  %v673 = vpack.c.b16 %v647, %v646
  %v674 = vpack.c.b16 %v649, %v648
  %v675 = vpack.c.b16 %v651, %v650
  %v676 = vpack.c.b16 %v653, %v652
  %v677 = vpack.c.b16 %v655, %v654
  %v678 = vpack.c.b16 %v657, %v656
  %v679 = vpack.c.b16 %v659, %v658
  %v680 = vpack.c.b16 %v661, %v660
  %v681 = vpack.c.b16 %v663, %v662
  %v682 = vpack.c.b16 %v665, %v664
  %v683 = vpack.c.b16 %v667, %v666
  %700 = vmatprep.subr.bf16.mxu0 0
  %701 = vmatpush1.bf16.msra.mxu0 %v668
  %702 = vmatprep.subr.bf16.mxu0 0
  %703 = vmatpush1.bf16.msra.mxu0 %v669
  %704 = vmatprep.subr.bf16.mxu0 0
  %705 = vmatpush1.bf16.msra.mxu0 %v670
  %706 = vmatprep.subr.bf16.mxu0 0
  %707 = vmatpush1.bf16.msra.mxu0 %v671
  %708 = vmatprep.subr.bf16.mxu0 0
  %709 = vmatpush1.bf16.msra.mxu0 %v672
  %710 = vmatprep.subr.bf16.mxu0 0
  %711 = vmatpush1.bf16.msra.mxu0 %v673
  %712 = vmatprep.subr.bf16.mxu0 0
  %713 = vmatpush1.bf16.msra.mxu0 %v674
  %714 = vmatprep.subr.bf16.mxu0 0
  %715 = vmatpush1.bf16.msra.mxu0 %v675
  %716 = vmatprep.subr.bf16.mxu0 0
  %717 = vmatpush1.bf16.msra.mxu0 %v676
  %718 = vmatprep.subr.bf16.mxu0 0
  %719 = vmatpush1.bf16.msra.mxu0 %v677
  %720 = vmatprep.subr.bf16.mxu0 0
  %721 = vmatpush1.bf16.msra.mxu0 %v678
  %722 = vmatprep.subr.bf16.mxu0 0
  %723 = vmatpush1.bf16.msra.mxu0 %v679
  %724 = vmatprep.subr.bf16.mxu0 0
  %725 = vmatpush1.bf16.msra.mxu0 %v680
  %726 = vmatprep.subr.bf16.mxu0 0
  %727 = vmatpush1.bf16.msra.mxu0 %v681
  %728 = vmatprep.subr.bf16.mxu0 0
  %729 = vmatpush1.bf16.msra.mxu0 %v682
  %730 = vmatprep.subr.bf16.mxu0 0
  %731 = vmatpush1.bf16.msra.mxu0 %v683
  %732 = vmatprep.mubr.bf16.mxu0 %v60
  %733 = vmatmul.mubr.bf16.gmra.mrb[0].mxu0 %v59
  %v734 = vpop.f32.mrb[0].mxu0
  %v735 = vadd.f32 0.0, %v734
  %v736 = vpop.f32.mrb[0].mxu0
  %v737 = vpop.f32.mrb[0].mxu0
  %v738 = vpop.f32.mrb[0].mxu0
  %739 = vdwg.mxu0
  %740 = vst.msk [vmem:[#allocation2 + $0x3] sm:$0x1] %vm229, %v735
  %s741 = scalar_lea.vmem %s3, 512
  %v742 = vld [vmem:[%s741] sm:$0xf]
  %v743 = vld [vmem:[%s741 + $0x4] sm:$0xf]
  %v744 = vld [vmem:[%s741 + $0x8] sm:$0xf]
  %v745 = vld [vmem:[%s741 + $0xc] sm:$0xf]
  %v746 = vld [vmem:[%s741 + $0x10] sm:$0xf]
  %v747 = vld [vmem:[%s741 + $0x14] sm:$0xf]
  %v748 = vld [vmem:[%s741 + $0x18] sm:$0xf]
  %v749 = vld [vmem:[%s741 + $0x1c] sm:$0xf]
  %v750 = vld [vmem:[%s741 + $0x20] sm:$0xf]
  %v751 = vld [vmem:[%s741 + $0x24] sm:$0xf]
  %v752 = vld [vmem:[%s741 + $0x28] sm:$0xf]
  %v753 = vld [vmem:[%s741 + $0x2c] sm:$0xf]
  %v754 = vld [vmem:[%s741 + $0x30] sm:$0xf]
  %v755 = vld [vmem:[%s741 + $0x34] sm:$0xf]
  %v756 = vld [vmem:[%s741 + $0x38] sm:$0xf]
  %v757 = vld [vmem:[%s741 + $0x3c] sm:$0xf]
  %v758 = vld [vmem:[%s741 + $0x40] sm:$0xf]
  %v759 = vld [vmem:[%s741 + $0x44] sm:$0xf]
  %v760 = vld [vmem:[%s741 + $0x48] sm:$0xf]
  %v761 = vld [vmem:[%s741 + $0x4c] sm:$0xf]
  %v762 = vld [vmem:[%s741 + $0x50] sm:$0xf]
  %v763 = vld [vmem:[%s741 + $0x54] sm:$0xf]
  %v764 = vld [vmem:[%s741 + $0x58] sm:$0xf]
  %v765 = vld [vmem:[%s741 + $0x5c] sm:$0xf]
  %v766 = vld [vmem:[%s741 + $0x60] sm:$0xf]
  %v767 = vld [vmem:[%s741 + $0x64] sm:$0xf]
  %v768 = vld [vmem:[%s741 + $0x68] sm:$0xf]
  %v769 = vld [vmem:[%s741 + $0x6c] sm:$0xf]
  %v770 = vld [vmem:[%s741 + $0x70] sm:$0xf]
  %v771 = vld [vmem:[%s741 + $0x74] sm:$0xf]
  %v772 = vld [vmem:[%s741 + $0x78] sm:$0xf]
  %v773 = vld [vmem:[%s741 + $0x7c] sm:$0xf]
  %v806 = vunpack.c.l.b16 %v742
  %v807 = vunpack.c.l.b16 %v743
  %v808 = vunpack.c.l.b16 %v744
  %v809 = vunpack.c.l.b16 %v745
  %v810 = vunpack.c.l.b16 %v746
  %v811 = vunpack.c.l.b16 %v747
  %v812 = vunpack.c.l.b16 %v748
  %v813 = vunpack.c.l.b16 %v749
  %v814 = vunpack.c.l.b16 %v750
  %v815 = vunpack.c.l.b16 %v751
  %v816 = vunpack.c.l.b16 %v752
  %v817 = vunpack.c.l.b16 %v753
  %v818 = vunpack.c.l.b16 %v754
  %v819 = vunpack.c.l.b16 %v755
  %v820 = vunpack.c.l.b16 %v756
  %v821 = vunpack.c.l.b16 %v757
  %v822 = vunpack.c.l.b16 %v758
  %v823 = vunpack.c.l.b16 %v759
  %v824 = vunpack.c.l.b16 %v760
  %v825 = vunpack.c.l.b16 %v761
  %v826 = vunpack.c.l.b16 %v762
  %v827 = vunpack.c.l.b16 %v763
  %v828 = vunpack.c.l.b16 %v764
  %v829 = vunpack.c.l.b16 %v765
  %v830 = vunpack.c.l.b16 %v766
  %v831 = vunpack.c.l.b16 %v767
  %v832 = vunpack.c.l.b16 %v768
  %v833 = vunpack.c.l.b16 %v769
  %v834 = vunpack.c.l.b16 %v770
  %v835 = vunpack.c.l.b16 %v771
  %v836 = vunpack.c.l.b16 %v772
  %v837 = vunpack.c.l.b16 %v773
  %v838 = vpack.c.b16 %v807, %v806
  %v839 = vpack.c.b16 %v809, %v808
  %v840 = vpack.c.b16 %v811, %v810
  %v841 = vpack.c.b16 %v813, %v812
  %v842 = vpack.c.b16 %v815, %v814
  %v843 = vpack.c.b16 %v817, %v816
  %v844 = vpack.c.b16 %v819, %v818
  %v845 = vpack.c.b16 %v821, %v820
  %v846 = vpack.c.b16 %v823, %v822
  %v847 = vpack.c.b16 %v825, %v824
  %v848 = vpack.c.b16 %v827, %v826
  %v849 = vpack.c.b16 %v829, %v828
  %v850 = vpack.c.b16 %v831, %v830
  %v851 = vpack.c.b16 %v833, %v832
  %v852 = vpack.c.b16 %v835, %v834
  %v853 = vpack.c.b16 %v837, %v836
  %870 = vmatprep.subr.bf16.mxu0 0
  %871 = vmatpush1.bf16.msra.mxu0 %v838
  %872 = vmatprep.subr.bf16.mxu0 0
  %873 = vmatpush1.bf16.msra.mxu0 %v839
  %874 = vmatprep.subr.bf16.mxu0 0
  %875 = vmatpush1.bf16.msra.mxu0 %v840
  %876 = vmatprep.subr.bf16.mxu0 0
  %877 = vmatpush1.bf16.msra.mxu0 %v841
  %878 = vmatprep.subr.bf16.mxu0 0
  %879 = vmatpush1.bf16.msra.mxu0 %v842
  %880 = vmatprep.subr.bf16.mxu0 0
  %881 = vmatpush1.bf16.msra.mxu0 %v843
  %882 = vmatprep.subr.bf16.mxu0 0
  %883 = vmatpush1.bf16.msra.mxu0 %v844
  %884 = vmatprep.subr.bf16.mxu0 0
  %885 = vmatpush1.bf16.msra.mxu0 %v845
  %886 = vmatprep.subr.bf16.mxu0 0
  %887 = vmatpush1.bf16.msra.mxu0 %v846
  %888 = vmatprep.subr.bf16.mxu0 0
  %889 = vmatpush1.bf16.msra.mxu0 %v847
  %890 = vmatprep.subr.bf16.mxu0 0
  %891 = vmatpush1.bf16.msra.mxu0 %v848
  %892 = vmatprep.subr.bf16.mxu0 0
  %893 = vmatpush1.bf16.msra.mxu0 %v849
  %894 = vmatprep.subr.bf16.mxu0 0
  %895 = vmatpush1.bf16.msra.mxu0 %v850
  %896 = vmatprep.subr.bf16.mxu0 0
  %897 = vmatpush1.bf16.msra.mxu0 %v851
  %898 = vmatprep.subr.bf16.mxu0 0
  %899 = vmatpush1.bf16.msra.mxu0 %v852
  %900 = vmatprep.subr.bf16.mxu0 0
  %901 = vmatpush1.bf16.msra.mxu0 %v853
  %902 = vmatprep.mubr.bf16.mxu0 %v60
  %903 = vmatmul.mubr.bf16.gmra.mrb[0].mxu0 %v59
  %v904 = vpop.f32.mrb[0].mxu0
  %v905 = vadd.f32 0.0, %v904
  %v906 = vpop.f32.mrb[0].mxu0
  %v907 = vpop.f32.mrb[0].mxu0
  %v908 = vpop.f32.mrb[0].mxu0
  %909 = vdwg.mxu0
  %910 = vst.msk [vmem:[#allocation2 + $0x4] sm:$0x1] %vm229, %v905
  %s911 = scalar_lea.vmem %s3, 640
  %v912 = vld [vmem:[%s911] sm:$0xf]
  %v913 = vld [vmem:[%s911 + $0x4] sm:$0xf]
  %v914 = vld [vmem:[%s911 + $0x8] sm:$0xf]
  %v915 = vld [vmem:[%s911 + $0xc] sm:$0xf]
  %v916 = vld [vmem:[%s911 + $0x10] sm:$0xf]
  %v917 = vld [vmem:[%s911 + $0x14] sm:$0xf]
  %v918 = vld [vmem:[%s911 + $0x18] sm:$0xf]
  %v919 = vld [vmem:[%s911 + $0x1c] sm:$0xf]
  %v920 = vld [vmem:[%s911 + $0x20] sm:$0xf]
  %v921 = vld [vmem:[%s911 + $0x24] sm:$0xf]
  %v922 = vld [vmem:[%s911 + $0x28] sm:$0xf]
  %v923 = vld [vmem:[%s911 + $0x2c] sm:$0xf]
  %v924 = vld [vmem:[%s911 + $0x30] sm:$0xf]
  %v925 = vld [vmem:[%s911 + $0x34] sm:$0xf]
  %v926 = vld [vmem:[%s911 + $0x38] sm:$0xf]
  %v927 = vld [vmem:[%s911 + $0x3c] sm:$0xf]
  %v928 = vld [vmem:[%s911 + $0x40] sm:$0xf]
  %v929 = vld [vmem:[%s911 + $0x44] sm:$0xf]
  %v930 = vld [vmem:[%s911 + $0x48] sm:$0xf]
  %v931 = vld [vmem:[%s911 + $0x4c] sm:$0xf]
  %v932 = vld [vmem:[%s911 + $0x50] sm:$0xf]
  %v933 = vld [vmem:[%s911 + $0x54] sm:$0xf]
  %v934 = vld [vmem:[%s911 + $0x58] sm:$0xf]
  %v935 = vld [vmem:[%s911 + $0x5c] sm:$0xf]
  %v936 = vld [vmem:[%s911 + $0x60] sm:$0xf]
  %v937 = vld [vmem:[%s911 + $0x64] sm:$0xf]
  %v938 = vld [vmem:[%s911 + $0x68] sm:$0xf]
  %v939 = vld [vmem:[%s911 + $0x6c] sm:$0xf]
  %v940 = vld [vmem:[%s911 + $0x70] sm:$0xf]
  %v941 = vld [vmem:[%s911 + $0x74] sm:$0xf]
  %v942 = vld [vmem:[%s911 + $0x78] sm:$0xf]
  %v943 = vld [vmem:[%s911 + $0x7c] sm:$0xf]
  %v976 = vunpack.c.l.b16 %v912
  %v977 = vunpack.c.l.b16 %v913
  %v978 = vunpack.c.l.b16 %v914
  %v979 = vunpack.c.l.b16 %v915
  %v980 = vunpack.c.l.b16 %v916
  %v981 = vunpack.c.l.b16 %v917
  %v982 = vunpack.c.l.b16 %v918
  %v983 = vunpack.c.l.b16 %v919
  %v984 = vunpack.c.l.b16 %v920
  %v985 = vunpack.c.l.b16 %v921
  %v986 = vunpack.c.l.b16 %v922
  %v987 = vunpack.c.l.b16 %v923
  %v988 = vunpack.c.l.b16 %v924
  %v989 = vunpack.c.l.b16 %v925
  %v990 = vunpack.c.l.b16 %v926
  %v991 = vunpack.c.l.b16 %v927
  %v992 = vunpack.c.l.b16 %v928
  %v993 = vunpack.c.l.b16 %v929
  %v994 = vunpack.c.l.b16 %v930
  %v995 = vunpack.c.l.b16 %v931
  %v996 = vunpack.c.l.b16 %v932
  %v997 = vunpack.c.l.b16 %v933
  %v998 = vunpack.c.l.b16 %v934
  %v999 = vunpack.c.l.b16 %v935
  %v1000 = vunpack.c.l.b16 %v936
  %v1001 = vunpack.c.l.b16 %v937
  %v1002 = vunpack.c.l.b16 %v938
  %v1003 = vunpack.c.l.b16 %v939
  %v1004 = vunpack.c.l.b16 %v940
  %v1005 = vunpack.c.l.b16 %v941
  %v1006 = vunpack.c.l.b16 %v942
  %v1007 = vunpack.c.l.b16 %v943
  %v1008 = vpack.c.b16 %v977, %v976
  %v1009 = vpack.c.b16 %v979, %v978
  %v1010 = vpack.c.b16 %v981, %v980
  %v1011 = vpack.c.b16 %v983, %v982
  %v1012 = vpack.c.b16 %v985, %v984
  %v1013 = vpack.c.b16 %v987, %v986
  %v1014 = vpack.c.b16 %v989, %v988
  %v1015 = vpack.c.b16 %v991, %v990
  %v1016 = vpack.c.b16 %v993, %v992
  %v1017 = vpack.c.b16 %v995, %v994
  %v1018 = vpack.c.b16 %v997, %v996
  %v1019 = vpack.c.b16 %v999, %v998
  %v1020 = vpack.c.b16 %v1001, %v1000
  %v1021 = vpack.c.b16 %v1003, %v1002
  %v1022 = vpack.c.b16 %v1005, %v1004
  %v1023 = vpack.c.b16 %v1007, %v1006
  %1040 = vmatprep.subr.bf16.mxu0 0
  %1041 = vmatpush1.bf16.msra.mxu0 %v1008
  %1042 = vmatprep.subr.bf16.mxu0 0
  %1043 = vmatpush1.bf16.msra.mxu0 %v1009
  %1044 = vmatprep.subr.bf16.mxu0 0
  %1045 = vmatpush1.bf16.msra.mxu0 %v1010
  %1046 = vmatprep.subr.bf16.mxu0 0
  %1047 = vmatpush1.bf16.msra.mxu0 %v1011
  %1048 = vmatprep.subr.bf16.mxu0 0
  %1049 = vmatpush1.bf16.msra.mxu0 %v1012
  %1050 = vmatprep.subr.bf16.mxu0 0
  %1051 = vmatpush1.bf16.msra.mxu0 %v1013
  %1052 = vmatprep.subr.bf16.mxu0 0
  %1053 = vmatpush1.bf16.msra.mxu0 %v1014
  %1054 = vmatprep.subr.bf16.mxu0 0
  %1055 = vmatpush1.bf16.msra.mxu0 %v1015
  %1056 = vmatprep.subr.bf16.mxu0 0
  %1057 = vmatpush1.bf16.msra.mxu0 %v1016
  %1058 = vmatprep.subr.bf16.mxu0 0
  %1059 = vmatpush1.bf16.msra.mxu0 %v1017
  %1060 = vmatprep.subr.bf16.mxu0 0
  %1061 = vmatpush1.bf16.msra.mxu0 %v1018
  %1062 = vmatprep.subr.bf16.mxu0 0
  %1063 = vmatpush1.bf16.msra.mxu0 %v1019
  %1064 = vmatprep.subr.bf16.mxu0 0
  %1065 = vmatpush1.bf16.msra.mxu0 %v1020
  %1066 = vmatprep.subr.bf16.mxu0 0
  %1067 = vmatpush1.bf16.msra.mxu0 %v1021
  %1068 = vmatprep.subr.bf16.mxu0 0
  %1069 = vmatpush1.bf16.msra.mxu0 %v1022
  %1070 = vmatprep.subr.bf16.mxu0 0
  %1071 = vmatpush1.bf16.msra.mxu0 %v1023
  %1072 = vmatprep.mubr.bf16.mxu0 %v60
  %1073 = vmatmul.mubr.bf16.gmra.mrb[0].mxu0 %v59
  %v1074 = vpop.f32.mrb[0].mxu0
  %v1075 = vadd.f32 0.0, %v1074
  %v1076 = vpop.f32.mrb[0].mxu0
  %v1077 = vpop.f32.mrb[0].mxu0
  %v1078 = vpop.f32.mrb[0].mxu0
  %1079 = vdwg.mxu0
  %1080 = vst.msk [vmem:[#allocation2 + $0x5] sm:$0x1] %vm229, %v1075
  %s1081 = scalar_lea.vmem %s3, 768
  %v1082 = vld [vmem:[%s1081] sm:$0xf]
  %v1083 = vld [vmem:[%s1081 + $0x4] sm:$0xf]
  %v1084 = vld [vmem:[%s1081 + $0x8] sm:$0xf]
  %v1085 = vld [vmem:[%s1081 + $0xc] sm:$0xf]
  %v1086 = vld [vmem:[%s1081 + $0x10] sm:$0xf]
  %v1087 = vld [vmem:[%s1081 + $0x14] sm:$0xf]
  %v1088 = vld [vmem:[%s1081 + $0x18] sm:$0xf]
  %v1089 = vld [vmem:[%s1081 + $0x1c] sm:$0xf]
  %v1090 = vld [vmem:[%s1081 + $0x20] sm:$0xf]
  %v1091 = vld [vmem:[%s1081 + $0x24] sm:$0xf]
  %v1092 = vld [vmem:[%s1081 + $0x28] sm:$0xf]
  %v1093 = vld [vmem:[%s1081 + $0x2c] sm:$0xf]
  %v1094 = vld [vmem:[%s1081 + $0x30] sm:$0xf]
  %v1095 = vld [vmem:[%s1081 + $0x34] sm:$0xf]
  %v1096 = vld [vmem:[%s1081 + $0x38] sm:$0xf]
  %v1097 = vld [vmem:[%s1081 + $0x3c] sm:$0xf]
  %v1098 = vld [vmem:[%s1081 + $0x40] sm:$0xf]
  %v1099 = vld [vmem:[%s1081 + $0x44] sm:$0xf]
  %v1100 = vld [vmem:[%s1081 + $0x48] sm:$0xf]
  %v1101 = vld [vmem:[%s1081 + $0x4c] sm:$0xf]
  %v1102 = vld [vmem:[%s1081 + $0x50] sm:$0xf]
  %v1103 = vld [vmem:[%s1081 + $0x54] sm:$0xf]
  %v1104 = vld [vmem:[%s1081 + $0x58] sm:$0xf]
  %v1105 = vld [vmem:[%s1081 + $0x5c] sm:$0xf]
  %v1106 = vld [vmem:[%s1081 + $0x60] sm:$0xf]
  %v1107 = vld [vmem:[%s1081 + $0x64] sm:$0xf]
  %v1108 = vld [vmem:[%s1081 + $0x68] sm:$0xf]
  %v1109 = vld [vmem:[%s1081 + $0x6c] sm:$0xf]
  %v1110 = vld [vmem:[%s1081 + $0x70] sm:$0xf]
  %v1111 = vld [vmem:[%s1081 + $0x74] sm:$0xf]
  %v1112 = vld [vmem:[%s1081 + $0x78] sm:$0xf]
  %v1113 = vld [vmem:[%s1081 + $0x7c] sm:$0xf]
  %v1146 = vunpack.c.l.b16 %v1082
  %v1147 = vunpack.c.l.b16 %v1083
  %v1148 = vunpack.c.l.b16 %v1084
  %v1149 = vunpack.c.l.b16 %v1085
  %v1150 = vunpack.c.l.b16 %v1086
  %v1151 = vunpack.c.l.b16 %v1087
  %v1152 = vunpack.c.l.b16 %v1088
  %v1153 = vunpack.c.l.b16 %v1089
  %v1154 = vunpack.c.l.b16 %v1090
  %v1155 = vunpack.c.l.b16 %v1091
  %v1156 = vunpack.c.l.b16 %v1092
  %v1157 = vunpack.c.l.b16 %v1093
  %v1158 = vunpack.c.l.b16 %v1094
  %v1159 = vunpack.c.l.b16 %v1095
  %v1160 = vunpack.c.l.b16 %v1096
  %v1161 = vunpack.c.l.b16 %v1097
  %v1162 = vunpack.c.l.b16 %v1098
  %v1163 = vunpack.c.l.b16 %v1099
  %v1164 = vunpack.c.l.b16 %v1100
  %v1165 = vunpack.c.l.b16 %v1101
  %v1166 = vunpack.c.l.b16 %v1102
  %v1167 = vunpack.c.l.b16 %v1103
  %v1168 = vunpack.c.l.b16 %v1104
  %v1169 = vunpack.c.l.b16 %v1105
  %v1170 = vunpack.c.l.b16 %v1106
  %v1171 = vunpack.c.l.b16 %v1107
  %v1172 = vunpack.c.l.b16 %v1108
  %v1173 = vunpack.c.l.b16 %v1109
  %v1174 = vunpack.c.l.b16 %v1110
  %v1175 = vunpack.c.l.b16 %v1111
  %v1176 = vunpack.c.l.b16 %v1112
  %v1177 = vunpack.c.l.b16 %v1113
  %v1178 = vpack.c.b16 %v1147, %v1146
  %v1179 = vpack.c.b16 %v1149, %v1148
  %v1180 = vpack.c.b16 %v1151, %v1150
  %v1181 = vpack.c.b16 %v1153, %v1152
  %v1182 = vpack.c.b16 %v1155, %v1154
  %v1183 = vpack.c.b16 %v1157, %v1156
  %v1184 = vpack.c.b16 %v1159, %v1158
  %v1185 = vpack.c.b16 %v1161, %v1160
  %v1186 = vpack.c.b16 %v1163, %v1162
  %v1187 = vpack.c.b16 %v1165, %v1164
  %v1188 = vpack.c.b16 %v1167, %v1166
  %v1189 = vpack.c.b16 %v1169, %v1168
  %v1190 = vpack.c.b16 %v1171, %v1170
  %v1191 = vpack.c.b16 %v1173, %v1172
  %v1192 = vpack.c.b16 %v1175, %v1174
  %v1193 = vpack.c.b16 %v1177, %v1176
  %1210 = vmatprep.subr.bf16.mxu0 0
  %1211 = vmatpush1.bf16.msra.mxu0 %v1178
  %1212 = vmatprep.subr.bf16.mxu0 0
  %1213 = vmatpush1.bf16.msra.mxu0 %v1179
  %1214 = vmatprep.subr.bf16.mxu0 0
  %1215 = vmatpush1.bf16.msra.mxu0 %v1180
  %1216 = vmatprep.subr.bf16.mxu0 0
  %1217 = vmatpush1.bf16.msra.mxu0 %v1181
  %1218 = vmatprep.subr.bf16.mxu0 0
  %1219 = vmatpush1.bf16.msra.mxu0 %v1182
  %1220 = vmatprep.subr.bf16.mxu0 0
  %1221 = vmatpush1.bf16.msra.mxu0 %v1183
  %1222 = vmatprep.subr.bf16.mxu0 0
  %1223 = vmatpush1.bf16.msra.mxu0 %v1184
  %1224 = vmatprep.subr.bf16.mxu0 0
  %1225 = vmatpush1.bf16.msra.mxu0 %v1185
  %1226 = vmatprep.subr.bf16.mxu0 0
  %1227 = vmatpush1.bf16.msra.mxu0 %v1186
  %1228 = vmatprep.subr.bf16.mxu0 0
  %1229 = vmatpush1.bf16.msra.mxu0 %v1187
  %1230 = vmatprep.subr.bf16.mxu0 0
  %1231 = vmatpush1.bf16.msra.mxu0 %v1188
  %1232 = vmatprep.subr.bf16.mxu0 0
  %1233 = vmatpush1.bf16.msra.mxu0 %v1189
  %1234 = vmatprep.subr.bf16.mxu0 0
  %1235 = vmatpush1.bf16.msra.mxu0 %v1190
  %1236 = vmatprep.subr.bf16.mxu0 0
  %1237 = vmatpush1.bf16.msra.mxu0 %v1191
  %1238 = vmatprep.subr.bf16.mxu0 0
  %1239 = vmatpush1.bf16.msra.mxu0 %v1192
  %1240 = vmatprep.subr.bf16.mxu0 0
  %1241 = vmatpush1.bf16.msra.mxu0 %v1193
  %1242 = vmatprep.mubr.bf16.mxu0 %v60
  %1243 = vmatmul.mubr.bf16.gmra.mrb[0].mxu0 %v59
  %v1244 = vpop.f32.mrb[0].mxu0
  %v1245 = vadd.f32 0.0, %v1244
  %v1246 = vpop.f32.mrb[0].mxu0
  %v1247 = vpop.f32.mrb[0].mxu0
  %v1248 = vpop.f32.mrb[0].mxu0
  %1249 = vdwg.mxu0
  %1250 = vst.msk [vmem:[#allocation2 + $0x6] sm:$0x1] %vm229, %v1245
  %s1251 = scalar_lea.vmem %s3, 896
  %v1252 = vld [vmem:[%s1251] sm:$0xf]
  %v1253 = vld [vmem:[%s1251 + $0x4] sm:$0xf]
  %v1254 = vld [vmem:[%s1251 + $0x8] sm:$0xf]
  %v1255 = vld [vmem:[%s1251 + $0xc] sm:$0xf]
  %v1256 = vld [vmem:[%s1251 + $0x10] sm:$0xf]
  %v1257 = vld [vmem:[%s1251 + $0x14] sm:$0xf]
  %v1258 = vld [vmem:[%s1251 + $0x18] sm:$0xf]
  %v1259 = vld [vmem:[%s1251 + $0x1c] sm:$0xf]
  %v1260 = vld [vmem:[%s1251 + $0x20] sm:$0xf]
  %v1261 = vld [vmem:[%s1251 + $0x24] sm:$0xf]
  %v1262 = vld [vmem:[%s1251 + $0x28] sm:$0xf]
  %v1263 = vld [vmem:[%s1251 + $0x2c] sm:$0xf]
  %v1264 = vld [vmem:[%s1251 + $0x30] sm:$0xf]
  %v1265 = vld [vmem:[%s1251 + $0x34] sm:$0xf]
  %v1266 = vld [vmem:[%s1251 + $0x38] sm:$0xf]
  %v1267 = vld [vmem:[%s1251 + $0x3c] sm:$0xf]
  %v1268 = vld [vmem:[%s1251 + $0x40] sm:$0xf]
  %v1269 = vld [vmem:[%s1251 + $0x44] sm:$0xf]
  %v1270 = vld [vmem:[%s1251 + $0x48] sm:$0xf]
  %v1271 = vld [vmem:[%s1251 + $0x4c] sm:$0xf]
  %v1272 = vld [vmem:[%s1251 + $0x50] sm:$0xf]
  %v1273 = vld [vmem:[%s1251 + $0x54] sm:$0xf]
  %v1274 = vld [vmem:[%s1251 + $0x58] sm:$0xf]
  %v1275 = vld [vmem:[%s1251 + $0x5c] sm:$0xf]
  %v1276 = vld [vmem:[%s1251 + $0x60] sm:$0xf]
  %v1277 = vld [vmem:[%s1251 + $0x64] sm:$0xf]
  %v1278 = vld [vmem:[%s1251 + $0x68] sm:$0xf]
  %v1279 = vld [vmem:[%s1251 + $0x6c] sm:$0xf]
  %v1280 = vld [vmem:[%s1251 + $0x70] sm:$0xf]
  %v1281 = vld [vmem:[%s1251 + $0x74] sm:$0xf]
  %v1282 = vld [vmem:[%s1251 + $0x78] sm:$0xf]
  %v1283 = vld [vmem:[%s1251 + $0x7c] sm:$0xf]
  %v1316 = vunpack.c.l.b16 %v1252
  %v1317 = vunpack.c.l.b16 %v1253
  %v1318 = vunpack.c.l.b16 %v1254
  %v1319 = vunpack.c.l.b16 %v1255
  %v1320 = vunpack.c.l.b16 %v1256
  %v1321 = vunpack.c.l.b16 %v1257
  %v1322 = vunpack.c.l.b16 %v1258
  %v1323 = vunpack.c.l.b16 %v1259
  %v1324 = vunpack.c.l.b16 %v1260
  %v1325 = vunpack.c.l.b16 %v1261
  %v1326 = vunpack.c.l.b16 %v1262
  %v1327 = vunpack.c.l.b16 %v1263
  %v1328 = vunpack.c.l.b16 %v1264
  %v1329 = vunpack.c.l.b16 %v1265
  %v1330 = vunpack.c.l.b16 %v1266
  %v1331 = vunpack.c.l.b16 %v1267
  %v1332 = vunpack.c.l.b16 %v1268
  %v1333 = vunpack.c.l.b16 %v1269
  %v1334 = vunpack.c.l.b16 %v1270
  %v1335 = vunpack.c.l.b16 %v1271
  %v1336 = vunpack.c.l.b16 %v1272
  %v1337 = vunpack.c.l.b16 %v1273
  %v1338 = vunpack.c.l.b16 %v1274
  %v1339 = vunpack.c.l.b16 %v1275
  %v1340 = vunpack.c.l.b16 %v1276
  %v1341 = vunpack.c.l.b16 %v1277
  %v1342 = vunpack.c.l.b16 %v1278
  %v1343 = vunpack.c.l.b16 %v1279
  %v1344 = vunpack.c.l.b16 %v1280
  %v1345 = vunpack.c.l.b16 %v1281
  %v1346 = vunpack.c.l.b16 %v1282
  %v1347 = vunpack.c.l.b16 %v1283
  %v1348 = vpack.c.b16 %v1317, %v1316
  %v1349 = vpack.c.b16 %v1319, %v1318
  %v1350 = vpack.c.b16 %v1321, %v1320
  %v1351 = vpack.c.b16 %v1323, %v1322
  %v1352 = vpack.c.b16 %v1325, %v1324
  %v1353 = vpack.c.b16 %v1327, %v1326
  %v1354 = vpack.c.b16 %v1329, %v1328
  %v1355 = vpack.c.b16 %v1331, %v1330
  %v1356 = vpack.c.b16 %v1333, %v1332
  %v1357 = vpack.c.b16 %v1335, %v1334
  %v1358 = vpack.c.b16 %v1337, %v1336
  %v1359 = vpack.c.b16 %v1339, %v1338
  %v1360 = vpack.c.b16 %v1341, %v1340
  %v1361 = vpack.c.b16 %v1343, %v1342
  %v1362 = vpack.c.b16 %v1345, %v1344
  %v1363 = vpack.c.b16 %v1347, %v1346
  %1380 = vmatprep.subr.bf16.mxu0 0
  %1381 = vmatpush1.bf16.msra.mxu0 %v1348
  %1382 = vmatprep.subr.bf16.mxu0 0
  %1383 = vmatpush1.bf16.msra.mxu0 %v1349
  %1384 = vmatprep.subr.bf16.mxu0 0
  %1385 = vmatpush1.bf16.msra.mxu0 %v1350
  %1386 = vmatprep.subr.bf16.mxu0 0
  %1387 = vmatpush1.bf16.msra.mxu0 %v1351
  %1388 = vmatprep.subr.bf16.mxu0 0
  %1389 = vmatpush1.bf16.msra.mxu0 %v1352
  %1390 = vmatprep.subr.bf16.mxu0 0
  %1391 = vmatpush1.bf16.msra.mxu0 %v1353
  %1392 = vmatprep.subr.bf16.mxu0 0
  %1393 = vmatpush1.bf16.msra.mxu0 %v1354
  %1394 = vmatprep.subr.bf16.mxu0 0
  %1395 = vmatpush1.bf16.msra.mxu0 %v1355
  %1396 = vmatprep.subr.bf16.mxu0 0
  %1397 = vmatpush1.bf16.msra.mxu0 %v1356
  %1398 = vmatprep.subr.bf16.mxu0 0
  %1399 = vmatpush1.bf16.msra.mxu0 %v1357
  %1400 = vmatprep.subr.bf16.mxu0 0
  %1401 = vmatpush1.bf16.msra.mxu0 %v1358
  %1402 = vmatprep.subr.bf16.mxu0 0
  %1403 = vmatpush1.bf16.msra.mxu0 %v1359
  %1404 = vmatprep.subr.bf16.mxu0 0
  %1405 = vmatpush1.bf16.msra.mxu0 %v1360
  %1406 = vmatprep.subr.bf16.mxu0 0
  %1407 = vmatpush1.bf16.msra.mxu0 %v1361
  %1408 = vmatprep.subr.bf16.mxu0 0
  %1409 = vmatpush1.bf16.msra.mxu0 %v1362
  %1410 = vmatprep.subr.bf16.mxu0 0
  %1411 = vmatpush1.bf16.msra.mxu0 %v1363
  %1412 = vmatprep.mubr.bf16.mxu0 %v60
  %1413 = vmatmul.mubr.bf16.gmra.mrb[0].mxu0 %v59
  %v1414 = vpop.f32.mrb[0].mxu0
  %v1415 = vadd.f32 0.0, %v1414
  %v1416 = vpop.f32.mrb[0].mxu0
  %v1417 = vpop.f32.mrb[0].mxu0
  %v1418 = vpop.f32.mrb[0].mxu0
  %1419 = vdwg.mxu0
  %1420 = vst.msk [vmem:[#allocation2 + $0x7] sm:$0x1] %vm229, %v1415
  %s1421 = scalar_lea.vmem %s3, 1024
  %v1422 = vld [vmem:[%s1421] sm:$0xf]
  %v1423 = vld [vmem:[%s1421 + $0x4] sm:$0xf]
  %v1424 = vld [vmem:[%s1421 + $0x8] sm:$0xf]
  %v1425 = vld [vmem:[%s1421 + $0xc] sm:$0xf]
  %v1426 = vld [vmem:[%s1421 + $0x10] sm:$0xf]
  %v1427 = vld [vmem:[%s1421 + $0x14] sm:$0xf]
  %v1428 = vld [vmem:[%s1421 + $0x18] sm:$0xf]
  %v1429 = vld [vmem:[%s1421 + $0x1c] sm:$0xf]
  %v1430 = vld [vmem:[%s1421 + $0x20] sm:$0xf]
  %v1431 = vld [vmem:[%s1421 + $0x24] sm:$0xf]
  %v1432 = vld [vmem:[%s1421 + $0x28] sm:$0xf]
  %v1433 = vld [vmem:[%s1421 + $0x2c] sm:$0xf]
  %v1434 = vld [vmem:[%s1421 + $0x30] sm:$0xf]
  %v1435 = vld [vmem:[%s1421 + $0x34] sm:$0xf]
  %v1436 = vld [vmem:[%s1421 + $0x38] sm:$0xf]
  %v1437 = vld [vmem:[%s1421 + $0x3c] sm:$0xf]
  %v1438 = vld [vmem:[%s1421 + $0x40] sm:$0xf]
  %v1439 = vld [vmem:[%s1421 + $0x44] sm:$0xf]
  %v1440 = vld [vmem:[%s1421 + $0x48] sm:$0xf]
  %v1441 = vld [vmem:[%s1421 + $0x4c] sm:$0xf]
  %v1442 = vld [vmem:[%s1421 + $0x50] sm:$0xf]
  %v1443 = vld [vmem:[%s1421 + $0x54] sm:$0xf]
  %v1444 = vld [vmem:[%s1421 + $0x58] sm:$0xf]
  %v1445 = vld [vmem:[%s1421 + $0x5c] sm:$0xf]
  %v1446 = vld [vmem:[%s1421 + $0x60] sm:$0xf]
  %v1447 = vld [vmem:[%s1421 + $0x64] sm:$0xf]
  %v1448 = vld [vmem:[%s1421 + $0x68] sm:$0xf]
  %v1449 = vld [vmem:[%s1421 + $0x6c] sm:$0xf]
  %v1450 = vld [vmem:[%s1421 + $0x70] sm:$0xf]
  %v1451 = vld [vmem:[%s1421 + $0x74] sm:$0xf]
  %v1452 = vld [vmem:[%s1421 + $0x78] sm:$0xf]
  %v1453 = vld [vmem:[%s1421 + $0x7c] sm:$0xf]
  %v1486 = vunpack.c.l.b16 %v1422
  %v1487 = vunpack.c.l.b16 %v1423
  %v1488 = vunpack.c.l.b16 %v1424
  %v1489 = vunpack.c.l.b16 %v1425
  %v1490 = vunpack.c.l.b16 %v1426
  %v1491 = vunpack.c.l.b16 %v1427
  %v1492 = vunpack.c.l.b16 %v1428
  %v1493 = vunpack.c.l.b16 %v1429
  %v1494 = vunpack.c.l.b16 %v1430
  %v1495 = vunpack.c.l.b16 %v1431
  %v1496 = vunpack.c.l.b16 %v1432
  %v1497 = vunpack.c.l.b16 %v1433
  %v1498 = vunpack.c.l.b16 %v1434
  %v1499 = vunpack.c.l.b16 %v1435
  %v1500 = vunpack.c.l.b16 %v1436
  %v1501 = vunpack.c.l.b16 %v1437
  %v1502 = vunpack.c.l.b16 %v1438
  %v1503 = vunpack.c.l.b16 %v1439
  %v1504 = vunpack.c.l.b16 %v1440
  %v1505 = vunpack.c.l.b16 %v1441
  %v1506 = vunpack.c.l.b16 %v1442
  %v1507 = vunpack.c.l.b16 %v1443
  %v1508 = vunpack.c.l.b16 %v1444
  %v1509 = vunpack.c.l.b16 %v1445
  %v1510 = vunpack.c.l.b16 %v1446
  %v1511 = vunpack.c.l.b16 %v1447
  %v1512 = vunpack.c.l.b16 %v1448
  %v1513 = vunpack.c.l.b16 %v1449
  %v1514 = vunpack.c.l.b16 %v1450
  %v1515 = vunpack.c.l.b16 %v1451
  %v1516 = vunpack.c.l.b16 %v1452
  %v1517 = vunpack.c.l.b16 %v1453
  %v1518 = vpack.c.b16 %v1487, %v1486
  %v1519 = vpack.c.b16 %v1489, %v1488
  %v1520 = vpack.c.b16 %v1491, %v1490
  %v1521 = vpack.c.b16 %v1493, %v1492
  %v1522 = vpack.c.b16 %v1495, %v1494
  %v1523 = vpack.c.b16 %v1497, %v1496
  %v1524 = vpack.c.b16 %v1499, %v1498
  %v1525 = vpack.c.b16 %v1501, %v1500
  %v1526 = vpack.c.b16 %v1503, %v1502
  %v1527 = vpack.c.b16 %v1505, %v1504
  %v1528 = vpack.c.b16 %v1507, %v1506
  %v1529 = vpack.c.b16 %v1509, %v1508
  %v1530 = vpack.c.b16 %v1511, %v1510
  %v1531 = vpack.c.b16 %v1513, %v1512
  %v1532 = vpack.c.b16 %v1515, %v1514
  %v1533 = vpack.c.b16 %v1517, %v1516
  %1550 = vmatprep.subr.bf16.mxu0 0
  %1551 = vmatpush1.bf16.msra.mxu0 %v1518
  %1552 = vmatprep.subr.bf16.mxu0 0
  %1553 = vmatpush1.bf16.msra.mxu0 %v1519
  %1554 = vmatprep.subr.bf16.mxu0 0
  %1555 = vmatpush1.bf16.msra.mxu0 %v1520
  %1556 = vmatprep.subr.bf16.mxu0 0
  %1557 = vmatpush1.bf16.msra.mxu0 %v1521
  %1558 = vmatprep.subr.bf16.mxu0 0
  %1559 = vmatpush1.bf16.msra.mxu0 %v1522
  %1560 = vmatprep.subr.bf16.mxu0 0
  %1561 = vmatpush1.bf16.msra.mxu0 %v1523
  %1562 = vmatprep.subr.bf16.mxu0 0
  %1563 = vmatpush1.bf16.msra.mxu0 %v1524
  %1564 = vmatprep.subr.bf16.mxu0 0
  %1565 = vmatpush1.bf16.msra.mxu0 %v1525
  %1566 = vmatprep.subr.bf16.mxu0 0
  %1567 = vmatpush1.bf16.msra.mxu0 %v1526
  %1568 = vmatprep.subr.bf16.mxu0 0
  %1569 = vmatpush1.bf16.msra.mxu0 %v1527
  %1570 = vmatprep.subr.bf16.mxu0 0
  %1571 = vmatpush1.bf16.msra.mxu0 %v1528
  %1572 = vmatprep.subr.bf16.mxu0 0
  %1573 = vmatpush1.bf16.msra.mxu0 %v1529
  %1574 = vmatprep.subr.bf16.mxu0 0
  %1575 = vmatpush1.bf16.msra.mxu0 %v1530
  %1576 = vmatprep.subr.bf16.mxu0 0
  %1577 = vmatpush1.bf16.msra.mxu0 %v1531
  %1578 = vmatprep.subr.bf16.mxu0 0
  %1579 = vmatpush1.bf16.msra.mxu0 %v1532
  %1580 = vmatprep.subr.bf16.mxu0 0
  %1581 = vmatpush1.bf16.msra.mxu0 %v1533
  %1582 = vmatprep.mubr.bf16.mxu0 %v60
  %1583 = vmatmul.mubr.bf16.gmra.mrb[0].mxu0 %v59
  %v1584 = vpop.f32.mrb[0].mxu0
  %v1585 = vadd.f32 0.0, %v1584
  %v1586 = vpop.f32.mrb[0].mxu0
  %v1587 = vpop.f32.mrb[0].mxu0
  %v1588 = vpop.f32.mrb[0].mxu0
  %1589 = vdwg.mxu0
  %1590 = vst.msk [vmem:[#allocation2 + $0x8] sm:$0x1] %vm229, %v1585
  %v1591 = vld [vmem:[%s1] sm:$0xf]
  %v1592 = vld [vmem:[%s1 + $0x4] sm:$0xf]
  %v1593 = vld [vmem:[%s1 + $0x8] sm:$0xf]
  %v1594 = vld [vmem:[%s1 + $0xc] sm:$0xf]
  %v1595 = vld [vmem:[#allocation2] sm:$0xff]
  %v1596 = vld [vmem:[#allocation2 + $0x8] sm:$0x1]
  %v1597 = vpack.c.bf16 %v1596, %v1595
  %v1598 = vld [vmem:[%s2] sm:$0xff]
  %v1599 = vld [vmem:[%s2 + $0x8] sm:$0xff]
  %v1600 = vld [vmem:[%s2 + $0x10] sm:$0xff]
  %v1601 = vld [vmem:[%s2 + $0x18] sm:$0xff]
  %1603 = vset.pattern.permute.xlu0 0
  %1604 = vperm.xlu0 %1603, %v1598
  %v1605 = vpop.permute.xlu0 %1604
  %1608 = vset.pattern.permute.xlu0 0
  %1609 = vperm.xlu0 %1608, %v1599
  %v1610 = vpop.permute.xlu0 %1609
  %1613 = vset.pattern.permute.xlu0 0
  %1614 = vperm.xlu0 %1613, %v1600
  %v1615 = vpop.permute.xlu0 %1614
  %1618 = vset.pattern.permute.xlu0 0
  %1619 = vperm.xlu0 %1618, %v1601
  %v1620 = vpop.permute.xlu0 %1619
  %v1626 = vunpack.c.l.b16 %v1591
  %v1627 = vunpack.c.l.b16 %v1592
  %v1628 = vunpack.c.l.b16 %v1593
  %v1629 = vunpack.c.l.b16 %v1594
  %v1630 = vpack.c.b16 %v1627, %v1626
  %v1631 = vpack.c.b16 %v1629, %v1628
  %vm1632 = vcmask 72704
  %v1634 = vsel %vm1632, %v1630, 0
  %v1637 = vsel %vm1632, %v1631, 0
  %vm1639 = vcmask 1043456
  %vm1640 = vcmask 1044480
  %v1641 = vsel %vm1639, 4294967295, 65535
  %v1642 = vsel %vm1640, %v1641, 0
  %v1644 = vand.u32 %v1597, %v1642
  %1646 = vmatprep.subr.bf16.mxu0 0
  %1647 = vmatpush1.bf16.msra.mxu0 %v1644
  %1648 = vmatprep.subr.bf16.mxu0 0
  %1649 = vmatpush1.bf16.msra.mxu0 0
  %1650 = vmatprep.subr.bf16.mxu0 0
  %1651 = vmatpush1.bf16.msra.mxu0 0
  %1652 = vmatprep.subr.bf16.mxu0 0
  %1653 = vmatpush1.bf16.msra.mxu0 0
  %1654 = vmatprep.subr.bf16.mxu0 0
  %1655 = vmatpush1.bf16.msra.mxu0 0
  %1656 = vmatprep.subr.bf16.mxu0 0
  %1657 = vmatpush1.bf16.msra.mxu0 0
  %1658 = vmatprep.subr.bf16.mxu0 0
  %1659 = vmatpush1.bf16.msra.mxu0 0
  %1660 = vmatprep.subr.bf16.mxu0 0
  %1661 = vmatpush1.bf16.msra.mxu0 0
  %1662 = vmatprep.subr.bf16.mxu0 0
  %1663 = vmatpush1.bf16.msra.mxu0 0
  %1664 = vmatprep.subr.bf16.mxu0 0
  %1665 = vmatpush1.bf16.msra.mxu0 0
  %1666 = vmatprep.subr.bf16.mxu0 0
  %1667 = vmatpush1.bf16.msra.mxu0 0
  %1668 = vmatprep.subr.bf16.mxu0 0
  %1669 = vmatpush1.bf16.msra.mxu0 0
  %1670 = vmatprep.subr.bf16.mxu0 0
  %1671 = vmatpush1.bf16.msra.mxu0 0
  %1672 = vmatprep.subr.bf16.mxu0 0
  %1673 = vmatpush1.bf16.msra.mxu0 0
  %1674 = vmatprep.subr.bf16.mxu0 0
  %1675 = vmatpush1.bf16.msra.mxu0 0
  %1676 = vmatprep.subr.bf16.mxu0 0
  %1677 = vmatpush1.bf16.msra.mxu0 0
  %1678 = vmatprep.mubr.bf16.mxu0 0
  %1679 = vmatmul.mubr.bf16.gmra.mrb[0].mxu0 %v1634
  %v1680 = vpop.f32.mrb[0].mxu0
  %v1681 = vadd.f32 %v1605, %v1680
  %v1682 = vpop.f32.mrb[0].mxu0
  %v1683 = vpop.f32.mrb[0].mxu0
  %v1684 = vadd.f32 %v1610, %v1683
  %v1685 = vpop.f32.mrb[0].mxu0
  %1686 = vmatprep.mubr.bf16.mxu0 0
  %1687 = vmatmul.mubr.bf16.gmra.mrb[0].mxu0 %v1637
  %v1688 = vpop.f32.mrb[0].mxu0
  %v1689 = vadd.f32 %v1615, %v1688
  %v1690 = vpop.f32.mrb[0].mxu0
  %v1691 = vpop.f32.mrb[0].mxu0
  %v1692 = vadd.f32 %v1620, %v1691
  %v1693 = vpop.f32.mrb[0].mxu0
  %1694 = vdwg.mxu0
  %v1695 = vmax.f32 %v1681, 0.0
  %v1696 = vmax.f32 %v1684, 0.0
  %v1697 = vmax.f32 %v1689, 0.0
  %v1698 = vmax.f32 %v1692, 0.0
  %v1699 = vpack.c.bf16 %v1696, %v1695
  %v1700 = vpack.c.bf16 %v1698, %v1697
  %v1701 = vld [vmem:[%s6] sm:$0xf]
  %v1702 = vld [vmem:[%s6 + $0x4] sm:$0xf]
  %v1703 = vld [vmem:[%s6 + $0x8] sm:$0xf]
  %v1704 = vld [vmem:[%s6 + $0xc] sm:$0xf]
  %v1705 = vld [vmem:[%s6 + $0x10] sm:$0xf]
  %v1706 = vld [vmem:[%s6 + $0x14] sm:$0xf]
  %v1707 = vld [vmem:[%s6 + $0x18] sm:$0xf]
  %v1708 = vld [vmem:[%s6 + $0x1c] sm:$0xf]
  %v1717 = vunpack.c.l.b16 %v1701
  %v1718 = vunpack.c.l.b16 %v1702
  %v1719 = vunpack.c.l.b16 %v1703
  %v1720 = vunpack.c.l.b16 %v1704
  %v1721 = vunpack.c.l.b16 %v1705
  %v1722 = vunpack.c.l.b16 %v1706
  %v1723 = vunpack.c.l.b16 %v1707
  %v1724 = vunpack.c.l.b16 %v1708
  %v1725 = vpack.c.b16 %v1718, %v1717
  %v1726 = vpack.c.b16 %v1720, %v1719
  %v1727 = vpack.c.b16 %v1722, %v1721
  %v1728 = vpack.c.b16 %v1724, %v1723
  %vm1733 = vcmask 523264
  %v1735 = vsel %vm1733, %v1699, 0
  %v1738 = vsel %vm1733, %v1700, 0
  %1740 = vmatprep.subr.bf16.mxu0 0
  %1741 = vmatpush1.bf16.msra.mxu0 %v1725
  %1742 = vmatprep.subr.bf16.mxu0 0
  %1743 = vmatpush1.bf16.msra.mxu0 %v1726
  %1744 = vmatprep.subr.bf16.mxu0 0
  %1745 = vmatpush1.bf16.msra.mxu0 %v1727
  %1746 = vmatprep.subr.bf16.mxu0 0
  %1747 = vmatpush1.bf16.msra.mxu0 %v1728
  %1748 = vmatprep.subr.bf16.mxu0 0
  %1749 = vmatpush1.bf16.msra.mxu0 0
  %1750 = vmatprep.subr.bf16.mxu0 0
  %1751 = vmatpush1.bf16.msra.mxu0 0
  %1752 = vmatprep.subr.bf16.mxu0 0
  %1753 = vmatpush1.bf16.msra.mxu0 0
  %1754 = vmatprep.subr.bf16.mxu0 0
  %1755 = vmatpush1.bf16.msra.mxu0 0
  %1756 = vmatprep.subr.bf16.mxu0 0
  %1757 = vmatpush1.bf16.msra.mxu0 0
  %1758 = vmatprep.subr.bf16.mxu0 0
  %1759 = vmatpush1.bf16.msra.mxu0 0
  %1760 = vmatprep.subr.bf16.mxu0 0
  %1761 = vmatpush1.bf16.msra.mxu0 0
  %1762 = vmatprep.subr.bf16.mxu0 0
  %1763 = vmatpush1.bf16.msra.mxu0 0
  %1764 = vmatprep.subr.bf16.mxu0 0
  %1765 = vmatpush1.bf16.msra.mxu0 0
  %1766 = vmatprep.subr.bf16.mxu0 0
  %1767 = vmatpush1.bf16.msra.mxu0 0
  %1768 = vmatprep.subr.bf16.mxu0 0
  %1769 = vmatpush1.bf16.msra.mxu0 0
  %1770 = vmatprep.subr.bf16.mxu0 0
  %1771 = vmatpush1.bf16.msra.mxu0 0
  %1772 = vmatprep.mubr.bf16.mxu0 0
  %1773 = vmatmul.mubr.bf16.gmra.mrb[0].mxu0 %v1735
  %v1774 = vpop.f32.mrb[0].mxu0
  %v1775 = vadd.f32 0.0, %v1774
  %v1776 = vpop.f32.mrb[0].mxu0
  %v1777 = vpop.f32.mrb[0].mxu0
  %v1778 = vadd.f32 0.0, %v1777
  %v1779 = vpop.f32.mrb[0].mxu0
  %1780 = vmatprep.mubr.bf16.mxu0 0
  %1781 = vmatmul.mubr.bf16.gmra.mrb[0].mxu0 %v1738
  %v1782 = vpop.f32.mrb[0].mxu0
  %v1783 = vadd.f32 0.0, %v1782
  %v1784 = vpop.f32.mrb[0].mxu0
  %v1785 = vpop.f32.mrb[0].mxu0
  %v1786 = vadd.f32 0.0, %v1785
  %v1787 = vpop.f32.mrb[0].mxu0
  %1788 = vdwg.mxu0
  %vm1789 = vcmask 130048
  %1790 = vst.msk [vmem:[#allocation3] sm:$0xff] %vm1789, %v1775
  %1791 = vst.msk [vmem:[#allocation3 + $0x8] sm:$0xff] %vm1789, %v1778
  %1792 = vst.msk [vmem:[#allocation3 + $0x10] sm:$0xff] %vm1789, %v1783
  %1793 = vst.msk [vmem:[#allocation3 + $0x18] sm:$0xff] %vm1789, %v1786
  %s1794 = scalar_lea.vmem %s6, 32
  %v1795 = vld [vmem:[%s1794] sm:$0xf]
  %v1796 = vld [vmem:[%s1794 + $0x4] sm:$0xf]
  %v1797 = vld [vmem:[%s1794 + $0x8] sm:$0xf]
  %v1798 = vld [vmem:[%s1794 + $0xc] sm:$0xf]
  %v1799 = vld [vmem:[%s1794 + $0x10] sm:$0xf]
  %v1800 = vld [vmem:[%s1794 + $0x14] sm:$0xf]
  %v1801 = vld [vmem:[%s1794 + $0x18] sm:$0xf]
  %v1802 = vld [vmem:[%s1794 + $0x1c] sm:$0xf]
  %v1811 = vunpack.c.l.b16 %v1795
  %v1812 = vunpack.c.l.b16 %v1796
  %v1813 = vunpack.c.l.b16 %v1797
  %v1814 = vunpack.c.l.b16 %v1798
  %v1815 = vunpack.c.l.b16 %v1799
  %v1816 = vunpack.c.l.b16 %v1800
  %v1817 = vunpack.c.l.b16 %v1801
  %v1818 = vunpack.c.l.b16 %v1802
  %v1819 = vpack.c.b16 %v1812, %v1811
  %v1820 = vpack.c.b16 %v1814, %v1813
  %v1821 = vpack.c.b16 %v1816, %v1815
  %v1822 = vpack.c.b16 %v1818, %v1817
  %1827 = vmatprep.subr.bf16.mxu0 0
  %1828 = vmatpush1.bf16.msra.mxu0 %v1819
  %1829 = vmatprep.subr.bf16.mxu0 0
  %1830 = vmatpush1.bf16.msra.mxu0 %v1820
  %1831 = vmatprep.subr.bf16.mxu0 0
  %1832 = vmatpush1.bf16.msra.mxu0 %v1821
  %1833 = vmatprep.subr.bf16.mxu0 0
  %1834 = vmatpush1.bf16.msra.mxu0 %v1822
  %1835 = vmatprep.subr.bf16.mxu0 0
  %1836 = vmatpush1.bf16.msra.mxu0 0
  %1837 = vmatprep.subr.bf16.mxu0 0
  %1838 = vmatpush1.bf16.msra.mxu0 0
  %1839 = vmatprep.subr.bf16.mxu0 0
  %1840 = vmatpush1.bf16.msra.mxu0 0
  %1841 = vmatprep.subr.bf16.mxu0 0
  %1842 = vmatpush1.bf16.msra.mxu0 0
  %1843 = vmatprep.subr.bf16.mxu0 0
  %1844 = vmatpush1.bf16.msra.mxu0 0
  %1845 = vmatprep.subr.bf16.mxu0 0
  %1846 = vmatpush1.bf16.msra.mxu0 0
  %1847 = vmatprep.subr.bf16.mxu0 0
  %1848 = vmatpush1.bf16.msra.mxu0 0
  %1849 = vmatprep.subr.bf16.mxu0 0
  %1850 = vmatpush1.bf16.msra.mxu0 0
  %1851 = vmatprep.subr.bf16.mxu0 0
  %1852 = vmatpush1.bf16.msra.mxu0 0
  %1853 = vmatprep.subr.bf16.mxu0 0
  %1854 = vmatpush1.bf16.msra.mxu0 0
  %1855 = vmatprep.subr.bf16.mxu0 0
  %1856 = vmatpush1.bf16.msra.mxu0 0
  %1857 = vmatprep.subr.bf16.mxu0 0
  %1858 = vmatpush1.bf16.msra.mxu0 0
  %1859 = vmatprep.mubr.bf16.mxu0 0
  %1860 = vmatmul.mubr.bf16.gmra.mrb[0].mxu0 %v1735
  %v1861 = vpop.f32.mrb[0].mxu0
  %v1862 = vadd.f32 0.0, %v1861
  %v1863 = vpop.f32.mrb[0].mxu0
  %v1864 = vpop.f32.mrb[0].mxu0
  %v1865 = vadd.f32 0.0, %v1864
  %v1866 = vpop.f32.mrb[0].mxu0
  %1867 = vmatprep.mubr.bf16.mxu0 0
  %1868 = vmatmul.mubr.bf16.gmra.mrb[0].mxu0 %v1738
  %v1869 = vpop.f32.mrb[0].mxu0
  %v1870 = vadd.f32 0.0, %v1869
  %v1871 = vpop.f32.mrb[0].mxu0
  %v1872 = vpop.f32.mrb[0].mxu0
  %v1873 = vadd.f32 0.0, %v1872
  %v1874 = vpop.f32.mrb[0].mxu0
  %1875 = vdwg.mxu0
  %1876 = vst.msk [vmem:[#allocation3 + $0x20] sm:$0xff] %vm1789, %v1862
  %1877 = vst.msk [vmem:[#allocation3 + $0x28] sm:$0xff] %vm1789, %v1865
  %1878 = vst.msk [vmem:[#allocation3 + $0x30] sm:$0xff] %vm1789, %v1870
  %1879 = vst.msk [vmem:[#allocation3 + $0x38] sm:$0xff] %vm1789, %v1873
  %s1880 = scalar_lea.vmem %s6, 64
  %v1881 = vld [vmem:[%s1880] sm:$0xf]
  %v1882 = vld [vmem:[%s1880 + $0x4] sm:$0xf]
  %v1883 = vld [vmem:[%s1880 + $0x8] sm:$0xf]
  %v1884 = vld [vmem:[%s1880 + $0xc] sm:$0xf]
  %v1885 = vld [vmem:[%s1880 + $0x10] sm:$0xf]
  %v1886 = vld [vmem:[%s1880 + $0x14] sm:$0xf]
  %v1887 = vld [vmem:[%s1880 + $0x18] sm:$0xf]
  %v1888 = vld [vmem:[%s1880 + $0x1c] sm:$0xf]
  %v1897 = vunpack.c.l.b16 %v1881
  %v1898 = vunpack.c.l.b16 %v1882
  %v1899 = vunpack.c.l.b16 %v1883
  %v1900 = vunpack.c.l.b16 %v1884
  %v1901 = vunpack.c.l.b16 %v1885
  %v1902 = vunpack.c.l.b16 %v1886
  %v1903 = vunpack.c.l.b16 %v1887
  %v1904 = vunpack.c.l.b16 %v1888
  %v1905 = vpack.c.b16 %v1898, %v1897
  %v1906 = vpack.c.b16 %v1900, %v1899
  %v1907 = vpack.c.b16 %v1902, %v1901
  %v1908 = vpack.c.b16 %v1904, %v1903
  %1913 = vmatprep.subr.bf16.mxu0 0
  %1914 = vmatpush1.bf16.msra.mxu0 %v1905
  %1915 = vmatprep.subr.bf16.mxu0 0
  %1916 = vmatpush1.bf16.msra.mxu0 %v1906
  %1917 = vmatprep.subr.bf16.mxu0 0
  %1918 = vmatpush1.bf16.msra.mxu0 %v1907
  %1919 = vmatprep.subr.bf16.mxu0 0
  %1920 = vmatpush1.bf16.msra.mxu0 %v1908
  %1921 = vmatprep.subr.bf16.mxu0 0
  %1922 = vmatpush1.bf16.msra.mxu0 0
  %1923 = vmatprep.subr.bf16.mxu0 0
  %1924 = vmatpush1.bf16.msra.mxu0 0
  %1925 = vmatprep.subr.bf16.mxu0 0
  %1926 = vmatpush1.bf16.msra.mxu0 0
  %1927 = vmatprep.subr.bf16.mxu0 0
  %1928 = vmatpush1.bf16.msra.mxu0 0
  %1929 = vmatprep.subr.bf16.mxu0 0
  %1930 = vmatpush1.bf16.msra.mxu0 0
  %1931 = vmatprep.subr.bf16.mxu0 0
  %1932 = vmatpush1.bf16.msra.mxu0 0
  %1933 = vmatprep.subr.bf16.mxu0 0
  %1934 = vmatpush1.bf16.msra.mxu0 0
  %1935 = vmatprep.subr.bf16.mxu0 0
  %1936 = vmatpush1.bf16.msra.mxu0 0
  %1937 = vmatprep.subr.bf16.mxu0 0
  %1938 = vmatpush1.bf16.msra.mxu0 0
  %1939 = vmatprep.subr.bf16.mxu0 0
  %1940 = vmatpush1.bf16.msra.mxu0 0
  %1941 = vmatprep.subr.bf16.mxu0 0
  %1942 = vmatpush1.bf16.msra.mxu0 0
  %1943 = vmatprep.subr.bf16.mxu0 0
  %1944 = vmatpush1.bf16.msra.mxu0 0
  %1945 = vmatprep.mubr.bf16.mxu0 0
  %1946 = vmatmul.mubr.bf16.gmra.mrb[0].mxu0 %v1735
  %v1947 = vpop.f32.mrb[0].mxu0
  %v1948 = vadd.f32 0.0, %v1947
  %v1949 = vpop.f32.mrb[0].mxu0
  %v1950 = vpop.f32.mrb[0].mxu0
  %v1951 = vadd.f32 0.0, %v1950
  %v1952 = vpop.f32.mrb[0].mxu0
  %1953 = vmatprep.mubr.bf16.mxu0 0
  %1954 = vmatmul.mubr.bf16.gmra.mrb[0].mxu0 %v1738
  %v1955 = vpop.f32.mrb[0].mxu0
  %v1956 = vadd.f32 0.0, %v1955
  %v1957 = vpop.f32.mrb[0].mxu0
  %v1958 = vpop.f32.mrb[0].mxu0
  %v1959 = vadd.f32 0.0, %v1958
  %v1960 = vpop.f32.mrb[0].mxu0
  %1961 = vdwg.mxu0
  %1962 = vst.msk [vmem:[#allocation3 + $0x40] sm:$0xff] %vm1789, %v1948
  %1963 = vst.msk [vmem:[#allocation3 + $0x48] sm:$0xff] %vm1789, %v1951
  %1964 = vst.msk [vmem:[#allocation3 + $0x50] sm:$0xff] %vm1789, %v1956
  %1965 = vst.msk [vmem:[#allocation3 + $0x58] sm:$0xff] %vm1789, %v1959
  %s1966 = scalar_lea.vmem %s6, 96
  %v1967 = vld [vmem:[%s1966] sm:$0xf]
  %v1968 = vld [vmem:[%s1966 + $0x4] sm:$0xf]
  %v1969 = vld [vmem:[%s1966 + $0x8] sm:$0xf]
  %v1970 = vld [vmem:[%s1966 + $0xc] sm:$0xf]
  %v1971 = vld [vmem:[%s1966 + $0x10] sm:$0xf]
  %v1972 = vld [vmem:[%s1966 + $0x14] sm:$0xf]
  %v1973 = vld [vmem:[%s1966 + $0x18] sm:$0xf]
  %v1974 = vld [vmem:[%s1966 + $0x1c] sm:$0xf]
  %v1983 = vunpack.c.l.b16 %v1967
  %v1984 = vunpack.c.l.b16 %v1968
  %v1985 = vunpack.c.l.b16 %v1969
  %v1986 = vunpack.c.l.b16 %v1970
  %v1987 = vunpack.c.l.b16 %v1971
  %v1988 = vunpack.c.l.b16 %v1972
  %v1989 = vunpack.c.l.b16 %v1973
  %v1990 = vunpack.c.l.b16 %v1974
  %v1991 = vpack.c.b16 %v1984, %v1983
  %v1992 = vpack.c.b16 %v1986, %v1985
  %v1993 = vpack.c.b16 %v1988, %v1987
  %v1994 = vpack.c.b16 %v1990, %v1989
  %1999 = vmatprep.subr.bf16.mxu0 0
  %2000 = vmatpush1.bf16.msra.mxu0 %v1991
  %2001 = vmatprep.subr.bf16.mxu0 0
  %2002 = vmatpush1.bf16.msra.mxu0 %v1992
  %2003 = vmatprep.subr.bf16.mxu0 0
  %2004 = vmatpush1.bf16.msra.mxu0 %v1993
  %2005 = vmatprep.subr.bf16.mxu0 0
  %2006 = vmatpush1.bf16.msra.mxu0 %v1994
  %2007 = vmatprep.subr.bf16.mxu0 0
  %2008 = vmatpush1.bf16.msra.mxu0 0
  %2009 = vmatprep.subr.bf16.mxu0 0
  %2010 = vmatpush1.bf16.msra.mxu0 0
  %2011 = vmatprep.subr.bf16.mxu0 0
  %2012 = vmatpush1.bf16.msra.mxu0 0
  %2013 = vmatprep.subr.bf16.mxu0 0
  %2014 = vmatpush1.bf16.msra.mxu0 0
  %2015 = vmatprep.subr.bf16.mxu0 0
  %2016 = vmatpush1.bf16.msra.mxu0 0
  %2017 = vmatprep.subr.bf16.mxu0 0
  %2018 = vmatpush1.bf16.msra.mxu0 0
  %2019 = vmatprep.subr.bf16.mxu0 0
  %2020 = vmatpush1.bf16.msra.mxu0 0
  %2021 = vmatprep.subr.bf16.mxu0 0
  %2022 = vmatpush1.bf16.msra.mxu0 0
  %2023 = vmatprep.subr.bf16.mxu0 0
  %2024 = vmatpush1.bf16.msra.mxu0 0
  %2025 = vmatprep.subr.bf16.mxu0 0
  %2026 = vmatpush1.bf16.msra.mxu0 0
  %2027 = vmatprep.subr.bf16.mxu0 0
  %2028 = vmatpush1.bf16.msra.mxu0 0
  %2029 = vmatprep.subr.bf16.mxu0 0
  %2030 = vmatpush1.bf16.msra.mxu0 0
  %2031 = vmatprep.mubr.bf16.mxu0 0
  %2032 = vmatmul.mubr.bf16.gmra.mrb[0].mxu0 %v1735
  %v2033 = vpop.f32.mrb[0].mxu0
  %v2034 = vadd.f32 0.0, %v2033
  %v2035 = vpop.f32.mrb[0].mxu0
  %v2036 = vpop.f32.mrb[0].mxu0
  %v2037 = vadd.f32 0.0, %v2036
  %v2038 = vpop.f32.mrb[0].mxu0
  %2039 = vmatprep.mubr.bf16.mxu0 0
  %2040 = vmatmul.mubr.bf16.gmra.mrb[0].mxu0 %v1738
  %v2041 = vpop.f32.mrb[0].mxu0
  %v2042 = vadd.f32 0.0, %v2041
  %v2043 = vpop.f32.mrb[0].mxu0
  %v2044 = vpop.f32.mrb[0].mxu0
  %v2045 = vadd.f32 0.0, %v2044
  %v2046 = vpop.f32.mrb[0].mxu0
  %2047 = vdwg.mxu0
  %2048 = vst.msk [vmem:[#allocation3 + $0x60] sm:$0xff] %vm1789, %v2034
  %2049 = vst.msk [vmem:[#allocation3 + $0x68] sm:$0xff] %vm1789, %v2037
  %2050 = vst.msk [vmem:[#allocation3 + $0x70] sm:$0xff] %vm1789, %v2042
  %2051 = vst.msk [vmem:[#allocation3 + $0x78] sm:$0xff] %vm1789, %v2045
  %s2052 = scalar_lea.vmem %s6, 128
  %v2053 = vld [vmem:[%s2052] sm:$0xf]
  %v2054 = vld [vmem:[%s2052 + $0x4] sm:$0xf]
  %v2055 = vld [vmem:[%s2052 + $0x8] sm:$0xf]
  %v2056 = vld [vmem:[%s2052 + $0xc] sm:$0xf]
  %v2057 = vld [vmem:[%s2052 + $0x10] sm:$0xf]
  %v2058 = vld [vmem:[%s2052 + $0x14] sm:$0xf]
  %v2059 = vld [vmem:[%s2052 + $0x18] sm:$0xf]
  %v2060 = vld [vmem:[%s2052 + $0x1c] sm:$0xf]
  %v2069 = vunpack.c.l.b16 %v2053
  %v2070 = vunpack.c.l.b16 %v2054
  %v2071 = vunpack.c.l.b16 %v2055
  %v2072 = vunpack.c.l.b16 %v2056
  %v2073 = vunpack.c.l.b16 %v2057
  %v2074 = vunpack.c.l.b16 %v2058
  %v2075 = vunpack.c.l.b16 %v2059
  %v2076 = vunpack.c.l.b16 %v2060
  %v2077 = vpack.c.b16 %v2070, %v2069
  %v2078 = vpack.c.b16 %v2072, %v2071
  %v2079 = vpack.c.b16 %v2074, %v2073
  %v2080 = vpack.c.b16 %v2076, %v2075
  %2085 = vmatprep.subr.bf16.mxu0 0
  %2086 = vmatpush1.bf16.msra.mxu0 %v2077
  %2087 = vmatprep.subr.bf16.mxu0 0
  %2088 = vmatpush1.bf16.msra.mxu0 %v2078
  %2089 = vmatprep.subr.bf16.mxu0 0
  %2090 = vmatpush1.bf16.msra.mxu0 %v2079
  %2091 = vmatprep.subr.bf16.mxu0 0
  %2092 = vmatpush1.bf16.msra.mxu0 %v2080
  %2093 = vmatprep.subr.bf16.mxu0 0
  %2094 = vmatpush1.bf16.msra.mxu0 0
  %2095 = vmatprep.subr.bf16.mxu0 0
  %2096 = vmatpush1.bf16.msra.mxu0 0
  %2097 = vmatprep.subr.bf16.mxu0 0
  %2098 = vmatpush1.bf16.msra.mxu0 0
  %2099 = vmatprep.subr.bf16.mxu0 0
  %2100 = vmatpush1.bf16.msra.mxu0 0
  %2101 = vmatprep.subr.bf16.mxu0 0
  %2102 = vmatpush1.bf16.msra.mxu0 0
  %2103 = vmatprep.subr.bf16.mxu0 0
  %2104 = vmatpush1.bf16.msra.mxu0 0
  %2105 = vmatprep.subr.bf16.mxu0 0
  %2106 = vmatpush1.bf16.msra.mxu0 0
  %2107 = vmatprep.subr.bf16.mxu0 0
  %2108 = vmatpush1.bf16.msra.mxu0 0
  %2109 = vmatprep.subr.bf16.mxu0 0
  %2110 = vmatpush1.bf16.msra.mxu0 0
  %2111 = vmatprep.subr.bf16.mxu0 0
  %2112 = vmatpush1.bf16.msra.mxu0 0
  %2113 = vmatprep.subr.bf16.mxu0 0
  %2114 = vmatpush1.bf16.msra.mxu0 0
  %2115 = vmatprep.subr.bf16.mxu0 0
  %2116 = vmatpush1.bf16.msra.mxu0 0
  %2117 = vmatprep.mubr.bf16.mxu0 0
  %2118 = vmatmul.mubr.bf16.gmra.mrb[0].mxu0 %v1735
  %v2119 = vpop.f32.mrb[0].mxu0
  %v2120 = vadd.f32 0.0, %v2119
  %v2121 = vpop.f32.mrb[0].mxu0
  %v2122 = vpop.f32.mrb[0].mxu0
  %v2123 = vadd.f32 0.0, %v2122
  %v2124 = vpop.f32.mrb[0].mxu0
  %2125 = vmatprep.mubr.bf16.mxu0 0
  %2126 = vmatmul.mubr.bf16.gmra.mrb[0].mxu0 %v1738
  %v2127 = vpop.f32.mrb[0].mxu0
  %v2128 = vadd.f32 0.0, %v2127
  %v2129 = vpop.f32.mrb[0].mxu0
  %v2130 = vpop.f32.mrb[0].mxu0
  %v2131 = vadd.f32 0.0, %v2130
  %v2132 = vpop.f32.mrb[0].mxu0
  %2133 = vdwg.mxu0
  %2134 = vst.msk [vmem:[#allocation3 + $0x80] sm:$0xff] %vm1789, %v2120
  %2135 = vst.msk [vmem:[#allocation3 + $0x88] sm:$0xff] %vm1789, %v2123
  %2136 = vst.msk [vmem:[#allocation3 + $0x90] sm:$0xff] %vm1789, %v2128
  %2137 = vst.msk [vmem:[#allocation3 + $0x98] sm:$0xff] %vm1789, %v2131
  %s2138 = scalar_lea.vmem %s6, 160
  %v2139 = vld [vmem:[%s2138] sm:$0xf]
  %v2140 = vld [vmem:[%s2138 + $0x4] sm:$0xf]
  %v2141 = vld [vmem:[%s2138 + $0x8] sm:$0xf]
  %v2142 = vld [vmem:[%s2138 + $0xc] sm:$0xf]
  %v2143 = vld [vmem:[%s2138 + $0x10] sm:$0xf]
  %v2144 = vld [vmem:[%s2138 + $0x14] sm:$0xf]
  %v2145 = vld [vmem:[%s2138 + $0x18] sm:$0xf]
  %v2146 = vld [vmem:[%s2138 + $0x1c] sm:$0xf]
  %v2155 = vunpack.c.l.b16 %v2139
  %v2156 = vunpack.c.l.b16 %v2140
  %v2157 = vunpack.c.l.b16 %v2141
  %v2158 = vunpack.c.l.b16 %v2142
  %v2159 = vunpack.c.l.b16 %v2143
  %v2160 = vunpack.c.l.b16 %v2144
  %v2161 = vunpack.c.l.b16 %v2145
  %v2162 = vunpack.c.l.b16 %v2146
  %v2163 = vpack.c.b16 %v2156, %v2155
  %v2164 = vpack.c.b16 %v2158, %v2157
  %v2165 = vpack.c.b16 %v2160, %v2159
  %v2166 = vpack.c.b16 %v2162, %v2161
  %2171 = vmatprep.subr.bf16.mxu0 0
  %2172 = vmatpush1.bf16.msra.mxu0 %v2163
  %2173 = vmatprep.subr.bf16.mxu0 0
  %2174 = vmatpush1.bf16.msra.mxu0 %v2164
  %2175 = vmatprep.subr.bf16.mxu0 0
  %2176 = vmatpush1.bf16.msra.mxu0 %v2165
  %2177 = vmatprep.subr.bf16.mxu0 0
  %2178 = vmatpush1.bf16.msra.mxu0 %v2166
  %2179 = vmatprep.subr.bf16.mxu0 0
  %2180 = vmatpush1.bf16.msra.mxu0 0
  %2181 = vmatprep.subr.bf16.mxu0 0
  %2182 = vmatpush1.bf16.msra.mxu0 0
  %2183 = vmatprep.subr.bf16.mxu0 0
  %2184 = vmatpush1.bf16.msra.mxu0 0
  %2185 = vmatprep.subr.bf16.mxu0 0
  %2186 = vmatpush1.bf16.msra.mxu0 0
  %2187 = vmatprep.subr.bf16.mxu0 0
  %2188 = vmatpush1.bf16.msra.mxu0 0
  %2189 = vmatprep.subr.bf16.mxu0 0
  %2190 = vmatpush1.bf16.msra.mxu0 0
  %2191 = vmatprep.subr.bf16.mxu0 0
  %2192 = vmatpush1.bf16.msra.mxu0 0
  %2193 = vmatprep.subr.bf16.mxu0 0
  %2194 = vmatpush1.bf16.msra.mxu0 0
  %2195 = vmatprep.subr.bf16.mxu0 0
  %2196 = vmatpush1.bf16.msra.mxu0 0
  %2197 = vmatprep.subr.bf16.mxu0 0
  %2198 = vmatpush1.bf16.msra.mxu0 0
  %2199 = vmatprep.subr.bf16.mxu0 0
  %2200 = vmatpush1.bf16.msra.mxu0 0
  %2201 = vmatprep.subr.bf16.mxu0 0
  %2202 = vmatpush1.bf16.msra.mxu0 0
  %2203 = vmatprep.mubr.bf16.mxu0 0
  %2204 = vmatmul.mubr.bf16.gmra.mrb[0].mxu0 %v1735
  %v2205 = vpop.f32.mrb[0].mxu0
  %v2206 = vadd.f32 0.0, %v2205
  %v2207 = vpop.f32.mrb[0].mxu0
  %v2208 = vpop.f32.mrb[0].mxu0
  %v2209 = vadd.f32 0.0, %v2208
  %v2210 = vpop.f32.mrb[0].mxu0
  %2211 = vmatprep.mubr.bf16.mxu0 0
  %2212 = vmatmul.mubr.bf16.gmra.mrb[0].mxu0 %v1738
  %v2213 = vpop.f32.mrb[0].mxu0
  %v2214 = vadd.f32 0.0, %v2213
  %v2215 = vpop.f32.mrb[0].mxu0
  %v2216 = vpop.f32.mrb[0].mxu0
  %v2217 = vadd.f32 0.0, %v2216
  %v2218 = vpop.f32.mrb[0].mxu0
  %2219 = vdwg.mxu0
  %2220 = vst.msk [vmem:[#allocation3 + $0xa0] sm:$0xff] %vm1789, %v2206
  %2221 = vst.msk [vmem:[#allocation3 + $0xa8] sm:$0xff] %vm1789, %v2209
  %2222 = vst.msk [vmem:[#allocation3 + $0xb0] sm:$0xff] %vm1789, %v2214
  %2223 = vst.msk [vmem:[#allocation3 + $0xb8] sm:$0xff] %vm1789, %v2217
  %s2224 = scalar_lea.vmem %s6, 192
  %v2225 = vld [vmem:[%s2224] sm:$0xf]
  %v2226 = vld [vmem:[%s2224 + $0x4] sm:$0xf]
  %v2227 = vld [vmem:[%s2224 + $0x8] sm:$0xf]
  %v2228 = vld [vmem:[%s2224 + $0xc] sm:$0xf]
  %v2229 = vld [vmem:[%s2224 + $0x10] sm:$0xf]
  %v2230 = vld [vmem:[%s2224 + $0x14] sm:$0xf]
  %v2231 = vld [vmem:[%s2224 + $0x18] sm:$0xf]
  %v2232 = vld [vmem:[%s2224 + $0x1c] sm:$0xf]
  %v2241 = vunpack.c.l.b16 %v2225
  %v2242 = vunpack.c.l.b16 %v2226
  %v2243 = vunpack.c.l.b16 %v2227
  %v2244 = vunpack.c.l.b16 %v2228
  %v2245 = vunpack.c.l.b16 %v2229
  %v2246 = vunpack.c.l.b16 %v2230
  %v2247 = vunpack.c.l.b16 %v2231
  %v2248 = vunpack.c.l.b16 %v2232
  %v2249 = vpack.c.b16 %v2242, %v2241
  %v2250 = vpack.c.b16 %v2244, %v2243
  %v2251 = vpack.c.b16 %v2246, %v2245
  %v2252 = vpack.c.b16 %v2248, %v2247
  %2257 = vmatprep.subr.bf16.mxu0 0
  %2258 = vmatpush1.bf16.msra.mxu0 %v2249
  %2259 = vmatprep.subr.bf16.mxu0 0
  %2260 = vmatpush1.bf16.msra.mxu0 %v2250
  %2261 = vmatprep.subr.bf16.mxu0 0
  %2262 = vmatpush1.bf16.msra.mxu0 %v2251
  %2263 = vmatprep.subr.bf16.mxu0 0
  %2264 = vmatpush1.bf16.msra.mxu0 %v2252
  %2265 = vmatprep.subr.bf16.mxu0 0
  %2266 = vmatpush1.bf16.msra.mxu0 0
  %2267 = vmatprep.subr.bf16.mxu0 0
  %2268 = vmatpush1.bf16.msra.mxu0 0
  %2269 = vmatprep.subr.bf16.mxu0 0
  %2270 = vmatpush1.bf16.msra.mxu0 0
  %2271 = vmatprep.subr.bf16.mxu0 0
  %2272 = vmatpush1.bf16.msra.mxu0 0
  %2273 = vmatprep.subr.bf16.mxu0 0
  %2274 = vmatpush1.bf16.msra.mxu0 0
  %2275 = vmatprep.subr.bf16.mxu0 0
  %2276 = vmatpush1.bf16.msra.mxu0 0
  %2277 = vmatprep.subr.bf16.mxu0 0
  %2278 = vmatpush1.bf16.msra.mxu0 0
  %2279 = vmatprep.subr.bf16.mxu0 0
  %2280 = vmatpush1.bf16.msra.mxu0 0
  %2281 = vmatprep.subr.bf16.mxu0 0
  %2282 = vmatpush1.bf16.msra.mxu0 0
  %2283 = vmatprep.subr.bf16.mxu0 0
  %2284 = vmatpush1.bf16.msra.mxu0 0
  %2285 = vmatprep.subr.bf16.mxu0 0
  %2286 = vmatpush1.bf16.msra.mxu0 0
  %2287 = vmatprep.subr.bf16.mxu0 0
  %2288 = vmatpush1.bf16.msra.mxu0 0
  %2289 = vmatprep.mubr.bf16.mxu0 0
  %2290 = vmatmul.mubr.bf16.gmra.mrb[0].mxu0 %v1735
  %v2291 = vpop.f32.mrb[0].mxu0
  %v2292 = vadd.f32 0.0, %v2291
  %v2293 = vpop.f32.mrb[0].mxu0
  %v2294 = vpop.f32.mrb[0].mxu0
  %v2295 = vadd.f32 0.0, %v2294
  %v2296 = vpop.f32.mrb[0].mxu0
  %2297 = vmatprep.mubr.bf16.mxu0 0
  %2298 = vmatmul.mubr.bf16.gmra.mrb[0].mxu0 %v1738
  %v2299 = vpop.f32.mrb[0].mxu0
  %v2300 = vadd.f32 0.0, %v2299
  %v2301 = vpop.f32.mrb[0].mxu0
  %v2302 = vpop.f32.mrb[0].mxu0
  %v2303 = vadd.f32 0.0, %v2302
  %v2304 = vpop.f32.mrb[0].mxu0
  %2305 = vdwg.mxu0
  %2306 = vst.msk [vmem:[#allocation3 + $0xc0] sm:$0xff] %vm1789, %v2292
  %2307 = vst.msk [vmem:[#allocation3 + $0xc8] sm:$0xff] %vm1789, %v2295
  %2308 = vst.msk [vmem:[#allocation3 + $0xd0] sm:$0xff] %vm1789, %v2300
  %2309 = vst.msk [vmem:[#allocation3 + $0xd8] sm:$0xff] %vm1789, %v2303
  %s2310 = scalar_lea.vmem %s6, 224
  %v2311 = vld [vmem:[%s2310] sm:$0xf]
  %v2312 = vld [vmem:[%s2310 + $0x4] sm:$0xf]
  %v2313 = vld [vmem:[%s2310 + $0x8] sm:$0xf]
  %v2314 = vld [vmem:[%s2310 + $0xc] sm:$0xf]
  %v2315 = vld [vmem:[%s2310 + $0x10] sm:$0xf]
  %v2316 = vld [vmem:[%s2310 + $0x14] sm:$0xf]
  %v2317 = vld [vmem:[%s2310 + $0x18] sm:$0xf]
  %v2318 = vld [vmem:[%s2310 + $0x1c] sm:$0xf]
  %v2327 = vunpack.c.l.b16 %v2311
  %v2328 = vunpack.c.l.b16 %v2312
  %v2329 = vunpack.c.l.b16 %v2313
  %v2330 = vunpack.c.l.b16 %v2314
  %v2331 = vunpack.c.l.b16 %v2315
  %v2332 = vunpack.c.l.b16 %v2316
  %v2333 = vunpack.c.l.b16 %v2317
  %v2334 = vunpack.c.l.b16 %v2318
  %v2335 = vpack.c.b16 %v2328, %v2327
  %v2336 = vpack.c.b16 %v2330, %v2329
  %v2337 = vpack.c.b16 %v2332, %v2331
  %v2338 = vpack.c.b16 %v2334, %v2333
  %2343 = vmatprep.subr.bf16.mxu0 0
  %2344 = vmatpush1.bf16.msra.mxu0 %v2335
  %2345 = vmatprep.subr.bf16.mxu0 0
  %2346 = vmatpush1.bf16.msra.mxu0 %v2336
  %2347 = vmatprep.subr.bf16.mxu0 0
  %2348 = vmatpush1.bf16.msra.mxu0 %v2337
  %2349 = vmatprep.subr.bf16.mxu0 0
  %2350 = vmatpush1.bf16.msra.mxu0 %v2338
  %2351 = vmatprep.subr.bf16.mxu0 0
  %2352 = vmatpush1.bf16.msra.mxu0 0
  %2353 = vmatprep.subr.bf16.mxu0 0
  %2354 = vmatpush1.bf16.msra.mxu0 0
  %2355 = vmatprep.subr.bf16.mxu0 0
  %2356 = vmatpush1.bf16.msra.mxu0 0
  %2357 = vmatprep.subr.bf16.mxu0 0
  %2358 = vmatpush1.bf16.msra.mxu0 0
  %2359 = vmatprep.subr.bf16.mxu0 0
  %2360 = vmatpush1.bf16.msra.mxu0 0
  %2361 = vmatprep.subr.bf16.mxu0 0
  %2362 = vmatpush1.bf16.msra.mxu0 0
  %2363 = vmatprep.subr.bf16.mxu0 0
  %2364 = vmatpush1.bf16.msra.mxu0 0
  %2365 = vmatprep.subr.bf16.mxu0 0
  %2366 = vmatpush1.bf16.msra.mxu0 0
  %2367 = vmatprep.subr.bf16.mxu0 0
  %2368 = vmatpush1.bf16.msra.mxu0 0
  %2369 = vmatprep.subr.bf16.mxu0 0
  %2370 = vmatpush1.bf16.msra.mxu0 0
  %2371 = vmatprep.subr.bf16.mxu0 0
  %2372 = vmatpush1.bf16.msra.mxu0 0
  %2373 = vmatprep.subr.bf16.mxu0 0
  %2374 = vmatpush1.bf16.msra.mxu0 0
  %2375 = vmatprep.mubr.bf16.mxu0 0
  %2376 = vmatmul.mubr.bf16.gmra.mrb[0].mxu0 %v1735
  %v2377 = vpop.f32.mrb[0].mxu0
  %v2378 = vadd.f32 0.0, %v2377
  %v2379 = vpop.f32.mrb[0].mxu0
  %v2380 = vpop.f32.mrb[0].mxu0
  %v2381 = vadd.f32 0.0, %v2380
  %v2382 = vpop.f32.mrb[0].mxu0
  %2383 = vmatprep.mubr.bf16.mxu0 0
  %2384 = vmatmul.mubr.bf16.gmra.mrb[0].mxu0 %v1738
  %v2385 = vpop.f32.mrb[0].mxu0
  %v2386 = vadd.f32 0.0, %v2385
  %v2387 = vpop.f32.mrb[0].mxu0
  %v2388 = vpop.f32.mrb[0].mxu0
  %v2389 = vadd.f32 0.0, %v2388
  %v2390 = vpop.f32.mrb[0].mxu0
  %2391 = vdwg.mxu0
  %2392 = vst.msk [vmem:[#allocation3 + $0xe0] sm:$0xff] %vm1789, %v2378
  %2393 = vst.msk [vmem:[#allocation3 + $0xe8] sm:$0xff] %vm1789, %v2381
  %2394 = vst.msk [vmem:[#allocation3 + $0xf0] sm:$0xff] %vm1789, %v2386
  %2395 = vst.msk [vmem:[#allocation3 + $0xf8] sm:$0xff] %vm1789, %v2389
  %s2396 = scalar_lea.vmem %s6, 256
  %v2397 = vld [vmem:[%s2396] sm:$0xf]
  %v2398 = vld [vmem:[%s2396 + $0x4] sm:$0xf]
  %v2399 = vld [vmem:[%s2396 + $0x8] sm:$0xf]
  %v2400 = vld [vmem:[%s2396 + $0xc] sm:$0xf]
  %v2401 = vld [vmem:[%s2396 + $0x10] sm:$0xf]
  %v2402 = vld [vmem:[%s2396 + $0x14] sm:$0xf]
  %v2403 = vld [vmem:[%s2396 + $0x18] sm:$0xf]
  %v2404 = vld [vmem:[%s2396 + $0x1c] sm:$0xf]
  %v2413 = vunpack.c.l.b16 %v2397
  %v2414 = vunpack.c.l.b16 %v2398
  %v2415 = vunpack.c.l.b16 %v2399
  %v2416 = vunpack.c.l.b16 %v2400
  %v2417 = vunpack.c.l.b16 %v2401
  %v2418 = vunpack.c.l.b16 %v2402
  %v2419 = vunpack.c.l.b16 %v2403
  %v2420 = vunpack.c.l.b16 %v2404
  %v2421 = vpack.c.b16 %v2414, %v2413
  %v2422 = vpack.c.b16 %v2416, %v2415
  %v2423 = vpack.c.b16 %v2418, %v2417
  %v2424 = vpack.c.b16 %v2420, %v2419
  %2429 = vmatprep.subr.bf16.mxu0 0
  %2430 = vmatpush1.bf16.msra.mxu0 %v2421
  %2431 = vmatprep.subr.bf16.mxu0 0
  %2432 = vmatpush1.bf16.msra.mxu0 %v2422
  %2433 = vmatprep.subr.bf16.mxu0 0
  %2434 = vmatpush1.bf16.msra.mxu0 %v2423
  %2435 = vmatprep.subr.bf16.mxu0 0
  %2436 = vmatpush1.bf16.msra.mxu0 %v2424
  %2437 = vmatprep.subr.bf16.mxu0 0
  %2438 = vmatpush1.bf16.msra.mxu0 0
  %2439 = vmatprep.subr.bf16.mxu0 0
  %2440 = vmatpush1.bf16.msra.mxu0 0
  %2441 = vmatprep.subr.bf16.mxu0 0
  %2442 = vmatpush1.bf16.msra.mxu0 0
  %2443 = vmatprep.subr.bf16.mxu0 0
  %2444 = vmatpush1.bf16.msra.mxu0 0
  %2445 = vmatprep.subr.bf16.mxu0 0
  %2446 = vmatpush1.bf16.msra.mxu0 0
  %2447 = vmatprep.subr.bf16.mxu0 0
  %2448 = vmatpush1.bf16.msra.mxu0 0
  %2449 = vmatprep.subr.bf16.mxu0 0
  %2450 = vmatpush1.bf16.msra.mxu0 0
  %2451 = vmatprep.subr.bf16.mxu0 0
  %2452 = vmatpush1.bf16.msra.mxu0 0
  %2453 = vmatprep.subr.bf16.mxu0 0
  %2454 = vmatpush1.bf16.msra.mxu0 0
  %2455 = vmatprep.subr.bf16.mxu0 0
  %2456 = vmatpush1.bf16.msra.mxu0 0
  %2457 = vmatprep.subr.bf16.mxu0 0
  %2458 = vmatpush1.bf16.msra.mxu0 0
  %2459 = vmatprep.subr.bf16.mxu0 0
  %2460 = vmatpush1.bf16.msra.mxu0 0
  %2461 = vmatprep.mubr.bf16.mxu0 0
  %2462 = vmatmul.mubr.bf16.gmra.mrb[0].mxu0 %v1735
  %v2463 = vpop.f32.mrb[0].mxu0
  %v2464 = vadd.f32 0.0, %v2463
  %v2465 = vpop.f32.mrb[0].mxu0
  %v2466 = vpop.f32.mrb[0].mxu0
  %v2467 = vadd.f32 0.0, %v2466
  %v2468 = vpop.f32.mrb[0].mxu0
  %2469 = vmatprep.mubr.bf16.mxu0 0
  %2470 = vmatmul.mubr.bf16.gmra.mrb[0].mxu0 %v1738
  %v2471 = vpop.f32.mrb[0].mxu0
  %v2472 = vadd.f32 0.0, %v2471
  %v2473 = vpop.f32.mrb[0].mxu0
  %v2474 = vpop.f32.mrb[0].mxu0
  %v2475 = vadd.f32 0.0, %v2474
  %v2476 = vpop.f32.mrb[0].mxu0
  %2477 = vdwg.mxu0
  %2478 = vst.msk [vmem:[#allocation3 + $0x100] sm:$0xff] %vm1789, %v2464
  %2479 = vst.msk [vmem:[#allocation3 + $0x108] sm:$0xff] %vm1789, %v2467
  %2480 = vst.msk [vmem:[#allocation3 + $0x110] sm:$0xff] %vm1789, %v2472
  %2481 = vst.msk [vmem:[#allocation3 + $0x118] sm:$0xff] %vm1789, %v2475
  %v2482 = vld [vmem:[%s4] sm:$0xff]
  %v2483 = vld [vmem:[%s4 + $0x8] sm:$0xf]
  %v2484 = vld [vmem:[%s4 + $0xc] sm:$0xff]
  %v2485 = vld [vmem:[%s4 + $0x14] sm:$0xf]
  %v2486 = vld [vmem:[%s4 + $0x18] sm:$0xff]
  %v2487 = vld [vmem:[%s4 + $0x20] sm:$0xf]
  %v2488 = vld [vmem:[%s4 + $0x24] sm:$0xff]
  %v2489 = vld [vmem:[%s4 + $0x2c] sm:$0xf]
  %v2490 = vld [vmem:[%s4 + $0x30] sm:$0xff]
  %v2491 = vld [vmem:[%s4 + $0x38] sm:$0xf]
  %v2492 = vld [vmem:[%s4 + $0x3c] sm:$0xff]
  %v2493 = vld [vmem:[%s4 + $0x44] sm:$0xf]
  %v2494 = vld [vmem:[%s4 + $0x48] sm:$0xff]
  %v2495 = vld [vmem:[%s4 + $0x50] sm:$0xf]
  %v2496 = vld [vmem:[%s4 + $0x54] sm:$0xff]
  %v2497 = vld [vmem:[%s4 + $0x5c] sm:$0xf]
  %v2498 = vld [vmem:[#allocation3] sm:$0xff]
  %v2499 = vld [vmem:[#allocation3 + $0x8] sm:$0xff]
  %v2500 = vld [vmem:[#allocation3 + $0x10] sm:$0xff]
  %v2501 = vld [vmem:[#allocation3 + $0x18] sm:$0xff]
  %v2502 = vld [vmem:[#allocation3 + $0x20] sm:$0xff]
  %v2503 = vld [vmem:[#allocation3 + $0x28] sm:$0xff]
  %v2504 = vld [vmem:[#allocation3 + $0x30] sm:$0xff]
  %v2505 = vld [vmem:[#allocation3 + $0x38] sm:$0xff]
  %v2506 = vld [vmem:[#allocation3 + $0x40] sm:$0xff]
  %v2507 = vld [vmem:[#allocation3 + $0x48] sm:$0xff]
  %v2508 = vld [vmem:[#allocation3 + $0x50] sm:$0xff]
  %v2509 = vld [vmem:[#allocation3 + $0x58] sm:$0xff]
  %v2510 = vld [vmem:[#allocation3 + $0x60] sm:$0xff]
  %v2511 = vld [vmem:[#allocation3 + $0x68] sm:$0xff]
  %v2512 = vld [vmem:[#allocation3 + $0x70] sm:$0xff]
  %v2513 = vld [vmem:[#allocation3 + $0x78] sm:$0xff]
  %v2514 = vld [vmem:[#allocation3 + $0x80] sm:$0xff]
  %v2515 = vld [vmem:[#allocation3 + $0x88] sm:$0xff]
  %v2516 = vld [vmem:[#allocation3 + $0x90] sm:$0xff]
  %v2517 = vld [vmem:[#allocation3 + $0x98] sm:$0xff]
  %v2518 = vld [vmem:[#allocation3 + $0xa0] sm:$0xff]
  %v2519 = vld [vmem:[#allocation3 + $0xa8] sm:$0xff]
  %v2520 = vld [vmem:[#allocation3 + $0xb0] sm:$0xff]
  %v2521 = vld [vmem:[#allocation3 + $0xb8] sm:$0xff]
  %v2522 = vld [vmem:[#allocation3 + $0xc0] sm:$0xff]
  %v2523 = vld [vmem:[#allocation3 + $0xc8] sm:$0xff]
  %v2524 = vld [vmem:[#allocation3 + $0xd0] sm:$0xff]
  %v2525 = vld [vmem:[#allocation3 + $0xd8] sm:$0xff]
  %v2526 = vld [vmem:[#allocation3 + $0xe0] sm:$0xff]
  %v2527 = vld [vmem:[#allocation3 + $0xe8] sm:$0xff]
  %v2528 = vld [vmem:[#allocation3 + $0xf0] sm:$0xff]
  %v2529 = vld [vmem:[#allocation3 + $0xf8] sm:$0xff]
  %v2530 = vld [vmem:[#allocation3 + $0x100] sm:$0xff]
  %v2531 = vld [vmem:[#allocation3 + $0x108] sm:$0xff]
  %v2532 = vld [vmem:[#allocation3 + $0x110] sm:$0xff]
  %v2533 = vld [vmem:[#allocation3 + $0x118] sm:$0xff]
  %v2534 = vpack.c.bf16 %v2499, %v2498
  %v2535 = vpack.c.bf16 %v2501, %v2500
  %v2536 = vpack.c.bf16 %v2503, %v2502
  %v2537 = vpack.c.bf16 %v2505, %v2504
  %v2538 = vpack.c.bf16 %v2507, %v2506
  %v2539 = vpack.c.bf16 %v2509, %v2508
  %v2540 = vpack.c.bf16 %v2511, %v2510
  %v2541 = vpack.c.bf16 %v2513, %v2512
  %v2542 = vpack.c.bf16 %v2515, %v2514
  %v2543 = vpack.c.bf16 %v2517, %v2516
  %v2544 = vpack.c.bf16 %v2519, %v2518
  %v2545 = vpack.c.bf16 %v2521, %v2520
  %v2546 = vpack.c.bf16 %v2523, %v2522
  %v2547 = vpack.c.bf16 %v2525, %v2524
  %v2548 = vpack.c.bf16 %v2527, %v2526
  %v2549 = vpack.c.bf16 %v2529, %v2528
  %v2550 = vpack.c.bf16 %v2531, %v2530
  %v2551 = vpack.c.bf16 %v2533, %v2532
  %v2552 = vld [vmem:[%s5] sm:$0xff]
  %v2553 = vld [vmem:[%s5 + $0x8] sm:$0xff]
  %v2554 = vld [vmem:[%s5 + $0x10] sm:$0xff]
  %v2555 = vld [vmem:[%s5 + $0x18] sm:$0xff]
  %v2556 = vld [vmem:[%s5 + $0x20] sm:$0xff]
  %v2557 = vld [vmem:[%s5 + $0x28] sm:$0xff]
  %v2558 = vld [vmem:[%s5 + $0x30] sm:$0xff]
  %v2559 = vld [vmem:[%s5 + $0x38] sm:$0xff]
  %2561 = vset.pattern.permute.xlu0 0
  %2562 = vperm.xlu0 %2561, %v2552
  %v2563 = vpop.permute.xlu0 %2562
  %2566 = vset.pattern.permute.xlu0 0
  %2567 = vperm.xlu0 %2566, %v2553
  %v2568 = vpop.permute.xlu0 %2567
  %2571 = vset.pattern.permute.xlu0 0
  %2572 = vperm.xlu0 %2571, %v2554
  %v2573 = vpop.permute.xlu0 %2572
  %2576 = vset.pattern.permute.xlu0 0
  %2577 = vperm.xlu0 %2576, %v2555
  %v2578 = vpop.permute.xlu0 %2577
  %2581 = vset.pattern.permute.xlu0 0
  %2582 = vperm.xlu0 %2581, %v2556
  %v2583 = vpop.permute.xlu0 %2582
  %2586 = vset.pattern.permute.xlu0 0
  %2587 = vperm.xlu0 %2586, %v2557
  %v2588 = vpop.permute.xlu0 %2587
  %2591 = vset.pattern.permute.xlu0 0
  %2592 = vperm.xlu0 %2591, %v2558
  %v2593 = vpop.permute.xlu0 %2592
  %2596 = vset.pattern.permute.xlu0 0
  %2597 = vperm.xlu0 %2596, %v2559
  %v2598 = vpop.permute.xlu0 %2597
  %v2616 = vunpack.c.l.b16 %v2482
  %v2617 = vunpack.c.h.b16 %v2482
  %v2618 = vunpack.c.l.b16 %v2483
  %v2619 = vunpack.c.l.b16 %v2484
  %v2620 = vunpack.c.h.b16 %v2484
  %v2621 = vunpack.c.l.b16 %v2485
  %v2622 = vunpack.c.l.b16 %v2486
  %v2623 = vunpack.c.h.b16 %v2486
  %v2624 = vunpack.c.l.b16 %v2487
  %v2625 = vunpack.c.l.b16 %v2488
  %v2626 = vunpack.c.h.b16 %v2488
  %v2627 = vunpack.c.l.b16 %v2489
  %v2628 = vunpack.c.l.b16 %v2490
  %v2629 = vunpack.c.h.b16 %v2490
  %v2630 = vunpack.c.l.b16 %v2491
  %v2631 = vunpack.c.l.b16 %v2492
  %v2632 = vunpack.c.h.b16 %v2492
  %v2633 = vunpack.c.l.b16 %v2493
  %v2634 = vunpack.c.l.b16 %v2494
  %v2635 = vunpack.c.h.b16 %v2494
  %v2636 = vunpack.c.l.b16 %v2495
  %v2637 = vunpack.c.l.b16 %v2496
  %v2638 = vunpack.c.h.b16 %v2496
  %v2639 = vunpack.c.l.b16 %v2497
  %v2640 = vpack.c.b16 %v2619, %v2616
  %v2641 = vpack.c.b16 %v2620, %v2617
  %v2642 = vpack.c.b16 %v2621, %v2618
  %v2643 = vpack.c.b16 %v2625, %v2622
  %v2644 = vpack.c.b16 %v2626, %v2623
  %v2645 = vpack.c.b16 %v2627, %v2624
  %v2646 = vpack.c.b16 %v2631, %v2628
  %v2647 = vpack.c.b16 %v2632, %v2629
  %v2648 = vpack.c.b16 %v2633, %v2630
  %v2649 = vpack.c.b16 %v2637, %v2634
  %v2650 = vpack.c.b16 %v2638, %v2635
  %v2651 = vpack.c.b16 %v2639, %v2636
  %vm2660 = vcmask 261120
  %v2662 = vsel %vm2660, %v2642, 0
  %v2665 = vsel %vm2660, %v2645, 0
  %v2668 = vsel %vm2660, %v2648, 0
  %v2671 = vsel %vm2660, %v2651, 0
  %2673 = vmatprep.subr.bf16.mxu0 0
  %2674 = vmatpush1.bf16.msra.mxu0 %v2534
  %2675 = vmatprep.subr.bf16.mxu0 0
  %2676 = vmatpush1.bf16.msra.mxu0 %v2535
  %2677 = vmatprep.subr.bf16.mxu0 0
  %2678 = vmatpush1.bf16.msra.mxu0 %v2536
  %2679 = vmatprep.subr.bf16.mxu0 0
  %2680 = vmatpush1.bf16.msra.mxu0 %v2537
  %2681 = vmatprep.subr.bf16.mxu0 0
  %2682 = vmatpush1.bf16.msra.mxu0 %v2538
  %2683 = vmatprep.subr.bf16.mxu0 0
  %2684 = vmatpush1.bf16.msra.mxu0 %v2539
  %2685 = vmatprep.subr.bf16.mxu0 0
  %2686 = vmatpush1.bf16.msra.mxu0 %v2540
  %2687 = vmatprep.subr.bf16.mxu0 0
  %2688 = vmatpush1.bf16.msra.mxu0 %v2541
  %2689 = vmatprep.subr.bf16.mxu0 0
  %2690 = vmatpush1.bf16.msra.mxu0 %v2542
  %2691 = vmatprep.subr.bf16.mxu0 0
  %2692 = vmatpush1.bf16.msra.mxu0 %v2543
  %2693 = vmatprep.subr.bf16.mxu0 0
  %2694 = vmatpush1.bf16.msra.mxu0 %v2544
  %2695 = vmatprep.subr.bf16.mxu0 0
  %2696 = vmatpush1.bf16.msra.mxu0 %v2545
  %2697 = vmatprep.subr.bf16.mxu0 0
  %2698 = vmatpush1.bf16.msra.mxu0 %v2546
  %2699 = vmatprep.subr.bf16.mxu0 0
  %2700 = vmatpush1.bf16.msra.mxu0 %v2547
  %2701 = vmatprep.subr.bf16.mxu0 0
  %2702 = vmatpush1.bf16.msra.mxu0 %v2548
  %2703 = vmatprep.subr.bf16.mxu0 0
  %2704 = vmatpush1.bf16.msra.mxu0 %v2549
  %2705 = vmatprep.mubr.bf16.mxu0 %v2641
  %2706 = vmatmul.mubr.bf16.gmra.mrb[0].mxu0 %v2640
  %v2707 = vpop.f32.mrb[0].mxu0
  %v2708 = vadd.f32 %v2563, %v2707
  %v2709 = vpop.f32.mrb[0].mxu0
  %v2710 = vpop.f32.mrb[0].mxu0
  %v2711 = vadd.f32 %v2568, %v2710
  %v2712 = vpop.f32.mrb[0].mxu0
  %2713 = vmatprep.mubr.bf16.mxu0 %v2644
  %2714 = vmatmul.mubr.bf16.gmra.mrb[0].mxu0 %v2643
  %v2715 = vpop.f32.mrb[0].mxu0
  %v2716 = vadd.f32 %v2573, %v2715
  %v2717 = vpop.f32.mrb[0].mxu0
  %v2718 = vpop.f32.mrb[0].mxu0
  %v2719 = vadd.f32 %v2578, %v2718
  %v2720 = vpop.f32.mrb[0].mxu0
  %2721 = vmatprep.mubr.bf16.mxu0 %v2647
  %2722 = vmatmul.mubr.bf16.gmra.mrb[0].mxu0 %v2646
  %v2723 = vpop.f32.mrb[0].mxu0
  %v2724 = vadd.f32 %v2583, %v2723
  %v2725 = vpop.f32.mrb[0].mxu0
  %v2726 = vpop.f32.mrb[0].mxu0
  %v2727 = vadd.f32 %v2588, %v2726
  %v2728 = vpop.f32.mrb[0].mxu0
  %2729 = vmatprep.mubr.bf16.mxu0 %v2650
  %2730 = vmatmul.mubr.bf16.gmra.mrb[0].mxu0 %v2649
  %v2731 = vpop.f32.mrb[0].mxu0
  %v2732 = vadd.f32 %v2593, %v2731
  %v2733 = vpop.f32.mrb[0].mxu0
  %v2734 = vpop.f32.mrb[0].mxu0
  %v2735 = vadd.f32 %v2598, %v2734
  %v2736 = vpop.f32.mrb[0].mxu0
  %2737 = vdwg.mxu0
  %2738 = vmatprep.subr.bf16.mxu0 0
  %2739 = vmatpush1.bf16.msra.mxu0 %v2550
  %2740 = vmatprep.subr.bf16.mxu0 0
  %2741 = vmatpush1.bf16.msra.mxu0 %v2551
  %2742 = vmatprep.subr.bf16.mxu0 0
  %2743 = vmatpush1.bf16.msra.mxu0 0
  %2744 = vmatprep.subr.bf16.mxu0 0
  %2745 = vmatpush1.bf16.msra.mxu0 0
  %2746 = vmatprep.subr.bf16.mxu0 0
  %2747 = vmatpush1.bf16.msra.mxu0 0
  %2748 = vmatprep.subr.bf16.mxu0 0
  %2749 = vmatpush1.bf16.msra.mxu0 0
  %2750 = vmatprep.subr.bf16.mxu0 0
  %2751 = vmatpush1.bf16.msra.mxu0 0
  %2752 = vmatprep.subr.bf16.mxu0 0
  %2753 = vmatpush1.bf16.msra.mxu0 0
  %2754 = vmatprep.subr.bf16.mxu0 0
  %2755 = vmatpush1.bf16.msra.mxu0 0
  %2756 = vmatprep.subr.bf16.mxu0 0
  %2757 = vmatpush1.bf16.msra.mxu0 0
  %2758 = vmatprep.subr.bf16.mxu0 0
  %2759 = vmatpush1.bf16.msra.mxu0 0
  %2760 = vmatprep.subr.bf16.mxu0 0
  %2761 = vmatpush1.bf16.msra.mxu0 0
  %2762 = vmatprep.subr.bf16.mxu0 0
  %2763 = vmatpush1.bf16.msra.mxu0 0
  %2764 = vmatprep.subr.bf16.mxu0 0
  %2765 = vmatpush1.bf16.msra.mxu0 0
  %2766 = vmatprep.subr.bf16.mxu0 0
  %2767 = vmatpush1.bf16.msra.mxu0 0
  %2768 = vmatprep.subr.bf16.mxu0 0
  %2769 = vmatpush1.bf16.msra.mxu0 0
  %2770 = vmatprep.mubr.bf16.mxu0 0
  %2771 = vmatmul.mubr.bf16.gmra.mrb[0].mxu0 %v2662
  %v2772 = vpop.f32.mrb[0].mxu0
  %v2773 = vadd.f32 %v2708, %v2772
  %v2774 = vpop.f32.mrb[0].mxu0
  %v2775 = vpop.f32.mrb[0].mxu0
  %v2776 = vadd.f32 %v2711, %v2775
  %v2777 = vpop.f32.mrb[0].mxu0
  %2778 = vmatprep.mubr.bf16.mxu0 0
  %2779 = vmatmul.mubr.bf16.gmra.mrb[0].mxu0 %v2665
  %v2780 = vpop.f32.mrb[0].mxu0
  %v2781 = vadd.f32 %v2716, %v2780
  %v2782 = vpop.f32.mrb[0].mxu0
  %v2783 = vpop.f32.mrb[0].mxu0
  %v2784 = vadd.f32 %v2719, %v2783
  %v2785 = vpop.f32.mrb[0].mxu0
  %2786 = vmatprep.mubr.bf16.mxu0 0
  %2787 = vmatmul.mubr.bf16.gmra.mrb[0].mxu0 %v2668
  %v2788 = vpop.f32.mrb[0].mxu0
  %v2789 = vadd.f32 %v2724, %v2788
  %v2790 = vpop.f32.mrb[0].mxu0
  %v2791 = vpop.f32.mrb[0].mxu0
  %v2792 = vadd.f32 %v2727, %v2791
  %v2793 = vpop.f32.mrb[0].mxu0
  %2794 = vmatprep.mubr.bf16.mxu0 0
  %2795 = vmatmul.mubr.bf16.gmra.mrb[0].mxu0 %v2671
  %v2796 = vpop.f32.mrb[0].mxu0
  %v2797 = vadd.f32 %v2732, %v2796
  %v2798 = vpop.f32.mrb[0].mxu0
  %v2799 = vpop.f32.mrb[0].mxu0
  %v2800 = vadd.f32 %v2735, %v2799
  %v2801 = vpop.f32.mrb[0].mxu0
  %2802 = vdwg.mxu0
  %v2803 = vmax.f32 %v2773, 0.0
  %v2804 = vmax.f32 %v2776, 0.0
  %v2805 = vmax.f32 %v2781, 0.0
  %v2806 = vmax.f32 %v2784, 0.0
  %v2807 = vmax.f32 %v2789, 0.0
  %v2808 = vmax.f32 %v2792, 0.0
  %v2809 = vmax.f32 %v2797, 0.0
  %v2810 = vmax.f32 %v2800, 0.0
  %v2811 = vpack.c.bf16 %v2804, %v2803
  %v2812 = vpack.c.bf16 %v2806, %v2805
  %v2813 = vpack.c.bf16 %v2808, %v2807
  %v2814 = vpack.c.bf16 %v2810, %v2809
  %v2815 = vld [vmem:[%s9] sm:$0xf]
  %v2816 = vld [vmem:[%s9 + $0x4] sm:$0xf]
  %v2819 = vunpack.c.l.b16 %v2815
  %v2820 = vunpack.c.l.b16 %v2816
  %v2821 = vpack.c.b16 %v2820, %v2819
  %v2824 = vsel %vm1789, %v2811, 0
  %v2827 = vsel %vm1789, %v2812, 0
  %v2830 = vsel %vm1789, %v2813, 0
  %v2833 = vsel %vm1789, %v2814, 0
  %2835 = vmatprep.subr.bf16.mxu0 0
  %2836 = vmatpush1.bf16.msra.mxu0 %v2821
  %2837 = vmatprep.subr.bf16.mxu0 0
  %2838 = vmatpush1.bf16.msra.mxu0 0
  %2839 = vmatprep.subr.bf16.mxu0 0
  %2840 = vmatpush1.bf16.msra.mxu0 0
  %2841 = vmatprep.subr.bf16.mxu0 0
  %2842 = vmatpush1.bf16.msra.mxu0 0
  %2843 = vmatprep.subr.bf16.mxu0 0
  %2844 = vmatpush1.bf16.msra.mxu0 0
  %2845 = vmatprep.subr.bf16.mxu0 0
  %2846 = vmatpush1.bf16.msra.mxu0 0
  %2847 = vmatprep.subr.bf16.mxu0 0
  %2848 = vmatpush1.bf16.msra.mxu0 0
  %2849 = vmatprep.subr.bf16.mxu0 0
  %2850 = vmatpush1.bf16.msra.mxu0 0
  %2851 = vmatprep.subr.bf16.mxu0 0
  %2852 = vmatpush1.bf16.msra.mxu0 0
  %2853 = vmatprep.subr.bf16.mxu0 0
  %2854 = vmatpush1.bf16.msra.mxu0 0
  %2855 = vmatprep.subr.bf16.mxu0 0
  %2856 = vmatpush1.bf16.msra.mxu0 0
  %2857 = vmatprep.subr.bf16.mxu0 0
  %2858 = vmatpush1.bf16.msra.mxu0 0
  %2859 = vmatprep.subr.bf16.mxu0 0
  %2860 = vmatpush1.bf16.msra.mxu0 0
  %2861 = vmatprep.subr.bf16.mxu0 0
  %2862 = vmatpush1.bf16.msra.mxu0 0
  %2863 = vmatprep.subr.bf16.mxu0 0
  %2864 = vmatpush1.bf16.msra.mxu0 0
  %2865 = vmatprep.subr.bf16.mxu0 0
  %2866 = vmatpush1.bf16.msra.mxu0 0
  %2867 = vmatprep.mubr.bf16.mxu0 0
  %2868 = vmatmul.mubr.bf16.gmra.mrb[0].mxu0 %v2824
  %v2869 = vpop.f32.mrb[0].mxu0
  %v2870 = vadd.f32 0.0, %v2869
  %v2871 = vpop.f32.mrb[0].mxu0
  %v2872 = vpop.f32.mrb[0].mxu0
  %v2873 = vadd.f32 0.0, %v2872
  %v2874 = vpop.f32.mrb[0].mxu0
  %2875 = vmatprep.mubr.bf16.mxu0 0
  %2876 = vmatmul.mubr.bf16.gmra.mrb[0].mxu0 %v2827
  %v2877 = vpop.f32.mrb[0].mxu0
  %v2878 = vadd.f32 0.0, %v2877
  %v2879 = vpop.f32.mrb[0].mxu0
  %v2880 = vpop.f32.mrb[0].mxu0
  %v2881 = vadd.f32 0.0, %v2880
  %v2882 = vpop.f32.mrb[0].mxu0
  %2883 = vmatprep.mubr.bf16.mxu0 0
  %2884 = vmatmul.mubr.bf16.gmra.mrb[0].mxu0 %v2830
  %v2885 = vpop.f32.mrb[0].mxu0
  %v2886 = vadd.f32 0.0, %v2885
  %v2887 = vpop.f32.mrb[0].mxu0
  %v2888 = vpop.f32.mrb[0].mxu0
  %v2889 = vadd.f32 0.0, %v2888
  %v2890 = vpop.f32.mrb[0].mxu0
  %2891 = vmatprep.mubr.bf16.mxu0 0
  %2892 = vmatmul.mubr.bf16.gmra.mrb[0].mxu0 %v2833
  %v2893 = vpop.f32.mrb[0].mxu0
  %v2894 = vadd.f32 0.0, %v2893
  %v2895 = vpop.f32.mrb[0].mxu0
  %v2896 = vpop.f32.mrb[0].mxu0
  %v2897 = vadd.f32 0.0, %v2896
  %v2898 = vpop.f32.mrb[0].mxu0
  %2899 = vdwg.mxu0
  %2900 = vst.msk [vmem:[#allocation4] sm:$0xff] %vm1733, %v2870
  %2901 = vst.msk [vmem:[#allocation4 + $0x8] sm:$0xff] %vm1733, %v2873
  %2902 = vst.msk [vmem:[#allocation4 + $0x10] sm:$0xff] %vm1733, %v2878
  %2903 = vst.msk [vmem:[#allocation4 + $0x18] sm:$0xff] %vm1733, %v2881
  %2904 = vst.msk [vmem:[#allocation4 + $0x20] sm:$0xff] %vm1733, %v2886
  %2905 = vst.msk [vmem:[#allocation4 + $0x28] sm:$0xff] %vm1733, %v2889
  %2906 = vst.msk [vmem:[#allocation4 + $0x30] sm:$0xff] %vm1733, %v2894
  %2907 = vst.msk [vmem:[#allocation4 + $0x38] sm:$0xff] %vm1733, %v2897
  %s2908 = scalar_lea.vmem %s9, 8
  %v2909 = vld [vmem:[%s2908] sm:$0xf]
  %v2910 = vld [vmem:[%s2908 + $0x4] sm:$0xf]
  %v2913 = vunpack.c.l.b16 %v2909
  %v2914 = vunpack.c.l.b16 %v2910
  %v2915 = vpack.c.b16 %v2914, %v2913
  %2917 = vmatprep.subr.bf16.mxu0 0
  %2918 = vmatpush1.bf16.msra.mxu0 %v2915
  %2919 = vmatprep.subr.bf16.mxu0 0
  %2920 = vmatpush1.bf16.msra.mxu0 0
  %2921 = vmatprep.subr.bf16.mxu0 0
  %2922 = vmatpush1.bf16.msra.mxu0 0
  %2923 = vmatprep.subr.bf16.mxu0 0
  %2924 = vmatpush1.bf16.msra.mxu0 0
  %2925 = vmatprep.subr.bf16.mxu0 0
  %2926 = vmatpush1.bf16.msra.mxu0 0
  %2927 = vmatprep.subr.bf16.mxu0 0
  %2928 = vmatpush1.bf16.msra.mxu0 0
  %2929 = vmatprep.subr.bf16.mxu0 0
  %2930 = vmatpush1.bf16.msra.mxu0 0
  %2931 = vmatprep.subr.bf16.mxu0 0
  %2932 = vmatpush1.bf16.msra.mxu0 0
  %2933 = vmatprep.subr.bf16.mxu0 0
  %2934 = vmatpush1.bf16.msra.mxu0 0
  %2935 = vmatprep.subr.bf16.mxu0 0
  %2936 = vmatpush1.bf16.msra.mxu0 0
  %2937 = vmatprep.subr.bf16.mxu0 0
  %2938 = vmatpush1.bf16.msra.mxu0 0
  %2939 = vmatprep.subr.bf16.mxu0 0
  %2940 = vmatpush1.bf16.msra.mxu0 0
  %2941 = vmatprep.subr.bf16.mxu0 0
  %2942 = vmatpush1.bf16.msra.mxu0 0
  %2943 = vmatprep.subr.bf16.mxu0 0
  %2944 = vmatpush1.bf16.msra.mxu0 0
  %2945 = vmatprep.subr.bf16.mxu0 0
  %2946 = vmatpush1.bf16.msra.mxu0 0
  %2947 = vmatprep.subr.bf16.mxu0 0
  %2948 = vmatpush1.bf16.msra.mxu0 0
  %2949 = vmatprep.mubr.bf16.mxu0 0
  %2950 = vmatmul.mubr.bf16.gmra.mrb[0].mxu0 %v2824
  %v2951 = vpop.f32.mrb[0].mxu0
  %v2952 = vadd.f32 0.0, %v2951
  %v2953 = vpop.f32.mrb[0].mxu0
  %v2954 = vpop.f32.mrb[0].mxu0
  %v2955 = vadd.f32 0.0, %v2954
  %v2956 = vpop.f32.mrb[0].mxu0
  %2957 = vmatprep.mubr.bf16.mxu0 0
  %2958 = vmatmul.mubr.bf16.gmra.mrb[0].mxu0 %v2827
  %v2959 = vpop.f32.mrb[0].mxu0
  %v2960 = vadd.f32 0.0, %v2959
  %v2961 = vpop.f32.mrb[0].mxu0
  %v2962 = vpop.f32.mrb[0].mxu0
  %v2963 = vadd.f32 0.0, %v2962
  %v2964 = vpop.f32.mrb[0].mxu0
  %2965 = vmatprep.mubr.bf16.mxu0 0
  %2966 = vmatmul.mubr.bf16.gmra.mrb[0].mxu0 %v2830
  %v2967 = vpop.f32.mrb[0].mxu0
  %v2968 = vadd.f32 0.0, %v2967
  %v2969 = vpop.f32.mrb[0].mxu0
  %v2970 = vpop.f32.mrb[0].mxu0
  %v2971 = vadd.f32 0.0, %v2970
  %v2972 = vpop.f32.mrb[0].mxu0
  %2973 = vmatprep.mubr.bf16.mxu0 0
  %2974 = vmatmul.mubr.bf16.gmra.mrb[0].mxu0 %v2833
  %v2975 = vpop.f32.mrb[0].mxu0
  %v2976 = vadd.f32 0.0, %v2975
  %v2977 = vpop.f32.mrb[0].mxu0
  %v2978 = vpop.f32.mrb[0].mxu0
  %v2979 = vadd.f32 0.0, %v2978
  %v2980 = vpop.f32.mrb[0].mxu0
  %2981 = vdwg.mxu0
  %2982 = vst.msk [vmem:[#allocation4 + $0x40] sm:$0xff] %vm1733, %v2952
  %2983 = vst.msk [vmem:[#allocation4 + $0x48] sm:$0xff] %vm1733, %v2955
  %2984 = vst.msk [vmem:[#allocation4 + $0x50] sm:$0xff] %vm1733, %v2960
  %2985 = vst.msk [vmem:[#allocation4 + $0x58] sm:$0xff] %vm1733, %v2963
  %2986 = vst.msk [vmem:[#allocation4 + $0x60] sm:$0xff] %vm1733, %v2968
  %2987 = vst.msk [vmem:[#allocation4 + $0x68] sm:$0xff] %vm1733, %v2971
  %2988 = vst.msk [vmem:[#allocation4 + $0x70] sm:$0xff] %vm1733, %v2976
  %2989 = vst.msk [vmem:[#allocation4 + $0x78] sm:$0xff] %vm1733, %v2979
  %s2990 = scalar_lea.vmem %s9, 16
  %v2991 = vld [vmem:[%s2990] sm:$0xf]
  %v2992 = vld [vmem:[%s2990 + $0x4] sm:$0xf]
  %v2995 = vunpack.c.l.b16 %v2991
  %v2996 = vunpack.c.l.b16 %v2992
  %v2997 = vpack.c.b16 %v2996, %v2995
  %2999 = vmatprep.subr.bf16.mxu0 0
  %3000 = vmatpush1.bf16.msra.mxu0 %v2997
  %3001 = vmatprep.subr.bf16.mxu0 0
  %3002 = vmatpush1.bf16.msra.mxu0 0
  %3003 = vmatprep.subr.bf16.mxu0 0
  %3004 = vmatpush1.bf16.msra.mxu0 0
  %3005 = vmatprep.subr.bf16.mxu0 0
  %3006 = vmatpush1.bf16.msra.mxu0 0
  %3007 = vmatprep.subr.bf16.mxu0 0
  %3008 = vmatpush1.bf16.msra.mxu0 0
  %3009 = vmatprep.subr.bf16.mxu0 0
  %3010 = vmatpush1.bf16.msra.mxu0 0
  %3011 = vmatprep.subr.bf16.mxu0 0
  %3012 = vmatpush1.bf16.msra.mxu0 0
  %3013 = vmatprep.subr.bf16.mxu0 0
  %3014 = vmatpush1.bf16.msra.mxu0 0
  %3015 = vmatprep.subr.bf16.mxu0 0
  %3016 = vmatpush1.bf16.msra.mxu0 0
  %3017 = vmatprep.subr.bf16.mxu0 0
  %3018 = vmatpush1.bf16.msra.mxu0 0
  %3019 = vmatprep.subr.bf16.mxu0 0
  %3020 = vmatpush1.bf16.msra.mxu0 0
  %3021 = vmatprep.subr.bf16.mxu0 0
  %3022 = vmatpush1.bf16.msra.mxu0 0
  %3023 = vmatprep.subr.bf16.mxu0 0
  %3024 = vmatpush1.bf16.msra.mxu0 0
  %3025 = vmatprep.subr.bf16.mxu0 0
  %3026 = vmatpush1.bf16.msra.mxu0 0
  %3027 = vmatprep.subr.bf16.mxu0 0
  %3028 = vmatpush1.bf16.msra.mxu0 0
  %3029 = vmatprep.subr.bf16.mxu0 0
  %3030 = vmatpush1.bf16.msra.mxu0 0
  %3031 = vmatprep.mubr.bf16.mxu0 0
  %3032 = vmatmul.mubr.bf16.gmra.mrb[0].mxu0 %v2824
  %v3033 = vpop.f32.mrb[0].mxu0
  %v3034 = vadd.f32 0.0, %v3033
  %v3035 = vpop.f32.mrb[0].mxu0
  %v3036 = vpop.f32.mrb[0].mxu0
  %v3037 = vadd.f32 0.0, %v3036
  %v3038 = vpop.f32.mrb[0].mxu0
  %3039 = vmatprep.mubr.bf16.mxu0 0
  %3040 = vmatmul.mubr.bf16.gmra.mrb[0].mxu0 %v2827
  %v3041 = vpop.f32.mrb[0].mxu0
  %v3042 = vadd.f32 0.0, %v3041
  %v3043 = vpop.f32.mrb[0].mxu0
  %v3044 = vpop.f32.mrb[0].mxu0
  %v3045 = vadd.f32 0.0, %v3044
  %v3046 = vpop.f32.mrb[0].mxu0
  %3047 = vmatprep.mubr.bf16.mxu0 0
  %3048 = vmatmul.mubr.bf16.gmra.mrb[0].mxu0 %v2830
  %v3049 = vpop.f32.mrb[0].mxu0
  %v3050 = vadd.f32 0.0, %v3049
  %v3051 = vpop.f32.mrb[0].mxu0
  %v3052 = vpop.f32.mrb[0].mxu0
  %v3053 = vadd.f32 0.0, %v3052
  %v3054 = vpop.f32.mrb[0].mxu0
  %3055 = vmatprep.mubr.bf16.mxu0 0
  %3056 = vmatmul.mubr.bf16.gmra.mrb[0].mxu0 %v2833
  %v3057 = vpop.f32.mrb[0].mxu0
  %v3058 = vadd.f32 0.0, %v3057
  %v3059 = vpop.f32.mrb[0].mxu0
  %v3060 = vpop.f32.mrb[0].mxu0
  %v3061 = vadd.f32 0.0, %v3060
  %v3062 = vpop.f32.mrb[0].mxu0
  %3063 = vdwg.mxu0
  %3064 = vst.msk [vmem:[#allocation4 + $0x80] sm:$0xff] %vm1733, %v3034
  %3065 = vst.msk [vmem:[#allocation4 + $0x88] sm:$0xff] %vm1733, %v3037
  %3066 = vst.msk [vmem:[#allocation4 + $0x90] sm:$0xff] %vm1733, %v3042
  %3067 = vst.msk [vmem:[#allocation4 + $0x98] sm:$0xff] %vm1733, %v3045
  %3068 = vst.msk [vmem:[#allocation4 + $0xa0] sm:$0xff] %vm1733, %v3050
  %3069 = vst.msk [vmem:[#allocation4 + $0xa8] sm:$0xff] %vm1733, %v3053
  %3070 = vst.msk [vmem:[#allocation4 + $0xb0] sm:$0xff] %vm1733, %v3058
  %3071 = vst.msk [vmem:[#allocation4 + $0xb8] sm:$0xff] %vm1733, %v3061
  %s3072 = scalar_lea.vmem %s9, 24
  %v3073 = vld [vmem:[%s3072] sm:$0xf]
  %v3074 = vld [vmem:[%s3072 + $0x4] sm:$0xf]
  %v3077 = vunpack.c.l.b16 %v3073
  %v3078 = vunpack.c.l.b16 %v3074
  %v3079 = vpack.c.b16 %v3078, %v3077
  %3081 = vmatprep.subr.bf16.mxu0 0
  %3082 = vmatpush1.bf16.msra.mxu0 %v3079
  %3083 = vmatprep.subr.bf16.mxu0 0
  %3084 = vmatpush1.bf16.msra.mxu0 0
  %3085 = vmatprep.subr.bf16.mxu0 0
  %3086 = vmatpush1.bf16.msra.mxu0 0
  %3087 = vmatprep.subr.bf16.mxu0 0
  %3088 = vmatpush1.bf16.msra.mxu0 0
  %3089 = vmatprep.subr.bf16.mxu0 0
  %3090 = vmatpush1.bf16.msra.mxu0 0
  %3091 = vmatprep.subr.bf16.mxu0 0
  %3092 = vmatpush1.bf16.msra.mxu0 0
  %3093 = vmatprep.subr.bf16.mxu0 0
  %3094 = vmatpush1.bf16.msra.mxu0 0
  %3095 = vmatprep.subr.bf16.mxu0 0
  %3096 = vmatpush1.bf16.msra.mxu0 0
  %3097 = vmatprep.subr.bf16.mxu0 0
  %3098 = vmatpush1.bf16.msra.mxu0 0
  %3099 = vmatprep.subr.bf16.mxu0 0
  %3100 = vmatpush1.bf16.msra.mxu0 0
  %3101 = vmatprep.subr.bf16.mxu0 0
  %3102 = vmatpush1.bf16.msra.mxu0 0
  %3103 = vmatprep.subr.bf16.mxu0 0
  %3104 = vmatpush1.bf16.msra.mxu0 0
  %3105 = vmatprep.subr.bf16.mxu0 0
  %3106 = vmatpush1.bf16.msra.mxu0 0
  %3107 = vmatprep.subr.bf16.mxu0 0
  %3108 = vmatpush1.bf16.msra.mxu0 0
  %3109 = vmatprep.subr.bf16.mxu0 0
  %3110 = vmatpush1.bf16.msra.mxu0 0
  %3111 = vmatprep.subr.bf16.mxu0 0
  %3112 = vmatpush1.bf16.msra.mxu0 0
  %3113 = vmatprep.mubr.bf16.mxu0 0
  %3114 = vmatmul.mubr.bf16.gmra.mrb[0].mxu0 %v2824
  %v3115 = vpop.f32.mrb[0].mxu0
  %v3116 = vadd.f32 0.0, %v3115
  %v3117 = vpop.f32.mrb[0].mxu0
  %v3118 = vpop.f32.mrb[0].mxu0
  %v3119 = vadd.f32 0.0, %v3118
  %v3120 = vpop.f32.mrb[0].mxu0
  %3121 = vmatprep.mubr.bf16.mxu0 0
  %3122 = vmatmul.mubr.bf16.gmra.mrb[0].mxu0 %v2827
  %v3123 = vpop.f32.mrb[0].mxu0
  %v3124 = vadd.f32 0.0, %v3123
  %v3125 = vpop.f32.mrb[0].mxu0
  %v3126 = vpop.f32.mrb[0].mxu0
  %v3127 = vadd.f32 0.0, %v3126
  %v3128 = vpop.f32.mrb[0].mxu0
  %3129 = vmatprep.mubr.bf16.mxu0 0
  %3130 = vmatmul.mubr.bf16.gmra.mrb[0].mxu0 %v2830
  %v3131 = vpop.f32.mrb[0].mxu0
  %v3132 = vadd.f32 0.0, %v3131
  %v3133 = vpop.f32.mrb[0].mxu0
  %v3134 = vpop.f32.mrb[0].mxu0
  %v3135 = vadd.f32 0.0, %v3134
  %v3136 = vpop.f32.mrb[0].mxu0
  %3137 = vmatprep.mubr.bf16.mxu0 0
  %3138 = vmatmul.mubr.bf16.gmra.mrb[0].mxu0 %v2833
  %v3139 = vpop.f32.mrb[0].mxu0
  %v3140 = vadd.f32 0.0, %v3139
  %v3141 = vpop.f32.mrb[0].mxu0
  %v3142 = vpop.f32.mrb[0].mxu0
  %v3143 = vadd.f32 0.0, %v3142
  %v3144 = vpop.f32.mrb[0].mxu0
  %3145 = vdwg.mxu0
  %3146 = vst.msk [vmem:[#allocation4 + $0xc0] sm:$0xff] %vm1733, %v3116
  %3147 = vst.msk [vmem:[#allocation4 + $0xc8] sm:$0xff] %vm1733, %v3119
  %3148 = vst.msk [vmem:[#allocation4 + $0xd0] sm:$0xff] %vm1733, %v3124
  %3149 = vst.msk [vmem:[#allocation4 + $0xd8] sm:$0xff] %vm1733, %v3127
  %3150 = vst.msk [vmem:[#allocation4 + $0xe0] sm:$0xff] %vm1733, %v3132
  %3151 = vst.msk [vmem:[#allocation4 + $0xe8] sm:$0xff] %vm1733, %v3135
  %3152 = vst.msk [vmem:[#allocation4 + $0xf0] sm:$0xff] %vm1733, %v3140
  %3153 = vst.msk [vmem:[#allocation4 + $0xf8] sm:$0xff] %vm1733, %v3143
  %s3154 = scalar_lea.vmem %s9, 32
  %v3155 = vld [vmem:[%s3154] sm:$0xf]
  %v3156 = vld [vmem:[%s3154 + $0x4] sm:$0xf]
  %v3159 = vunpack.c.l.b16 %v3155
  %v3160 = vunpack.c.l.b16 %v3156
  %v3161 = vpack.c.b16 %v3160, %v3159
  %3163 = vmatprep.subr.bf16.mxu0 0
  %3164 = vmatpush1.bf16.msra.mxu0 %v3161
  %3165 = vmatprep.subr.bf16.mxu0 0
  %3166 = vmatpush1.bf16.msra.mxu0 0
  %3167 = vmatprep.subr.bf16.mxu0 0
  %3168 = vmatpush1.bf16.msra.mxu0 0
  %3169 = vmatprep.subr.bf16.mxu0 0
  %3170 = vmatpush1.bf16.msra.mxu0 0
  %3171 = vmatprep.subr.bf16.mxu0 0
  %3172 = vmatpush1.bf16.msra.mxu0 0
  %3173 = vmatprep.subr.bf16.mxu0 0
  %3174 = vmatpush1.bf16.msra.mxu0 0
  %3175 = vmatprep.subr.bf16.mxu0 0
  %3176 = vmatpush1.bf16.msra.mxu0 0
  %3177 = vmatprep.subr.bf16.mxu0 0
  %3178 = vmatpush1.bf16.msra.mxu0 0
  %3179 = vmatprep.subr.bf16.mxu0 0
  %3180 = vmatpush1.bf16.msra.mxu0 0
  %3181 = vmatprep.subr.bf16.mxu0 0
  %3182 = vmatpush1.bf16.msra.mxu0 0
  %3183 = vmatprep.subr.bf16.mxu0 0
  %3184 = vmatpush1.bf16.msra.mxu0 0
  %3185 = vmatprep.subr.bf16.mxu0 0
  %3186 = vmatpush1.bf16.msra.mxu0 0
  %3187 = vmatprep.subr.bf16.mxu0 0
  %3188 = vmatpush1.bf16.msra.mxu0 0
  %3189 = vmatprep.subr.bf16.mxu0 0
  %3190 = vmatpush1.bf16.msra.mxu0 0
  %3191 = vmatprep.subr.bf16.mxu0 0
  %3192 = vmatpush1.bf16.msra.mxu0 0
  %3193 = vmatprep.subr.bf16.mxu0 0
  %3194 = vmatpush1.bf16.msra.mxu0 0
  %3195 = vmatprep.mubr.bf16.mxu0 0
  %3196 = vmatmul.mubr.bf16.gmra.mrb[0].mxu0 %v2824
  %v3197 = vpop.f32.mrb[0].mxu0
  %v3198 = vadd.f32 0.0, %v3197
  %v3199 = vpop.f32.mrb[0].mxu0
  %v3200 = vpop.f32.mrb[0].mxu0
  %v3201 = vadd.f32 0.0, %v3200
  %v3202 = vpop.f32.mrb[0].mxu0
  %3203 = vmatprep.mubr.bf16.mxu0 0
  %3204 = vmatmul.mubr.bf16.gmra.mrb[0].mxu0 %v2827
  %v3205 = vpop.f32.mrb[0].mxu0
  %v3206 = vadd.f32 0.0, %v3205
  %v3207 = vpop.f32.mrb[0].mxu0
  %v3208 = vpop.f32.mrb[0].mxu0
  %v3209 = vadd.f32 0.0, %v3208
  %v3210 = vpop.f32.mrb[0].mxu0
  %3211 = vmatprep.mubr.bf16.mxu0 0
  %3212 = vmatmul.mubr.bf16.gmra.mrb[0].mxu0 %v2830
  %v3213 = vpop.f32.mrb[0].mxu0
  %v3214 = vadd.f32 0.0, %v3213
  %v3215 = vpop.f32.mrb[0].mxu0
  %v3216 = vpop.f32.mrb[0].mxu0
  %v3217 = vadd.f32 0.0, %v3216
  %v3218 = vpop.f32.mrb[0].mxu0
  %3219 = vmatprep.mubr.bf16.mxu0 0
  %3220 = vmatmul.mubr.bf16.gmra.mrb[0].mxu0 %v2833
  %v3221 = vpop.f32.mrb[0].mxu0
  %v3222 = vadd.f32 0.0, %v3221
  %v3223 = vpop.f32.mrb[0].mxu0
  %v3224 = vpop.f32.mrb[0].mxu0
  %v3225 = vadd.f32 0.0, %v3224
  %v3226 = vpop.f32.mrb[0].mxu0
  %3227 = vdwg.mxu0
  %3228 = vst.msk [vmem:[#allocation4 + $0x100] sm:$0xff] %vm1733, %v3198
  %3229 = vst.msk [vmem:[#allocation4 + $0x108] sm:$0xff] %vm1733, %v3201
  %3230 = vst.msk [vmem:[#allocation4 + $0x110] sm:$0xff] %vm1733, %v3206
  %3231 = vst.msk [vmem:[#allocation4 + $0x118] sm:$0xff] %vm1733, %v3209
  %3232 = vst.msk [vmem:[#allocation4 + $0x120] sm:$0xff] %vm1733, %v3214
  %3233 = vst.msk [vmem:[#allocation4 + $0x128] sm:$0xff] %vm1733, %v3217
  %3234 = vst.msk [vmem:[#allocation4 + $0x130] sm:$0xff] %vm1733, %v3222
  %3235 = vst.msk [vmem:[#allocation4 + $0x138] sm:$0xff] %vm1733, %v3225
  %s3236 = scalar_lea.vmem %s9, 40
  %v3237 = vld [vmem:[%s3236] sm:$0xf]
  %v3238 = vld [vmem:[%s3236 + $0x4] sm:$0xf]
  %v3241 = vunpack.c.l.b16 %v3237
  %v3242 = vunpack.c.l.b16 %v3238
  %v3243 = vpack.c.b16 %v3242, %v3241
  %3245 = vmatprep.subr.bf16.mxu0 0
  %3246 = vmatpush1.bf16.msra.mxu0 %v3243
  %3247 = vmatprep.subr.bf16.mxu0 0
  %3248 = vmatpush1.bf16.msra.mxu0 0
  %3249 = vmatprep.subr.bf16.mxu0 0
  %3250 = vmatpush1.bf16.msra.mxu0 0
  %3251 = vmatprep.subr.bf16.mxu0 0
  %3252 = vmatpush1.bf16.msra.mxu0 0
  %3253 = vmatprep.subr.bf16.mxu0 0
  %3254 = vmatpush1.bf16.msra.mxu0 0
  %3255 = vmatprep.subr.bf16.mxu0 0
  %3256 = vmatpush1.bf16.msra.mxu0 0
  %3257 = vmatprep.subr.bf16.mxu0 0
  %3258 = vmatpush1.bf16.msra.mxu0 0
  %3259 = vmatprep.subr.bf16.mxu0 0
  %3260 = vmatpush1.bf16.msra.mxu0 0
  %3261 = vmatprep.subr.bf16.mxu0 0
  %3262 = vmatpush1.bf16.msra.mxu0 0
  %3263 = vmatprep.subr.bf16.mxu0 0
  %3264 = vmatpush1.bf16.msra.mxu0 0
  %3265 = vmatprep.subr.bf16.mxu0 0
  %3266 = vmatpush1.bf16.msra.mxu0 0
  %3267 = vmatprep.subr.bf16.mxu0 0
  %3268 = vmatpush1.bf16.msra.mxu0 0
  %3269 = vmatprep.subr.bf16.mxu0 0
  %3270 = vmatpush1.bf16.msra.mxu0 0
  %3271 = vmatprep.subr.bf16.mxu0 0
  %3272 = vmatpush1.bf16.msra.mxu0 0
  %3273 = vmatprep.subr.bf16.mxu0 0
  %3274 = vmatpush1.bf16.msra.mxu0 0
  %3275 = vmatprep.subr.bf16.mxu0 0
  %3276 = vmatpush1.bf16.msra.mxu0 0
  %3277 = vmatprep.mubr.bf16.mxu0 0
  %3278 = vmatmul.mubr.bf16.gmra.mrb[0].mxu0 %v2824
  %v3279 = vpop.f32.mrb[0].mxu0
  %v3280 = vadd.f32 0.0, %v3279
  %v3281 = vpop.f32.mrb[0].mxu0
  %v3282 = vpop.f32.mrb[0].mxu0
  %v3283 = vadd.f32 0.0, %v3282
  %v3284 = vpop.f32.mrb[0].mxu0
  %3285 = vmatprep.mubr.bf16.mxu0 0
  %3286 = vmatmul.mubr.bf16.gmra.mrb[0].mxu0 %v2827
  %v3287 = vpop.f32.mrb[0].mxu0
  %v3288 = vadd.f32 0.0, %v3287
  %v3289 = vpop.f32.mrb[0].mxu0
  %v3290 = vpop.f32.mrb[0].mxu0
  %v3291 = vadd.f32 0.0, %v3290
  %v3292 = vpop.f32.mrb[0].mxu0
  %3293 = vmatprep.mubr.bf16.mxu0 0
  %3294 = vmatmul.mubr.bf16.gmra.mrb[0].mxu0 %v2830
  %v3295 = vpop.f32.mrb[0].mxu0
  %v3296 = vadd.f32 0.0, %v3295
  %v3297 = vpop.f32.mrb[0].mxu0
  %v3298 = vpop.f32.mrb[0].mxu0
  %v3299 = vadd.f32 0.0, %v3298
  %v3300 = vpop.f32.mrb[0].mxu0
  %3301 = vmatprep.mubr.bf16.mxu0 0
  %3302 = vmatmul.mubr.bf16.gmra.mrb[0].mxu0 %v2833
  %v3303 = vpop.f32.mrb[0].mxu0
  %v3304 = vadd.f32 0.0, %v3303
  %v3305 = vpop.f32.mrb[0].mxu0
  %v3306 = vpop.f32.mrb[0].mxu0
  %v3307 = vadd.f32 0.0, %v3306
  %v3308 = vpop.f32.mrb[0].mxu0
  %3309 = vdwg.mxu0
  %3310 = vst.msk [vmem:[#allocation4 + $0x140] sm:$0xff] %vm1733, %v3280
  %3311 = vst.msk [vmem:[#allocation4 + $0x148] sm:$0xff] %vm1733, %v3283
  %3312 = vst.msk [vmem:[#allocation4 + $0x150] sm:$0xff] %vm1733, %v3288
  %3313 = vst.msk [vmem:[#allocation4 + $0x158] sm:$0xff] %vm1733, %v3291
  %3314 = vst.msk [vmem:[#allocation4 + $0x160] sm:$0xff] %vm1733, %v3296
  %3315 = vst.msk [vmem:[#allocation4 + $0x168] sm:$0xff] %vm1733, %v3299
  %3316 = vst.msk [vmem:[#allocation4 + $0x170] sm:$0xff] %vm1733, %v3304
  %3317 = vst.msk [vmem:[#allocation4 + $0x178] sm:$0xff] %vm1733, %v3307
  %s3318 = scalar_lea.vmem %s9, 48
  %v3319 = vld [vmem:[%s3318] sm:$0xf]
  %v3320 = vld [vmem:[%s3318 + $0x4] sm:$0xf]
  %v3323 = vunpack.c.l.b16 %v3319
  %v3324 = vunpack.c.l.b16 %v3320
  %v3325 = vpack.c.b16 %v3324, %v3323
  %3327 = vmatprep.subr.bf16.mxu0 0
  %3328 = vmatpush1.bf16.msra.mxu0 %v3325
  %3329 = vmatprep.subr.bf16.mxu0 0
  %3330 = vmatpush1.bf16.msra.mxu0 0
  %3331 = vmatprep.subr.bf16.mxu0 0
  %3332 = vmatpush1.bf16.msra.mxu0 0
  %3333 = vmatprep.subr.bf16.mxu0 0
  %3334 = vmatpush1.bf16.msra.mxu0 0
  %3335 = vmatprep.subr.bf16.mxu0 0
  %3336 = vmatpush1.bf16.msra.mxu0 0
  %3337 = vmatprep.subr.bf16.mxu0 0
  %3338 = vmatpush1.bf16.msra.mxu0 0
  %3339 = vmatprep.subr.bf16.mxu0 0
  %3340 = vmatpush1.bf16.msra.mxu0 0
  %3341 = vmatprep.subr.bf16.mxu0 0
  %3342 = vmatpush1.bf16.msra.mxu0 0
  %3343 = vmatprep.subr.bf16.mxu0 0
  %3344 = vmatpush1.bf16.msra.mxu0 0
  %3345 = vmatprep.subr.bf16.mxu0 0
  %3346 = vmatpush1.bf16.msra.mxu0 0
  %3347 = vmatprep.subr.bf16.mxu0 0
  %3348 = vmatpush1.bf16.msra.mxu0 0
  %3349 = vmatprep.subr.bf16.mxu0 0
  %3350 = vmatpush1.bf16.msra.mxu0 0
  %3351 = vmatprep.subr.bf16.mxu0 0
  %3352 = vmatpush1.bf16.msra.mxu0 0
  %3353 = vmatprep.subr.bf16.mxu0 0
  %3354 = vmatpush1.bf16.msra.mxu0 0
  %3355 = vmatprep.subr.bf16.mxu0 0
  %3356 = vmatpush1.bf16.msra.mxu0 0
  %3357 = vmatprep.subr.bf16.mxu0 0
  %3358 = vmatpush1.bf16.msra.mxu0 0
  %3359 = vmatprep.mubr.bf16.mxu0 0
  %3360 = vmatmul.mubr.bf16.gmra.mrb[0].mxu0 %v2824
  %v3361 = vpop.f32.mrb[0].mxu0
  %v3362 = vadd.f32 0.0, %v3361
  %v3363 = vpop.f32.mrb[0].mxu0
  %v3364 = vpop.f32.mrb[0].mxu0
  %v3365 = vadd.f32 0.0, %v3364
  %v3366 = vpop.f32.mrb[0].mxu0
  %3367 = vmatprep.mubr.bf16.mxu0 0
  %3368 = vmatmul.mubr.bf16.gmra.mrb[0].mxu0 %v2827
  %v3369 = vpop.f32.mrb[0].mxu0
  %v3370 = vadd.f32 0.0, %v3369
  %v3371 = vpop.f32.mrb[0].mxu0
  %v3372 = vpop.f32.mrb[0].mxu0
  %v3373 = vadd.f32 0.0, %v3372
  %v3374 = vpop.f32.mrb[0].mxu0
  %3375 = vmatprep.mubr.bf16.mxu0 0
  %3376 = vmatmul.mubr.bf16.gmra.mrb[0].mxu0 %v2830
  %v3377 = vpop.f32.mrb[0].mxu0
  %v3378 = vadd.f32 0.0, %v3377
  %v3379 = vpop.f32.mrb[0].mxu0
  %v3380 = vpop.f32.mrb[0].mxu0
  %v3381 = vadd.f32 0.0, %v3380
  %v3382 = vpop.f32.mrb[0].mxu0
  %3383 = vmatprep.mubr.bf16.mxu0 0
  %3384 = vmatmul.mubr.bf16.gmra.mrb[0].mxu0 %v2833
  %v3385 = vpop.f32.mrb[0].mxu0
  %v3386 = vadd.f32 0.0, %v3385
  %v3387 = vpop.f32.mrb[0].mxu0
  %v3388 = vpop.f32.mrb[0].mxu0
  %v3389 = vadd.f32 0.0, %v3388
  %v3390 = vpop.f32.mrb[0].mxu0
  %3391 = vdwg.mxu0
  %3392 = vst.msk [vmem:[#allocation4 + $0x180] sm:$0xff] %vm1733, %v3362
  %3393 = vst.msk [vmem:[#allocation4 + $0x188] sm:$0xff] %vm1733, %v3365
  %3394 = vst.msk [vmem:[#allocation4 + $0x190] sm:$0xff] %vm1733, %v3370
  %3395 = vst.msk [vmem:[#allocation4 + $0x198] sm:$0xff] %vm1733, %v3373
  %3396 = vst.msk [vmem:[#allocation4 + $0x1a0] sm:$0xff] %vm1733, %v3378
  %3397 = vst.msk [vmem:[#allocation4 + $0x1a8] sm:$0xff] %vm1733, %v3381
  %3398 = vst.msk [vmem:[#allocation4 + $0x1b0] sm:$0xff] %vm1733, %v3386
  %3399 = vst.msk [vmem:[#allocation4 + $0x1b8] sm:$0xff] %vm1733, %v3389
  %s3400 = scalar_lea.vmem %s9, 56
  %v3401 = vld [vmem:[%s3400] sm:$0xf]
  %v3402 = vld [vmem:[%s3400 + $0x4] sm:$0xf]
  %v3405 = vunpack.c.l.b16 %v3401
  %v3406 = vunpack.c.l.b16 %v3402
  %v3407 = vpack.c.b16 %v3406, %v3405
  %3409 = vmatprep.subr.bf16.mxu0 0
  %3410 = vmatpush1.bf16.msra.mxu0 %v3407
  %3411 = vmatprep.subr.bf16.mxu0 0
  %3412 = vmatpush1.bf16.msra.mxu0 0
  %3413 = vmatprep.subr.bf16.mxu0 0
  %3414 = vmatpush1.bf16.msra.mxu0 0
  %3415 = vmatprep.subr.bf16.mxu0 0
  %3416 = vmatpush1.bf16.msra.mxu0 0
  %3417 = vmatprep.subr.bf16.mxu0 0
  %3418 = vmatpush1.bf16.msra.mxu0 0
  %3419 = vmatprep.subr.bf16.mxu0 0
  %3420 = vmatpush1.bf16.msra.mxu0 0
  %3421 = vmatprep.subr.bf16.mxu0 0
  %3422 = vmatpush1.bf16.msra.mxu0 0
  %3423 = vmatprep.subr.bf16.mxu0 0
  %3424 = vmatpush1.bf16.msra.mxu0 0
  %3425 = vmatprep.subr.bf16.mxu0 0
  %3426 = vmatpush1.bf16.msra.mxu0 0
  %3427 = vmatprep.subr.bf16.mxu0 0
  %3428 = vmatpush1.bf16.msra.mxu0 0
  %3429 = vmatprep.subr.bf16.mxu0 0
  %3430 = vmatpush1.bf16.msra.mxu0 0
  %3431 = vmatprep.subr.bf16.mxu0 0
  %3432 = vmatpush1.bf16.msra.mxu0 0
  %3433 = vmatprep.subr.bf16.mxu0 0
  %3434 = vmatpush1.bf16.msra.mxu0 0
  %3435 = vmatprep.subr.bf16.mxu0 0
  %3436 = vmatpush1.bf16.msra.mxu0 0
  %3437 = vmatprep.subr.bf16.mxu0 0
  %3438 = vmatpush1.bf16.msra.mxu0 0
  %3439 = vmatprep.subr.bf16.mxu0 0
  %3440 = vmatpush1.bf16.msra.mxu0 0
  %3441 = vmatprep.mubr.bf16.mxu0 0
  %3442 = vmatmul.mubr.bf16.gmra.mrb[0].mxu0 %v2824
  %v3443 = vpop.f32.mrb[0].mxu0
  %v3444 = vadd.f32 0.0, %v3443
  %v3445 = vpop.f32.mrb[0].mxu0
  %v3446 = vpop.f32.mrb[0].mxu0
  %v3447 = vadd.f32 0.0, %v3446
  %v3448 = vpop.f32.mrb[0].mxu0
  %3449 = vmatprep.mubr.bf16.mxu0 0
  %3450 = vmatmul.mubr.bf16.gmra.mrb[0].mxu0 %v2827
  %v3451 = vpop.f32.mrb[0].mxu0
  %v3452 = vadd.f32 0.0, %v3451
  %v3453 = vpop.f32.mrb[0].mxu0
  %v3454 = vpop.f32.mrb[0].mxu0
  %v3455 = vadd.f32 0.0, %v3454
  %v3456 = vpop.f32.mrb[0].mxu0
  %3457 = vmatprep.mubr.bf16.mxu0 0
  %3458 = vmatmul.mubr.bf16.gmra.mrb[0].mxu0 %v2830
  %v3459 = vpop.f32.mrb[0].mxu0
  %v3460 = vadd.f32 0.0, %v3459
  %v3461 = vpop.f32.mrb[0].mxu0
  %v3462 = vpop.f32.mrb[0].mxu0
  %v3463 = vadd.f32 0.0, %v3462
  %v3464 = vpop.f32.mrb[0].mxu0
  %3465 = vmatprep.mubr.bf16.mxu0 0
  %3466 = vmatmul.mubr.bf16.gmra.mrb[0].mxu0 %v2833
  %v3467 = vpop.f32.mrb[0].mxu0
  %v3468 = vadd.f32 0.0, %v3467
  %v3469 = vpop.f32.mrb[0].mxu0
  %v3470 = vpop.f32.mrb[0].mxu0
  %v3471 = vadd.f32 0.0, %v3470
  %v3472 = vpop.f32.mrb[0].mxu0
  %3473 = vdwg.mxu0
  %3474 = vst.msk [vmem:[#allocation4 + $0x1c0] sm:$0xff] %vm1733, %v3444
  %3475 = vst.msk [vmem:[#allocation4 + $0x1c8] sm:$0xff] %vm1733, %v3447
  %3476 = vst.msk [vmem:[#allocation4 + $0x1d0] sm:$0xff] %vm1733, %v3452
  %3477 = vst.msk [vmem:[#allocation4 + $0x1d8] sm:$0xff] %vm1733, %v3455
  %3478 = vst.msk [vmem:[#allocation4 + $0x1e0] sm:$0xff] %vm1733, %v3460
  %3479 = vst.msk [vmem:[#allocation4 + $0x1e8] sm:$0xff] %vm1733, %v3463
  %3480 = vst.msk [vmem:[#allocation4 + $0x1f0] sm:$0xff] %vm1733, %v3468
  %3481 = vst.msk [vmem:[#allocation4 + $0x1f8] sm:$0xff] %vm1733, %v3471
  %s3482 = scalar_lea.vmem %s9, 64
  %v3483 = vld [vmem:[%s3482] sm:$0xf]
  %v3484 = vld [vmem:[%s3482 + $0x4] sm:$0xf]
  %v3487 = vunpack.c.l.b16 %v3483
  %v3488 = vunpack.c.l.b16 %v3484
  %v3489 = vpack.c.b16 %v3488, %v3487
  %3491 = vmatprep.subr.bf16.mxu0 0
  %3492 = vmatpush1.bf16.msra.mxu0 %v3489
  %3493 = vmatprep.subr.bf16.mxu0 0
  %3494 = vmatpush1.bf16.msra.mxu0 0
  %3495 = vmatprep.subr.bf16.mxu0 0
  %3496 = vmatpush1.bf16.msra.mxu0 0
  %3497 = vmatprep.subr.bf16.mxu0 0
  %3498 = vmatpush1.bf16.msra.mxu0 0
  %3499 = vmatprep.subr.bf16.mxu0 0
  %3500 = vmatpush1.bf16.msra.mxu0 0
  %3501 = vmatprep.subr.bf16.mxu0 0
  %3502 = vmatpush1.bf16.msra.mxu0 0
  %3503 = vmatprep.subr.bf16.mxu0 0
  %3504 = vmatpush1.bf16.msra.mxu0 0
  %3505 = vmatprep.subr.bf16.mxu0 0
  %3506 = vmatpush1.bf16.msra.mxu0 0
  %3507 = vmatprep.subr.bf16.mxu0 0
  %3508 = vmatpush1.bf16.msra.mxu0 0
  %3509 = vmatprep.subr.bf16.mxu0 0
  %3510 = vmatpush1.bf16.msra.mxu0 0
  %3511 = vmatprep.subr.bf16.mxu0 0
  %3512 = vmatpush1.bf16.msra.mxu0 0
  %3513 = vmatprep.subr.bf16.mxu0 0
  %3514 = vmatpush1.bf16.msra.mxu0 0
  %3515 = vmatprep.subr.bf16.mxu0 0
  %3516 = vmatpush1.bf16.msra.mxu0 0
  %3517 = vmatprep.subr.bf16.mxu0 0
  %3518 = vmatpush1.bf16.msra.mxu0 0
  %3519 = vmatprep.subr.bf16.mxu0 0
  %3520 = vmatpush1.bf16.msra.mxu0 0
  %3521 = vmatprep.subr.bf16.mxu0 0
  %3522 = vmatpush1.bf16.msra.mxu0 0
  %3523 = vmatprep.mubr.bf16.mxu0 0
  %3524 = vmatmul.mubr.bf16.gmra.mrb[0].mxu0 %v2824
  %v3525 = vpop.f32.mrb[0].mxu0
  %v3526 = vadd.f32 0.0, %v3525
  %v3527 = vpop.f32.mrb[0].mxu0
  %v3528 = vpop.f32.mrb[0].mxu0
  %v3529 = vadd.f32 0.0, %v3528
  %v3530 = vpop.f32.mrb[0].mxu0
  %3531 = vmatprep.mubr.bf16.mxu0 0
  %3532 = vmatmul.mubr.bf16.gmra.mrb[0].mxu0 %v2827
  %v3533 = vpop.f32.mrb[0].mxu0
  %v3534 = vadd.f32 0.0, %v3533
  %v3535 = vpop.f32.mrb[0].mxu0
  %v3536 = vpop.f32.mrb[0].mxu0
  %v3537 = vadd.f32 0.0, %v3536
  %v3538 = vpop.f32.mrb[0].mxu0
  %3539 = vmatprep.mubr.bf16.mxu0 0
  %3540 = vmatmul.mubr.bf16.gmra.mrb[0].mxu0 %v2830
  %v3541 = vpop.f32.mrb[0].mxu0
  %v3542 = vadd.f32 0.0, %v3541
  %v3543 = vpop.f32.mrb[0].mxu0
  %v3544 = vpop.f32.mrb[0].mxu0
  %v3545 = vadd.f32 0.0, %v3544
  %v3546 = vpop.f32.mrb[0].mxu0
  %3547 = vmatprep.mubr.bf16.mxu0 0
  %3548 = vmatmul.mubr.bf16.gmra.mrb[0].mxu0 %v2833
  %v3549 = vpop.f32.mrb[0].mxu0
  %v3550 = vadd.f32 0.0, %v3549
  %v3551 = vpop.f32.mrb[0].mxu0
  %v3552 = vpop.f32.mrb[0].mxu0
  %v3553 = vadd.f32 0.0, %v3552
  %v3554 = vpop.f32.mrb[0].mxu0
  %3555 = vdwg.mxu0
  %3556 = vst.msk [vmem:[#allocation4 + $0x200] sm:$0xff] %vm1733, %v3526
  %3557 = vst.msk [vmem:[#allocation4 + $0x208] sm:$0xff] %vm1733, %v3529
  %3558 = vst.msk [vmem:[#allocation4 + $0x210] sm:$0xff] %vm1733, %v3534
  %3559 = vst.msk [vmem:[#allocation4 + $0x218] sm:$0xff] %vm1733, %v3537
  %3560 = vst.msk [vmem:[#allocation4 + $0x220] sm:$0xff] %vm1733, %v3542
  %3561 = vst.msk [vmem:[#allocation4 + $0x228] sm:$0xff] %vm1733, %v3545
  %3562 = vst.msk [vmem:[#allocation4 + $0x230] sm:$0xff] %vm1733, %v3550
  %3563 = vst.msk [vmem:[#allocation4 + $0x238] sm:$0xff] %vm1733, %v3553
  %v3564 = vld [vmem:[%s7] sm:$0xff]
  %v3565 = vld [vmem:[%s7 + $0x8] sm:$0xff]
  %v3566 = vld [vmem:[%s7 + $0x10] sm:$0xf]
  %v3567 = vld [vmem:[%s7 + $0x14] sm:$0xff]
  %v3568 = vld [vmem:[%s7 + $0x1c] sm:$0xff]
  %v3569 = vld [vmem:[%s7 + $0x24] sm:$0xf]
  %v3570 = vld [vmem:[%s7 + $0x28] sm:$0xff]
  %v3571 = vld [vmem:[%s7 + $0x30] sm:$0xff]
  %v3572 = vld [vmem:[%s7 + $0x38] sm:$0xf]
  %v3573 = vld [vmem:[%s7 + $0x3c] sm:$0xff]
  %v3574 = vld [vmem:[%s7 + $0x44] sm:$0xff]
  %v3575 = vld [vmem:[%s7 + $0x4c] sm:$0xf]
  %v3576 = vld [vmem:[#allocation4] sm:$0xff]
  %v3577 = vld [vmem:[#allocation4 + $0x8] sm:$0xff]
  %v3578 = vld [vmem:[#allocation4 + $0x10] sm:$0xff]
  %v3579 = vld [vmem:[#allocation4 + $0x18] sm:$0xff]
  %v3580 = vld [vmem:[#allocation4 + $0x20] sm:$0xff]
  %v3581 = vld [vmem:[#allocation4 + $0x28] sm:$0xff]
  %v3582 = vld [vmem:[#allocation4 + $0x30] sm:$0xff]
  %v3583 = vld [vmem:[#allocation4 + $0x38] sm:$0xff]
  %v3584 = vld [vmem:[#allocation4 + $0x40] sm:$0xff]
  %v3585 = vld [vmem:[#allocation4 + $0x48] sm:$0xff]
  %v3586 = vld [vmem:[#allocation4 + $0x50] sm:$0xff]
  %v3587 = vld [vmem:[#allocation4 + $0x58] sm:$0xff]
  %v3588 = vld [vmem:[#allocation4 + $0x60] sm:$0xff]
  %v3589 = vld [vmem:[#allocation4 + $0x68] sm:$0xff]
  %v3590 = vld [vmem:[#allocation4 + $0x70] sm:$0xff]
  %v3591 = vld [vmem:[#allocation4 + $0x78] sm:$0xff]
  %v3592 = vld [vmem:[#allocation4 + $0x80] sm:$0xff]
  %v3593 = vld [vmem:[#allocation4 + $0x88] sm:$0xff]
  %v3594 = vld [vmem:[#allocation4 + $0x90] sm:$0xff]
  %v3595 = vld [vmem:[#allocation4 + $0x98] sm:$0xff]
  %v3596 = vld [vmem:[#allocation4 + $0xa0] sm:$0xff]
  %v3597 = vld [vmem:[#allocation4 + $0xa8] sm:$0xff]
  %v3598 = vld [vmem:[#allocation4 + $0xb0] sm:$0xff]
  %v3599 = vld [vmem:[#allocation4 + $0xb8] sm:$0xff]
  %v3600 = vld [vmem:[#allocation4 + $0xc0] sm:$0xff]
  %v3601 = vld [vmem:[#allocation4 + $0xc8] sm:$0xff]
  %v3602 = vld [vmem:[#allocation4 + $0xd0] sm:$0xff]
  %v3603 = vld [vmem:[#allocation4 + $0xd8] sm:$0xff]
  %v3604 = vld [vmem:[#allocation4 + $0xe0] sm:$0xff]
  %v3605 = vld [vmem:[#allocation4 + $0xe8] sm:$0xff]
  %v3606 = vld [vmem:[#allocation4 + $0xf0] sm:$0xff]
  %v3607 = vld [vmem:[#allocation4 + $0xf8] sm:$0xff]
  %v3608 = vld [vmem:[#allocation4 + $0x100] sm:$0xff]
  %v3609 = vld [vmem:[#allocation4 + $0x108] sm:$0xff]
  %v3610 = vld [vmem:[#allocation4 + $0x110] sm:$0xff]
  %v3611 = vld [vmem:[#allocation4 + $0x118] sm:$0xff]
  %v3612 = vld [vmem:[#allocation4 + $0x120] sm:$0xff]
  %v3613 = vld [vmem:[#allocation4 + $0x128] sm:$0xff]
  %v3614 = vld [vmem:[#allocation4 + $0x130] sm:$0xff]
  %v3615 = vld [vmem:[#allocation4 + $0x138] sm:$0xff]
  %v3616 = vld [vmem:[#allocation4 + $0x140] sm:$0xff]
  %v3617 = vld [vmem:[#allocation4 + $0x148] sm:$0xff]
  %v3618 = vld [vmem:[#allocation4 + $0x150] sm:$0xff]
  %v3619 = vld [vmem:[#allocation4 + $0x158] sm:$0xff]
  %v3620 = vld [vmem:[#allocation4 + $0x160] sm:$0xff]
  %v3621 = vld [vmem:[#allocation4 + $0x168] sm:$0xff]
  %v3622 = vld [vmem:[#allocation4 + $0x170] sm:$0xff]
  %v3623 = vld [vmem:[#allocation4 + $0x178] sm:$0xff]
  %v3624 = vld [vmem:[#allocation4 + $0x180] sm:$0xff]
  %v3625 = vld [vmem:[#allocation4 + $0x188] sm:$0xff]
  %v3626 = vld [vmem:[#allocation4 + $0x190] sm:$0xff]
  %v3627 = vld [vmem:[#allocation4 + $0x198] sm:$0xff]
  %v3628 = vld [vmem:[#allocation4 + $0x1a0] sm:$0xff]
  %v3629 = vld [vmem:[#allocation4 + $0x1a8] sm:$0xff]
  %v3630 = vld [vmem:[#allocation4 + $0x1b0] sm:$0xff]
  %v3631 = vld [vmem:[#allocation4 + $0x1b8] sm:$0xff]
  %v3632 = vld [vmem:[#allocation4 + $0x1c0] sm:$0xff]
  %v3633 = vld [vmem:[#allocation4 + $0x1c8] sm:$0xff]
  %v3634 = vld [vmem:[#allocation4 + $0x1d0] sm:$0xff]
  %v3635 = vld [vmem:[#allocation4 + $0x1d8] sm:$0xff]
  %v3636 = vld [vmem:[#allocation4 + $0x1e0] sm:$0xff]
  %v3637 = vld [vmem:[#allocation4 + $0x1e8] sm:$0xff]
  %v3638 = vld [vmem:[#allocation4 + $0x1f0] sm:$0xff]
  %v3639 = vld [vmem:[#allocation4 + $0x1f8] sm:$0xff]
  %v3640 = vld [vmem:[#allocation4 + $0x200] sm:$0xff]
  %v3641 = vld [vmem:[#allocation4 + $0x208] sm:$0xff]
  %v3642 = vld [vmem:[#allocation4 + $0x210] sm:$0xff]
  %v3643 = vld [vmem:[#allocation4 + $0x218] sm:$0xff]
  %v3644 = vld [vmem:[#allocation4 + $0x220] sm:$0xff]
  %v3645 = vld [vmem:[#allocation4 + $0x228] sm:$0xff]
  %v3646 = vld [vmem:[#allocation4 + $0x230] sm:$0xff]
  %v3647 = vld [vmem:[#allocation4 + $0x238] sm:$0xff]
  %v3648 = vpack.c.bf16 %v3577, %v3576
  %v3649 = vpack.c.bf16 %v3579, %v3578
  %v3650 = vpack.c.bf16 %v3581, %v3580
  %v3651 = vpack.c.bf16 %v3583, %v3582
  %v3652 = vpack.c.bf16 %v3585, %v3584
  %v3653 = vpack.c.bf16 %v3587, %v3586
  %v3654 = vpack.c.bf16 %v3589, %v3588
  %v3655 = vpack.c.bf16 %v3591, %v3590
  %v3656 = vpack.c.bf16 %v3593, %v3592
  %v3657 = vpack.c.bf16 %v3595, %v3594
  %v3658 = vpack.c.bf16 %v3597, %v3596
  %v3659 = vpack.c.bf16 %v3599, %v3598
  %v3660 = vpack.c.bf16 %v3601, %v3600
  %v3661 = vpack.c.bf16 %v3603, %v3602
  %v3662 = vpack.c.bf16 %v3605, %v3604
  %v3663 = vpack.c.bf16 %v3607, %v3606
  %v3664 = vpack.c.bf16 %v3609, %v3608
  %v3665 = vpack.c.bf16 %v3611, %v3610
  %v3666 = vpack.c.bf16 %v3613, %v3612
  %v3667 = vpack.c.bf16 %v3615, %v3614
  %v3668 = vpack.c.bf16 %v3617, %v3616
  %v3669 = vpack.c.bf16 %v3619, %v3618
  %v3670 = vpack.c.bf16 %v3621, %v3620
  %v3671 = vpack.c.bf16 %v3623, %v3622
  %v3672 = vpack.c.bf16 %v3625, %v3624
  %v3673 = vpack.c.bf16 %v3627, %v3626
  %v3674 = vpack.c.bf16 %v3629, %v3628
  %v3675 = vpack.c.bf16 %v3631, %v3630
  %v3676 = vpack.c.bf16 %v3633, %v3632
  %v3677 = vpack.c.bf16 %v3635, %v3634
  %v3678 = vpack.c.bf16 %v3637, %v3636
  %v3679 = vpack.c.bf16 %v3639, %v3638
  %v3680 = vpack.c.bf16 %v3641, %v3640
  %v3681 = vpack.c.bf16 %v3643, %v3642
  %v3682 = vpack.c.bf16 %v3645, %v3644
  %v3683 = vpack.c.bf16 %v3647, %v3646
  %v3684 = vld [vmem:[%s8] sm:$0xff]
  %v3685 = vld [vmem:[%s8 + $0x8] sm:$0xff]
  %v3686 = vld [vmem:[%s8 + $0x10] sm:$0xff]
  %v3687 = vld [vmem:[%s8 + $0x18] sm:$0xff]
  %3689 = vset.pattern.permute.xlu0 0
  %3690 = vperm.xlu0 %3689, %v3684
  %v3691 = vpop.permute.xlu0 %3690
  %3694 = vset.pattern.permute.xlu0 0
  %3695 = vperm.xlu0 %3694, %v3685
  %v3696 = vpop.permute.xlu0 %3695
  %3699 = vset.pattern.permute.xlu0 0
  %3700 = vperm.xlu0 %3699, %v3686
  %v3701 = vpop.permute.xlu0 %3700
  %3704 = vset.pattern.permute.xlu0 0
  %3705 = vperm.xlu0 %3704, %v3687
  %v3706 = vpop.permute.xlu0 %3705
  %v3720 = vunpack.c.l.b16 %v3564
  %v3721 = vunpack.c.h.b16 %v3564
  %v3722 = vunpack.c.l.b16 %v3565
  %v3723 = vunpack.c.h.b16 %v3565
  %v3724 = vunpack.c.l.b16 %v3566
  %v3725 = vunpack.c.l.b16 %v3567
  %v3726 = vunpack.c.h.b16 %v3567
  %v3727 = vunpack.c.l.b16 %v3568
  %v3728 = vunpack.c.h.b16 %v3568
  %v3729 = vunpack.c.l.b16 %v3569
  %v3730 = vunpack.c.l.b16 %v3570
  %v3731 = vunpack.c.h.b16 %v3570
  %v3732 = vunpack.c.l.b16 %v3571
  %v3733 = vunpack.c.h.b16 %v3571
  %v3734 = vunpack.c.l.b16 %v3572
  %v3735 = vunpack.c.l.b16 %v3573
  %v3736 = vunpack.c.h.b16 %v3573
  %v3737 = vunpack.c.l.b16 %v3574
  %v3738 = vunpack.c.h.b16 %v3574
  %v3739 = vunpack.c.l.b16 %v3575
  %v3740 = vpack.c.b16 %v3725, %v3720
  %v3741 = vpack.c.b16 %v3726, %v3721
  %v3742 = vpack.c.b16 %v3727, %v3722
  %v3743 = vpack.c.b16 %v3728, %v3723
  %v3744 = vpack.c.b16 %v3729, %v3724
  %v3745 = vpack.c.b16 %v3735, %v3730
  %v3746 = vpack.c.b16 %v3736, %v3731
  %v3747 = vpack.c.b16 %v3737, %v3732
  %v3748 = vpack.c.b16 %v3738, %v3733
  %v3749 = vpack.c.b16 %v3739, %v3734
  %v3759 = vsel %vm1733, %v3744, 0
  %v3762 = vsel %vm1733, %v3749, 0
  %3764 = vmatprep.subr.bf16.mxu0 0
  %3765 = vmatpush1.bf16.msra.mxu0 %v3648
  %3766 = vmatprep.subr.bf16.mxu0 0
  %3767 = vmatpush1.bf16.msra.mxu0 %v3649
  %3768 = vmatprep.subr.bf16.mxu0 0
  %3769 = vmatpush1.bf16.msra.mxu0 %v3650
  %3770 = vmatprep.subr.bf16.mxu0 0
  %3771 = vmatpush1.bf16.msra.mxu0 %v3651
  %3772 = vmatprep.subr.bf16.mxu0 0
  %3773 = vmatpush1.bf16.msra.mxu0 %v3652
  %3774 = vmatprep.subr.bf16.mxu0 0
  %3775 = vmatpush1.bf16.msra.mxu0 %v3653
  %3776 = vmatprep.subr.bf16.mxu0 0
  %3777 = vmatpush1.bf16.msra.mxu0 %v3654
  %3778 = vmatprep.subr.bf16.mxu0 0
  %3779 = vmatpush1.bf16.msra.mxu0 %v3655
  %3780 = vmatprep.subr.bf16.mxu0 0
  %3781 = vmatpush1.bf16.msra.mxu0 %v3656
  %3782 = vmatprep.subr.bf16.mxu0 0
  %3783 = vmatpush1.bf16.msra.mxu0 %v3657
  %3784 = vmatprep.subr.bf16.mxu0 0
  %3785 = vmatpush1.bf16.msra.mxu0 %v3658
  %3786 = vmatprep.subr.bf16.mxu0 0
  %3787 = vmatpush1.bf16.msra.mxu0 %v3659
  %3788 = vmatprep.subr.bf16.mxu0 0
  %3789 = vmatpush1.bf16.msra.mxu0 %v3660
  %3790 = vmatprep.subr.bf16.mxu0 0
  %3791 = vmatpush1.bf16.msra.mxu0 %v3661
  %3792 = vmatprep.subr.bf16.mxu0 0
  %3793 = vmatpush1.bf16.msra.mxu0 %v3662
  %3794 = vmatprep.subr.bf16.mxu0 0
  %3795 = vmatpush1.bf16.msra.mxu0 %v3663
  %3796 = vmatprep.mubr.bf16.mxu0 %v3741
  %3797 = vmatmul.mubr.bf16.gmra.mrb[0].mxu0 %v3740
  %v3798 = vpop.f32.mrb[0].mxu0
  %v3799 = vadd.f32 %v3691, %v3798
  %v3800 = vpop.f32.mrb[0].mxu0
  %v3801 = vpop.f32.mrb[0].mxu0
  %v3802 = vadd.f32 %v3696, %v3801
  %v3803 = vpop.f32.mrb[0].mxu0
  %3804 = vmatprep.mubr.bf16.mxu0 %v3746
  %3805 = vmatmul.mubr.bf16.gmra.mrb[0].mxu0 %v3745
  %v3806 = vpop.f32.mrb[0].mxu0
  %v3807 = vadd.f32 %v3701, %v3806
  %v3808 = vpop.f32.mrb[0].mxu0
  %v3809 = vpop.f32.mrb[0].mxu0
  %v3810 = vadd.f32 %v3706, %v3809
  %v3811 = vpop.f32.mrb[0].mxu0
  %3812 = vdwg.mxu0
  %3813 = vmatprep.subr.bf16.mxu0 0
  %3814 = vmatpush1.bf16.msra.mxu0 %v3664
  %3815 = vmatprep.subr.bf16.mxu0 0
  %3816 = vmatpush1.bf16.msra.mxu0 %v3665
  %3817 = vmatprep.subr.bf16.mxu0 0
  %3818 = vmatpush1.bf16.msra.mxu0 %v3666
  %3819 = vmatprep.subr.bf16.mxu0 0
  %3820 = vmatpush1.bf16.msra.mxu0 %v3667
  %3821 = vmatprep.subr.bf16.mxu0 0
  %3822 = vmatpush1.bf16.msra.mxu0 %v3668
  %3823 = vmatprep.subr.bf16.mxu0 0
  %3824 = vmatpush1.bf16.msra.mxu0 %v3669
  %3825 = vmatprep.subr.bf16.mxu0 0
  %3826 = vmatpush1.bf16.msra.mxu0 %v3670
  %3827 = vmatprep.subr.bf16.mxu0 0
  %3828 = vmatpush1.bf16.msra.mxu0 %v3671
  %3829 = vmatprep.subr.bf16.mxu0 0
  %3830 = vmatpush1.bf16.msra.mxu0 %v3672
  %3831 = vmatprep.subr.bf16.mxu0 0
  %3832 = vmatpush1.bf16.msra.mxu0 %v3673
  %3833 = vmatprep.subr.bf16.mxu0 0
  %3834 = vmatpush1.bf16.msra.mxu0 %v3674
  %3835 = vmatprep.subr.bf16.mxu0 0
  %3836 = vmatpush1.bf16.msra.mxu0 %v3675
  %3837 = vmatprep.subr.bf16.mxu0 0
  %3838 = vmatpush1.bf16.msra.mxu0 %v3676
  %3839 = vmatprep.subr.bf16.mxu0 0
  %3840 = vmatpush1.bf16.msra.mxu0 %v3677
  %3841 = vmatprep.subr.bf16.mxu0 0
  %3842 = vmatpush1.bf16.msra.mxu0 %v3678
  %3843 = vmatprep.subr.bf16.mxu0 0
  %3844 = vmatpush1.bf16.msra.mxu0 %v3679
  %3845 = vmatprep.mubr.bf16.mxu0 %v3743
  %3846 = vmatmul.mubr.bf16.gmra.mrb[0].mxu0 %v3742
  %v3847 = vpop.f32.mrb[0].mxu0
  %v3848 = vadd.f32 %v3799, %v3847
  %v3849 = vpop.f32.mrb[0].mxu0
  %v3850 = vpop.f32.mrb[0].mxu0
  %v3851 = vadd.f32 %v3802, %v3850
  %v3852 = vpop.f32.mrb[0].mxu0
  %3853 = vmatprep.mubr.bf16.mxu0 %v3748
  %3854 = vmatmul.mubr.bf16.gmra.mrb[0].mxu0 %v3747
  %v3855 = vpop.f32.mrb[0].mxu0
  %v3856 = vadd.f32 %v3807, %v3855
  %v3857 = vpop.f32.mrb[0].mxu0
  %v3858 = vpop.f32.mrb[0].mxu0
  %v3859 = vadd.f32 %v3810, %v3858
  %v3860 = vpop.f32.mrb[0].mxu0
  %3861 = vdwg.mxu0
  %3862 = vmatprep.subr.bf16.mxu0 0
  %3863 = vmatpush1.bf16.msra.mxu0 %v3680
  %3864 = vmatprep.subr.bf16.mxu0 0
  %3865 = vmatpush1.bf16.msra.mxu0 %v3681
  %3866 = vmatprep.subr.bf16.mxu0 0
  %3867 = vmatpush1.bf16.msra.mxu0 %v3682
  %3868 = vmatprep.subr.bf16.mxu0 0
  %3869 = vmatpush1.bf16.msra.mxu0 %v3683
  %3870 = vmatprep.subr.bf16.mxu0 0
  %3871 = vmatpush1.bf16.msra.mxu0 0
  %3872 = vmatprep.subr.bf16.mxu0 0
  %3873 = vmatpush1.bf16.msra.mxu0 0
  %3874 = vmatprep.subr.bf16.mxu0 0
  %3875 = vmatpush1.bf16.msra.mxu0 0
  %3876 = vmatprep.subr.bf16.mxu0 0
  %3877 = vmatpush1.bf16.msra.mxu0 0
  %3878 = vmatprep.subr.bf16.mxu0 0
  %3879 = vmatpush1.bf16.msra.mxu0 0
  %3880 = vmatprep.subr.bf16.mxu0 0
  %3881 = vmatpush1.bf16.msra.mxu0 0
  %3882 = vmatprep.subr.bf16.mxu0 0
  %3883 = vmatpush1.bf16.msra.mxu0 0
  %3884 = vmatprep.subr.bf16.mxu0 0
  %3885 = vmatpush1.bf16.msra.mxu0 0
  %3886 = vmatprep.subr.bf16.mxu0 0
  %3887 = vmatpush1.bf16.msra.mxu0 0
  %3888 = vmatprep.subr.bf16.mxu0 0
  %3889 = vmatpush1.bf16.msra.mxu0 0
  %3890 = vmatprep.subr.bf16.mxu0 0
  %3891 = vmatpush1.bf16.msra.mxu0 0
  %3892 = vmatprep.subr.bf16.mxu0 0
  %3893 = vmatpush1.bf16.msra.mxu0 0
  %3894 = vmatprep.mubr.bf16.mxu0 0
  %3895 = vmatmul.mubr.bf16.gmra.mrb[0].mxu0 %v3759
  %v3896 = vpop.f32.mrb[0].mxu0
  %v3897 = vadd.f32 %v3848, %v3896
  %v3898 = vpop.f32.mrb[0].mxu0
  %v3899 = vpop.f32.mrb[0].mxu0
  %v3900 = vadd.f32 %v3851, %v3899
  %v3901 = vpop.f32.mrb[0].mxu0
  %3902 = vmatprep.mubr.bf16.mxu0 0
  %3903 = vmatmul.mubr.bf16.gmra.mrb[0].mxu0 %v3762
  %v3904 = vpop.f32.mrb[0].mxu0
  %v3905 = vadd.f32 %v3856, %v3904
  %v3906 = vpop.f32.mrb[0].mxu0
  %v3907 = vpop.f32.mrb[0].mxu0
  %v3908 = vadd.f32 %v3859, %v3907
  %v3909 = vpop.f32.mrb[0].mxu0
  %3910 = vdwg.mxu0
  %v3911 = vmax.f32 %v3897, 0.0
  %v3912 = vmax.f32 %v3900, 0.0
  %v3913 = vmax.f32 %v3905, 0.0
  %v3914 = vmax.f32 %v3908, 0.0
  %v3915 = vpack.c.bf16 %v3912, %v3911
  %v3916 = vpack.c.bf16 %v3914, %v3913
  %v3917 = vld [vmem:[%s12] sm:$0xff]
  %v3918 = vld [vmem:[%s12 + $0x8] sm:$0xff]
  %v3919 = vld [vmem:[%s12 + $0x10] sm:$0xff]
  %v3920 = vld [vmem:[%s12 + $0x18] sm:$0xff]
  %v3921 = vld [vmem:[%s12 + $0x20] sm:$0xff]
  %v3922 = vld [vmem:[%s12 + $0x28] sm:$0xff]
  %v3923 = vld [vmem:[%s12 + $0x30] sm:$0xff]
  %v3924 = vld [vmem:[%s12 + $0x38] sm:$0xff]
  %v3933 = vunpack.c.l.b16 %v3917
  %v3934 = vunpack.c.h.b16 %v3917
  %v3935 = vunpack.c.l.b16 %v3918
  %v3936 = vunpack.c.h.b16 %v3918
  %v3937 = vunpack.c.l.b16 %v3919
  %v3938 = vunpack.c.h.b16 %v3919
  %v3939 = vunpack.c.l.b16 %v3920
  %v3940 = vunpack.c.h.b16 %v3920
  %v3941 = vunpack.c.l.b16 %v3921
  %v3942 = vunpack.c.h.b16 %v3921
  %v3943 = vunpack.c.l.b16 %v3922
  %v3944 = vunpack.c.h.b16 %v3922
  %v3945 = vunpack.c.l.b16 %v3923
  %v3946 = vunpack.c.h.b16 %v3923
  %v3947 = vunpack.c.l.b16 %v3924
  %v3948 = vunpack.c.h.b16 %v3924
  %v3949 = vpack.c.b16 %v3935, %v3933
  %v3950 = vpack.c.b16 %v3936, %v3934
  %v3951 = vpack.c.b16 %v3939, %v3937
  %v3952 = vpack.c.b16 %v3940, %v3938
  %v3953 = vpack.c.b16 %v3943, %v3941
  %v3954 = vpack.c.b16 %v3944, %v3942
  %v3955 = vpack.c.b16 %v3947, %v3945
  %v3956 = vpack.c.b16 %v3948, %v3946
  %v3966 = vsel %vm1733, %v3915, 0
  %v3969 = vsel %vm1733, %v3916, 0
  %3971 = vmatprep.subr.bf16.mxu0 %v3950
  %3972 = vmatpush1.bf16.msra.mxu0 %v3949
  %3973 = vmatprep.subr.bf16.mxu0 %v3952
  %3974 = vmatpush1.bf16.msra.mxu0 %v3951
  %3975 = vmatprep.subr.bf16.mxu0 %v3954
  %3976 = vmatpush1.bf16.msra.mxu0 %v3953
  %3977 = vmatprep.subr.bf16.mxu0 %v3956
  %3978 = vmatpush1.bf16.msra.mxu0 %v3955
  %3979 = vmatprep.subr.bf16.mxu0 0
  %3980 = vmatpush1.bf16.msra.mxu0 0
  %3981 = vmatprep.subr.bf16.mxu0 0
  %3982 = vmatpush1.bf16.msra.mxu0 0
  %3983 = vmatprep.subr.bf16.mxu0 0
  %3984 = vmatpush1.bf16.msra.mxu0 0
  %3985 = vmatprep.subr.bf16.mxu0 0
  %3986 = vmatpush1.bf16.msra.mxu0 0
  %3987 = vmatprep.subr.bf16.mxu0 0
  %3988 = vmatpush1.bf16.msra.mxu0 0
  %3989 = vmatprep.subr.bf16.mxu0 0
  %3990 = vmatpush1.bf16.msra.mxu0 0
  %3991 = vmatprep.subr.bf16.mxu0 0
  %3992 = vmatpush1.bf16.msra.mxu0 0
  %3993 = vmatprep.subr.bf16.mxu0 0
  %3994 = vmatpush1.bf16.msra.mxu0 0
  %3995 = vmatprep.subr.bf16.mxu0 0
  %3996 = vmatpush1.bf16.msra.mxu0 0
  %3997 = vmatprep.subr.bf16.mxu0 0
  %3998 = vmatpush1.bf16.msra.mxu0 0
  %3999 = vmatprep.subr.bf16.mxu0 0
  %4000 = vmatpush1.bf16.msra.mxu0 0
  %4001 = vmatprep.subr.bf16.mxu0 0
  %4002 = vmatpush1.bf16.msra.mxu0 0
  %4003 = vmatprep.mubr.bf16.mxu0 0
  %4004 = vmatmul.mubr.bf16.gmra.mrb[0].mxu0 %v3966
  %v4005 = vpop.f32.mrb[0].mxu0
  %v4006 = vadd.f32 0.0, %v4005
  %v4007 = vpop.f32.mrb[0].mxu0
  %v4008 = vadd.f32 0.0, %v4007
  %v4009 = vpop.f32.mrb[0].mxu0
  %v4010 = vadd.f32 0.0, %v4009
  %v4011 = vpop.f32.mrb[0].mxu0
  %v4012 = vadd.f32 0.0, %v4011
  %4013 = vmatprep.mubr.bf16.mxu0 0
  %4014 = vmatmul.mubr.bf16.gmra.mrb[0].mxu0 %v3969
  %v4015 = vpop.f32.mrb[0].mxu0
  %v4016 = vadd.f32 0.0, %v4015
  %v4017 = vpop.f32.mrb[0].mxu0
  %v4018 = vadd.f32 0.0, %v4017
  %v4019 = vpop.f32.mrb[0].mxu0
  %v4020 = vadd.f32 0.0, %v4019
  %v4021 = vpop.f32.mrb[0].mxu0
  %v4022 = vadd.f32 0.0, %v4021
  %4023 = vdwg.mxu0
  %4024 = vst [vmem:[#allocation5] sm:$0xff] %v4006
  %4025 = vst [vmem:[#allocation5 + $0x8] sm:$0xff] %v4008
  %4026 = vst [vmem:[#allocation5 + $0x10] sm:$0xff] %v4010
  %4027 = vst [vmem:[#allocation5 + $0x18] sm:$0xff] %v4012
  %4028 = vst [vmem:[#allocation5 + $0x20] sm:$0xff] %v4016
  %4029 = vst [vmem:[#allocation5 + $0x28] sm:$0xff] %v4018
  %4030 = vst [vmem:[#allocation5 + $0x30] sm:$0xff] %v4020
  %4031 = vst [vmem:[#allocation5 + $0x38] sm:$0xff] %v4022
  %s4032 = scalar_lea.vmem %s12, 64
  %v4033 = vld [vmem:[%s4032] sm:$0xff]
  %v4034 = vld [vmem:[%s4032 + $0x8] sm:$0xff]
  %v4035 = vld [vmem:[%s4032 + $0x10] sm:$0xff]
  %v4036 = vld [vmem:[%s4032 + $0x18] sm:$0xff]
  %v4037 = vld [vmem:[%s4032 + $0x20] sm:$0xff]
  %v4038 = vld [vmem:[%s4032 + $0x28] sm:$0xff]
  %v4039 = vld [vmem:[%s4032 + $0x30] sm:$0xff]
  %v4040 = vld [vmem:[%s4032 + $0x38] sm:$0xff]
  %v4049 = vunpack.c.l.b16 %v4033
  %v4050 = vunpack.c.h.b16 %v4033
  %v4051 = vunpack.c.l.b16 %v4034
  %v4052 = vunpack.c.h.b16 %v4034
  %v4053 = vunpack.c.l.b16 %v4035
  %v4054 = vunpack.c.h.b16 %v4035
  %v4055 = vunpack.c.l.b16 %v4036
  %v4056 = vunpack.c.h.b16 %v4036
  %v4057 = vunpack.c.l.b16 %v4037
  %v4058 = vunpack.c.h.b16 %v4037
  %v4059 = vunpack.c.l.b16 %v4038
  %v4060 = vunpack.c.h.b16 %v4038
  %v4061 = vunpack.c.l.b16 %v4039
  %v4062 = vunpack.c.h.b16 %v4039
  %v4063 = vunpack.c.l.b16 %v4040
  %v4064 = vunpack.c.h.b16 %v4040
  %v4065 = vpack.c.b16 %v4051, %v4049
  %v4066 = vpack.c.b16 %v4052, %v4050
  %v4067 = vpack.c.b16 %v4055, %v4053
  %v4068 = vpack.c.b16 %v4056, %v4054
  %v4069 = vpack.c.b16 %v4059, %v4057
  %v4070 = vpack.c.b16 %v4060, %v4058
  %v4071 = vpack.c.b16 %v4063, %v4061
  %v4072 = vpack.c.b16 %v4064, %v4062
  %4081 = vmatprep.subr.bf16.mxu0 %v4066
  %4082 = vmatpush1.bf16.msra.mxu0 %v4065
  %4083 = vmatprep.subr.bf16.mxu0 %v4068
  %4084 = vmatpush1.bf16.msra.mxu0 %v4067
  %4085 = vmatprep.subr.bf16.mxu0 %v4070
  %4086 = vmatpush1.bf16.msra.mxu0 %v4069
  %4087 = vmatprep.subr.bf16.mxu0 %v4072
  %4088 = vmatpush1.bf16.msra.mxu0 %v4071
  %4089 = vmatprep.subr.bf16.mxu0 0
  %4090 = vmatpush1.bf16.msra.mxu0 0
  %4091 = vmatprep.subr.bf16.mxu0 0
  %4092 = vmatpush1.bf16.msra.mxu0 0
  %4093 = vmatprep.subr.bf16.mxu0 0
  %4094 = vmatpush1.bf16.msra.mxu0 0
  %4095 = vmatprep.subr.bf16.mxu0 0
  %4096 = vmatpush1.bf16.msra.mxu0 0
  %4097 = vmatprep.subr.bf16.mxu0 0
  %4098 = vmatpush1.bf16.msra.mxu0 0
  %4099 = vmatprep.subr.bf16.mxu0 0
  %4100 = vmatpush1.bf16.msra.mxu0 0
  %4101 = vmatprep.subr.bf16.mxu0 0
  %4102 = vmatpush1.bf16.msra.mxu0 0
  %4103 = vmatprep.subr.bf16.mxu0 0
  %4104 = vmatpush1.bf16.msra.mxu0 0
  %4105 = vmatprep.subr.bf16.mxu0 0
  %4106 = vmatpush1.bf16.msra.mxu0 0
  %4107 = vmatprep.subr.bf16.mxu0 0
  %4108 = vmatpush1.bf16.msra.mxu0 0
  %4109 = vmatprep.subr.bf16.mxu0 0
  %4110 = vmatpush1.bf16.msra.mxu0 0
  %4111 = vmatprep.subr.bf16.mxu0 0
  %4112 = vmatpush1.bf16.msra.mxu0 0
  %4113 = vmatprep.mubr.bf16.mxu0 0
  %4114 = vmatmul.mubr.bf16.gmra.mrb[0].mxu0 %v3966
  %v4115 = vpop.f32.mrb[0].mxu0
  %v4116 = vadd.f32 0.0, %v4115
  %v4117 = vpop.f32.mrb[0].mxu0
  %v4118 = vadd.f32 0.0, %v4117
  %v4119 = vpop.f32.mrb[0].mxu0
  %v4120 = vadd.f32 0.0, %v4119
  %v4121 = vpop.f32.mrb[0].mxu0
  %v4122 = vadd.f32 0.0, %v4121
  %4123 = vmatprep.mubr.bf16.mxu0 0
  %4124 = vmatmul.mubr.bf16.gmra.mrb[0].mxu0 %v3969
  %v4125 = vpop.f32.mrb[0].mxu0
  %v4126 = vadd.f32 0.0, %v4125
  %v4127 = vpop.f32.mrb[0].mxu0
  %v4128 = vadd.f32 0.0, %v4127
  %v4129 = vpop.f32.mrb[0].mxu0
  %v4130 = vadd.f32 0.0, %v4129
  %v4131 = vpop.f32.mrb[0].mxu0
  %v4132 = vadd.f32 0.0, %v4131
  %4133 = vdwg.mxu0
  %4134 = vst [vmem:[#allocation5 + $0x40] sm:$0xff] %v4116
  %4135 = vst [vmem:[#allocation5 + $0x48] sm:$0xff] %v4118
  %4136 = vst [vmem:[#allocation5 + $0x50] sm:$0xff] %v4120
  %4137 = vst [vmem:[#allocation5 + $0x58] sm:$0xff] %v4122
  %4138 = vst [vmem:[#allocation5 + $0x60] sm:$0xff] %v4126
  %4139 = vst [vmem:[#allocation5 + $0x68] sm:$0xff] %v4128
  %4140 = vst [vmem:[#allocation5 + $0x70] sm:$0xff] %v4130
  %4141 = vst [vmem:[#allocation5 + $0x78] sm:$0xff] %v4132
  %s4142 = scalar_lea.vmem %s12, 128
  %v4143 = vld [vmem:[%s4142] sm:$0xff]
  %v4144 = vld [vmem:[%s4142 + $0x8] sm:$0xff]
  %v4145 = vld [vmem:[%s4142 + $0x10] sm:$0xff]
  %v4146 = vld [vmem:[%s4142 + $0x18] sm:$0xff]
  %v4147 = vld [vmem:[%s4142 + $0x20] sm:$0xff]
  %v4148 = vld [vmem:[%s4142 + $0x28] sm:$0xff]
  %v4149 = vld [vmem:[%s4142 + $0x30] sm:$0xff]
  %v4150 = vld [vmem:[%s4142 + $0x38] sm:$0xff]
  %v4159 = vunpack.c.l.b16 %v4143
  %v4160 = vunpack.c.h.b16 %v4143
  %v4161 = vunpack.c.l.b16 %v4144
  %v4162 = vunpack.c.h.b16 %v4144
  %v4163 = vunpack.c.l.b16 %v4145
  %v4164 = vunpack.c.h.b16 %v4145
  %v4165 = vunpack.c.l.b16 %v4146
  %v4166 = vunpack.c.h.b16 %v4146
  %v4167 = vunpack.c.l.b16 %v4147
  %v4168 = vunpack.c.h.b16 %v4147
  %v4169 = vunpack.c.l.b16 %v4148
  %v4170 = vunpack.c.h.b16 %v4148
  %v4171 = vunpack.c.l.b16 %v4149
  %v4172 = vunpack.c.h.b16 %v4149
  %v4173 = vunpack.c.l.b16 %v4150
  %v4174 = vunpack.c.h.b16 %v4150
  %v4175 = vpack.c.b16 %v4161, %v4159
  %v4176 = vpack.c.b16 %v4162, %v4160
  %v4177 = vpack.c.b16 %v4165, %v4163
  %v4178 = vpack.c.b16 %v4166, %v4164
  %v4179 = vpack.c.b16 %v4169, %v4167
  %v4180 = vpack.c.b16 %v4170, %v4168
  %v4181 = vpack.c.b16 %v4173, %v4171
  %v4182 = vpack.c.b16 %v4174, %v4172
  %4191 = vmatprep.subr.bf16.mxu0 %v4176
  %4192 = vmatpush1.bf16.msra.mxu0 %v4175
  %4193 = vmatprep.subr.bf16.mxu0 %v4178
  %4194 = vmatpush1.bf16.msra.mxu0 %v4177
  %4195 = vmatprep.subr.bf16.mxu0 %v4180
  %4196 = vmatpush1.bf16.msra.mxu0 %v4179
  %4197 = vmatprep.subr.bf16.mxu0 %v4182
  %4198 = vmatpush1.bf16.msra.mxu0 %v4181
  %4199 = vmatprep.subr.bf16.mxu0 0
  %4200 = vmatpush1.bf16.msra.mxu0 0
  %4201 = vmatprep.subr.bf16.mxu0 0
  %4202 = vmatpush1.bf16.msra.mxu0 0
  %4203 = vmatprep.subr.bf16.mxu0 0
  %4204 = vmatpush1.bf16.msra.mxu0 0
  %4205 = vmatprep.subr.bf16.mxu0 0
  %4206 = vmatpush1.bf16.msra.mxu0 0
  %4207 = vmatprep.subr.bf16.mxu0 0
  %4208 = vmatpush1.bf16.msra.mxu0 0
  %4209 = vmatprep.subr.bf16.mxu0 0
  %4210 = vmatpush1.bf16.msra.mxu0 0
  %4211 = vmatprep.subr.bf16.mxu0 0
  %4212 = vmatpush1.bf16.msra.mxu0 0
  %4213 = vmatprep.subr.bf16.mxu0 0
  %4214 = vmatpush1.bf16.msra.mxu0 0
  %4215 = vmatprep.subr.bf16.mxu0 0
  %4216 = vmatpush1.bf16.msra.mxu0 0
  %4217 = vmatprep.subr.bf16.mxu0 0
  %4218 = vmatpush1.bf16.msra.mxu0 0
  %4219 = vmatprep.subr.bf16.mxu0 0
  %4220 = vmatpush1.bf16.msra.mxu0 0
  %4221 = vmatprep.subr.bf16.mxu0 0
  %4222 = vmatpush1.bf16.msra.mxu0 0
  %4223 = vmatprep.mubr.bf16.mxu0 0
  %4224 = vmatmul.mubr.bf16.gmra.mrb[0].mxu0 %v3966
  %v4225 = vpop.f32.mrb[0].mxu0
  %v4226 = vadd.f32 0.0, %v4225
  %v4227 = vpop.f32.mrb[0].mxu0
  %v4228 = vadd.f32 0.0, %v4227
  %v4229 = vpop.f32.mrb[0].mxu0
  %v4230 = vadd.f32 0.0, %v4229
  %v4231 = vpop.f32.mrb[0].mxu0
  %v4232 = vadd.f32 0.0, %v4231
  %4233 = vmatprep.mubr.bf16.mxu0 0
  %4234 = vmatmul.mubr.bf16.gmra.mrb[0].mxu0 %v3969
  %v4235 = vpop.f32.mrb[0].mxu0
  %v4236 = vadd.f32 0.0, %v4235
  %v4237 = vpop.f32.mrb[0].mxu0
  %v4238 = vadd.f32 0.0, %v4237
  %v4239 = vpop.f32.mrb[0].mxu0
  %v4240 = vadd.f32 0.0, %v4239
  %v4241 = vpop.f32.mrb[0].mxu0
  %v4242 = vadd.f32 0.0, %v4241
  %4243 = vdwg.mxu0
  %4244 = vst [vmem:[#allocation5 + $0x80] sm:$0xff] %v4226
  %4245 = vst [vmem:[#allocation5 + $0x88] sm:$0xff] %v4228
  %4246 = vst [vmem:[#allocation5 + $0x90] sm:$0xff] %v4230
  %4247 = vst [vmem:[#allocation5 + $0x98] sm:$0xff] %v4232
  %4248 = vst [vmem:[#allocation5 + $0xa0] sm:$0xff] %v4236
  %4249 = vst [vmem:[#allocation5 + $0xa8] sm:$0xff] %v4238
  %4250 = vst [vmem:[#allocation5 + $0xb0] sm:$0xff] %v4240
  %4251 = vst [vmem:[#allocation5 + $0xb8] sm:$0xff] %v4242
  %s4252 = scalar_lea.vmem %s12, 192
  %v4253 = vld [vmem:[%s4252] sm:$0xff]
  %v4254 = vld [vmem:[%s4252 + $0x8] sm:$0xff]
  %v4255 = vld [vmem:[%s4252 + $0x10] sm:$0xff]
  %v4256 = vld [vmem:[%s4252 + $0x18] sm:$0xff]
  %v4257 = vld [vmem:[%s4252 + $0x20] sm:$0xff]
  %v4258 = vld [vmem:[%s4252 + $0x28] sm:$0xff]
  %v4259 = vld [vmem:[%s4252 + $0x30] sm:$0xff]
  %v4260 = vld [vmem:[%s4252 + $0x38] sm:$0xff]
  %v4269 = vunpack.c.l.b16 %v4253
  %v4270 = vunpack.c.h.b16 %v4253
  %v4271 = vunpack.c.l.b16 %v4254
  %v4272 = vunpack.c.h.b16 %v4254
  %v4273 = vunpack.c.l.b16 %v4255
  %v4274 = vunpack.c.h.b16 %v4255
  %v4275 = vunpack.c.l.b16 %v4256
  %v4276 = vunpack.c.h.b16 %v4256
  %v4277 = vunpack.c.l.b16 %v4257
  %v4278 = vunpack.c.h.b16 %v4257
  %v4279 = vunpack.c.l.b16 %v4258
  %v4280 = vunpack.c.h.b16 %v4258
  %v4281 = vunpack.c.l.b16 %v4259
  %v4282 = vunpack.c.h.b16 %v4259
  %v4283 = vunpack.c.l.b16 %v4260
  %v4284 = vunpack.c.h.b16 %v4260
  %v4285 = vpack.c.b16 %v4271, %v4269
  %v4286 = vpack.c.b16 %v4272, %v4270
  %v4287 = vpack.c.b16 %v4275, %v4273
  %v4288 = vpack.c.b16 %v4276, %v4274
  %v4289 = vpack.c.b16 %v4279, %v4277
  %v4290 = vpack.c.b16 %v4280, %v4278
  %v4291 = vpack.c.b16 %v4283, %v4281
  %v4292 = vpack.c.b16 %v4284, %v4282
  %4301 = vmatprep.subr.bf16.mxu0 %v4286
  %4302 = vmatpush1.bf16.msra.mxu0 %v4285
  %4303 = vmatprep.subr.bf16.mxu0 %v4288
  %4304 = vmatpush1.bf16.msra.mxu0 %v4287
  %4305 = vmatprep.subr.bf16.mxu0 %v4290
  %4306 = vmatpush1.bf16.msra.mxu0 %v4289
  %4307 = vmatprep.subr.bf16.mxu0 %v4292
  %4308 = vmatpush1.bf16.msra.mxu0 %v4291
  %4309 = vmatprep.subr.bf16.mxu0 0
  %4310 = vmatpush1.bf16.msra.mxu0 0
  %4311 = vmatprep.subr.bf16.mxu0 0
  %4312 = vmatpush1.bf16.msra.mxu0 0
  %4313 = vmatprep.subr.bf16.mxu0 0
  %4314 = vmatpush1.bf16.msra.mxu0 0
  %4315 = vmatprep.subr.bf16.mxu0 0
  %4316 = vmatpush1.bf16.msra.mxu0 0
  %4317 = vmatprep.subr.bf16.mxu0 0
  %4318 = vmatpush1.bf16.msra.mxu0 0
  %4319 = vmatprep.subr.bf16.mxu0 0
  %4320 = vmatpush1.bf16.msra.mxu0 0
  %4321 = vmatprep.subr.bf16.mxu0 0
  %4322 = vmatpush1.bf16.msra.mxu0 0
  %4323 = vmatprep.subr.bf16.mxu0 0
  %4324 = vmatpush1.bf16.msra.mxu0 0
  %4325 = vmatprep.subr.bf16.mxu0 0
  %4326 = vmatpush1.bf16.msra.mxu0 0
  %4327 = vmatprep.subr.bf16.mxu0 0
  %4328 = vmatpush1.bf16.msra.mxu0 0
  %4329 = vmatprep.subr.bf16.mxu0 0
  %4330 = vmatpush1.bf16.msra.mxu0 0
  %4331 = vmatprep.subr.bf16.mxu0 0
  %4332 = vmatpush1.bf16.msra.mxu0 0
  %4333 = vmatprep.mubr.bf16.mxu0 0
  %4334 = vmatmul.mubr.bf16.gmra.mrb[0].mxu0 %v3966
  %v4335 = vpop.f32.mrb[0].mxu0
  %v4336 = vadd.f32 0.0, %v4335
  %v4337 = vpop.f32.mrb[0].mxu0
  %v4338 = vadd.f32 0.0, %v4337
  %v4339 = vpop.f32.mrb[0].mxu0
  %v4340 = vadd.f32 0.0, %v4339
  %v4341 = vpop.f32.mrb[0].mxu0
  %v4342 = vadd.f32 0.0, %v4341
  %4343 = vmatprep.mubr.bf16.mxu0 0
  %4344 = vmatmul.mubr.bf16.gmra.mrb[0].mxu0 %v3969
  %v4345 = vpop.f32.mrb[0].mxu0
  %v4346 = vadd.f32 0.0, %v4345
  %v4347 = vpop.f32.mrb[0].mxu0
  %v4348 = vadd.f32 0.0, %v4347
  %v4349 = vpop.f32.mrb[0].mxu0
  %v4350 = vadd.f32 0.0, %v4349
  %v4351 = vpop.f32.mrb[0].mxu0
  %v4352 = vadd.f32 0.0, %v4351
  %4353 = vdwg.mxu0
  %4354 = vst [vmem:[#allocation5 + $0xc0] sm:$0xff] %v4336
  %4355 = vst [vmem:[#allocation5 + $0xc8] sm:$0xff] %v4338
  %4356 = vst [vmem:[#allocation5 + $0xd0] sm:$0xff] %v4340
  %4357 = vst [vmem:[#allocation5 + $0xd8] sm:$0xff] %v4342
  %4358 = vst [vmem:[#allocation5 + $0xe0] sm:$0xff] %v4346
  %4359 = vst [vmem:[#allocation5 + $0xe8] sm:$0xff] %v4348
  %4360 = vst [vmem:[#allocation5 + $0xf0] sm:$0xff] %v4350
  %4361 = vst [vmem:[#allocation5 + $0xf8] sm:$0xff] %v4352
  %s4362 = scalar_lea.vmem %s12, 256
  %v4363 = vld [vmem:[%s4362] sm:$0xff]
  %v4364 = vld [vmem:[%s4362 + $0x8] sm:$0xff]
  %v4365 = vld [vmem:[%s4362 + $0x10] sm:$0xff]
  %v4366 = vld [vmem:[%s4362 + $0x18] sm:$0xff]
  %v4367 = vld [vmem:[%s4362 + $0x20] sm:$0xff]
  %v4368 = vld [vmem:[%s4362 + $0x28] sm:$0xff]
  %v4369 = vld [vmem:[%s4362 + $0x30] sm:$0xff]
  %v4370 = vld [vmem:[%s4362 + $0x38] sm:$0xff]
  %v4379 = vunpack.c.l.b16 %v4363
  %v4380 = vunpack.c.h.b16 %v4363
  %v4381 = vunpack.c.l.b16 %v4364
  %v4382 = vunpack.c.h.b16 %v4364
  %v4383 = vunpack.c.l.b16 %v4365
  %v4384 = vunpack.c.h.b16 %v4365
  %v4385 = vunpack.c.l.b16 %v4366
  %v4386 = vunpack.c.h.b16 %v4366
  %v4387 = vunpack.c.l.b16 %v4367
  %v4388 = vunpack.c.h.b16 %v4367
  %v4389 = vunpack.c.l.b16 %v4368
  %v4390 = vunpack.c.h.b16 %v4368
  %v4391 = vunpack.c.l.b16 %v4369
  %v4392 = vunpack.c.h.b16 %v4369
  %v4393 = vunpack.c.l.b16 %v4370
  %v4394 = vunpack.c.h.b16 %v4370
  %v4395 = vpack.c.b16 %v4381, %v4379
  %v4396 = vpack.c.b16 %v4382, %v4380
  %v4397 = vpack.c.b16 %v4385, %v4383
  %v4398 = vpack.c.b16 %v4386, %v4384
  %v4399 = vpack.c.b16 %v4389, %v4387
  %v4400 = vpack.c.b16 %v4390, %v4388
  %v4401 = vpack.c.b16 %v4393, %v4391
  %v4402 = vpack.c.b16 %v4394, %v4392
  %4411 = vmatprep.subr.bf16.mxu0 %v4396
  %4412 = vmatpush1.bf16.msra.mxu0 %v4395
  %4413 = vmatprep.subr.bf16.mxu0 %v4398
  %4414 = vmatpush1.bf16.msra.mxu0 %v4397
  %4415 = vmatprep.subr.bf16.mxu0 %v4400
  %4416 = vmatpush1.bf16.msra.mxu0 %v4399
  %4417 = vmatprep.subr.bf16.mxu0 %v4402
  %4418 = vmatpush1.bf16.msra.mxu0 %v4401
  %4419 = vmatprep.subr.bf16.mxu0 0
  %4420 = vmatpush1.bf16.msra.mxu0 0
  %4421 = vmatprep.subr.bf16.mxu0 0
  %4422 = vmatpush1.bf16.msra.mxu0 0
  %4423 = vmatprep.subr.bf16.mxu0 0
  %4424 = vmatpush1.bf16.msra.mxu0 0
  %4425 = vmatprep.subr.bf16.mxu0 0
  %4426 = vmatpush1.bf16.msra.mxu0 0
  %4427 = vmatprep.subr.bf16.mxu0 0
  %4428 = vmatpush1.bf16.msra.mxu0 0
  %4429 = vmatprep.subr.bf16.mxu0 0
  %4430 = vmatpush1.bf16.msra.mxu0 0
  %4431 = vmatprep.subr.bf16.mxu0 0
  %4432 = vmatpush1.bf16.msra.mxu0 0
  %4433 = vmatprep.subr.bf16.mxu0 0
  %4434 = vmatpush1.bf16.msra.mxu0 0
  %4435 = vmatprep.subr.bf16.mxu0 0
  %4436 = vmatpush1.bf16.msra.mxu0 0
  %4437 = vmatprep.subr.bf16.mxu0 0
  %4438 = vmatpush1.bf16.msra.mxu0 0
  %4439 = vmatprep.subr.bf16.mxu0 0
  %4440 = vmatpush1.bf16.msra.mxu0 0
  %4441 = vmatprep.subr.bf16.mxu0 0
  %4442 = vmatpush1.bf16.msra.mxu0 0
  %4443 = vmatprep.mubr.bf16.mxu0 0
  %4444 = vmatmul.mubr.bf16.gmra.mrb[0].mxu0 %v3966
  %v4445 = vpop.f32.mrb[0].mxu0
  %v4446 = vadd.f32 0.0, %v4445
  %v4447 = vpop.f32.mrb[0].mxu0
  %v4448 = vadd.f32 0.0, %v4447
  %v4449 = vpop.f32.mrb[0].mxu0
  %v4450 = vadd.f32 0.0, %v4449
  %v4451 = vpop.f32.mrb[0].mxu0
  %v4452 = vadd.f32 0.0, %v4451
  %4453 = vmatprep.mubr.bf16.mxu0 0
  %4454 = vmatmul.mubr.bf16.gmra.mrb[0].mxu0 %v3969
  %v4455 = vpop.f32.mrb[0].mxu0
  %v4456 = vadd.f32 0.0, %v4455
  %v4457 = vpop.f32.mrb[0].mxu0
  %v4458 = vadd.f32 0.0, %v4457
  %v4459 = vpop.f32.mrb[0].mxu0
  %v4460 = vadd.f32 0.0, %v4459
  %v4461 = vpop.f32.mrb[0].mxu0
  %v4462 = vadd.f32 0.0, %v4461
  %4463 = vdwg.mxu0
  %4464 = vst [vmem:[#allocation5 + $0x100] sm:$0xff] %v4446
  %4465 = vst [vmem:[#allocation5 + $0x108] sm:$0xff] %v4448
  %4466 = vst [vmem:[#allocation5 + $0x110] sm:$0xff] %v4450
  %4467 = vst [vmem:[#allocation5 + $0x118] sm:$0xff] %v4452
  %4468 = vst [vmem:[#allocation5 + $0x120] sm:$0xff] %v4456
  %4469 = vst [vmem:[#allocation5 + $0x128] sm:$0xff] %v4458
  %4470 = vst [vmem:[#allocation5 + $0x130] sm:$0xff] %v4460
  %4471 = vst [vmem:[#allocation5 + $0x138] sm:$0xff] %v4462
  %s4472 = scalar_lea.vmem %s12, 320
  %v4473 = vld [vmem:[%s4472] sm:$0xff]
  %v4474 = vld [vmem:[%s4472 + $0x8] sm:$0xff]
  %v4475 = vld [vmem:[%s4472 + $0x10] sm:$0xff]
  %v4476 = vld [vmem:[%s4472 + $0x18] sm:$0xff]
  %v4477 = vld [vmem:[%s4472 + $0x20] sm:$0xff]
  %v4478 = vld [vmem:[%s4472 + $0x28] sm:$0xff]
  %v4479 = vld [vmem:[%s4472 + $0x30] sm:$0xff]
  %v4480 = vld [vmem:[%s4472 + $0x38] sm:$0xff]
  %v4489 = vunpack.c.l.b16 %v4473
  %v4490 = vunpack.c.h.b16 %v4473
  %v4491 = vunpack.c.l.b16 %v4474
  %v4492 = vunpack.c.h.b16 %v4474
  %v4493 = vunpack.c.l.b16 %v4475
  %v4494 = vunpack.c.h.b16 %v4475
  %v4495 = vunpack.c.l.b16 %v4476
  %v4496 = vunpack.c.h.b16 %v4476
  %v4497 = vunpack.c.l.b16 %v4477
  %v4498 = vunpack.c.h.b16 %v4477
  %v4499 = vunpack.c.l.b16 %v4478
  %v4500 = vunpack.c.h.b16 %v4478
  %v4501 = vunpack.c.l.b16 %v4479
  %v4502 = vunpack.c.h.b16 %v4479
  %v4503 = vunpack.c.l.b16 %v4480
  %v4504 = vunpack.c.h.b16 %v4480
  %v4505 = vpack.c.b16 %v4491, %v4489
  %v4506 = vpack.c.b16 %v4492, %v4490
  %v4507 = vpack.c.b16 %v4495, %v4493
  %v4508 = vpack.c.b16 %v4496, %v4494
  %v4509 = vpack.c.b16 %v4499, %v4497
  %v4510 = vpack.c.b16 %v4500, %v4498
  %v4511 = vpack.c.b16 %v4503, %v4501
  %v4512 = vpack.c.b16 %v4504, %v4502
  %4521 = vmatprep.subr.bf16.mxu0 %v4506
  %4522 = vmatpush1.bf16.msra.mxu0 %v4505
  %4523 = vmatprep.subr.bf16.mxu0 %v4508
  %4524 = vmatpush1.bf16.msra.mxu0 %v4507
  %4525 = vmatprep.subr.bf16.mxu0 %v4510
  %4526 = vmatpush1.bf16.msra.mxu0 %v4509
  %4527 = vmatprep.subr.bf16.mxu0 %v4512
  %4528 = vmatpush1.bf16.msra.mxu0 %v4511
  %4529 = vmatprep.subr.bf16.mxu0 0
  %4530 = vmatpush1.bf16.msra.mxu0 0
  %4531 = vmatprep.subr.bf16.mxu0 0
  %4532 = vmatpush1.bf16.msra.mxu0 0
  %4533 = vmatprep.subr.bf16.mxu0 0
  %4534 = vmatpush1.bf16.msra.mxu0 0
  %4535 = vmatprep.subr.bf16.mxu0 0
  %4536 = vmatpush1.bf16.msra.mxu0 0
  %4537 = vmatprep.subr.bf16.mxu0 0
  %4538 = vmatpush1.bf16.msra.mxu0 0
  %4539 = vmatprep.subr.bf16.mxu0 0
  %4540 = vmatpush1.bf16.msra.mxu0 0
  %4541 = vmatprep.subr.bf16.mxu0 0
  %4542 = vmatpush1.bf16.msra.mxu0 0
  %4543 = vmatprep.subr.bf16.mxu0 0
  %4544 = vmatpush1.bf16.msra.mxu0 0
  %4545 = vmatprep.subr.bf16.mxu0 0
  %4546 = vmatpush1.bf16.msra.mxu0 0
  %4547 = vmatprep.subr.bf16.mxu0 0
  %4548 = vmatpush1.bf16.msra.mxu0 0
  %4549 = vmatprep.subr.bf16.mxu0 0
  %4550 = vmatpush1.bf16.msra.mxu0 0
  %4551 = vmatprep.subr.bf16.mxu0 0
  %4552 = vmatpush1.bf16.msra.mxu0 0
  %4553 = vmatprep.mubr.bf16.mxu0 0
  %4554 = vmatmul.mubr.bf16.gmra.mrb[0].mxu0 %v3966
  %v4555 = vpop.f32.mrb[0].mxu0
  %v4556 = vadd.f32 0.0, %v4555
  %v4557 = vpop.f32.mrb[0].mxu0
  %v4558 = vadd.f32 0.0, %v4557
  %v4559 = vpop.f32.mrb[0].mxu0
  %v4560 = vadd.f32 0.0, %v4559
  %v4561 = vpop.f32.mrb[0].mxu0
  %v4562 = vadd.f32 0.0, %v4561
  %4563 = vmatprep.mubr.bf16.mxu0 0
  %4564 = vmatmul.mubr.bf16.gmra.mrb[0].mxu0 %v3969
  %v4565 = vpop.f32.mrb[0].mxu0
  %v4566 = vadd.f32 0.0, %v4565
  %v4567 = vpop.f32.mrb[0].mxu0
  %v4568 = vadd.f32 0.0, %v4567
  %v4569 = vpop.f32.mrb[0].mxu0
  %v4570 = vadd.f32 0.0, %v4569
  %v4571 = vpop.f32.mrb[0].mxu0
  %v4572 = vadd.f32 0.0, %v4571
  %4573 = vdwg.mxu0
  %4574 = vst [vmem:[#allocation5 + $0x140] sm:$0xff] %v4556
  %4575 = vst [vmem:[#allocation5 + $0x148] sm:$0xff] %v4558
  %4576 = vst [vmem:[#allocation5 + $0x150] sm:$0xff] %v4560
  %4577 = vst [vmem:[#allocation5 + $0x158] sm:$0xff] %v4562
  %4578 = vst [vmem:[#allocation5 + $0x160] sm:$0xff] %v4566
  %4579 = vst [vmem:[#allocation5 + $0x168] sm:$0xff] %v4568
  %4580 = vst [vmem:[#allocation5 + $0x170] sm:$0xff] %v4570
  %4581 = vst [vmem:[#allocation5 + $0x178] sm:$0xff] %v4572
  %s4582 = scalar_lea.vmem %s12, 384
  %v4583 = vld [vmem:[%s4582] sm:$0xff]
  %v4584 = vld [vmem:[%s4582 + $0x8] sm:$0xff]
  %v4585 = vld [vmem:[%s4582 + $0x10] sm:$0xff]
  %v4586 = vld [vmem:[%s4582 + $0x18] sm:$0xff]
  %v4587 = vld [vmem:[%s4582 + $0x20] sm:$0xff]
  %v4588 = vld [vmem:[%s4582 + $0x28] sm:$0xff]
  %v4589 = vld [vmem:[%s4582 + $0x30] sm:$0xff]
  %v4590 = vld [vmem:[%s4582 + $0x38] sm:$0xff]
  %v4599 = vunpack.c.l.b16 %v4583
  %v4600 = vunpack.c.h.b16 %v4583
  %v4601 = vunpack.c.l.b16 %v4584
  %v4602 = vunpack.c.h.b16 %v4584
  %v4603 = vunpack.c.l.b16 %v4585
  %v4604 = vunpack.c.h.b16 %v4585
  %v4605 = vunpack.c.l.b16 %v4586
  %v4606 = vunpack.c.h.b16 %v4586
  %v4607 = vunpack.c.l.b16 %v4587
  %v4608 = vunpack.c.h.b16 %v4587
  %v4609 = vunpack.c.l.b16 %v4588
  %v4610 = vunpack.c.h.b16 %v4588
  %v4611 = vunpack.c.l.b16 %v4589
  %v4612 = vunpack.c.h.b16 %v4589
  %v4613 = vunpack.c.l.b16 %v4590
  %v4614 = vunpack.c.h.b16 %v4590
  %v4615 = vpack.c.b16 %v4601, %v4599
  %v4616 = vpack.c.b16 %v4602, %v4600
  %v4617 = vpack.c.b16 %v4605, %v4603
  %v4618 = vpack.c.b16 %v4606, %v4604
  %v4619 = vpack.c.b16 %v4609, %v4607
  %v4620 = vpack.c.b16 %v4610, %v4608
  %v4621 = vpack.c.b16 %v4613, %v4611
  %v4622 = vpack.c.b16 %v4614, %v4612
  %4631 = vmatprep.subr.bf16.mxu0 %v4616
  %4632 = vmatpush1.bf16.msra.mxu0 %v4615
  %4633 = vmatprep.subr.bf16.mxu0 %v4618
  %4634 = vmatpush1.bf16.msra.mxu0 %v4617
  %4635 = vmatprep.subr.bf16.mxu0 %v4620
  %4636 = vmatpush1.bf16.msra.mxu0 %v4619
  %4637 = vmatprep.subr.bf16.mxu0 %v4622
  %4638 = vmatpush1.bf16.msra.mxu0 %v4621
  %4639 = vmatprep.subr.bf16.mxu0 0
  %4640 = vmatpush1.bf16.msra.mxu0 0
  %4641 = vmatprep.subr.bf16.mxu0 0
  %4642 = vmatpush1.bf16.msra.mxu0 0
  %4643 = vmatprep.subr.bf16.mxu0 0
  %4644 = vmatpush1.bf16.msra.mxu0 0
  %4645 = vmatprep.subr.bf16.mxu0 0
  %4646 = vmatpush1.bf16.msra.mxu0 0
  %4647 = vmatprep.subr.bf16.mxu0 0
  %4648 = vmatpush1.bf16.msra.mxu0 0
  %4649 = vmatprep.subr.bf16.mxu0 0
  %4650 = vmatpush1.bf16.msra.mxu0 0
  %4651 = vmatprep.subr.bf16.mxu0 0
  %4652 = vmatpush1.bf16.msra.mxu0 0
  %4653 = vmatprep.subr.bf16.mxu0 0
  %4654 = vmatpush1.bf16.msra.mxu0 0
  %4655 = vmatprep.subr.bf16.mxu0 0
  %4656 = vmatpush1.bf16.msra.mxu0 0
  %4657 = vmatprep.subr.bf16.mxu0 0
  %4658 = vmatpush1.bf16.msra.mxu0 0
  %4659 = vmatprep.subr.bf16.mxu0 0
  %4660 = vmatpush1.bf16.msra.mxu0 0
  %4661 = vmatprep.subr.bf16.mxu0 0
  %4662 = vmatpush1.bf16.msra.mxu0 0
  %4663 = vmatprep.mubr.bf16.mxu0 0
  %4664 = vmatmul.mubr.bf16.gmra.mrb[0].mxu0 %v3966
  %v4665 = vpop.f32.mrb[0].mxu0
  %v4666 = vadd.f32 0.0, %v4665
  %v4667 = vpop.f32.mrb[0].mxu0
  %v4668 = vadd.f32 0.0, %v4667
  %v4669 = vpop.f32.mrb[0].mxu0
  %v4670 = vadd.f32 0.0, %v4669
  %v4671 = vpop.f32.mrb[0].mxu0
  %v4672 = vadd.f32 0.0, %v4671
  %4673 = vmatprep.mubr.bf16.mxu0 0
  %4674 = vmatmul.mubr.bf16.gmra.mrb[0].mxu0 %v3969
  %v4675 = vpop.f32.mrb[0].mxu0
  %v4676 = vadd.f32 0.0, %v4675
  %v4677 = vpop.f32.mrb[0].mxu0
  %v4678 = vadd.f32 0.0, %v4677
  %v4679 = vpop.f32.mrb[0].mxu0
  %v4680 = vadd.f32 0.0, %v4679
  %v4681 = vpop.f32.mrb[0].mxu0
  %v4682 = vadd.f32 0.0, %v4681
  %4683 = vdwg.mxu0
  %4684 = vst [vmem:[#allocation5 + $0x180] sm:$0xff] %v4666
  %4685 = vst [vmem:[#allocation5 + $0x188] sm:$0xff] %v4668
  %4686 = vst [vmem:[#allocation5 + $0x190] sm:$0xff] %v4670
  %4687 = vst [vmem:[#allocation5 + $0x198] sm:$0xff] %v4672
  %4688 = vst [vmem:[#allocation5 + $0x1a0] sm:$0xff] %v4676
  %4689 = vst [vmem:[#allocation5 + $0x1a8] sm:$0xff] %v4678
  %4690 = vst [vmem:[#allocation5 + $0x1b0] sm:$0xff] %v4680
  %4691 = vst [vmem:[#allocation5 + $0x1b8] sm:$0xff] %v4682
  %s4692 = scalar_lea.vmem %s12, 448
  %v4693 = vld [vmem:[%s4692] sm:$0xff]
  %v4694 = vld [vmem:[%s4692 + $0x8] sm:$0xff]
  %v4695 = vld [vmem:[%s4692 + $0x10] sm:$0xff]
  %v4696 = vld [vmem:[%s4692 + $0x18] sm:$0xff]
  %v4697 = vld [vmem:[%s4692 + $0x20] sm:$0xff]
  %v4698 = vld [vmem:[%s4692 + $0x28] sm:$0xff]
  %v4699 = vld [vmem:[%s4692 + $0x30] sm:$0xff]
  %v4700 = vld [vmem:[%s4692 + $0x38] sm:$0xff]
  %v4709 = vunpack.c.l.b16 %v4693
  %v4710 = vunpack.c.h.b16 %v4693
  %v4711 = vunpack.c.l.b16 %v4694
  %v4712 = vunpack.c.h.b16 %v4694
  %v4713 = vunpack.c.l.b16 %v4695
  %v4714 = vunpack.c.h.b16 %v4695
  %v4715 = vunpack.c.l.b16 %v4696
  %v4716 = vunpack.c.h.b16 %v4696
  %v4717 = vunpack.c.l.b16 %v4697
  %v4718 = vunpack.c.h.b16 %v4697
  %v4719 = vunpack.c.l.b16 %v4698
  %v4720 = vunpack.c.h.b16 %v4698
  %v4721 = vunpack.c.l.b16 %v4699
  %v4722 = vunpack.c.h.b16 %v4699
  %v4723 = vunpack.c.l.b16 %v4700
  %v4724 = vunpack.c.h.b16 %v4700
  %v4725 = vpack.c.b16 %v4711, %v4709
  %v4726 = vpack.c.b16 %v4712, %v4710
  %v4727 = vpack.c.b16 %v4715, %v4713
  %v4728 = vpack.c.b16 %v4716, %v4714
  %v4729 = vpack.c.b16 %v4719, %v4717
  %v4730 = vpack.c.b16 %v4720, %v4718
  %v4731 = vpack.c.b16 %v4723, %v4721
  %v4732 = vpack.c.b16 %v4724, %v4722
  %4741 = vmatprep.subr.bf16.mxu0 %v4726
  %4742 = vmatpush1.bf16.msra.mxu0 %v4725
  %4743 = vmatprep.subr.bf16.mxu0 %v4728
  %4744 = vmatpush1.bf16.msra.mxu0 %v4727
  %4745 = vmatprep.subr.bf16.mxu0 %v4730
  %4746 = vmatpush1.bf16.msra.mxu0 %v4729
  %4747 = vmatprep.subr.bf16.mxu0 %v4732
  %4748 = vmatpush1.bf16.msra.mxu0 %v4731
  %4749 = vmatprep.subr.bf16.mxu0 0
  %4750 = vmatpush1.bf16.msra.mxu0 0
  %4751 = vmatprep.subr.bf16.mxu0 0
  %4752 = vmatpush1.bf16.msra.mxu0 0
  %4753 = vmatprep.subr.bf16.mxu0 0
  %4754 = vmatpush1.bf16.msra.mxu0 0
  %4755 = vmatprep.subr.bf16.mxu0 0
  %4756 = vmatpush1.bf16.msra.mxu0 0
  %4757 = vmatprep.subr.bf16.mxu0 0
  %4758 = vmatpush1.bf16.msra.mxu0 0
  %4759 = vmatprep.subr.bf16.mxu0 0
  %4760 = vmatpush1.bf16.msra.mxu0 0
  %4761 = vmatprep.subr.bf16.mxu0 0
  %4762 = vmatpush1.bf16.msra.mxu0 0
  %4763 = vmatprep.subr.bf16.mxu0 0
  %4764 = vmatpush1.bf16.msra.mxu0 0
  %4765 = vmatprep.subr.bf16.mxu0 0
  %4766 = vmatpush1.bf16.msra.mxu0 0
  %4767 = vmatprep.subr.bf16.mxu0 0
  %4768 = vmatpush1.bf16.msra.mxu0 0
  %4769 = vmatprep.subr.bf16.mxu0 0
  %4770 = vmatpush1.bf16.msra.mxu0 0
  %4771 = vmatprep.subr.bf16.mxu0 0
  %4772 = vmatpush1.bf16.msra.mxu0 0
  %4773 = vmatprep.mubr.bf16.mxu0 0
  %4774 = vmatmul.mubr.bf16.gmra.mrb[0].mxu0 %v3966
  %v4775 = vpop.f32.mrb[0].mxu0
  %v4776 = vadd.f32 0.0, %v4775
  %v4777 = vpop.f32.mrb[0].mxu0
  %v4778 = vadd.f32 0.0, %v4777
  %v4779 = vpop.f32.mrb[0].mxu0
  %v4780 = vadd.f32 0.0, %v4779
  %v4781 = vpop.f32.mrb[0].mxu0
  %v4782 = vadd.f32 0.0, %v4781
  %4783 = vmatprep.mubr.bf16.mxu0 0
  %4784 = vmatmul.mubr.bf16.gmra.mrb[0].mxu0 %v3969
  %v4785 = vpop.f32.mrb[0].mxu0
  %v4786 = vadd.f32 0.0, %v4785
  %v4787 = vpop.f32.mrb[0].mxu0
  %v4788 = vadd.f32 0.0, %v4787
  %v4789 = vpop.f32.mrb[0].mxu0
  %v4790 = vadd.f32 0.0, %v4789
  %v4791 = vpop.f32.mrb[0].mxu0
  %v4792 = vadd.f32 0.0, %v4791
  %4793 = vdwg.mxu0
  %4794 = vst [vmem:[#allocation5 + $0x1c0] sm:$0xff] %v4776
  %4795 = vst [vmem:[#allocation5 + $0x1c8] sm:$0xff] %v4778
  %4796 = vst [vmem:[#allocation5 + $0x1d0] sm:$0xff] %v4780
  %4797 = vst [vmem:[#allocation5 + $0x1d8] sm:$0xff] %v4782
  %4798 = vst [vmem:[#allocation5 + $0x1e0] sm:$0xff] %v4786
  %4799 = vst [vmem:[#allocation5 + $0x1e8] sm:$0xff] %v4788
  %4800 = vst [vmem:[#allocation5 + $0x1f0] sm:$0xff] %v4790
  %4801 = vst [vmem:[#allocation5 + $0x1f8] sm:$0xff] %v4792
  %s4802 = scalar_lea.vmem %s12, 512
  %v4803 = vld [vmem:[%s4802] sm:$0xff]
  %v4804 = vld [vmem:[%s4802 + $0x8] sm:$0xff]
  %v4805 = vld [vmem:[%s4802 + $0x10] sm:$0xff]
  %v4806 = vld [vmem:[%s4802 + $0x18] sm:$0xff]
  %v4807 = vld [vmem:[%s4802 + $0x20] sm:$0xff]
  %v4808 = vld [vmem:[%s4802 + $0x28] sm:$0xff]
  %v4809 = vld [vmem:[%s4802 + $0x30] sm:$0xff]
  %v4810 = vld [vmem:[%s4802 + $0x38] sm:$0xff]
  %v4819 = vunpack.c.l.b16 %v4803
  %v4820 = vunpack.c.h.b16 %v4803
  %v4821 = vunpack.c.l.b16 %v4804
  %v4822 = vunpack.c.h.b16 %v4804
  %v4823 = vunpack.c.l.b16 %v4805
  %v4824 = vunpack.c.h.b16 %v4805
  %v4825 = vunpack.c.l.b16 %v4806
  %v4826 = vunpack.c.h.b16 %v4806
  %v4827 = vunpack.c.l.b16 %v4807
  %v4828 = vunpack.c.h.b16 %v4807
  %v4829 = vunpack.c.l.b16 %v4808
  %v4830 = vunpack.c.h.b16 %v4808
  %v4831 = vunpack.c.l.b16 %v4809
  %v4832 = vunpack.c.h.b16 %v4809
  %v4833 = vunpack.c.l.b16 %v4810
  %v4834 = vunpack.c.h.b16 %v4810
  %v4835 = vpack.c.b16 %v4821, %v4819
  %v4836 = vpack.c.b16 %v4822, %v4820
  %v4837 = vpack.c.b16 %v4825, %v4823
  %v4838 = vpack.c.b16 %v4826, %v4824
  %v4839 = vpack.c.b16 %v4829, %v4827
  %v4840 = vpack.c.b16 %v4830, %v4828
  %v4841 = vpack.c.b16 %v4833, %v4831
  %v4842 = vpack.c.b16 %v4834, %v4832
  %4851 = vmatprep.subr.bf16.mxu0 %v4836
  %4852 = vmatpush1.bf16.msra.mxu0 %v4835
  %4853 = vmatprep.subr.bf16.mxu0 %v4838
  %4854 = vmatpush1.bf16.msra.mxu0 %v4837
  %4855 = vmatprep.subr.bf16.mxu0 %v4840
  %4856 = vmatpush1.bf16.msra.mxu0 %v4839
  %4857 = vmatprep.subr.bf16.mxu0 %v4842
  %4858 = vmatpush1.bf16.msra.mxu0 %v4841
  %4859 = vmatprep.subr.bf16.mxu0 0
  %4860 = vmatpush1.bf16.msra.mxu0 0
  %4861 = vmatprep.subr.bf16.mxu0 0
  %4862 = vmatpush1.bf16.msra.mxu0 0
  %4863 = vmatprep.subr.bf16.mxu0 0
  %4864 = vmatpush1.bf16.msra.mxu0 0
  %4865 = vmatprep.subr.bf16.mxu0 0
  %4866 = vmatpush1.bf16.msra.mxu0 0
  %4867 = vmatprep.subr.bf16.mxu0 0
  %4868 = vmatpush1.bf16.msra.mxu0 0
  %4869 = vmatprep.subr.bf16.mxu0 0
  %4870 = vmatpush1.bf16.msra.mxu0 0
  %4871 = vmatprep.subr.bf16.mxu0 0
  %4872 = vmatpush1.bf16.msra.mxu0 0
  %4873 = vmatprep.subr.bf16.mxu0 0
  %4874 = vmatpush1.bf16.msra.mxu0 0
  %4875 = vmatprep.subr.bf16.mxu0 0
  %4876 = vmatpush1.bf16.msra.mxu0 0
  %4877 = vmatprep.subr.bf16.mxu0 0
  %4878 = vmatpush1.bf16.msra.mxu0 0
  %4879 = vmatprep.subr.bf16.mxu0 0
  %4880 = vmatpush1.bf16.msra.mxu0 0
  %4881 = vmatprep.subr.bf16.mxu0 0
  %4882 = vmatpush1.bf16.msra.mxu0 0
  %4883 = vmatprep.mubr.bf16.mxu0 0
  %4884 = vmatmul.mubr.bf16.gmra.mrb[0].mxu0 %v3966
  %v4885 = vpop.f32.mrb[0].mxu0
  %v4886 = vadd.f32 0.0, %v4885
  %v4887 = vpop.f32.mrb[0].mxu0
  %v4888 = vadd.f32 0.0, %v4887
  %v4889 = vpop.f32.mrb[0].mxu0
  %v4890 = vadd.f32 0.0, %v4889
  %v4891 = vpop.f32.mrb[0].mxu0
  %v4892 = vadd.f32 0.0, %v4891
  %4893 = vmatprep.mubr.bf16.mxu0 0
  %4894 = vmatmul.mubr.bf16.gmra.mrb[0].mxu0 %v3969
  %v4895 = vpop.f32.mrb[0].mxu0
  %v4896 = vadd.f32 0.0, %v4895
  %v4897 = vpop.f32.mrb[0].mxu0
  %v4898 = vadd.f32 0.0, %v4897
  %v4899 = vpop.f32.mrb[0].mxu0
  %v4900 = vadd.f32 0.0, %v4899
  %v4901 = vpop.f32.mrb[0].mxu0
  %v4902 = vadd.f32 0.0, %v4901
  %4903 = vdwg.mxu0
  %4904 = vst [vmem:[#allocation5 + $0x200] sm:$0xff] %v4886
  %4905 = vst [vmem:[#allocation5 + $0x208] sm:$0xff] %v4888
  %4906 = vst [vmem:[#allocation5 + $0x210] sm:$0xff] %v4890
  %4907 = vst [vmem:[#allocation5 + $0x218] sm:$0xff] %v4892
  %4908 = vst [vmem:[#allocation5 + $0x220] sm:$0xff] %v4896
  %4909 = vst [vmem:[#allocation5 + $0x228] sm:$0xff] %v4898
  %4910 = vst [vmem:[#allocation5 + $0x230] sm:$0xff] %v4900
  %4911 = vst [vmem:[#allocation5 + $0x238] sm:$0xff] %v4902
  %v4912 = vld [vmem:[%s10] sm:$0x7]
  %v4913 = vld [vmem:[#allocation5] sm:$0xff]
  %v4914 = vld [vmem:[#allocation5 + $0x8] sm:$0xff]
  %v4915 = vld [vmem:[#allocation5 + $0x10] sm:$0xff]
  %v4916 = vld [vmem:[#allocation5 + $0x18] sm:$0xff]
  %v4917 = vld [vmem:[#allocation5 + $0x20] sm:$0xff]
  %v4918 = vld [vmem:[#allocation5 + $0x28] sm:$0xff]
  %v4919 = vld [vmem:[#allocation5 + $0x30] sm:$0xff]
  %v4920 = vld [vmem:[#allocation5 + $0x38] sm:$0xff]
  %v4921 = vld [vmem:[#allocation5 + $0x40] sm:$0xff]
  %v4922 = vld [vmem:[#allocation5 + $0x48] sm:$0xff]
  %v4923 = vld [vmem:[#allocation5 + $0x50] sm:$0xff]
  %v4924 = vld [vmem:[#allocation5 + $0x58] sm:$0xff]
  %v4925 = vld [vmem:[#allocation5 + $0x60] sm:$0xff]
  %v4926 = vld [vmem:[#allocation5 + $0x68] sm:$0xff]
  %v4927 = vld [vmem:[#allocation5 + $0x70] sm:$0xff]
  %v4928 = vld [vmem:[#allocation5 + $0x78] sm:$0xff]
  %v4929 = vld [vmem:[#allocation5 + $0x80] sm:$0xff]
  %v4930 = vld [vmem:[#allocation5 + $0x88] sm:$0xff]
  %v4931 = vld [vmem:[#allocation5 + $0x90] sm:$0xff]
  %v4932 = vld [vmem:[#allocation5 + $0x98] sm:$0xff]
  %v4933 = vld [vmem:[#allocation5 + $0xa0] sm:$0xff]
  %v4934 = vld [vmem:[#allocation5 + $0xa8] sm:$0xff]
  %v4935 = vld [vmem:[#allocation5 + $0xb0] sm:$0xff]
  %v4936 = vld [vmem:[#allocation5 + $0xb8] sm:$0xff]
  %v4937 = vld [vmem:[#allocation5 + $0xc0] sm:$0xff]
  %v4938 = vld [vmem:[#allocation5 + $0xc8] sm:$0xff]
  %v4939 = vld [vmem:[#allocation5 + $0xd0] sm:$0xff]
  %v4940 = vld [vmem:[#allocation5 + $0xd8] sm:$0xff]
  %v4941 = vld [vmem:[#allocation5 + $0xe0] sm:$0xff]
  %v4942 = vld [vmem:[#allocation5 + $0xe8] sm:$0xff]
  %v4943 = vld [vmem:[#allocation5 + $0xf0] sm:$0xff]
  %v4944 = vld [vmem:[#allocation5 + $0xf8] sm:$0xff]
  %v4945 = vld [vmem:[#allocation5 + $0x100] sm:$0xff]
  %v4946 = vld [vmem:[#allocation5 + $0x108] sm:$0xff]
  %v4947 = vld [vmem:[#allocation5 + $0x110] sm:$0xff]
  %v4948 = vld [vmem:[#allocation5 + $0x118] sm:$0xff]
  %v4949 = vld [vmem:[#allocation5 + $0x120] sm:$0xff]
  %v4950 = vld [vmem:[#allocation5 + $0x128] sm:$0xff]
  %v4951 = vld [vmem:[#allocation5 + $0x130] sm:$0xff]
  %v4952 = vld [vmem:[#allocation5 + $0x138] sm:$0xff]
  %v4953 = vld [vmem:[#allocation5 + $0x140] sm:$0xff]
  %v4954 = vld [vmem:[#allocation5 + $0x148] sm:$0xff]
  %v4955 = vld [vmem:[#allocation5 + $0x150] sm:$0xff]
  %v4956 = vld [vmem:[#allocation5 + $0x158] sm:$0xff]
  %v4957 = vld [vmem:[#allocation5 + $0x160] sm:$0xff]
  %v4958 = vld [vmem:[#allocation5 + $0x168] sm:$0xff]
  %v4959 = vld [vmem:[#allocation5 + $0x170] sm:$0xff]
  %v4960 = vld [vmem:[#allocation5 + $0x178] sm:$0xff]
  %v4961 = vld [vmem:[#allocation5 + $0x180] sm:$0xff]
  %v4962 = vld [vmem:[#allocation5 + $0x188] sm:$0xff]
  %v4963 = vld [vmem:[#allocation5 + $0x190] sm:$0xff]
  %v4964 = vld [vmem:[#allocation5 + $0x198] sm:$0xff]
  %v4965 = vld [vmem:[#allocation5 + $0x1a0] sm:$0xff]
  %v4966 = vld [vmem:[#allocation5 + $0x1a8] sm:$0xff]
  %v4967 = vld [vmem:[#allocation5 + $0x1b0] sm:$0xff]
  %v4968 = vld [vmem:[#allocation5 + $0x1b8] sm:$0xff]
  %v4969 = vld [vmem:[#allocation5 + $0x1c0] sm:$0xff]
  %v4970 = vld [vmem:[#allocation5 + $0x1c8] sm:$0xff]
  %v4971 = vld [vmem:[#allocation5 + $0x1d0] sm:$0xff]
  %v4972 = vld [vmem:[#allocation5 + $0x1d8] sm:$0xff]
  %v4973 = vld [vmem:[#allocation5 + $0x1e0] sm:$0xff]
  %v4974 = vld [vmem:[#allocation5 + $0x1e8] sm:$0xff]
  %v4975 = vld [vmem:[#allocation5 + $0x1f0] sm:$0xff]
  %v4976 = vld [vmem:[#allocation5 + $0x1f8] sm:$0xff]
  %v4977 = vld [vmem:[#allocation5 + $0x200] sm:$0xff]
  %v4978 = vld [vmem:[#allocation5 + $0x208] sm:$0xff]
  %v4979 = vld [vmem:[#allocation5 + $0x210] sm:$0xff]
  %v4980 = vld [vmem:[#allocation5 + $0x218] sm:$0xff]
  %v4981 = vld [vmem:[#allocation5 + $0x220] sm:$0xff]
  %v4982 = vld [vmem:[#allocation5 + $0x228] sm:$0xff]
  %v4983 = vld [vmem:[#allocation5 + $0x230] sm:$0xff]
  %v4984 = vld [vmem:[#allocation5 + $0x238] sm:$0xff]
  %v4985 = vpack.c.bf16 %v4915, %v4913
  %v4986 = vpack.c.bf16 %v4916, %v4914
  %v4987 = vpack.c.bf16 %v4919, %v4917
  %v4988 = vpack.c.bf16 %v4920, %v4918
  %v4989 = vpack.c.bf16 %v4923, %v4921
  %v4990 = vpack.c.bf16 %v4924, %v4922
  %v4991 = vpack.c.bf16 %v4927, %v4925
  %v4992 = vpack.c.bf16 %v4928, %v4926
  %v4993 = vpack.c.bf16 %v4931, %v4929
  %v4994 = vpack.c.bf16 %v4932, %v4930
  %v4995 = vpack.c.bf16 %v4935, %v4933
  %v4996 = vpack.c.bf16 %v4936, %v4934
  %v4997 = vpack.c.bf16 %v4939, %v4937
  %v4998 = vpack.c.bf16 %v4940, %v4938
  %v4999 = vpack.c.bf16 %v4943, %v4941
  %v5000 = vpack.c.bf16 %v4944, %v4942
  %v5001 = vpack.c.bf16 %v4947, %v4945
  %v5002 = vpack.c.bf16 %v4948, %v4946
  %v5003 = vpack.c.bf16 %v4951, %v4949
  %v5004 = vpack.c.bf16 %v4952, %v4950
  %v5005 = vpack.c.bf16 %v4955, %v4953
  %v5006 = vpack.c.bf16 %v4956, %v4954
  %v5007 = vpack.c.bf16 %v4959, %v4957
  %v5008 = vpack.c.bf16 %v4960, %v4958
  %v5009 = vpack.c.bf16 %v4963, %v4961
  %v5010 = vpack.c.bf16 %v4964, %v4962
  %v5011 = vpack.c.bf16 %v4967, %v4965
  %v5012 = vpack.c.bf16 %v4968, %v4966
  %v5013 = vpack.c.bf16 %v4971, %v4969
  %v5014 = vpack.c.bf16 %v4972, %v4970
  %v5015 = vpack.c.bf16 %v4975, %v4973
  %v5016 = vpack.c.bf16 %v4976, %v4974
  %v5017 = vpack.c.bf16 %v4979, %v4977
  %v5018 = vpack.c.bf16 %v4980, %v4978
  %v5019 = vpack.c.bf16 %v4983, %v4981
  %v5020 = vpack.c.bf16 %v4984, %v4982
  %v5021 = vld [vmem:[#allocation6] sm:$0x1]
  %5023 = vset.pattern.permute.xlu0 0
  %5024 = vperm.xlu0 %5023, %v5021
  %v5025 = vpop.permute.xlu0 %5024
  %v5027 = vlaneseq
  %v5028 = vshrl.u32 %v5027, 7
  %v5029 = vsub.s32 0, %v5028
  %v5030 = vrot.slane %v5025, %v5029
  %v5033 = vunpack.c.l.s4 1966171168
  %v5034 = vunpack.c.0.s8 %v5033
  %v5035 = vlaneseq
  %v5036 = vshrl.u32 %v5035, 7
  %v5037 = vsub.s32 %v5034, %v5036
  %v5038 = vrot.slane %v4912, %v5037
  %v5039 = vcombine.high %v5038, %v5038
  %v5041 = vunpack.c.l.s4 1966171168
  %v5042 = vunpack.c.0.s8 %v5041
  %v5043 = vlaneseq
  %v5044 = vshrl.u32 %v5043, 7
  %v5045 = vsub.s32 %v5042, %v5044
  %v5046 = vrot.slane %v5038, %v5045
  %v5048 = vunpack.c.l.s4 1966171168
  %v5049 = vunpack.c.0.s8 %v5048
  %v5050 = vlaneseq
  %v5051 = vshrl.u32 %v5050, 7
  %v5052 = vsub.s32 %v5049, %v5051
  %v5053 = vrot.slane %v5039, %v5052
  %v5054 = vcombine.high %v5046, %v5046
  %v5058 = vsel %vm2660, %v5054, 0
  %5060 = vmatprep.subr.bf16.mxu0 %v4986
  %5061 = vmatpush1.bf16.msra.mxu0 %v4985
  %5062 = vmatprep.subr.bf16.mxu0 %v4988
  %5063 = vmatpush1.bf16.msra.mxu0 %v4987
  %5064 = vmatprep.subr.bf16.mxu0 %v4990
  %5065 = vmatpush1.bf16.msra.mxu0 %v4989
  %5066 = vmatprep.subr.bf16.mxu0 %v4992
  %5067 = vmatpush1.bf16.msra.mxu0 %v4991
  %5068 = vmatprep.subr.bf16.mxu0 %v4994
  %5069 = vmatpush1.bf16.msra.mxu0 %v4993
  %5070 = vmatprep.subr.bf16.mxu0 %v4996
  %5071 = vmatpush1.bf16.msra.mxu0 %v4995
  %5072 = vmatprep.subr.bf16.mxu0 %v4998
  %5073 = vmatpush1.bf16.msra.mxu0 %v4997
  %5074 = vmatprep.subr.bf16.mxu0 %v5000
  %5075 = vmatpush1.bf16.msra.mxu0 %v4999
  %5076 = vmatprep.subr.bf16.mxu0 %v5002
  %5077 = vmatpush1.bf16.msra.mxu0 %v5001
  %5078 = vmatprep.subr.bf16.mxu0 %v5004
  %5079 = vmatpush1.bf16.msra.mxu0 %v5003
  %5080 = vmatprep.subr.bf16.mxu0 %v5006
  %5081 = vmatpush1.bf16.msra.mxu0 %v5005
  %5082 = vmatprep.subr.bf16.mxu0 %v5008
  %5083 = vmatpush1.bf16.msra.mxu0 %v5007
  %5084 = vmatprep.subr.bf16.mxu0 %v5010
  %5085 = vmatpush1.bf16.msra.mxu0 %v5009
  %5086 = vmatprep.subr.bf16.mxu0 %v5012
  %5087 = vmatpush1.bf16.msra.mxu0 %v5011
  %5088 = vmatprep.subr.bf16.mxu0 %v5014
  %5089 = vmatpush1.bf16.msra.mxu0 %v5013
  %5090 = vmatprep.subr.bf16.mxu0 %v5016
  %5091 = vmatpush1.bf16.msra.mxu0 %v5015
  %5092 = vmatprep.mubr.bf16.mxu0 %v5053
  %5093 = vmatmul.mubr.bf16.gmra.mrb[0].mxu0 %v5046
  %v5094 = vpop.f32.mrb[0].mxu0
  %v5095 = vadd.f32 %v5030, %v5094
  %v5096 = vpop.f32.mrb[0].mxu0
  %v5097 = vadd.f32 %v5030, %v5096
  %v5098 = vpop.f32.mrb[0].mxu0
  %v5099 = vpop.f32.mrb[0].mxu0
  %5100 = vdwg.mxu0
  %5101 = vmatprep.subr.bf16.mxu0 %v5018
  %5102 = vmatpush1.bf16.msra.mxu0 %v5017
  %5103 = vmatprep.subr.bf16.mxu0 %v5020
  %5104 = vmatpush1.bf16.msra.mxu0 %v5019
  %5105 = vmatprep.subr.bf16.mxu0 0
  %5106 = vmatpush1.bf16.msra.mxu0 0
  %5107 = vmatprep.subr.bf16.mxu0 0
  %5108 = vmatpush1.bf16.msra.mxu0 0
  %5109 = vmatprep.subr.bf16.mxu0 0
  %5110 = vmatpush1.bf16.msra.mxu0 0
  %5111 = vmatprep.subr.bf16.mxu0 0
  %5112 = vmatpush1.bf16.msra.mxu0 0
  %5113 = vmatprep.subr.bf16.mxu0 0
  %5114 = vmatpush1.bf16.msra.mxu0 0
  %5115 = vmatprep.subr.bf16.mxu0 0
  %5116 = vmatpush1.bf16.msra.mxu0 0
  %5117 = vmatprep.subr.bf16.mxu0 0
  %5118 = vmatpush1.bf16.msra.mxu0 0
  %5119 = vmatprep.subr.bf16.mxu0 0
  %5120 = vmatpush1.bf16.msra.mxu0 0
  %5121 = vmatprep.subr.bf16.mxu0 0
  %5122 = vmatpush1.bf16.msra.mxu0 0
  %5123 = vmatprep.subr.bf16.mxu0 0
  %5124 = vmatpush1.bf16.msra.mxu0 0
  %5125 = vmatprep.subr.bf16.mxu0 0
  %5126 = vmatpush1.bf16.msra.mxu0 0
  %5127 = vmatprep.subr.bf16.mxu0 0
  %5128 = vmatpush1.bf16.msra.mxu0 0
  %5129 = vmatprep.subr.bf16.mxu0 0
  %5130 = vmatpush1.bf16.msra.mxu0 0
  %5131 = vmatprep.subr.bf16.mxu0 0
  %5132 = vmatpush1.bf16.msra.mxu0 0
  %5133 = vmatprep.mubr.bf16.mxu0 0
  %5134 = vmatmul.mubr.bf16.gmra.mrb[0].mxu0 %v5058
  %v5135 = vpop.f32.mrb[0].mxu0
  %v5136 = vadd.f32 %v5095, %v5135
  %v5137 = vpop.f32.mrb[0].mxu0
  %v5138 = vadd.f32 %v5097, %v5137
  %v5139 = vpop.f32.mrb[0].mxu0
  %v5140 = vpop.f32.mrb[0].mxu0
  %5141 = vdwg.mxu0
  %v5142 = vsub.f32 0.0, %v5136
  %v5143 = vsub.f32 0.0, %v5138
  %v5144 = vmul.f32 %v5142, 1.442695
  %v5145 = vpow.pop %v5144
  %v5146 = vmul.f32 %v5143, 1.442695
  %v5147 = vpow.pop %v5146
  %v5148 = vadd.f32 %v5145, 1.0
  %v5149 = vadd.f32 %v5147, 1.0
  %v5150 = vrcp.pop %v5148
  %v5151 = vmul.f32 1.0, %v5150
  %v5152 = vrcp.pop %v5149
  %v5153 = vmul.f32 1.0, %v5152
  %v5156 = vcombine.low %v5151, %v5153
  %v5158 = vunpack.c.l.s4 1966171168
  %v5159 = vunpack.c.0.s8 %v5158
  %v5160 = vlaneseq
  %v5161 = vshrl.u32 %v5160, 7
  %v5162 = vsub.s32 %v5159, %v5161
  %v5163 = vrot.slane %v5156, %v5162
  %v5165 = vunpack.c.l.s4 1966171168
  %v5166 = vunpack.c.0.s8 %v5165
  %v5167 = vlaneseq
  %v5168 = vshrl.u32 %v5167, 7
  %v5169 = vsub.s32 %v5166, %v5168
  %v5170 = vrot.slane %v5163, %v5169
  %v5172 = vlaneseq
  %vm5173 = vcmp.ge.s32.totalorder %v5172, 0
  %vm5174 = vcmp.lt.s32.totalorder %v5172, 256
  %vm5175 = vmand %vm5173, %vm5174
  %5176 = vst.msk [vmem:[%s13] sm:$0x3] %vm5175, %v5170
  %s5177 = scalar_lea.vmem %s0, 2
  %v5178 = vld [vmem:[%s5177] sm:$0x3]
  %v5180 = vlaneseq
  %v5181 = vshrl.u32 %v5180, 7
  %v5182 = vsub.s32 0, %v5181
  %v5183 = vrot.slane %v5178, %v5182
  %v5184 = vlaneseq
  %v5185 = vshrl.u32 %v5184, 7
  %v5186 = vsub.s32 1, %v5185
  %v5187 = vrot.slane %v5178, %v5186
  %v5190 = vpack.c.bf16 %v5183, %v5183
  %v5191 = vpack.c.bf16 %v5187, %v5187
  %v5192 = vld [vmem:[%s3] sm:$0xf]
  %v5193 = vld [vmem:[%s3 + $0x4] sm:$0xf]
  %v5194 = vld [vmem:[%s3 + $0x8] sm:$0xf]
  %v5195 = vld [vmem:[%s3 + $0xc] sm:$0xf]
  %v5196 = vld [vmem:[%s3 + $0x10] sm:$0xf]
  %v5197 = vld [vmem:[%s3 + $0x14] sm:$0xf]
  %v5198 = vld [vmem:[%s3 + $0x18] sm:$0xf]
  %v5199 = vld [vmem:[%s3 + $0x1c] sm:$0xf]
  %v5200 = vld [vmem:[%s3 + $0x20] sm:$0xf]
  %v5201 = vld [vmem:[%s3 + $0x24] sm:$0xf]
  %v5202 = vld [vmem:[%s3 + $0x28] sm:$0xf]
  %v5203 = vld [vmem:[%s3 + $0x2c] sm:$0xf]
  %v5204 = vld [vmem:[%s3 + $0x30] sm:$0xf]
  %v5205 = vld [vmem:[%s3 + $0x34] sm:$0xf]
  %v5206 = vld [vmem:[%s3 + $0x38] sm:$0xf]
  %v5207 = vld [vmem:[%s3 + $0x3c] sm:$0xf]
  %v5208 = vld [vmem:[%s3 + $0x40] sm:$0xf]
  %v5209 = vld [vmem:[%s3 + $0x44] sm:$0xf]
  %v5210 = vld [vmem:[%s3 + $0x48] sm:$0xf]
  %v5211 = vld [vmem:[%s3 + $0x4c] sm:$0xf]
  %v5212 = vld [vmem:[%s3 + $0x50] sm:$0xf]
  %v5213 = vld [vmem:[%s3 + $0x54] sm:$0xf]
  %v5214 = vld [vmem:[%s3 + $0x58] sm:$0xf]
  %v5215 = vld [vmem:[%s3 + $0x5c] sm:$0xf]
  %v5216 = vld [vmem:[%s3 + $0x60] sm:$0xf]
  %v5217 = vld [vmem:[%s3 + $0x64] sm:$0xf]
  %v5218 = vld [vmem:[%s3 + $0x68] sm:$0xf]
  %v5219 = vld [vmem:[%s3 + $0x6c] sm:$0xf]
  %v5220 = vld [vmem:[%s3 + $0x70] sm:$0xf]
  %v5221 = vld [vmem:[%s3 + $0x74] sm:$0xf]
  %v5222 = vld [vmem:[%s3 + $0x78] sm:$0xf]
  %v5223 = vld [vmem:[%s3 + $0x7c] sm:$0xf]
  %v5256 = vunpack.c.l.b16 %v5192
  %v5257 = vunpack.c.l.b16 %v5193
  %v5258 = vunpack.c.l.b16 %v5194
  %v5259 = vunpack.c.l.b16 %v5195
  %v5260 = vunpack.c.l.b16 %v5196
  %v5261 = vunpack.c.l.b16 %v5197
  %v5262 = vunpack.c.l.b16 %v5198
  %v5263 = vunpack.c.l.b16 %v5199
  %v5264 = vunpack.c.l.b16 %v5200
  %v5265 = vunpack.c.l.b16 %v5201
  %v5266 = vunpack.c.l.b16 %v5202
  %v5267 = vunpack.c.l.b16 %v5203
  %v5268 = vunpack.c.l.b16 %v5204
  %v5269 = vunpack.c.l.b16 %v5205
  %v5270 = vunpack.c.l.b16 %v5206
  %v5271 = vunpack.c.l.b16 %v5207
  %v5272 = vunpack.c.l.b16 %v5208
  %v5273 = vunpack.c.l.b16 %v5209
  %v5274 = vunpack.c.l.b16 %v5210
  %v5275 = vunpack.c.l.b16 %v5211
  %v5276 = vunpack.c.l.b16 %v5212
  %v5277 = vunpack.c.l.b16 %v5213
  %v5278 = vunpack.c.l.b16 %v5214
  %v5279 = vunpack.c.l.b16 %v5215
  %v5280 = vunpack.c.l.b16 %v5216
  %v5281 = vunpack.c.l.b16 %v5217
  %v5282 = vunpack.c.l.b16 %v5218
  %v5283 = vunpack.c.l.b16 %v5219
  %v5284 = vunpack.c.l.b16 %v5220
  %v5285 = vunpack.c.l.b16 %v5221
  %v5286 = vunpack.c.l.b16 %v5222
  %v5287 = vunpack.c.l.b16 %v5223
  %v5288 = vpack.c.b16 %v5257, %v5256
  %v5289 = vpack.c.b16 %v5259, %v5258
  %v5290 = vpack.c.b16 %v5261, %v5260
  %v5291 = vpack.c.b16 %v5263, %v5262
  %v5292 = vpack.c.b16 %v5265, %v5264
  %v5293 = vpack.c.b16 %v5267, %v5266
  %v5294 = vpack.c.b16 %v5269, %v5268
  %v5295 = vpack.c.b16 %v5271, %v5270
  %v5296 = vpack.c.b16 %v5273, %v5272
  %v5297 = vpack.c.b16 %v5275, %v5274
  %v5298 = vpack.c.b16 %v5277, %v5276
  %v5299 = vpack.c.b16 %v5279, %v5278
  %v5300 = vpack.c.b16 %v5281, %v5280
  %v5301 = vpack.c.b16 %v5283, %v5282
  %v5302 = vpack.c.b16 %v5285, %v5284
  %v5303 = vpack.c.b16 %v5287, %v5286
  %5320 = vmatprep.subr.bf16.mxu0 0
  %5321 = vmatpush1.bf16.msra.mxu0 %v5288
  %5322 = vmatprep.subr.bf16.mxu0 0
  %5323 = vmatpush1.bf16.msra.mxu0 %v5289
  %5324 = vmatprep.subr.bf16.mxu0 0
  %5325 = vmatpush1.bf16.msra.mxu0 %v5290
  %5326 = vmatprep.subr.bf16.mxu0 0
  %5327 = vmatpush1.bf16.msra.mxu0 %v5291
  %5328 = vmatprep.subr.bf16.mxu0 0
  %5329 = vmatpush1.bf16.msra.mxu0 %v5292
  %5330 = vmatprep.subr.bf16.mxu0 0
  %5331 = vmatpush1.bf16.msra.mxu0 %v5293
  %5332 = vmatprep.subr.bf16.mxu0 0
  %5333 = vmatpush1.bf16.msra.mxu0 %v5294
  %5334 = vmatprep.subr.bf16.mxu0 0
  %5335 = vmatpush1.bf16.msra.mxu0 %v5295
  %5336 = vmatprep.subr.bf16.mxu0 0
  %5337 = vmatpush1.bf16.msra.mxu0 %v5296
  %5338 = vmatprep.subr.bf16.mxu0 0
  %5339 = vmatpush1.bf16.msra.mxu0 %v5297
  %5340 = vmatprep.subr.bf16.mxu0 0
  %5341 = vmatpush1.bf16.msra.mxu0 %v5298
  %5342 = vmatprep.subr.bf16.mxu0 0
  %5343 = vmatpush1.bf16.msra.mxu0 %v5299
  %5344 = vmatprep.subr.bf16.mxu0 0
  %5345 = vmatpush1.bf16.msra.mxu0 %v5300
  %5346 = vmatprep.subr.bf16.mxu0 0
  %5347 = vmatpush1.bf16.msra.mxu0 %v5301
  %5348 = vmatprep.subr.bf16.mxu0 0
  %5349 = vmatpush1.bf16.msra.mxu0 %v5302
  %5350 = vmatprep.subr.bf16.mxu0 0
  %5351 = vmatpush1.bf16.msra.mxu0 %v5303
  %5352 = vmatprep.mubr.bf16.mxu0 %v5191
  %5353 = vmatmul.mubr.bf16.gmra.mrb[0].mxu0 %v5190
  %v5354 = vpop.f32.mrb[0].mxu0
  %v5355 = vadd.f32 0.0, %v5354
  %v5356 = vpop.f32.mrb[0].mxu0
  %v5357 = vpop.f32.mrb[0].mxu0
  %v5358 = vpop.f32.mrb[0].mxu0
  %5359 = vdwg.mxu0
  %5360 = vst.msk [vmem:[#allocation2] sm:$0x1] %vm229, %v5355
  %v5361 = vld [vmem:[%s231] sm:$0xf]
  %v5362 = vld [vmem:[%s231 + $0x4] sm:$0xf]
  %v5363 = vld [vmem:[%s231 + $0x8] sm:$0xf]
  %v5364 = vld [vmem:[%s231 + $0xc] sm:$0xf]
  %v5365 = vld [vmem:[%s231 + $0x10] sm:$0xf]
  %v5366 = vld [vmem:[%s231 + $0x14] sm:$0xf]
  %v5367 = vld [vmem:[%s231 + $0x18] sm:$0xf]
  %v5368 = vld [vmem:[%s231 + $0x1c] sm:$0xf]
  %v5369 = vld [vmem:[%s231 + $0x20] sm:$0xf]
  %v5370 = vld [vmem:[%s231 + $0x24] sm:$0xf]
  %v5371 = vld [vmem:[%s231 + $0x28] sm:$0xf]
  %v5372 = vld [vmem:[%s231 + $0x2c] sm:$0xf]
  %v5373 = vld [vmem:[%s231 + $0x30] sm:$0xf]
  %v5374 = vld [vmem:[%s231 + $0x34] sm:$0xf]
  %v5375 = vld [vmem:[%s231 + $0x38] sm:$0xf]
  %v5376 = vld [vmem:[%s231 + $0x3c] sm:$0xf]
  %v5377 = vld [vmem:[%s231 + $0x40] sm:$0xf]
  %v5378 = vld [vmem:[%s231 + $0x44] sm:$0xf]
  %v5379 = vld [vmem:[%s231 + $0x48] sm:$0xf]
  %v5380 = vld [vmem:[%s231 + $0x4c] sm:$0xf]
  %v5381 = vld [vmem:[%s231 + $0x50] sm:$0xf]
  %v5382 = vld [vmem:[%s231 + $0x54] sm:$0xf]
  %v5383 = vld [vmem:[%s231 + $0x58] sm:$0xf]
  %v5384 = vld [vmem:[%s231 + $0x5c] sm:$0xf]
  %v5385 = vld [vmem:[%s231 + $0x60] sm:$0xf]
  %v5386 = vld [vmem:[%s231 + $0x64] sm:$0xf]
  %v5387 = vld [vmem:[%s231 + $0x68] sm:$0xf]
  %v5388 = vld [vmem:[%s231 + $0x6c] sm:$0xf]
  %v5389 = vld [vmem:[%s231 + $0x70] sm:$0xf]
  %v5390 = vld [vmem:[%s231 + $0x74] sm:$0xf]
  %v5391 = vld [vmem:[%s231 + $0x78] sm:$0xf]
  %v5392 = vld [vmem:[%s231 + $0x7c] sm:$0xf]
  %v5425 = vunpack.c.l.b16 %v5361
  %v5426 = vunpack.c.l.b16 %v5362
  %v5427 = vunpack.c.l.b16 %v5363
  %v5428 = vunpack.c.l.b16 %v5364
  %v5429 = vunpack.c.l.b16 %v5365
  %v5430 = vunpack.c.l.b16 %v5366
  %v5431 = vunpack.c.l.b16 %v5367
  %v5432 = vunpack.c.l.b16 %v5368
  %v5433 = vunpack.c.l.b16 %v5369
  %v5434 = vunpack.c.l.b16 %v5370
  %v5435 = vunpack.c.l.b16 %v5371
  %v5436 = vunpack.c.l.b16 %v5372
  %v5437 = vunpack.c.l.b16 %v5373
  %v5438 = vunpack.c.l.b16 %v5374
  %v5439 = vunpack.c.l.b16 %v5375
  %v5440 = vunpack.c.l.b16 %v5376
  %v5441 = vunpack.c.l.b16 %v5377
  %v5442 = vunpack.c.l.b16 %v5378
  %v5443 = vunpack.c.l.b16 %v5379
  %v5444 = vunpack.c.l.b16 %v5380
  %v5445 = vunpack.c.l.b16 %v5381
  %v5446 = vunpack.c.l.b16 %v5382
  %v5447 = vunpack.c.l.b16 %v5383
  %v5448 = vunpack.c.l.b16 %v5384
  %v5449 = vunpack.c.l.b16 %v5385
  %v5450 = vunpack.c.l.b16 %v5386
  %v5451 = vunpack.c.l.b16 %v5387
  %v5452 = vunpack.c.l.b16 %v5388
  %v5453 = vunpack.c.l.b16 %v5389
  %v5454 = vunpack.c.l.b16 %v5390
  %v5455 = vunpack.c.l.b16 %v5391
  %v5456 = vunpack.c.l.b16 %v5392
  %v5457 = vpack.c.b16 %v5426, %v5425
  %v5458 = vpack.c.b16 %v5428, %v5427
  %v5459 = vpack.c.b16 %v5430, %v5429
  %v5460 = vpack.c.b16 %v5432, %v5431
  %v5461 = vpack.c.b16 %v5434, %v5433
  %v5462 = vpack.c.b16 %v5436, %v5435
  %v5463 = vpack.c.b16 %v5438, %v5437
  %v5464 = vpack.c.b16 %v5440, %v5439
  %v5465 = vpack.c.b16 %v5442, %v5441
  %v5466 = vpack.c.b16 %v5444, %v5443
  %v5467 = vpack.c.b16 %v5446, %v5445
  %v5468 = vpack.c.b16 %v5448, %v5447
  %v5469 = vpack.c.b16 %v5450, %v5449
  %v5470 = vpack.c.b16 %v5452, %v5451
  %v5471 = vpack.c.b16 %v5454, %v5453
  %v5472 = vpack.c.b16 %v5456, %v5455
  %5489 = vmatprep.subr.bf16.mxu0 0
  %5490 = vmatpush1.bf16.msra.mxu0 %v5457
  %5491 = vmatprep.subr.bf16.mxu0 0
  %5492 = vmatpush1.bf16.msra.mxu0 %v5458
  %5493 = vmatprep.subr.bf16.mxu0 0
  %5494 = vmatpush1.bf16.msra.mxu0 %v5459
  %5495 = vmatprep.subr.bf16.mxu0 0
  %5496 = vmatpush1.bf16.msra.mxu0 %v5460
  %5497 = vmatprep.subr.bf16.mxu0 0
  %5498 = vmatpush1.bf16.msra.mxu0 %v5461
  %5499 = vmatprep.subr.bf16.mxu0 0
  %5500 = vmatpush1.bf16.msra.mxu0 %v5462
  %5501 = vmatprep.subr.bf16.mxu0 0
  %5502 = vmatpush1.bf16.msra.mxu0 %v5463
  %5503 = vmatprep.subr.bf16.mxu0 0
  %5504 = vmatpush1.bf16.msra.mxu0 %v5464
  %5505 = vmatprep.subr.bf16.mxu0 0
  %5506 = vmatpush1.bf16.msra.mxu0 %v5465
  %5507 = vmatprep.subr.bf16.mxu0 0
  %5508 = vmatpush1.bf16.msra.mxu0 %v5466
  %5509 = vmatprep.subr.bf16.mxu0 0
  %5510 = vmatpush1.bf16.msra.mxu0 %v5467
  %5511 = vmatprep.subr.bf16.mxu0 0
  %5512 = vmatpush1.bf16.msra.mxu0 %v5468
  %5513 = vmatprep.subr.bf16.mxu0 0
  %5514 = vmatpush1.bf16.msra.mxu0 %v5469
  %5515 = vmatprep.subr.bf16.mxu0 0
  %5516 = vmatpush1.bf16.msra.mxu0 %v5470
  %5517 = vmatprep.subr.bf16.mxu0 0
  %5518 = vmatpush1.bf16.msra.mxu0 %v5471
  %5519 = vmatprep.subr.bf16.mxu0 0
  %5520 = vmatpush1.bf16.msra.mxu0 %v5472
  %5521 = vmatprep.mubr.bf16.mxu0 %v5191
  %5522 = vmatmul.mubr.bf16.gmra.mrb[0].mxu0 %v5190
  %v5523 = vpop.f32.mrb[0].mxu0
  %v5524 = vadd.f32 0.0, %v5523
  %v5525 = vpop.f32.mrb[0].mxu0
  %v5526 = vpop.f32.mrb[0].mxu0
  %v5527 = vpop.f32.mrb[0].mxu0
  %5528 = vdwg.mxu0
  %5529 = vst.msk [vmem:[#allocation2 + $0x1] sm:$0x1] %vm229, %v5524
  %v5530 = vld [vmem:[%s401] sm:$0xf]
  %v5531 = vld [vmem:[%s401 + $0x4] sm:$0xf]
  %v5532 = vld [vmem:[%s401 + $0x8] sm:$0xf]
  %v5533 = vld [vmem:[%s401 + $0xc] sm:$0xf]
  %v5534 = vld [vmem:[%s401 + $0x10] sm:$0xf]
  %v5535 = vld [vmem:[%s401 + $0x14] sm:$0xf]
  %v5536 = vld [vmem:[%s401 + $0x18] sm:$0xf]
  %v5537 = vld [vmem:[%s401 + $0x1c] sm:$0xf]
  %v5538 = vld [vmem:[%s401 + $0x20] sm:$0xf]
  %v5539 = vld [vmem:[%s401 + $0x24] sm:$0xf]
  %v5540 = vld [vmem:[%s401 + $0x28] sm:$0xf]
  %v5541 = vld [vmem:[%s401 + $0x2c] sm:$0xf]
  %v5542 = vld [vmem:[%s401 + $0x30] sm:$0xf]
  %v5543 = vld [vmem:[%s401 + $0x34] sm:$0xf]
  %v5544 = vld [vmem:[%s401 + $0x38] sm:$0xf]
  %v5545 = vld [vmem:[%s401 + $0x3c] sm:$0xf]
  %v5546 = vld [vmem:[%s401 + $0x40] sm:$0xf]
  %v5547 = vld [vmem:[%s401 + $0x44] sm:$0xf]
  %v5548 = vld [vmem:[%s401 + $0x48] sm:$0xf]
  %v5549 = vld [vmem:[%s401 + $0x4c] sm:$0xf]
  %v5550 = vld [vmem:[%s401 + $0x50] sm:$0xf]
  %v5551 = vld [vmem:[%s401 + $0x54] sm:$0xf]
  %v5552 = vld [vmem:[%s401 + $0x58] sm:$0xf]
  %v5553 = vld [vmem:[%s401 + $0x5c] sm:$0xf]
  %v5554 = vld [vmem:[%s401 + $0x60] sm:$0xf]
  %v5555 = vld [vmem:[%s401 + $0x64] sm:$0xf]
  %v5556 = vld [vmem:[%s401 + $0x68] sm:$0xf]
  %v5557 = vld [vmem:[%s401 + $0x6c] sm:$0xf]
  %v5558 = vld [vmem:[%s401 + $0x70] sm:$0xf]
  %v5559 = vld [vmem:[%s401 + $0x74] sm:$0xf]
  %v5560 = vld [vmem:[%s401 + $0x78] sm:$0xf]
  %v5561 = vld [vmem:[%s401 + $0x7c] sm:$0xf]
  %v5594 = vunpack.c.l.b16 %v5530
  %v5595 = vunpack.c.l.b16 %v5531
  %v5596 = vunpack.c.l.b16 %v5532
  %v5597 = vunpack.c.l.b16 %v5533
  %v5598 = vunpack.c.l.b16 %v5534
  %v5599 = vunpack.c.l.b16 %v5535
  %v5600 = vunpack.c.l.b16 %v5536
  %v5601 = vunpack.c.l.b16 %v5537
  %v5602 = vunpack.c.l.b16 %v5538
  %v5603 = vunpack.c.l.b16 %v5539
  %v5604 = vunpack.c.l.b16 %v5540
  %v5605 = vunpack.c.l.b16 %v5541
  %v5606 = vunpack.c.l.b16 %v5542
  %v5607 = vunpack.c.l.b16 %v5543
  %v5608 = vunpack.c.l.b16 %v5544
  %v5609 = vunpack.c.l.b16 %v5545
  %v5610 = vunpack.c.l.b16 %v5546
  %v5611 = vunpack.c.l.b16 %v5547
  %v5612 = vunpack.c.l.b16 %v5548
  %v5613 = vunpack.c.l.b16 %v5549
  %v5614 = vunpack.c.l.b16 %v5550
  %v5615 = vunpack.c.l.b16 %v5551
  %v5616 = vunpack.c.l.b16 %v5552
  %v5617 = vunpack.c.l.b16 %v5553
  %v5618 = vunpack.c.l.b16 %v5554
  %v5619 = vunpack.c.l.b16 %v5555
  %v5620 = vunpack.c.l.b16 %v5556
  %v5621 = vunpack.c.l.b16 %v5557
  %v5622 = vunpack.c.l.b16 %v5558
  %v5623 = vunpack.c.l.b16 %v5559
  %v5624 = vunpack.c.l.b16 %v5560
  %v5625 = vunpack.c.l.b16 %v5561
  %v5626 = vpack.c.b16 %v5595, %v5594
  %v5627 = vpack.c.b16 %v5597, %v5596
  %v5628 = vpack.c.b16 %v5599, %v5598
  %v5629 = vpack.c.b16 %v5601, %v5600
  %v5630 = vpack.c.b16 %v5603, %v5602
  %v5631 = vpack.c.b16 %v5605, %v5604
  %v5632 = vpack.c.b16 %v5607, %v5606
  %v5633 = vpack.c.b16 %v5609, %v5608
  %v5634 = vpack.c.b16 %v5611, %v5610
  %v5635 = vpack.c.b16 %v5613, %v5612
  %v5636 = vpack.c.b16 %v5615, %v5614
  %v5637 = vpack.c.b16 %v5617, %v5616
  %v5638 = vpack.c.b16 %v5619, %v5618
  %v5639 = vpack.c.b16 %v5621, %v5620
  %v5640 = vpack.c.b16 %v5623, %v5622
  %v5641 = vpack.c.b16 %v5625, %v5624
  %5658 = vmatprep.subr.bf16.mxu0 0
  %5659 = vmatpush1.bf16.msra.mxu0 %v5626
  %5660 = vmatprep.subr.bf16.mxu0 0
  %5661 = vmatpush1.bf16.msra.mxu0 %v5627
  %5662 = vmatprep.subr.bf16.mxu0 0
  %5663 = vmatpush1.bf16.msra.mxu0 %v5628
  %5664 = vmatprep.subr.bf16.mxu0 0
  %5665 = vmatpush1.bf16.msra.mxu0 %v5629
  %5666 = vmatprep.subr.bf16.mxu0 0
  %5667 = vmatpush1.bf16.msra.mxu0 %v5630
  %5668 = vmatprep.subr.bf16.mxu0 0
  %5669 = vmatpush1.bf16.msra.mxu0 %v5631
  %5670 = vmatprep.subr.bf16.mxu0 0
  %5671 = vmatpush1.bf16.msra.mxu0 %v5632
  %5672 = vmatprep.subr.bf16.mxu0 0
  %5673 = vmatpush1.bf16.msra.mxu0 %v5633
  %5674 = vmatprep.subr.bf16.mxu0 0
  %5675 = vmatpush1.bf16.msra.mxu0 %v5634
  %5676 = vmatprep.subr.bf16.mxu0 0
  %5677 = vmatpush1.bf16.msra.mxu0 %v5635
  %5678 = vmatprep.subr.bf16.mxu0 0
  %5679 = vmatpush1.bf16.msra.mxu0 %v5636
  %5680 = vmatprep.subr.bf16.mxu0 0
  %5681 = vmatpush1.bf16.msra.mxu0 %v5637
  %5682 = vmatprep.subr.bf16.mxu0 0
  %5683 = vmatpush1.bf16.msra.mxu0 %v5638
  %5684 = vmatprep.subr.bf16.mxu0 0
  %5685 = vmatpush1.bf16.msra.mxu0 %v5639
  %5686 = vmatprep.subr.bf16.mxu0 0
  %5687 = vmatpush1.bf16.msra.mxu0 %v5640
  %5688 = vmatprep.subr.bf16.mxu0 0
  %5689 = vmatpush1.bf16.msra.mxu0 %v5641
  %5690 = vmatprep.mubr.bf16.mxu0 %v5191
  %5691 = vmatmul.mubr.bf16.gmra.mrb[0].mxu0 %v5190
  %v5692 = vpop.f32.mrb[0].mxu0
  %v5693 = vadd.f32 0.0, %v5692
  %v5694 = vpop.f32.mrb[0].mxu0
  %v5695 = vpop.f32.mrb[0].mxu0
  %v5696 = vpop.f32.mrb[0].mxu0
  %5697 = vdwg.mxu0
  %5698 = vst.msk [vmem:[#allocation2 + $0x2] sm:$0x1] %vm229, %v5693
  %v5699 = vld [vmem:[%s571] sm:$0xf]
  %v5700 = vld [vmem:[%s571 + $0x4] sm:$0xf]
  %v5701 = vld [vmem:[%s571 + $0x8] sm:$0xf]
  %v5702 = vld [vmem:[%s571 + $0xc] sm:$0xf]
  %v5703 = vld [vmem:[%s571 + $0x10] sm:$0xf]
  %v5704 = vld [vmem:[%s571 + $0x14] sm:$0xf]
  %v5705 = vld [vmem:[%s571 + $0x18] sm:$0xf]
  %v5706 = vld [vmem:[%s571 + $0x1c] sm:$0xf]
  %v5707 = vld [vmem:[%s571 + $0x20] sm:$0xf]
  %v5708 = vld [vmem:[%s571 + $0x24] sm:$0xf]
  %v5709 = vld [vmem:[%s571 + $0x28] sm:$0xf]
  %v5710 = vld [vmem:[%s571 + $0x2c] sm:$0xf]
  %v5711 = vld [vmem:[%s571 + $0x30] sm:$0xf]
  %v5712 = vld [vmem:[%s571 + $0x34] sm:$0xf]
  %v5713 = vld [vmem:[%s571 + $0x38] sm:$0xf]
  %v5714 = vld [vmem:[%s571 + $0x3c] sm:$0xf]
  %v5715 = vld [vmem:[%s571 + $0x40] sm:$0xf]
  %v5716 = vld [vmem:[%s571 + $0x44] sm:$0xf]
  %v5717 = vld [vmem:[%s571 + $0x48] sm:$0xf]
  %v5718 = vld [vmem:[%s571 + $0x4c] sm:$0xf]
  %v5719 = vld [vmem:[%s571 + $0x50] sm:$0xf]
  %v5720 = vld [vmem:[%s571 + $0x54] sm:$0xf]
  %v5721 = vld [vmem:[%s571 + $0x58] sm:$0xf]
  %v5722 = vld [vmem:[%s571 + $0x5c] sm:$0xf]
  %v5723 = vld [vmem:[%s571 + $0x60] sm:$0xf]
  %v5724 = vld [vmem:[%s571 + $0x64] sm:$0xf]
  %v5725 = vld [vmem:[%s571 + $0x68] sm:$0xf]
  %v5726 = vld [vmem:[%s571 + $0x6c] sm:$0xf]
  %v5727 = vld [vmem:[%s571 + $0x70] sm:$0xf]
  %v5728 = vld [vmem:[%s571 + $0x74] sm:$0xf]
  %v5729 = vld [vmem:[%s571 + $0x78] sm:$0xf]
  %v5730 = vld [vmem:[%s571 + $0x7c] sm:$0xf]
  %v5763 = vunpack.c.l.b16 %v5699
  %v5764 = vunpack.c.l.b16 %v5700
  %v5765 = vunpack.c.l.b16 %v5701
  %v5766 = vunpack.c.l.b16 %v5702
  %v5767 = vunpack.c.l.b16 %v5703
  %v5768 = vunpack.c.l.b16 %v5704
  %v5769 = vunpack.c.l.b16 %v5705
  %v5770 = vunpack.c.l.b16 %v5706
  %v5771 = vunpack.c.l.b16 %v5707
  %v5772 = vunpack.c.l.b16 %v5708
  %v5773 = vunpack.c.l.b16 %v5709
  %v5774 = vunpack.c.l.b16 %v5710
  %v5775 = vunpack.c.l.b16 %v5711
  %v5776 = vunpack.c.l.b16 %v5712
  %v5777 = vunpack.c.l.b16 %v5713
  %v5778 = vunpack.c.l.b16 %v5714
  %v5779 = vunpack.c.l.b16 %v5715
  %v5780 = vunpack.c.l.b16 %v5716
  %v5781 = vunpack.c.l.b16 %v5717
  %v5782 = vunpack.c.l.b16 %v5718
  %v5783 = vunpack.c.l.b16 %v5719
  %v5784 = vunpack.c.l.b16 %v5720
  %v5785 = vunpack.c.l.b16 %v5721
  %v5786 = vunpack.c.l.b16 %v5722
  %v5787 = vunpack.c.l.b16 %v5723
  %v5788 = vunpack.c.l.b16 %v5724
  %v5789 = vunpack.c.l.b16 %v5725
  %v5790 = vunpack.c.l.b16 %v5726
  %v5791 = vunpack.c.l.b16 %v5727
  %v5792 = vunpack.c.l.b16 %v5728
  %v5793 = vunpack.c.l.b16 %v5729
  %v5794 = vunpack.c.l.b16 %v5730
  %v5795 = vpack.c.b16 %v5764, %v5763
  %v5796 = vpack.c.b16 %v5766, %v5765
  %v5797 = vpack.c.b16 %v5768, %v5767
  %v5798 = vpack.c.b16 %v5770, %v5769
  %v5799 = vpack.c.b16 %v5772, %v5771
  %v5800 = vpack.c.b16 %v5774, %v5773
  %v5801 = vpack.c.b16 %v5776, %v5775
  %v5802 = vpack.c.b16 %v5778, %v5777
  %v5803 = vpack.c.b16 %v5780, %v5779
  %v5804 = vpack.c.b16 %v5782, %v5781
  %v5805 = vpack.c.b16 %v5784, %v5783
  %v5806 = vpack.c.b16 %v5786, %v5785
  %v5807 = vpack.c.b16 %v5788, %v5787
  %v5808 = vpack.c.b16 %v5790, %v5789
  %v5809 = vpack.c.b16 %v5792, %v5791
  %v5810 = vpack.c.b16 %v5794, %v5793
  %5827 = vmatprep.subr.bf16.mxu0 0
  %5828 = vmatpush1.bf16.msra.mxu0 %v5795
  %5829 = vmatprep.subr.bf16.mxu0 0
  %5830 = vmatpush1.bf16.msra.mxu0 %v5796
  %5831 = vmatprep.subr.bf16.mxu0 0
  %5832 = vmatpush1.bf16.msra.mxu0 %v5797
  %5833 = vmatprep.subr.bf16.mxu0 0
  %5834 = vmatpush1.bf16.msra.mxu0 %v5798
  %5835 = vmatprep.subr.bf16.mxu0 0
  %5836 = vmatpush1.bf16.msra.mxu0 %v5799
  %5837 = vmatprep.subr.bf16.mxu0 0
  %5838 = vmatpush1.bf16.msra.mxu0 %v5800
  %5839 = vmatprep.subr.bf16.mxu0 0
  %5840 = vmatpush1.bf16.msra.mxu0 %v5801
  %5841 = vmatprep.subr.bf16.mxu0 0
  %5842 = vmatpush1.bf16.msra.mxu0 %v5802
  %5843 = vmatprep.subr.bf16.mxu0 0
  %5844 = vmatpush1.bf16.msra.mxu0 %v5803
  %5845 = vmatprep.subr.bf16.mxu0 0
  %5846 = vmatpush1.bf16.msra.mxu0 %v5804
  %5847 = vmatprep.subr.bf16.mxu0 0
  %5848 = vmatpush1.bf16.msra.mxu0 %v5805
  %5849 = vmatprep.subr.bf16.mxu0 0
  %5850 = vmatpush1.bf16.msra.mxu0 %v5806
  %5851 = vmatprep.subr.bf16.mxu0 0
  %5852 = vmatpush1.bf16.msra.mxu0 %v5807
  %5853 = vmatprep.subr.bf16.mxu0 0
  %5854 = vmatpush1.bf16.msra.mxu0 %v5808
  %5855 = vmatprep.subr.bf16.mxu0 0
  %5856 = vmatpush1.bf16.msra.mxu0 %v5809
  %5857 = vmatprep.subr.bf16.mxu0 0
  %5858 = vmatpush1.bf16.msra.mxu0 %v5810
  %5859 = vmatprep.mubr.bf16.mxu0 %v5191
  %5860 = vmatmul.mubr.bf16.gmra.mrb[0].mxu0 %v5190
  %v5861 = vpop.f32.mrb[0].mxu0
  %v5862 = vadd.f32 0.0, %v5861
  %v5863 = vpop.f32.mrb[0].mxu0
  %v5864 = vpop.f32.mrb[0].mxu0
  %v5865 = vpop.f32.mrb[0].mxu0
  %5866 = vdwg.mxu0
  %5867 = vst.msk [vmem:[#allocation2 + $0x3] sm:$0x1] %vm229, %v5862
  %v5868 = vld [vmem:[%s741] sm:$0xf]
  %v5869 = vld [vmem:[%s741 + $0x4] sm:$0xf]
  %v5870 = vld [vmem:[%s741 + $0x8] sm:$0xf]
  %v5871 = vld [vmem:[%s741 + $0xc] sm:$0xf]
  %v5872 = vld [vmem:[%s741 + $0x10] sm:$0xf]
  %v5873 = vld [vmem:[%s741 + $0x14] sm:$0xf]
  %v5874 = vld [vmem:[%s741 + $0x18] sm:$0xf]
  %v5875 = vld [vmem:[%s741 + $0x1c] sm:$0xf]
  %v5876 = vld [vmem:[%s741 + $0x20] sm:$0xf]
  %v5877 = vld [vmem:[%s741 + $0x24] sm:$0xf]
  %v5878 = vld [vmem:[%s741 + $0x28] sm:$0xf]
  %v5879 = vld [vmem:[%s741 + $0x2c] sm:$0xf]
  %v5880 = vld [vmem:[%s741 + $0x30] sm:$0xf]
  %v5881 = vld [vmem:[%s741 + $0x34] sm:$0xf]
  %v5882 = vld [vmem:[%s741 + $0x38] sm:$0xf]
  %v5883 = vld [vmem:[%s741 + $0x3c] sm:$0xf]
  %v5884 = vld [vmem:[%s741 + $0x40] sm:$0xf]
  %v5885 = vld [vmem:[%s741 + $0x44] sm:$0xf]
  %v5886 = vld [vmem:[%s741 + $0x48] sm:$0xf]
  %v5887 = vld [vmem:[%s741 + $0x4c] sm:$0xf]
  %v5888 = vld [vmem:[%s741 + $0x50] sm:$0xf]
  %v5889 = vld [vmem:[%s741 + $0x54] sm:$0xf]
  %v5890 = vld [vmem:[%s741 + $0x58] sm:$0xf]
  %v5891 = vld [vmem:[%s741 + $0x5c] sm:$0xf]
  %v5892 = vld [vmem:[%s741 + $0x60] sm:$0xf]
  %v5893 = vld [vmem:[%s741 + $0x64] sm:$0xf]
  %v5894 = vld [vmem:[%s741 + $0x68] sm:$0xf]
  %v5895 = vld [vmem:[%s741 + $0x6c] sm:$0xf]
  %v5896 = vld [vmem:[%s741 + $0x70] sm:$0xf]
  %v5897 = vld [vmem:[%s741 + $0x74] sm:$0xf]
  %v5898 = vld [vmem:[%s741 + $0x78] sm:$0xf]
  %v5899 = vld [vmem:[%s741 + $0x7c] sm:$0xf]
  %v5932 = vunpack.c.l.b16 %v5868
  %v5933 = vunpack.c.l.b16 %v5869
  %v5934 = vunpack.c.l.b16 %v5870
  %v5935 = vunpack.c.l.b16 %v5871
  %v5936 = vunpack.c.l.b16 %v5872
  %v5937 = vunpack.c.l.b16 %v5873
  %v5938 = vunpack.c.l.b16 %v5874
  %v5939 = vunpack.c.l.b16 %v5875
  %v5940 = vunpack.c.l.b16 %v5876
  %v5941 = vunpack.c.l.b16 %v5877
  %v5942 = vunpack.c.l.b16 %v5878
  %v5943 = vunpack.c.l.b16 %v5879
  %v5944 = vunpack.c.l.b16 %v5880
  %v5945 = vunpack.c.l.b16 %v5881
  %v5946 = vunpack.c.l.b16 %v5882
  %v5947 = vunpack.c.l.b16 %v5883
  %v5948 = vunpack.c.l.b16 %v5884
  %v5949 = vunpack.c.l.b16 %v5885
  %v5950 = vunpack.c.l.b16 %v5886
  %v5951 = vunpack.c.l.b16 %v5887
  %v5952 = vunpack.c.l.b16 %v5888
  %v5953 = vunpack.c.l.b16 %v5889
  %v5954 = vunpack.c.l.b16 %v5890
  %v5955 = vunpack.c.l.b16 %v5891
  %v5956 = vunpack.c.l.b16 %v5892
  %v5957 = vunpack.c.l.b16 %v5893
  %v5958 = vunpack.c.l.b16 %v5894
  %v5959 = vunpack.c.l.b16 %v5895
  %v5960 = vunpack.c.l.b16 %v5896
  %v5961 = vunpack.c.l.b16 %v5897
  %v5962 = vunpack.c.l.b16 %v5898
  %v5963 = vunpack.c.l.b16 %v5899
  %v5964 = vpack.c.b16 %v5933, %v5932
  %v5965 = vpack.c.b16 %v5935, %v5934
  %v5966 = vpack.c.b16 %v5937, %v5936
  %v5967 = vpack.c.b16 %v5939, %v5938
  %v5968 = vpack.c.b16 %v5941, %v5940
  %v5969 = vpack.c.b16 %v5943, %v5942
  %v5970 = vpack.c.b16 %v5945, %v5944
  %v5971 = vpack.c.b16 %v5947, %v5946
  %v5972 = vpack.c.b16 %v5949, %v5948
  %v5973 = vpack.c.b16 %v5951, %v5950
  %v5974 = vpack.c.b16 %v5953, %v5952
  %v5975 = vpack.c.b16 %v5955, %v5954
  %v5976 = vpack.c.b16 %v5957, %v5956
  %v5977 = vpack.c.b16 %v5959, %v5958
  %v5978 = vpack.c.b16 %v5961, %v5960
  %v5979 = vpack.c.b16 %v5963, %v5962
  %5996 = vmatprep.subr.bf16.mxu0 0
  %5997 = vmatpush1.bf16.msra.mxu0 %v5964
  %5998 = vmatprep.subr.bf16.mxu0 0
  %5999 = vmatpush1.bf16.msra.mxu0 %v5965
  %6000 = vmatprep.subr.bf16.mxu0 0
  %6001 = vmatpush1.bf16.msra.mxu0 %v5966
  %6002 = vmatprep.subr.bf16.mxu0 0
  %6003 = vmatpush1.bf16.msra.mxu0 %v5967
  %6004 = vmatprep.subr.bf16.mxu0 0
  %6005 = vmatpush1.bf16.msra.mxu0 %v5968
  %6006 = vmatprep.subr.bf16.mxu0 0
  %6007 = vmatpush1.bf16.msra.mxu0 %v5969
  %6008 = vmatprep.subr.bf16.mxu0 0
  %6009 = vmatpush1.bf16.msra.mxu0 %v5970
  %6010 = vmatprep.subr.bf16.mxu0 0
  %6011 = vmatpush1.bf16.msra.mxu0 %v5971
  %6012 = vmatprep.subr.bf16.mxu0 0
  %6013 = vmatpush1.bf16.msra.mxu0 %v5972
  %6014 = vmatprep.subr.bf16.mxu0 0
  %6015 = vmatpush1.bf16.msra.mxu0 %v5973
  %6016 = vmatprep.subr.bf16.mxu0 0
  %6017 = vmatpush1.bf16.msra.mxu0 %v5974
  %6018 = vmatprep.subr.bf16.mxu0 0
  %6019 = vmatpush1.bf16.msra.mxu0 %v5975
  %6020 = vmatprep.subr.bf16.mxu0 0
  %6021 = vmatpush1.bf16.msra.mxu0 %v5976
  %6022 = vmatprep.subr.bf16.mxu0 0
  %6023 = vmatpush1.bf16.msra.mxu0 %v5977
  %6024 = vmatprep.subr.bf16.mxu0 0
  %6025 = vmatpush1.bf16.msra.mxu0 %v5978
  %6026 = vmatprep.subr.bf16.mxu0 0
  %6027 = vmatpush1.bf16.msra.mxu0 %v5979
  %6028 = vmatprep.mubr.bf16.mxu0 %v5191
  %6029 = vmatmul.mubr.bf16.gmra.mrb[0].mxu0 %v5190
  %v6030 = vpop.f32.mrb[0].mxu0
  %v6031 = vadd.f32 0.0, %v6030
  %v6032 = vpop.f32.mrb[0].mxu0
  %v6033 = vpop.f32.mrb[0].mxu0
  %v6034 = vpop.f32.mrb[0].mxu0
  %6035 = vdwg.mxu0
  %6036 = vst.msk [vmem:[#allocation2 + $0x4] sm:$0x1] %vm229, %v6031
  %v6037 = vld [vmem:[%s911] sm:$0xf]
  %v6038 = vld [vmem:[%s911 + $0x4] sm:$0xf]
  %v6039 = vld [vmem:[%s911 + $0x8] sm:$0xf]
  %v6040 = vld [vmem:[%s911 + $0xc] sm:$0xf]
  %v6041 = vld [vmem:[%s911 + $0x10] sm:$0xf]
  %v6042 = vld [vmem:[%s911 + $0x14] sm:$0xf]
  %v6043 = vld [vmem:[%s911 + $0x18] sm:$0xf]
  %v6044 = vld [vmem:[%s911 + $0x1c] sm:$0xf]
  %v6045 = vld [vmem:[%s911 + $0x20] sm:$0xf]
  %v6046 = vld [vmem:[%s911 + $0x24] sm:$0xf]
  %v6047 = vld [vmem:[%s911 + $0x28] sm:$0xf]
  %v6048 = vld [vmem:[%s911 + $0x2c] sm:$0xf]
  %v6049 = vld [vmem:[%s911 + $0x30] sm:$0xf]
  %v6050 = vld [vmem:[%s911 + $0x34] sm:$0xf]
  %v6051 = vld [vmem:[%s911 + $0x38] sm:$0xf]
  %v6052 = vld [vmem:[%s911 + $0x3c] sm:$0xf]
  %v6053 = vld [vmem:[%s911 + $0x40] sm:$0xf]
  %v6054 = vld [vmem:[%s911 + $0x44] sm:$0xf]
  %v6055 = vld [vmem:[%s911 + $0x48] sm:$0xf]
  %v6056 = vld [vmem:[%s911 + $0x4c] sm:$0xf]
  %v6057 = vld [vmem:[%s911 + $0x50] sm:$0xf]
  %v6058 = vld [vmem:[%s911 + $0x54] sm:$0xf]
  %v6059 = vld [vmem:[%s911 + $0x58] sm:$0xf]
  %v6060 = vld [vmem:[%s911 + $0x5c] sm:$0xf]
  %v6061 = vld [vmem:[%s911 + $0x60] sm:$0xf]
  %v6062 = vld [vmem:[%s911 + $0x64] sm:$0xf]
  %v6063 = vld [vmem:[%s911 + $0x68] sm:$0xf]
  %v6064 = vld [vmem:[%s911 + $0x6c] sm:$0xf]
  %v6065 = vld [vmem:[%s911 + $0x70] sm:$0xf]
  %v6066 = vld [vmem:[%s911 + $0x74] sm:$0xf]
  %v6067 = vld [vmem:[%s911 + $0x78] sm:$0xf]
  %v6068 = vld [vmem:[%s911 + $0x7c] sm:$0xf]
  %v6101 = vunpack.c.l.b16 %v6037
  %v6102 = vunpack.c.l.b16 %v6038
  %v6103 = vunpack.c.l.b16 %v6039
  %v6104 = vunpack.c.l.b16 %v6040
  %v6105 = vunpack.c.l.b16 %v6041
  %v6106 = vunpack.c.l.b16 %v6042
  %v6107 = vunpack.c.l.b16 %v6043
  %v6108 = vunpack.c.l.b16 %v6044
  %v6109 = vunpack.c.l.b16 %v6045
  %v6110 = vunpack.c.l.b16 %v6046
  %v6111 = vunpack.c.l.b16 %v6047
  %v6112 = vunpack.c.l.b16 %v6048
  %v6113 = vunpack.c.l.b16 %v6049
  %v6114 = vunpack.c.l.b16 %v6050
  %v6115 = vunpack.c.l.b16 %v6051
  %v6116 = vunpack.c.l.b16 %v6052
  %v6117 = vunpack.c.l.b16 %v6053
  %v6118 = vunpack.c.l.b16 %v6054
  %v6119 = vunpack.c.l.b16 %v6055
  %v6120 = vunpack.c.l.b16 %v6056
  %v6121 = vunpack.c.l.b16 %v6057
  %v6122 = vunpack.c.l.b16 %v6058
  %v6123 = vunpack.c.l.b16 %v6059
  %v6124 = vunpack.c.l.b16 %v6060
  %v6125 = vunpack.c.l.b16 %v6061
  %v6126 = vunpack.c.l.b16 %v6062
  %v6127 = vunpack.c.l.b16 %v6063
  %v6128 = vunpack.c.l.b16 %v6064
  %v6129 = vunpack.c.l.b16 %v6065
  %v6130 = vunpack.c.l.b16 %v6066
  %v6131 = vunpack.c.l.b16 %v6067
  %v6132 = vunpack.c.l.b16 %v6068
  %v6133 = vpack.c.b16 %v6102, %v6101
  %v6134 = vpack.c.b16 %v6104, %v6103
  %v6135 = vpack.c.b16 %v6106, %v6105
  %v6136 = vpack.c.b16 %v6108, %v6107
  %v6137 = vpack.c.b16 %v6110, %v6109
  %v6138 = vpack.c.b16 %v6112, %v6111
  %v6139 = vpack.c.b16 %v6114, %v6113
  %v6140 = vpack.c.b16 %v6116, %v6115
  %v6141 = vpack.c.b16 %v6118, %v6117
  %v6142 = vpack.c.b16 %v6120, %v6119
  %v6143 = vpack.c.b16 %v6122, %v6121
  %v6144 = vpack.c.b16 %v6124, %v6123
  %v6145 = vpack.c.b16 %v6126, %v6125
  %v6146 = vpack.c.b16 %v6128, %v6127
  %v6147 = vpack.c.b16 %v6130, %v6129
  %v6148 = vpack.c.b16 %v6132, %v6131
  %6165 = vmatprep.subr.bf16.mxu0 0
  %6166 = vmatpush1.bf16.msra.mxu0 %v6133
  %6167 = vmatprep.subr.bf16.mxu0 0
  %6168 = vmatpush1.bf16.msra.mxu0 %v6134
  %6169 = vmatprep.subr.bf16.mxu0 0
  %6170 = vmatpush1.bf16.msra.mxu0 %v6135
  %6171 = vmatprep.subr.bf16.mxu0 0
  %6172 = vmatpush1.bf16.msra.mxu0 %v6136
  %6173 = vmatprep.subr.bf16.mxu0 0
  %6174 = vmatpush1.bf16.msra.mxu0 %v6137
  %6175 = vmatprep.subr.bf16.mxu0 0
  %6176 = vmatpush1.bf16.msra.mxu0 %v6138
  %6177 = vmatprep.subr.bf16.mxu0 0
  %6178 = vmatpush1.bf16.msra.mxu0 %v6139
  %6179 = vmatprep.subr.bf16.mxu0 0
  %6180 = vmatpush1.bf16.msra.mxu0 %v6140
  %6181 = vmatprep.subr.bf16.mxu0 0
  %6182 = vmatpush1.bf16.msra.mxu0 %v6141
  %6183 = vmatprep.subr.bf16.mxu0 0
  %6184 = vmatpush1.bf16.msra.mxu0 %v6142
  %6185 = vmatprep.subr.bf16.mxu0 0
  %6186 = vmatpush1.bf16.msra.mxu0 %v6143
  %6187 = vmatprep.subr.bf16.mxu0 0
  %6188 = vmatpush1.bf16.msra.mxu0 %v6144
  %6189 = vmatprep.subr.bf16.mxu0 0
  %6190 = vmatpush1.bf16.msra.mxu0 %v6145
  %6191 = vmatprep.subr.bf16.mxu0 0
  %6192 = vmatpush1.bf16.msra.mxu0 %v6146
  %6193 = vmatprep.subr.bf16.mxu0 0
  %6194 = vmatpush1.bf16.msra.mxu0 %v6147
  %6195 = vmatprep.subr.bf16.mxu0 0
  %6196 = vmatpush1.bf16.msra.mxu0 %v6148
  %6197 = vmatprep.mubr.bf16.mxu0 %v5191
  %6198 = vmatmul.mubr.bf16.gmra.mrb[0].mxu0 %v5190
  %v6199 = vpop.f32.mrb[0].mxu0
  %v6200 = vadd.f32 0.0, %v6199
  %v6201 = vpop.f32.mrb[0].mxu0
  %v6202 = vpop.f32.mrb[0].mxu0
  %v6203 = vpop.f32.mrb[0].mxu0
  %6204 = vdwg.mxu0
  %6205 = vst.msk [vmem:[#allocation2 + $0x5] sm:$0x1] %vm229, %v6200
  %v6206 = vld [vmem:[%s1081] sm:$0xf]
  %v6207 = vld [vmem:[%s1081 + $0x4] sm:$0xf]
  %v6208 = vld [vmem:[%s1081 + $0x8] sm:$0xf]
  %v6209 = vld [vmem:[%s1081 + $0xc] sm:$0xf]
  %v6210 = vld [vmem:[%s1081 + $0x10] sm:$0xf]
  %v6211 = vld [vmem:[%s1081 + $0x14] sm:$0xf]
  %v6212 = vld [vmem:[%s1081 + $0x18] sm:$0xf]
  %v6213 = vld [vmem:[%s1081 + $0x1c] sm:$0xf]
  %v6214 = vld [vmem:[%s1081 + $0x20] sm:$0xf]
  %v6215 = vld [vmem:[%s1081 + $0x24] sm:$0xf]
  %v6216 = vld [vmem:[%s1081 + $0x28] sm:$0xf]
  %v6217 = vld [vmem:[%s1081 + $0x2c] sm:$0xf]
  %v6218 = vld [vmem:[%s1081 + $0x30] sm:$0xf]
  %v6219 = vld [vmem:[%s1081 + $0x34] sm:$0xf]
  %v6220 = vld [vmem:[%s1081 + $0x38] sm:$0xf]
  %v6221 = vld [vmem:[%s1081 + $0x3c] sm:$0xf]
  %v6222 = vld [vmem:[%s1081 + $0x40] sm:$0xf]
  %v6223 = vld [vmem:[%s1081 + $0x44] sm:$0xf]
  %v6224 = vld [vmem:[%s1081 + $0x48] sm:$0xf]
  %v6225 = vld [vmem:[%s1081 + $0x4c] sm:$0xf]
  %v6226 = vld [vmem:[%s1081 + $0x50] sm:$0xf]
  %v6227 = vld [vmem:[%s1081 + $0x54] sm:$0xf]
  %v6228 = vld [vmem:[%s1081 + $0x58] sm:$0xf]
  %v6229 = vld [vmem:[%s1081 + $0x5c] sm:$0xf]
  %v6230 = vld [vmem:[%s1081 + $0x60] sm:$0xf]
  %v6231 = vld [vmem:[%s1081 + $0x64] sm:$0xf]
  %v6232 = vld [vmem:[%s1081 + $0x68] sm:$0xf]
  %v6233 = vld [vmem:[%s1081 + $0x6c] sm:$0xf]
  %v6234 = vld [vmem:[%s1081 + $0x70] sm:$0xf]
  %v6235 = vld [vmem:[%s1081 + $0x74] sm:$0xf]
  %v6236 = vld [vmem:[%s1081 + $0x78] sm:$0xf]
  %v6237 = vld [vmem:[%s1081 + $0x7c] sm:$0xf]
  %v6270 = vunpack.c.l.b16 %v6206
  %v6271 = vunpack.c.l.b16 %v6207
  %v6272 = vunpack.c.l.b16 %v6208
  %v6273 = vunpack.c.l.b16 %v6209
  %v6274 = vunpack.c.l.b16 %v6210
  %v6275 = vunpack.c.l.b16 %v6211
  %v6276 = vunpack.c.l.b16 %v6212
  %v6277 = vunpack.c.l.b16 %v6213
  %v6278 = vunpack.c.l.b16 %v6214
  %v6279 = vunpack.c.l.b16 %v6215
  %v6280 = vunpack.c.l.b16 %v6216
  %v6281 = vunpack.c.l.b16 %v6217
  %v6282 = vunpack.c.l.b16 %v6218
  %v6283 = vunpack.c.l.b16 %v6219
  %v6284 = vunpack.c.l.b16 %v6220
  %v6285 = vunpack.c.l.b16 %v6221
  %v6286 = vunpack.c.l.b16 %v6222
  %v6287 = vunpack.c.l.b16 %v6223
  %v6288 = vunpack.c.l.b16 %v6224
  %v6289 = vunpack.c.l.b16 %v6225
  %v6290 = vunpack.c.l.b16 %v6226
  %v6291 = vunpack.c.l.b16 %v6227
  %v6292 = vunpack.c.l.b16 %v6228
  %v6293 = vunpack.c.l.b16 %v6229
  %v6294 = vunpack.c.l.b16 %v6230
  %v6295 = vunpack.c.l.b16 %v6231
  %v6296 = vunpack.c.l.b16 %v6232
  %v6297 = vunpack.c.l.b16 %v6233
  %v6298 = vunpack.c.l.b16 %v6234
  %v6299 = vunpack.c.l.b16 %v6235
  %v6300 = vunpack.c.l.b16 %v6236
  %v6301 = vunpack.c.l.b16 %v6237
  %v6302 = vpack.c.b16 %v6271, %v6270
  %v6303 = vpack.c.b16 %v6273, %v6272
  %v6304 = vpack.c.b16 %v6275, %v6274
  %v6305 = vpack.c.b16 %v6277, %v6276
  %v6306 = vpack.c.b16 %v6279, %v6278
  %v6307 = vpack.c.b16 %v6281, %v6280
  %v6308 = vpack.c.b16 %v6283, %v6282
  %v6309 = vpack.c.b16 %v6285, %v6284
  %v6310 = vpack.c.b16 %v6287, %v6286
  %v6311 = vpack.c.b16 %v6289, %v6288
  %v6312 = vpack.c.b16 %v6291, %v6290
  %v6313 = vpack.c.b16 %v6293, %v6292
  %v6314 = vpack.c.b16 %v6295, %v6294
  %v6315 = vpack.c.b16 %v6297, %v6296
  %v6316 = vpack.c.b16 %v6299, %v6298
  %v6317 = vpack.c.b16 %v6301, %v6300
  %6334 = vmatprep.subr.bf16.mxu0 0
  %6335 = vmatpush1.bf16.msra.mxu0 %v6302
  %6336 = vmatprep.subr.bf16.mxu0 0
  %6337 = vmatpush1.bf16.msra.mxu0 %v6303
  %6338 = vmatprep.subr.bf16.mxu0 0
  %6339 = vmatpush1.bf16.msra.mxu0 %v6304
  %6340 = vmatprep.subr.bf16.mxu0 0
  %6341 = vmatpush1.bf16.msra.mxu0 %v6305
  %6342 = vmatprep.subr.bf16.mxu0 0
  %6343 = vmatpush1.bf16.msra.mxu0 %v6306
  %6344 = vmatprep.subr.bf16.mxu0 0
  %6345 = vmatpush1.bf16.msra.mxu0 %v6307
  %6346 = vmatprep.subr.bf16.mxu0 0
  %6347 = vmatpush1.bf16.msra.mxu0 %v6308
  %6348 = vmatprep.subr.bf16.mxu0 0
  %6349 = vmatpush1.bf16.msra.mxu0 %v6309
  %6350 = vmatprep.subr.bf16.mxu0 0
  %6351 = vmatpush1.bf16.msra.mxu0 %v6310
  %6352 = vmatprep.subr.bf16.mxu0 0
  %6353 = vmatpush1.bf16.msra.mxu0 %v6311
  %6354 = vmatprep.subr.bf16.mxu0 0
  %6355 = vmatpush1.bf16.msra.mxu0 %v6312
  %6356 = vmatprep.subr.bf16.mxu0 0
  %6357 = vmatpush1.bf16.msra.mxu0 %v6313
  %6358 = vmatprep.subr.bf16.mxu0 0
  %6359 = vmatpush1.bf16.msra.mxu0 %v6314
  %6360 = vmatprep.subr.bf16.mxu0 0
  %6361 = vmatpush1.bf16.msra.mxu0 %v6315
  %6362 = vmatprep.subr.bf16.mxu0 0
  %6363 = vmatpush1.bf16.msra.mxu0 %v6316
  %6364 = vmatprep.subr.bf16.mxu0 0
  %6365 = vmatpush1.bf16.msra.mxu0 %v6317
  %6366 = vmatprep.mubr.bf16.mxu0 %v5191
  %6367 = vmatmul.mubr.bf16.gmra.mrb[0].mxu0 %v5190
  %v6368 = vpop.f32.mrb[0].mxu0
  %v6369 = vadd.f32 0.0, %v6368
  %v6370 = vpop.f32.mrb[0].mxu0
  %v6371 = vpop.f32.mrb[0].mxu0
  %v6372 = vpop.f32.mrb[0].mxu0
  %6373 = vdwg.mxu0
  %6374 = vst.msk [vmem:[#allocation2 + $0x6] sm:$0x1] %vm229, %v6369
  %v6375 = vld [vmem:[%s1251] sm:$0xf]
  %v6376 = vld [vmem:[%s1251 + $0x4] sm:$0xf]
  %v6377 = vld [vmem:[%s1251 + $0x8] sm:$0xf]
  %v6378 = vld [vmem:[%s1251 + $0xc] sm:$0xf]
  %v6379 = vld [vmem:[%s1251 + $0x10] sm:$0xf]
  %v6380 = vld [vmem:[%s1251 + $0x14] sm:$0xf]
  %v6381 = vld [vmem:[%s1251 + $0x18] sm:$0xf]
  %v6382 = vld [vmem:[%s1251 + $0x1c] sm:$0xf]
  %v6383 = vld [vmem:[%s1251 + $0x20] sm:$0xf]
  %v6384 = vld [vmem:[%s1251 + $0x24] sm:$0xf]
  %v6385 = vld [vmem:[%s1251 + $0x28] sm:$0xf]
  %v6386 = vld [vmem:[%s1251 + $0x2c] sm:$0xf]
  %v6387 = vld [vmem:[%s1251 + $0x30] sm:$0xf]
  %v6388 = vld [vmem:[%s1251 + $0x34] sm:$0xf]
  %v6389 = vld [vmem:[%s1251 + $0x38] sm:$0xf]
  %v6390 = vld [vmem:[%s1251 + $0x3c] sm:$0xf]
  %v6391 = vld [vmem:[%s1251 + $0x40] sm:$0xf]
  %v6392 = vld [vmem:[%s1251 + $0x44] sm:$0xf]
  %v6393 = vld [vmem:[%s1251 + $0x48] sm:$0xf]
  %v6394 = vld [vmem:[%s1251 + $0x4c] sm:$0xf]
  %v6395 = vld [vmem:[%s1251 + $0x50] sm:$0xf]
  %v6396 = vld [vmem:[%s1251 + $0x54] sm:$0xf]
  %v6397 = vld [vmem:[%s1251 + $0x58] sm:$0xf]
  %v6398 = vld [vmem:[%s1251 + $0x5c] sm:$0xf]
  %v6399 = vld [vmem:[%s1251 + $0x60] sm:$0xf]
  %v6400 = vld [vmem:[%s1251 + $0x64] sm:$0xf]
  %v6401 = vld [vmem:[%s1251 + $0x68] sm:$0xf]
  %v6402 = vld [vmem:[%s1251 + $0x6c] sm:$0xf]
  %v6403 = vld [vmem:[%s1251 + $0x70] sm:$0xf]
  %v6404 = vld [vmem:[%s1251 + $0x74] sm:$0xf]
  %v6405 = vld [vmem:[%s1251 + $0x78] sm:$0xf]
  %v6406 = vld [vmem:[%s1251 + $0x7c] sm:$0xf]
  %v6439 = vunpack.c.l.b16 %v6375
  %v6440 = vunpack.c.l.b16 %v6376
  %v6441 = vunpack.c.l.b16 %v6377
  %v6442 = vunpack.c.l.b16 %v6378
  %v6443 = vunpack.c.l.b16 %v6379
  %v6444 = vunpack.c.l.b16 %v6380
  %v6445 = vunpack.c.l.b16 %v6381
  %v6446 = vunpack.c.l.b16 %v6382
  %v6447 = vunpack.c.l.b16 %v6383
  %v6448 = vunpack.c.l.b16 %v6384
  %v6449 = vunpack.c.l.b16 %v6385
  %v6450 = vunpack.c.l.b16 %v6386
  %v6451 = vunpack.c.l.b16 %v6387
  %v6452 = vunpack.c.l.b16 %v6388
  %v6453 = vunpack.c.l.b16 %v6389
  %v6454 = vunpack.c.l.b16 %v6390
  %v6455 = vunpack.c.l.b16 %v6391
  %v6456 = vunpack.c.l.b16 %v6392
  %v6457 = vunpack.c.l.b16 %v6393
  %v6458 = vunpack.c.l.b16 %v6394
  %v6459 = vunpack.c.l.b16 %v6395
  %v6460 = vunpack.c.l.b16 %v6396
  %v6461 = vunpack.c.l.b16 %v6397
  %v6462 = vunpack.c.l.b16 %v6398
  %v6463 = vunpack.c.l.b16 %v6399
  %v6464 = vunpack.c.l.b16 %v6400
  %v6465 = vunpack.c.l.b16 %v6401
  %v6466 = vunpack.c.l.b16 %v6402
  %v6467 = vunpack.c.l.b16 %v6403
  %v6468 = vunpack.c.l.b16 %v6404
  %v6469 = vunpack.c.l.b16 %v6405
  %v6470 = vunpack.c.l.b16 %v6406
  %v6471 = vpack.c.b16 %v6440, %v6439
  %v6472 = vpack.c.b16 %v6442, %v6441
  %v6473 = vpack.c.b16 %v6444, %v6443
  %v6474 = vpack.c.b16 %v6446, %v6445
  %v6475 = vpack.c.b16 %v6448, %v6447
  %v6476 = vpack.c.b16 %v6450, %v6449
  %v6477 = vpack.c.b16 %v6452, %v6451
  %v6478 = vpack.c.b16 %v6454, %v6453
  %v6479 = vpack.c.b16 %v6456, %v6455
  %v6480 = vpack.c.b16 %v6458, %v6457
  %v6481 = vpack.c.b16 %v6460, %v6459
  %v6482 = vpack.c.b16 %v6462, %v6461
  %v6483 = vpack.c.b16 %v6464, %v6463
  %v6484 = vpack.c.b16 %v6466, %v6465
  %v6485 = vpack.c.b16 %v6468, %v6467
  %v6486 = vpack.c.b16 %v6470, %v6469
  %6503 = vmatprep.subr.bf16.mxu0 0
  %6504 = vmatpush1.bf16.msra.mxu0 %v6471
  %6505 = vmatprep.subr.bf16.mxu0 0
  %6506 = vmatpush1.bf16.msra.mxu0 %v6472
  %6507 = vmatprep.subr.bf16.mxu0 0
  %6508 = vmatpush1.bf16.msra.mxu0 %v6473
  %6509 = vmatprep.subr.bf16.mxu0 0
  %6510 = vmatpush1.bf16.msra.mxu0 %v6474
  %6511 = vmatprep.subr.bf16.mxu0 0
  %6512 = vmatpush1.bf16.msra.mxu0 %v6475
  %6513 = vmatprep.subr.bf16.mxu0 0
  %6514 = vmatpush1.bf16.msra.mxu0 %v6476
  %6515 = vmatprep.subr.bf16.mxu0 0
  %6516 = vmatpush1.bf16.msra.mxu0 %v6477
  %6517 = vmatprep.subr.bf16.mxu0 0
  %6518 = vmatpush1.bf16.msra.mxu0 %v6478
  %6519 = vmatprep.subr.bf16.mxu0 0
  %6520 = vmatpush1.bf16.msra.mxu0 %v6479
  %6521 = vmatprep.subr.bf16.mxu0 0
  %6522 = vmatpush1.bf16.msra.mxu0 %v6480
  %6523 = vmatprep.subr.bf16.mxu0 0
  %6524 = vmatpush1.bf16.msra.mxu0 %v6481
  %6525 = vmatprep.subr.bf16.mxu0 0
  %6526 = vmatpush1.bf16.msra.mxu0 %v6482
  %6527 = vmatprep.subr.bf16.mxu0 0
  %6528 = vmatpush1.bf16.msra.mxu0 %v6483
  %6529 = vmatprep.subr.bf16.mxu0 0
  %6530 = vmatpush1.bf16.msra.mxu0 %v6484
  %6531 = vmatprep.subr.bf16.mxu0 0
  %6532 = vmatpush1.bf16.msra.mxu0 %v6485
  %6533 = vmatprep.subr.bf16.mxu0 0
  %6534 = vmatpush1.bf16.msra.mxu0 %v6486
  %6535 = vmatprep.mubr.bf16.mxu0 %v5191
  %6536 = vmatmul.mubr.bf16.gmra.mrb[0].mxu0 %v5190
  %v6537 = vpop.f32.mrb[0].mxu0
  %v6538 = vadd.f32 0.0, %v6537
  %v6539 = vpop.f32.mrb[0].mxu0
  %v6540 = vpop.f32.mrb[0].mxu0
  %v6541 = vpop.f32.mrb[0].mxu0
  %6542 = vdwg.mxu0
  %6543 = vst.msk [vmem:[#allocation2 + $0x7] sm:$0x1] %vm229, %v6538
  %v6544 = vld [vmem:[%s1421] sm:$0xf]
  %v6545 = vld [vmem:[%s1421 + $0x4] sm:$0xf]
  %v6546 = vld [vmem:[%s1421 + $0x8] sm:$0xf]
  %v6547 = vld [vmem:[%s1421 + $0xc] sm:$0xf]
  %v6548 = vld [vmem:[%s1421 + $0x10] sm:$0xf]
  %v6549 = vld [vmem:[%s1421 + $0x14] sm:$0xf]
  %v6550 = vld [vmem:[%s1421 + $0x18] sm:$0xf]
  %v6551 = vld [vmem:[%s1421 + $0x1c] sm:$0xf]
  %v6552 = vld [vmem:[%s1421 + $0x20] sm:$0xf]
  %v6553 = vld [vmem:[%s1421 + $0x24] sm:$0xf]
  %v6554 = vld [vmem:[%s1421 + $0x28] sm:$0xf]
  %v6555 = vld [vmem:[%s1421 + $0x2c] sm:$0xf]
  %v6556 = vld [vmem:[%s1421 + $0x30] sm:$0xf]
  %v6557 = vld [vmem:[%s1421 + $0x34] sm:$0xf]
  %v6558 = vld [vmem:[%s1421 + $0x38] sm:$0xf]
  %v6559 = vld [vmem:[%s1421 + $0x3c] sm:$0xf]
  %v6560 = vld [vmem:[%s1421 + $0x40] sm:$0xf]
  %v6561 = vld [vmem:[%s1421 + $0x44] sm:$0xf]
  %v6562 = vld [vmem:[%s1421 + $0x48] sm:$0xf]
  %v6563 = vld [vmem:[%s1421 + $0x4c] sm:$0xf]
  %v6564 = vld [vmem:[%s1421 + $0x50] sm:$0xf]
  %v6565 = vld [vmem:[%s1421 + $0x54] sm:$0xf]
  %v6566 = vld [vmem:[%s1421 + $0x58] sm:$0xf]
  %v6567 = vld [vmem:[%s1421 + $0x5c] sm:$0xf]
  %v6568 = vld [vmem:[%s1421 + $0x60] sm:$0xf]
  %v6569 = vld [vmem:[%s1421 + $0x64] sm:$0xf]
  %v6570 = vld [vmem:[%s1421 + $0x68] sm:$0xf]
  %v6571 = vld [vmem:[%s1421 + $0x6c] sm:$0xf]
  %v6572 = vld [vmem:[%s1421 + $0x70] sm:$0xf]
  %v6573 = vld [vmem:[%s1421 + $0x74] sm:$0xf]
  %v6574 = vld [vmem:[%s1421 + $0x78] sm:$0xf]
  %v6575 = vld [vmem:[%s1421 + $0x7c] sm:$0xf]
  %v6608 = vunpack.c.l.b16 %v6544
  %v6609 = vunpack.c.l.b16 %v6545
  %v6610 = vunpack.c.l.b16 %v6546
  %v6611 = vunpack.c.l.b16 %v6547
  %v6612 = vunpack.c.l.b16 %v6548
  %v6613 = vunpack.c.l.b16 %v6549
  %v6614 = vunpack.c.l.b16 %v6550
  %v6615 = vunpack.c.l.b16 %v6551
  %v6616 = vunpack.c.l.b16 %v6552
  %v6617 = vunpack.c.l.b16 %v6553
  %v6618 = vunpack.c.l.b16 %v6554
  %v6619 = vunpack.c.l.b16 %v6555
  %v6620 = vunpack.c.l.b16 %v6556
  %v6621 = vunpack.c.l.b16 %v6557
  %v6622 = vunpack.c.l.b16 %v6558
  %v6623 = vunpack.c.l.b16 %v6559
  %v6624 = vunpack.c.l.b16 %v6560
  %v6625 = vunpack.c.l.b16 %v6561
  %v6626 = vunpack.c.l.b16 %v6562
  %v6627 = vunpack.c.l.b16 %v6563
  %v6628 = vunpack.c.l.b16 %v6564
  %v6629 = vunpack.c.l.b16 %v6565
  %v6630 = vunpack.c.l.b16 %v6566
  %v6631 = vunpack.c.l.b16 %v6567
  %v6632 = vunpack.c.l.b16 %v6568
  %v6633 = vunpack.c.l.b16 %v6569
  %v6634 = vunpack.c.l.b16 %v6570
  %v6635 = vunpack.c.l.b16 %v6571
  %v6636 = vunpack.c.l.b16 %v6572
  %v6637 = vunpack.c.l.b16 %v6573
  %v6638 = vunpack.c.l.b16 %v6574
  %v6639 = vunpack.c.l.b16 %v6575
  %v6640 = vpack.c.b16 %v6609, %v6608
  %v6641 = vpack.c.b16 %v6611, %v6610
  %v6642 = vpack.c.b16 %v6613, %v6612
  %v6643 = vpack.c.b16 %v6615, %v6614
  %v6644 = vpack.c.b16 %v6617, %v6616
  %v6645 = vpack.c.b16 %v6619, %v6618
  %v6646 = vpack.c.b16 %v6621, %v6620
  %v6647 = vpack.c.b16 %v6623, %v6622
  %v6648 = vpack.c.b16 %v6625, %v6624
  %v6649 = vpack.c.b16 %v6627, %v6626
  %v6650 = vpack.c.b16 %v6629, %v6628
  %v6651 = vpack.c.b16 %v6631, %v6630
  %v6652 = vpack.c.b16 %v6633, %v6632
  %v6653 = vpack.c.b16 %v6635, %v6634
  %v6654 = vpack.c.b16 %v6637, %v6636
  %v6655 = vpack.c.b16 %v6639, %v6638
  %6672 = vmatprep.subr.bf16.mxu0 0
  %6673 = vmatpush1.bf16.msra.mxu0 %v6640
  %6674 = vmatprep.subr.bf16.mxu0 0
  %6675 = vmatpush1.bf16.msra.mxu0 %v6641
  %6676 = vmatprep.subr.bf16.mxu0 0
  %6677 = vmatpush1.bf16.msra.mxu0 %v6642
  %6678 = vmatprep.subr.bf16.mxu0 0
  %6679 = vmatpush1.bf16.msra.mxu0 %v6643
  %6680 = vmatprep.subr.bf16.mxu0 0
  %6681 = vmatpush1.bf16.msra.mxu0 %v6644
  %6682 = vmatprep.subr.bf16.mxu0 0
  %6683 = vmatpush1.bf16.msra.mxu0 %v6645
  %6684 = vmatprep.subr.bf16.mxu0 0
  %6685 = vmatpush1.bf16.msra.mxu0 %v6646
  %6686 = vmatprep.subr.bf16.mxu0 0
  %6687 = vmatpush1.bf16.msra.mxu0 %v6647
  %6688 = vmatprep.subr.bf16.mxu0 0
  %6689 = vmatpush1.bf16.msra.mxu0 %v6648
  %6690 = vmatprep.subr.bf16.mxu0 0
  %6691 = vmatpush1.bf16.msra.mxu0 %v6649
  %6692 = vmatprep.subr.bf16.mxu0 0
  %6693 = vmatpush1.bf16.msra.mxu0 %v6650
  %6694 = vmatprep.subr.bf16.mxu0 0
  %6695 = vmatpush1.bf16.msra.mxu0 %v6651
  %6696 = vmatprep.subr.bf16.mxu0 0
  %6697 = vmatpush1.bf16.msra.mxu0 %v6652
  %6698 = vmatprep.subr.bf16.mxu0 0
  %6699 = vmatpush1.bf16.msra.mxu0 %v6653
  %6700 = vmatprep.subr.bf16.mxu0 0
  %6701 = vmatpush1.bf16.msra.mxu0 %v6654
  %6702 = vmatprep.subr.bf16.mxu0 0
  %6703 = vmatpush1.bf16.msra.mxu0 %v6655
  %6704 = vmatprep.mubr.bf16.mxu0 %v5191
  %6705 = vmatmul.mubr.bf16.gmra.mrb[0].mxu0 %v5190
  %v6706 = vpop.f32.mrb[0].mxu0
  %v6707 = vadd.f32 0.0, %v6706
  %v6708 = vpop.f32.mrb[0].mxu0
  %v6709 = vpop.f32.mrb[0].mxu0
  %v6710 = vpop.f32.mrb[0].mxu0
  %6711 = vdwg.mxu0
  %6712 = vst.msk [vmem:[#allocation2 + $0x8] sm:$0x1] %vm229, %v6707
  %v6713 = vld [vmem:[%s1] sm:$0xf]
  %v6714 = vld [vmem:[%s1 + $0x4] sm:$0xf]
  %v6715 = vld [vmem:[%s1 + $0x8] sm:$0xf]
  %v6716 = vld [vmem:[%s1 + $0xc] sm:$0xf]
  %v6717 = vld [vmem:[#allocation2] sm:$0xff]
  %v6718 = vld [vmem:[#allocation2 + $0x8] sm:$0x1]
  %v6719 = vpack.c.bf16 %v6718, %v6717
  %v6720 = vld [vmem:[%s2] sm:$0xff]
  %v6721 = vld [vmem:[%s2 + $0x8] sm:$0xff]
  %v6722 = vld [vmem:[%s2 + $0x10] sm:$0xff]
  %v6723 = vld [vmem:[%s2 + $0x18] sm:$0xff]
  %6725 = vset.pattern.permute.xlu0 0
  %6726 = vperm.xlu0 %6725, %v6720
  %v6727 = vpop.permute.xlu0 %6726
  %6730 = vset.pattern.permute.xlu0 0
  %6731 = vperm.xlu0 %6730, %v6721
  %v6732 = vpop.permute.xlu0 %6731
  %6735 = vset.pattern.permute.xlu0 0
  %6736 = vperm.xlu0 %6735, %v6722
  %v6737 = vpop.permute.xlu0 %6736
  %6740 = vset.pattern.permute.xlu0 0
  %6741 = vperm.xlu0 %6740, %v6723
  %v6742 = vpop.permute.xlu0 %6741
  %v6748 = vunpack.c.l.b16 %v6713
  %v6749 = vunpack.c.l.b16 %v6714
  %v6750 = vunpack.c.l.b16 %v6715
  %v6751 = vunpack.c.l.b16 %v6716
  %v6752 = vpack.c.b16 %v6749, %v6748
  %v6753 = vpack.c.b16 %v6751, %v6750
  %v6755 = vsel %vm1632, %v6752, 0
  %v6758 = vsel %vm1632, %v6753, 0
  %v6761 = vand.u32 %v6719, %v1642
  %6763 = vmatprep.subr.bf16.mxu0 0
  %6764 = vmatpush1.bf16.msra.mxu0 %v6761
  %6765 = vmatprep.subr.bf16.mxu0 0
  %6766 = vmatpush1.bf16.msra.mxu0 0
  %6767 = vmatprep.subr.bf16.mxu0 0
  %6768 = vmatpush1.bf16.msra.mxu0 0
  %6769 = vmatprep.subr.bf16.mxu0 0
  %6770 = vmatpush1.bf16.msra.mxu0 0
  %6771 = vmatprep.subr.bf16.mxu0 0
  %6772 = vmatpush1.bf16.msra.mxu0 0
  %6773 = vmatprep.subr.bf16.mxu0 0
  %6774 = vmatpush1.bf16.msra.mxu0 0
  %6775 = vmatprep.subr.bf16.mxu0 0
  %6776 = vmatpush1.bf16.msra.mxu0 0
  %6777 = vmatprep.subr.bf16.mxu0 0
  %6778 = vmatpush1.bf16.msra.mxu0 0
  %6779 = vmatprep.subr.bf16.mxu0 0
  %6780 = vmatpush1.bf16.msra.mxu0 0
  %6781 = vmatprep.subr.bf16.mxu0 0
  %6782 = vmatpush1.bf16.msra.mxu0 0
  %6783 = vmatprep.subr.bf16.mxu0 0
  %6784 = vmatpush1.bf16.msra.mxu0 0
  %6785 = vmatprep.subr.bf16.mxu0 0
  %6786 = vmatpush1.bf16.msra.mxu0 0
  %6787 = vmatprep.subr.bf16.mxu0 0
  %6788 = vmatpush1.bf16.msra.mxu0 0
  %6789 = vmatprep.subr.bf16.mxu0 0
  %6790 = vmatpush1.bf16.msra.mxu0 0
  %6791 = vmatprep.subr.bf16.mxu0 0
  %6792 = vmatpush1.bf16.msra.mxu0 0
  %6793 = vmatprep.subr.bf16.mxu0 0
  %6794 = vmatpush1.bf16.msra.mxu0 0
  %6795 = vmatprep.mubr.bf16.mxu0 0
  %6796 = vmatmul.mubr.bf16.gmra.mrb[0].mxu0 %v6755
  %v6797 = vpop.f32.mrb[0].mxu0
  %v6798 = vadd.f32 %v6727, %v6797
  %v6799 = vpop.f32.mrb[0].mxu0
  %v6800 = vpop.f32.mrb[0].mxu0
  %v6801 = vadd.f32 %v6732, %v6800
  %v6802 = vpop.f32.mrb[0].mxu0
  %6803 = vmatprep.mubr.bf16.mxu0 0
  %6804 = vmatmul.mubr.bf16.gmra.mrb[0].mxu0 %v6758
  %v6805 = vpop.f32.mrb[0].mxu0
  %v6806 = vadd.f32 %v6737, %v6805
  %v6807 = vpop.f32.mrb[0].mxu0
  %v6808 = vpop.f32.mrb[0].mxu0
  %v6809 = vadd.f32 %v6742, %v6808
  %v6810 = vpop.f32.mrb[0].mxu0
  %6811 = vdwg.mxu0
  %v6812 = vmax.f32 %v6798, 0.0
  %v6813 = vmax.f32 %v6801, 0.0
  %v6814 = vmax.f32 %v6806, 0.0
  %v6815 = vmax.f32 %v6809, 0.0
  %v6816 = vpack.c.bf16 %v6813, %v6812
  %v6817 = vpack.c.bf16 %v6815, %v6814
  %v6818 = vld [vmem:[%s6] sm:$0xf]
  %v6819 = vld [vmem:[%s6 + $0x4] sm:$0xf]
  %v6820 = vld [vmem:[%s6 + $0x8] sm:$0xf]
  %v6821 = vld [vmem:[%s6 + $0xc] sm:$0xf]
  %v6822 = vld [vmem:[%s6 + $0x10] sm:$0xf]
  %v6823 = vld [vmem:[%s6 + $0x14] sm:$0xf]
  %v6824 = vld [vmem:[%s6 + $0x18] sm:$0xf]
  %v6825 = vld [vmem:[%s6 + $0x1c] sm:$0xf]
  %v6834 = vunpack.c.l.b16 %v6818
  %v6835 = vunpack.c.l.b16 %v6819
  %v6836 = vunpack.c.l.b16 %v6820
  %v6837 = vunpack.c.l.b16 %v6821
  %v6838 = vunpack.c.l.b16 %v6822
  %v6839 = vunpack.c.l.b16 %v6823
  %v6840 = vunpack.c.l.b16 %v6824
  %v6841 = vunpack.c.l.b16 %v6825
  %v6842 = vpack.c.b16 %v6835, %v6834
  %v6843 = vpack.c.b16 %v6837, %v6836
  %v6844 = vpack.c.b16 %v6839, %v6838
  %v6845 = vpack.c.b16 %v6841, %v6840
  %v6851 = vsel %vm1733, %v6816, 0
  %v6854 = vsel %vm1733, %v6817, 0
  %6856 = vmatprep.subr.bf16.mxu0 0
  %6857 = vmatpush1.bf16.msra.mxu0 %v6842
  %6858 = vmatprep.subr.bf16.mxu0 0
  %6859 = vmatpush1.bf16.msra.mxu0 %v6843
  %6860 = vmatprep.subr.bf16.mxu0 0
  %6861 = vmatpush1.bf16.msra.mxu0 %v6844
  %6862 = vmatprep.subr.bf16.mxu0 0
  %6863 = vmatpush1.bf16.msra.mxu0 %v6845
  %6864 = vmatprep.subr.bf16.mxu0 0
  %6865 = vmatpush1.bf16.msra.mxu0 0
  %6866 = vmatprep.subr.bf16.mxu0 0
  %6867 = vmatpush1.bf16.msra.mxu0 0
  %6868 = vmatprep.subr.bf16.mxu0 0
  %6869 = vmatpush1.bf16.msra.mxu0 0
  %6870 = vmatprep.subr.bf16.mxu0 0
  %6871 = vmatpush1.bf16.msra.mxu0 0
  %6872 = vmatprep.subr.bf16.mxu0 0
  %6873 = vmatpush1.bf16.msra.mxu0 0
  %6874 = vmatprep.subr.bf16.mxu0 0
  %6875 = vmatpush1.bf16.msra.mxu0 0
  %6876 = vmatprep.subr.bf16.mxu0 0
  %6877 = vmatpush1.bf16.msra.mxu0 0
  %6878 = vmatprep.subr.bf16.mxu0 0
  %6879 = vmatpush1.bf16.msra.mxu0 0
  %6880 = vmatprep.subr.bf16.mxu0 0
  %6881 = vmatpush1.bf16.msra.mxu0 0
  %6882 = vmatprep.subr.bf16.mxu0 0
  %6883 = vmatpush1.bf16.msra.mxu0 0
  %6884 = vmatprep.subr.bf16.mxu0 0
  %6885 = vmatpush1.bf16.msra.mxu0 0
  %6886 = vmatprep.subr.bf16.mxu0 0
  %6887 = vmatpush1.bf16.msra.mxu0 0
  %6888 = vmatprep.mubr.bf16.mxu0 0
  %6889 = vmatmul.mubr.bf16.gmra.mrb[0].mxu0 %v6851
  %v6890 = vpop.f32.mrb[0].mxu0
  %v6891 = vadd.f32 0.0, %v6890
  %v6892 = vpop.f32.mrb[0].mxu0
  %v6893 = vpop.f32.mrb[0].mxu0
  %v6894 = vadd.f32 0.0, %v6893
  %v6895 = vpop.f32.mrb[0].mxu0
  %6896 = vmatprep.mubr.bf16.mxu0 0
  %6897 = vmatmul.mubr.bf16.gmra.mrb[0].mxu0 %v6854
  %v6898 = vpop.f32.mrb[0].mxu0
  %v6899 = vadd.f32 0.0, %v6898
  %v6900 = vpop.f32.mrb[0].mxu0
  %v6901 = vpop.f32.mrb[0].mxu0
  %v6902 = vadd.f32 0.0, %v6901
  %v6903 = vpop.f32.mrb[0].mxu0
  %6904 = vdwg.mxu0
  %6905 = vst.msk [vmem:[#allocation3] sm:$0xff] %vm1789, %v6891
  %6906 = vst.msk [vmem:[#allocation3 + $0x8] sm:$0xff] %vm1789, %v6894
  %6907 = vst.msk [vmem:[#allocation3 + $0x10] sm:$0xff] %vm1789, %v6899
  %6908 = vst.msk [vmem:[#allocation3 + $0x18] sm:$0xff] %vm1789, %v6902
  %v6909 = vld [vmem:[%s1794] sm:$0xf]
  %v6910 = vld [vmem:[%s1794 + $0x4] sm:$0xf]
  %v6911 = vld [vmem:[%s1794 + $0x8] sm:$0xf]
  %v6912 = vld [vmem:[%s1794 + $0xc] sm:$0xf]
  %v6913 = vld [vmem:[%s1794 + $0x10] sm:$0xf]
  %v6914 = vld [vmem:[%s1794 + $0x14] sm:$0xf]
  %v6915 = vld [vmem:[%s1794 + $0x18] sm:$0xf]
  %v6916 = vld [vmem:[%s1794 + $0x1c] sm:$0xf]
  %v6925 = vunpack.c.l.b16 %v6909
  %v6926 = vunpack.c.l.b16 %v6910
  %v6927 = vunpack.c.l.b16 %v6911
  %v6928 = vunpack.c.l.b16 %v6912
  %v6929 = vunpack.c.l.b16 %v6913
  %v6930 = vunpack.c.l.b16 %v6914
  %v6931 = vunpack.c.l.b16 %v6915
  %v6932 = vunpack.c.l.b16 %v6916
  %v6933 = vpack.c.b16 %v6926, %v6925
  %v6934 = vpack.c.b16 %v6928, %v6927
  %v6935 = vpack.c.b16 %v6930, %v6929
  %v6936 = vpack.c.b16 %v6932, %v6931
  %6941 = vmatprep.subr.bf16.mxu0 0
  %6942 = vmatpush1.bf16.msra.mxu0 %v6933
  %6943 = vmatprep.subr.bf16.mxu0 0
  %6944 = vmatpush1.bf16.msra.mxu0 %v6934
  %6945 = vmatprep.subr.bf16.mxu0 0
  %6946 = vmatpush1.bf16.msra.mxu0 %v6935
  %6947 = vmatprep.subr.bf16.mxu0 0
  %6948 = vmatpush1.bf16.msra.mxu0 %v6936
  %6949 = vmatprep.subr.bf16.mxu0 0
  %6950 = vmatpush1.bf16.msra.mxu0 0
  %6951 = vmatprep.subr.bf16.mxu0 0
  %6952 = vmatpush1.bf16.msra.mxu0 0
  %6953 = vmatprep.subr.bf16.mxu0 0
  %6954 = vmatpush1.bf16.msra.mxu0 0
  %6955 = vmatprep.subr.bf16.mxu0 0
  %6956 = vmatpush1.bf16.msra.mxu0 0
  %6957 = vmatprep.subr.bf16.mxu0 0
  %6958 = vmatpush1.bf16.msra.mxu0 0
  %6959 = vmatprep.subr.bf16.mxu0 0
  %6960 = vmatpush1.bf16.msra.mxu0 0
  %6961 = vmatprep.subr.bf16.mxu0 0
  %6962 = vmatpush1.bf16.msra.mxu0 0
  %6963 = vmatprep.subr.bf16.mxu0 0
  %6964 = vmatpush1.bf16.msra.mxu0 0
  %6965 = vmatprep.subr.bf16.mxu0 0
  %6966 = vmatpush1.bf16.msra.mxu0 0
  %6967 = vmatprep.subr.bf16.mxu0 0
  %6968 = vmatpush1.bf16.msra.mxu0 0
  %6969 = vmatprep.subr.bf16.mxu0 0
  %6970 = vmatpush1.bf16.msra.mxu0 0
  %6971 = vmatprep.subr.bf16.mxu0 0
  %6972 = vmatpush1.bf16.msra.mxu0 0
  %6973 = vmatprep.mubr.bf16.mxu0 0
  %6974 = vmatmul.mubr.bf16.gmra.mrb[0].mxu0 %v6851
  %v6975 = vpop.f32.mrb[0].mxu0
  %v6976 = vadd.f32 0.0, %v6975
  %v6977 = vpop.f32.mrb[0].mxu0
  %v6978 = vpop.f32.mrb[0].mxu0
  %v6979 = vadd.f32 0.0, %v6978
  %v6980 = vpop.f32.mrb[0].mxu0
  %6981 = vmatprep.mubr.bf16.mxu0 0
  %6982 = vmatmul.mubr.bf16.gmra.mrb[0].mxu0 %v6854
  %v6983 = vpop.f32.mrb[0].mxu0
  %v6984 = vadd.f32 0.0, %v6983
  %v6985 = vpop.f32.mrb[0].mxu0
  %v6986 = vpop.f32.mrb[0].mxu0
  %v6987 = vadd.f32 0.0, %v6986
  %v6988 = vpop.f32.mrb[0].mxu0
  %6989 = vdwg.mxu0
  %6990 = vst.msk [vmem:[#allocation3 + $0x20] sm:$0xff] %vm1789, %v6976
  %6991 = vst.msk [vmem:[#allocation3 + $0x28] sm:$0xff] %vm1789, %v6979
  %6992 = vst.msk [vmem:[#allocation3 + $0x30] sm:$0xff] %vm1789, %v6984
  %6993 = vst.msk [vmem:[#allocation3 + $0x38] sm:$0xff] %vm1789, %v6987
  %v6994 = vld [vmem:[%s1880] sm:$0xf]
  %v6995 = vld [vmem:[%s1880 + $0x4] sm:$0xf]
  %v6996 = vld [vmem:[%s1880 + $0x8] sm:$0xf]
  %v6997 = vld [vmem:[%s1880 + $0xc] sm:$0xf]
  %v6998 = vld [vmem:[%s1880 + $0x10] sm:$0xf]
  %v6999 = vld [vmem:[%s1880 + $0x14] sm:$0xf]
  %v7000 = vld [vmem:[%s1880 + $0x18] sm:$0xf]
  %v7001 = vld [vmem:[%s1880 + $0x1c] sm:$0xf]
  %v7010 = vunpack.c.l.b16 %v6994
  %v7011 = vunpack.c.l.b16 %v6995
  %v7012 = vunpack.c.l.b16 %v6996
  %v7013 = vunpack.c.l.b16 %v6997
  %v7014 = vunpack.c.l.b16 %v6998
  %v7015 = vunpack.c.l.b16 %v6999
  %v7016 = vunpack.c.l.b16 %v7000
  %v7017 = vunpack.c.l.b16 %v7001
  %v7018 = vpack.c.b16 %v7011, %v7010
  %v7019 = vpack.c.b16 %v7013, %v7012
  %v7020 = vpack.c.b16 %v7015, %v7014
  %v7021 = vpack.c.b16 %v7017, %v7016
  %7026 = vmatprep.subr.bf16.mxu0 0
  %7027 = vmatpush1.bf16.msra.mxu0 %v7018
  %7028 = vmatprep.subr.bf16.mxu0 0
  %7029 = vmatpush1.bf16.msra.mxu0 %v7019
  %7030 = vmatprep.subr.bf16.mxu0 0
  %7031 = vmatpush1.bf16.msra.mxu0 %v7020
  %7032 = vmatprep.subr.bf16.mxu0 0
  %7033 = vmatpush1.bf16.msra.mxu0 %v7021
  %7034 = vmatprep.subr.bf16.mxu0 0
  %7035 = vmatpush1.bf16.msra.mxu0 0
  %7036 = vmatprep.subr.bf16.mxu0 0
  %7037 = vmatpush1.bf16.msra.mxu0 0
  %7038 = vmatprep.subr.bf16.mxu0 0
  %7039 = vmatpush1.bf16.msra.mxu0 0
  %7040 = vmatprep.subr.bf16.mxu0 0
  %7041 = vmatpush1.bf16.msra.mxu0 0
  %7042 = vmatprep.subr.bf16.mxu0 0
  %7043 = vmatpush1.bf16.msra.mxu0 0
  %7044 = vmatprep.subr.bf16.mxu0 0
  %7045 = vmatpush1.bf16.msra.mxu0 0
  %7046 = vmatprep.subr.bf16.mxu0 0
  %7047 = vmatpush1.bf16.msra.mxu0 0
  %7048 = vmatprep.subr.bf16.mxu0 0
  %7049 = vmatpush1.bf16.msra.mxu0 0
  %7050 = vmatprep.subr.bf16.mxu0 0
  %7051 = vmatpush1.bf16.msra.mxu0 0
  %7052 = vmatprep.subr.bf16.mxu0 0
  %7053 = vmatpush1.bf16.msra.mxu0 0
  %7054 = vmatprep.subr.bf16.mxu0 0
  %7055 = vmatpush1.bf16.msra.mxu0 0
  %7056 = vmatprep.subr.bf16.mxu0 0
  %7057 = vmatpush1.bf16.msra.mxu0 0
  %7058 = vmatprep.mubr.bf16.mxu0 0
  %7059 = vmatmul.mubr.bf16.gmra.mrb[0].mxu0 %v6851
  %v7060 = vpop.f32.mrb[0].mxu0
  %v7061 = vadd.f32 0.0, %v7060
  %v7062 = vpop.f32.mrb[0].mxu0
  %v7063 = vpop.f32.mrb[0].mxu0
  %v7064 = vadd.f32 0.0, %v7063
  %v7065 = vpop.f32.mrb[0].mxu0
  %7066 = vmatprep.mubr.bf16.mxu0 0
  %7067 = vmatmul.mubr.bf16.gmra.mrb[0].mxu0 %v6854
  %v7068 = vpop.f32.mrb[0].mxu0
  %v7069 = vadd.f32 0.0, %v7068
  %v7070 = vpop.f32.mrb[0].mxu0
  %v7071 = vpop.f32.mrb[0].mxu0
  %v7072 = vadd.f32 0.0, %v7071
  %v7073 = vpop.f32.mrb[0].mxu0
  %7074 = vdwg.mxu0
  %7075 = vst.msk [vmem:[#allocation3 + $0x40] sm:$0xff] %vm1789, %v7061
  %7076 = vst.msk [vmem:[#allocation3 + $0x48] sm:$0xff] %vm1789, %v7064
  %7077 = vst.msk [vmem:[#allocation3 + $0x50] sm:$0xff] %vm1789, %v7069
  %7078 = vst.msk [vmem:[#allocation3 + $0x58] sm:$0xff] %vm1789, %v7072
  %v7079 = vld [vmem:[%s1966] sm:$0xf]
  %v7080 = vld [vmem:[%s1966 + $0x4] sm:$0xf]
  %v7081 = vld [vmem:[%s1966 + $0x8] sm:$0xf]
  %v7082 = vld [vmem:[%s1966 + $0xc] sm:$0xf]
  %v7083 = vld [vmem:[%s1966 + $0x10] sm:$0xf]
  %v7084 = vld [vmem:[%s1966 + $0x14] sm:$0xf]
  %v7085 = vld [vmem:[%s1966 + $0x18] sm:$0xf]
  %v7086 = vld [vmem:[%s1966 + $0x1c] sm:$0xf]
  %v7095 = vunpack.c.l.b16 %v7079
  %v7096 = vunpack.c.l.b16 %v7080
  %v7097 = vunpack.c.l.b16 %v7081
  %v7098 = vunpack.c.l.b16 %v7082
  %v7099 = vunpack.c.l.b16 %v7083
  %v7100 = vunpack.c.l.b16 %v7084
  %v7101 = vunpack.c.l.b16 %v7085
  %v7102 = vunpack.c.l.b16 %v7086
  %v7103 = vpack.c.b16 %v7096, %v7095
  %v7104 = vpack.c.b16 %v7098, %v7097
  %v7105 = vpack.c.b16 %v7100, %v7099
  %v7106 = vpack.c.b16 %v7102, %v7101
  %7111 = vmatprep.subr.bf16.mxu0 0
  %7112 = vmatpush1.bf16.msra.mxu0 %v7103
  %7113 = vmatprep.subr.bf16.mxu0 0
  %7114 = vmatpush1.bf16.msra.mxu0 %v7104
  %7115 = vmatprep.subr.bf16.mxu0 0
  %7116 = vmatpush1.bf16.msra.mxu0 %v7105
  %7117 = vmatprep.subr.bf16.mxu0 0
  %7118 = vmatpush1.bf16.msra.mxu0 %v7106
  %7119 = vmatprep.subr.bf16.mxu0 0
  %7120 = vmatpush1.bf16.msra.mxu0 0
  %7121 = vmatprep.subr.bf16.mxu0 0
  %7122 = vmatpush1.bf16.msra.mxu0 0
  %7123 = vmatprep.subr.bf16.mxu0 0
  %7124 = vmatpush1.bf16.msra.mxu0 0
  %7125 = vmatprep.subr.bf16.mxu0 0
  %7126 = vmatpush1.bf16.msra.mxu0 0
  %7127 = vmatprep.subr.bf16.mxu0 0
  %7128 = vmatpush1.bf16.msra.mxu0 0
  %7129 = vmatprep.subr.bf16.mxu0 0
  %7130 = vmatpush1.bf16.msra.mxu0 0
  %7131 = vmatprep.subr.bf16.mxu0 0
  %7132 = vmatpush1.bf16.msra.mxu0 0
  %7133 = vmatprep.subr.bf16.mxu0 0
  %7134 = vmatpush1.bf16.msra.mxu0 0
  %7135 = vmatprep.subr.bf16.mxu0 0
  %7136 = vmatpush1.bf16.msra.mxu0 0
  %7137 = vmatprep.subr.bf16.mxu0 0
  %7138 = vmatpush1.bf16.msra.mxu0 0
  %7139 = vmatprep.subr.bf16.mxu0 0
  %7140 = vmatpush1.bf16.msra.mxu0 0
  %7141 = vmatprep.subr.bf16.mxu0 0
  %7142 = vmatpush1.bf16.msra.mxu0 0
  %7143 = vmatprep.mubr.bf16.mxu0 0
  %7144 = vmatmul.mubr.bf16.gmra.mrb[0].mxu0 %v6851
  %v7145 = vpop.f32.mrb[0].mxu0
  %v7146 = vadd.f32 0.0, %v7145
  %v7147 = vpop.f32.mrb[0].mxu0
  %v7148 = vpop.f32.mrb[0].mxu0
  %v7149 = vadd.f32 0.0, %v7148
  %v7150 = vpop.f32.mrb[0].mxu0
  %7151 = vmatprep.mubr.bf16.mxu0 0
  %7152 = vmatmul.mubr.bf16.gmra.mrb[0].mxu0 %v6854
  %v7153 = vpop.f32.mrb[0].mxu0
  %v7154 = vadd.f32 0.0, %v7153
  %v7155 = vpop.f32.mrb[0].mxu0
  %v7156 = vpop.f32.mrb[0].mxu0
  %v7157 = vadd.f32 0.0, %v7156
  %v7158 = vpop.f32.mrb[0].mxu0
  %7159 = vdwg.mxu0
  %7160 = vst.msk [vmem:[#allocation3 + $0x60] sm:$0xff] %vm1789, %v7146
  %7161 = vst.msk [vmem:[#allocation3 + $0x68] sm:$0xff] %vm1789, %v7149
  %7162 = vst.msk [vmem:[#allocation3 + $0x70] sm:$0xff] %vm1789, %v7154
  %7163 = vst.msk [vmem:[#allocation3 + $0x78] sm:$0xff] %vm1789, %v7157
  %v7164 = vld [vmem:[%s2052] sm:$0xf]
  %v7165 = vld [vmem:[%s2052 + $0x4] sm:$0xf]
  %v7166 = vld [vmem:[%s2052 + $0x8] sm:$0xf]
  %v7167 = vld [vmem:[%s2052 + $0xc] sm:$0xf]
  %v7168 = vld [vmem:[%s2052 + $0x10] sm:$0xf]
  %v7169 = vld [vmem:[%s2052 + $0x14] sm:$0xf]
  %v7170 = vld [vmem:[%s2052 + $0x18] sm:$0xf]
  %v7171 = vld [vmem:[%s2052 + $0x1c] sm:$0xf]
  %v7180 = vunpack.c.l.b16 %v7164
  %v7181 = vunpack.c.l.b16 %v7165
  %v7182 = vunpack.c.l.b16 %v7166
  %v7183 = vunpack.c.l.b16 %v7167
  %v7184 = vunpack.c.l.b16 %v7168
  %v7185 = vunpack.c.l.b16 %v7169
  %v7186 = vunpack.c.l.b16 %v7170
  %v7187 = vunpack.c.l.b16 %v7171
  %v7188 = vpack.c.b16 %v7181, %v7180
  %v7189 = vpack.c.b16 %v7183, %v7182
  %v7190 = vpack.c.b16 %v7185, %v7184
  %v7191 = vpack.c.b16 %v7187, %v7186
  %7196 = vmatprep.subr.bf16.mxu0 0
  %7197 = vmatpush1.bf16.msra.mxu0 %v7188
  %7198 = vmatprep.subr.bf16.mxu0 0
  %7199 = vmatpush1.bf16.msra.mxu0 %v7189
  %7200 = vmatprep.subr.bf16.mxu0 0
  %7201 = vmatpush1.bf16.msra.mxu0 %v7190
  %7202 = vmatprep.subr.bf16.mxu0 0
  %7203 = vmatpush1.bf16.msra.mxu0 %v7191
  %7204 = vmatprep.subr.bf16.mxu0 0
  %7205 = vmatpush1.bf16.msra.mxu0 0
  %7206 = vmatprep.subr.bf16.mxu0 0
  %7207 = vmatpush1.bf16.msra.mxu0 0
  %7208 = vmatprep.subr.bf16.mxu0 0
  %7209 = vmatpush1.bf16.msra.mxu0 0
  %7210 = vmatprep.subr.bf16.mxu0 0
  %7211 = vmatpush1.bf16.msra.mxu0 0
  %7212 = vmatprep.subr.bf16.mxu0 0
  %7213 = vmatpush1.bf16.msra.mxu0 0
  %7214 = vmatprep.subr.bf16.mxu0 0
  %7215 = vmatpush1.bf16.msra.mxu0 0
  %7216 = vmatprep.subr.bf16.mxu0 0
  %7217 = vmatpush1.bf16.msra.mxu0 0
  %7218 = vmatprep.subr.bf16.mxu0 0
  %7219 = vmatpush1.bf16.msra.mxu0 0
  %7220 = vmatprep.subr.bf16.mxu0 0
  %7221 = vmatpush1.bf16.msra.mxu0 0
  %7222 = vmatprep.subr.bf16.mxu0 0
  %7223 = vmatpush1.bf16.msra.mxu0 0
  %7224 = vmatprep.subr.bf16.mxu0 0
  %7225 = vmatpush1.bf16.msra.mxu0 0
  %7226 = vmatprep.subr.bf16.mxu0 0
  %7227 = vmatpush1.bf16.msra.mxu0 0
  %7228 = vmatprep.mubr.bf16.mxu0 0
  %7229 = vmatmul.mubr.bf16.gmra.mrb[0].mxu0 %v6851
  %v7230 = vpop.f32.mrb[0].mxu0
  %v7231 = vadd.f32 0.0, %v7230
  %v7232 = vpop.f32.mrb[0].mxu0
  %v7233 = vpop.f32.mrb[0].mxu0
  %v7234 = vadd.f32 0.0, %v7233
  %v7235 = vpop.f32.mrb[0].mxu0
  %7236 = vmatprep.mubr.bf16.mxu0 0
  %7237 = vmatmul.mubr.bf16.gmra.mrb[0].mxu0 %v6854
  %v7238 = vpop.f32.mrb[0].mxu0
  %v7239 = vadd.f32 0.0, %v7238
  %v7240 = vpop.f32.mrb[0].mxu0
  %v7241 = vpop.f32.mrb[0].mxu0
  %v7242 = vadd.f32 0.0, %v7241
  %v7243 = vpop.f32.mrb[0].mxu0
  %7244 = vdwg.mxu0
  %7245 = vst.msk [vmem:[#allocation3 + $0x80] sm:$0xff] %vm1789, %v7231
  %7246 = vst.msk [vmem:[#allocation3 + $0x88] sm:$0xff] %vm1789, %v7234
  %7247 = vst.msk [vmem:[#allocation3 + $0x90] sm:$0xff] %vm1789, %v7239
  %7248 = vst.msk [vmem:[#allocation3 + $0x98] sm:$0xff] %vm1789, %v7242
  %v7249 = vld [vmem:[%s2138] sm:$0xf]
  %v7250 = vld [vmem:[%s2138 + $0x4] sm:$0xf]
  %v7251 = vld [vmem:[%s2138 + $0x8] sm:$0xf]
  %v7252 = vld [vmem:[%s2138 + $0xc] sm:$0xf]
  %v7253 = vld [vmem:[%s2138 + $0x10] sm:$0xf]
  %v7254 = vld [vmem:[%s2138 + $0x14] sm:$0xf]
  %v7255 = vld [vmem:[%s2138 + $0x18] sm:$0xf]
  %v7256 = vld [vmem:[%s2138 + $0x1c] sm:$0xf]
  %v7265 = vunpack.c.l.b16 %v7249
  %v7266 = vunpack.c.l.b16 %v7250
  %v7267 = vunpack.c.l.b16 %v7251
  %v7268 = vunpack.c.l.b16 %v7252
  %v7269 = vunpack.c.l.b16 %v7253
  %v7270 = vunpack.c.l.b16 %v7254
  %v7271 = vunpack.c.l.b16 %v7255
  %v7272 = vunpack.c.l.b16 %v7256
  %v7273 = vpack.c.b16 %v7266, %v7265
  %v7274 = vpack.c.b16 %v7268, %v7267
  %v7275 = vpack.c.b16 %v7270, %v7269
  %v7276 = vpack.c.b16 %v7272, %v7271
  %7281 = vmatprep.subr.bf16.mxu0 0
  %7282 = vmatpush1.bf16.msra.mxu0 %v7273
  %7283 = vmatprep.subr.bf16.mxu0 0
  %7284 = vmatpush1.bf16.msra.mxu0 %v7274
  %7285 = vmatprep.subr.bf16.mxu0 0
  %7286 = vmatpush1.bf16.msra.mxu0 %v7275
  %7287 = vmatprep.subr.bf16.mxu0 0
  %7288 = vmatpush1.bf16.msra.mxu0 %v7276
  %7289 = vmatprep.subr.bf16.mxu0 0
  %7290 = vmatpush1.bf16.msra.mxu0 0
  %7291 = vmatprep.subr.bf16.mxu0 0
  %7292 = vmatpush1.bf16.msra.mxu0 0
  %7293 = vmatprep.subr.bf16.mxu0 0
  %7294 = vmatpush1.bf16.msra.mxu0 0
  %7295 = vmatprep.subr.bf16.mxu0 0
  %7296 = vmatpush1.bf16.msra.mxu0 0
  %7297 = vmatprep.subr.bf16.mxu0 0
  %7298 = vmatpush1.bf16.msra.mxu0 0
  %7299 = vmatprep.subr.bf16.mxu0 0
  %7300 = vmatpush1.bf16.msra.mxu0 0
  %7301 = vmatprep.subr.bf16.mxu0 0
  %7302 = vmatpush1.bf16.msra.mxu0 0
  %7303 = vmatprep.subr.bf16.mxu0 0
  %7304 = vmatpush1.bf16.msra.mxu0 0
  %7305 = vmatprep.subr.bf16.mxu0 0
  %7306 = vmatpush1.bf16.msra.mxu0 0
  %7307 = vmatprep.subr.bf16.mxu0 0
  %7308 = vmatpush1.bf16.msra.mxu0 0
  %7309 = vmatprep.subr.bf16.mxu0 0
  %7310 = vmatpush1.bf16.msra.mxu0 0
  %7311 = vmatprep.subr.bf16.mxu0 0
  %7312 = vmatpush1.bf16.msra.mxu0 0
  %7313 = vmatprep.mubr.bf16.mxu0 0
  %7314 = vmatmul.mubr.bf16.gmra.mrb[0].mxu0 %v6851
  %v7315 = vpop.f32.mrb[0].mxu0
  %v7316 = vadd.f32 0.0, %v7315
  %v7317 = vpop.f32.mrb[0].mxu0
  %v7318 = vpop.f32.mrb[0].mxu0
  %v7319 = vadd.f32 0.0, %v7318
  %v7320 = vpop.f32.mrb[0].mxu0
  %7321 = vmatprep.mubr.bf16.mxu0 0
  %7322 = vmatmul.mubr.bf16.gmra.mrb[0].mxu0 %v6854
  %v7323 = vpop.f32.mrb[0].mxu0
  %v7324 = vadd.f32 0.0, %v7323
  %v7325 = vpop.f32.mrb[0].mxu0
  %v7326 = vpop.f32.mrb[0].mxu0
  %v7327 = vadd.f32 0.0, %v7326
  %v7328 = vpop.f32.mrb[0].mxu0
  %7329 = vdwg.mxu0
  %7330 = vst.msk [vmem:[#allocation3 + $0xa0] sm:$0xff] %vm1789, %v7316
  %7331 = vst.msk [vmem:[#allocation3 + $0xa8] sm:$0xff] %vm1789, %v7319
  %7332 = vst.msk [vmem:[#allocation3 + $0xb0] sm:$0xff] %vm1789, %v7324
  %7333 = vst.msk [vmem:[#allocation3 + $0xb8] sm:$0xff] %vm1789, %v7327
  %v7334 = vld [vmem:[%s2224] sm:$0xf]
  %v7335 = vld [vmem:[%s2224 + $0x4] sm:$0xf]
  %v7336 = vld [vmem:[%s2224 + $0x8] sm:$0xf]
  %v7337 = vld [vmem:[%s2224 + $0xc] sm:$0xf]
  %v7338 = vld [vmem:[%s2224 + $0x10] sm:$0xf]
  %v7339 = vld [vmem:[%s2224 + $0x14] sm:$0xf]
  %v7340 = vld [vmem:[%s2224 + $0x18] sm:$0xf]
  %v7341 = vld [vmem:[%s2224 + $0x1c] sm:$0xf]
  %v7350 = vunpack.c.l.b16 %v7334
  %v7351 = vunpack.c.l.b16 %v7335
  %v7352 = vunpack.c.l.b16 %v7336
  %v7353 = vunpack.c.l.b16 %v7337
  %v7354 = vunpack.c.l.b16 %v7338
  %v7355 = vunpack.c.l.b16 %v7339
  %v7356 = vunpack.c.l.b16 %v7340
  %v7357 = vunpack.c.l.b16 %v7341
  %v7358 = vpack.c.b16 %v7351, %v7350
  %v7359 = vpack.c.b16 %v7353, %v7352
  %v7360 = vpack.c.b16 %v7355, %v7354
  %v7361 = vpack.c.b16 %v7357, %v7356
  %7366 = vmatprep.subr.bf16.mxu0 0
  %7367 = vmatpush1.bf16.msra.mxu0 %v7358
  %7368 = vmatprep.subr.bf16.mxu0 0
  %7369 = vmatpush1.bf16.msra.mxu0 %v7359
  %7370 = vmatprep.subr.bf16.mxu0 0
  %7371 = vmatpush1.bf16.msra.mxu0 %v7360
  %7372 = vmatprep.subr.bf16.mxu0 0
  %7373 = vmatpush1.bf16.msra.mxu0 %v7361
  %7374 = vmatprep.subr.bf16.mxu0 0
  %7375 = vmatpush1.bf16.msra.mxu0 0
  %7376 = vmatprep.subr.bf16.mxu0 0
  %7377 = vmatpush1.bf16.msra.mxu0 0
  %7378 = vmatprep.subr.bf16.mxu0 0
  %7379 = vmatpush1.bf16.msra.mxu0 0
  %7380 = vmatprep.subr.bf16.mxu0 0
  %7381 = vmatpush1.bf16.msra.mxu0 0
  %7382 = vmatprep.subr.bf16.mxu0 0
  %7383 = vmatpush1.bf16.msra.mxu0 0
  %7384 = vmatprep.subr.bf16.mxu0 0
  %7385 = vmatpush1.bf16.msra.mxu0 0
  %7386 = vmatprep.subr.bf16.mxu0 0
  %7387 = vmatpush1.bf16.msra.mxu0 0
  %7388 = vmatprep.subr.bf16.mxu0 0
  %7389 = vmatpush1.bf16.msra.mxu0 0
  %7390 = vmatprep.subr.bf16.mxu0 0
  %7391 = vmatpush1.bf16.msra.mxu0 0
  %7392 = vmatprep.subr.bf16.mxu0 0
  %7393 = vmatpush1.bf16.msra.mxu0 0
  %7394 = vmatprep.subr.bf16.mxu0 0
  %7395 = vmatpush1.bf16.msra.mxu0 0
  %7396 = vmatprep.subr.bf16.mxu0 0
  %7397 = vmatpush1.bf16.msra.mxu0 0
  %7398 = vmatprep.mubr.bf16.mxu0 0
  %7399 = vmatmul.mubr.bf16.gmra.mrb[0].mxu0 %v6851
  %v7400 = vpop.f32.mrb[0].mxu0
  %v7401 = vadd.f32 0.0, %v7400
  %v7402 = vpop.f32.mrb[0].mxu0
  %v7403 = vpop.f32.mrb[0].mxu0
  %v7404 = vadd.f32 0.0, %v7403
  %v7405 = vpop.f32.mrb[0].mxu0
  %7406 = vmatprep.mubr.bf16.mxu0 0
  %7407 = vmatmul.mubr.bf16.gmra.mrb[0].mxu0 %v6854
  %v7408 = vpop.f32.mrb[0].mxu0
  %v7409 = vadd.f32 0.0, %v7408
  %v7410 = vpop.f32.mrb[0].mxu0
  %v7411 = vpop.f32.mrb[0].mxu0
  %v7412 = vadd.f32 0.0, %v7411
  %v7413 = vpop.f32.mrb[0].mxu0
  %7414 = vdwg.mxu0
  %7415 = vst.msk [vmem:[#allocation3 + $0xc0] sm:$0xff] %vm1789, %v7401
  %7416 = vst.msk [vmem:[#allocation3 + $0xc8] sm:$0xff] %vm1789, %v7404
  %7417 = vst.msk [vmem:[#allocation3 + $0xd0] sm:$0xff] %vm1789, %v7409
  %7418 = vst.msk [vmem:[#allocation3 + $0xd8] sm:$0xff] %vm1789, %v7412
  %v7419 = vld [vmem:[%s2310] sm:$0xf]
  %v7420 = vld [vmem:[%s2310 + $0x4] sm:$0xf]
  %v7421 = vld [vmem:[%s2310 + $0x8] sm:$0xf]
  %v7422 = vld [vmem:[%s2310 + $0xc] sm:$0xf]
  %v7423 = vld [vmem:[%s2310 + $0x10] sm:$0xf]
  %v7424 = vld [vmem:[%s2310 + $0x14] sm:$0xf]
  %v7425 = vld [vmem:[%s2310 + $0x18] sm:$0xf]
  %v7426 = vld [vmem:[%s2310 + $0x1c] sm:$0xf]
  %v7435 = vunpack.c.l.b16 %v7419
  %v7436 = vunpack.c.l.b16 %v7420
  %v7437 = vunpack.c.l.b16 %v7421
  %v7438 = vunpack.c.l.b16 %v7422
  %v7439 = vunpack.c.l.b16 %v7423
  %v7440 = vunpack.c.l.b16 %v7424
  %v7441 = vunpack.c.l.b16 %v7425
  %v7442 = vunpack.c.l.b16 %v7426
  %v7443 = vpack.c.b16 %v7436, %v7435
  %v7444 = vpack.c.b16 %v7438, %v7437
  %v7445 = vpack.c.b16 %v7440, %v7439
  %v7446 = vpack.c.b16 %v7442, %v7441
  %7451 = vmatprep.subr.bf16.mxu0 0
  %7452 = vmatpush1.bf16.msra.mxu0 %v7443
  %7453 = vmatprep.subr.bf16.mxu0 0
  %7454 = vmatpush1.bf16.msra.mxu0 %v7444
  %7455 = vmatprep.subr.bf16.mxu0 0
  %7456 = vmatpush1.bf16.msra.mxu0 %v7445
  %7457 = vmatprep.subr.bf16.mxu0 0
  %7458 = vmatpush1.bf16.msra.mxu0 %v7446
  %7459 = vmatprep.subr.bf16.mxu0 0
  %7460 = vmatpush1.bf16.msra.mxu0 0
  %7461 = vmatprep.subr.bf16.mxu0 0
  %7462 = vmatpush1.bf16.msra.mxu0 0
  %7463 = vmatprep.subr.bf16.mxu0 0
  %7464 = vmatpush1.bf16.msra.mxu0 0
  %7465 = vmatprep.subr.bf16.mxu0 0
  %7466 = vmatpush1.bf16.msra.mxu0 0
  %7467 = vmatprep.subr.bf16.mxu0 0
  %7468 = vmatpush1.bf16.msra.mxu0 0
  %7469 = vmatprep.subr.bf16.mxu0 0
  %7470 = vmatpush1.bf16.msra.mxu0 0
  %7471 = vmatprep.subr.bf16.mxu0 0
  %7472 = vmatpush1.bf16.msra.mxu0 0
  %7473 = vmatprep.subr.bf16.mxu0 0
  %7474 = vmatpush1.bf16.msra.mxu0 0
  %7475 = vmatprep.subr.bf16.mxu0 0
  %7476 = vmatpush1.bf16.msra.mxu0 0
  %7477 = vmatprep.subr.bf16.mxu0 0
  %7478 = vmatpush1.bf16.msra.mxu0 0
  %7479 = vmatprep.subr.bf16.mxu0 0
  %7480 = vmatpush1.bf16.msra.mxu0 0
  %7481 = vmatprep.subr.bf16.mxu0 0
  %7482 = vmatpush1.bf16.msra.mxu0 0
  %7483 = vmatprep.mubr.bf16.mxu0 0
  %7484 = vmatmul.mubr.bf16.gmra.mrb[0].mxu0 %v6851
  %v7485 = vpop.f32.mrb[0].mxu0
  %v7486 = vadd.f32 0.0, %v7485
  %v7487 = vpop.f32.mrb[0].mxu0
  %v7488 = vpop.f32.mrb[0].mxu0
  %v7489 = vadd.f32 0.0, %v7488
  %v7490 = vpop.f32.mrb[0].mxu0
  %7491 = vmatprep.mubr.bf16.mxu0 0
  %7492 = vmatmul.mubr.bf16.gmra.mrb[0].mxu0 %v6854
  %v7493 = vpop.f32.mrb[0].mxu0
  %v7494 = vadd.f32 0.0, %v7493
  %v7495 = vpop.f32.mrb[0].mxu0
  %v7496 = vpop.f32.mrb[0].mxu0
  %v7497 = vadd.f32 0.0, %v7496
  %v7498 = vpop.f32.mrb[0].mxu0
  %7499 = vdwg.mxu0
  %7500 = vst.msk [vmem:[#allocation3 + $0xe0] sm:$0xff] %vm1789, %v7486
  %7501 = vst.msk [vmem:[#allocation3 + $0xe8] sm:$0xff] %vm1789, %v7489
  %7502 = vst.msk [vmem:[#allocation3 + $0xf0] sm:$0xff] %vm1789, %v7494
  %7503 = vst.msk [vmem:[#allocation3 + $0xf8] sm:$0xff] %vm1789, %v7497
  %v7504 = vld [vmem:[%s2396] sm:$0xf]
  %v7505 = vld [vmem:[%s2396 + $0x4] sm:$0xf]
  %v7506 = vld [vmem:[%s2396 + $0x8] sm:$0xf]
  %v7507 = vld [vmem:[%s2396 + $0xc] sm:$0xf]
  %v7508 = vld [vmem:[%s2396 + $0x10] sm:$0xf]
  %v7509 = vld [vmem:[%s2396 + $0x14] sm:$0xf]
  %v7510 = vld [vmem:[%s2396 + $0x18] sm:$0xf]
  %v7511 = vld [vmem:[%s2396 + $0x1c] sm:$0xf]
  %v7520 = vunpack.c.l.b16 %v7504
  %v7521 = vunpack.c.l.b16 %v7505
  %v7522 = vunpack.c.l.b16 %v7506
  %v7523 = vunpack.c.l.b16 %v7507
  %v7524 = vunpack.c.l.b16 %v7508
  %v7525 = vunpack.c.l.b16 %v7509
  %v7526 = vunpack.c.l.b16 %v7510
  %v7527 = vunpack.c.l.b16 %v7511
  %v7528 = vpack.c.b16 %v7521, %v7520
  %v7529 = vpack.c.b16 %v7523, %v7522
  %v7530 = vpack.c.b16 %v7525, %v7524
  %v7531 = vpack.c.b16 %v7527, %v7526
  %7536 = vmatprep.subr.bf16.mxu0 0
  %7537 = vmatpush1.bf16.msra.mxu0 %v7528
  %7538 = vmatprep.subr.bf16.mxu0 0
  %7539 = vmatpush1.bf16.msra.mxu0 %v7529
  %7540 = vmatprep.subr.bf16.mxu0 0
  %7541 = vmatpush1.bf16.msra.mxu0 %v7530
  %7542 = vmatprep.subr.bf16.mxu0 0
  %7543 = vmatpush1.bf16.msra.mxu0 %v7531
  %7544 = vmatprep.subr.bf16.mxu0 0
  %7545 = vmatpush1.bf16.msra.mxu0 0
  %7546 = vmatprep.subr.bf16.mxu0 0
  %7547 = vmatpush1.bf16.msra.mxu0 0
  %7548 = vmatprep.subr.bf16.mxu0 0
  %7549 = vmatpush1.bf16.msra.mxu0 0
  %7550 = vmatprep.subr.bf16.mxu0 0
  %7551 = vmatpush1.bf16.msra.mxu0 0
  %7552 = vmatprep.subr.bf16.mxu0 0
  %7553 = vmatpush1.bf16.msra.mxu0 0
  %7554 = vmatprep.subr.bf16.mxu0 0
  %7555 = vmatpush1.bf16.msra.mxu0 0
  %7556 = vmatprep.subr.bf16.mxu0 0
  %7557 = vmatpush1.bf16.msra.mxu0 0
  %7558 = vmatprep.subr.bf16.mxu0 0
  %7559 = vmatpush1.bf16.msra.mxu0 0
  %7560 = vmatprep.subr.bf16.mxu0 0
  %7561 = vmatpush1.bf16.msra.mxu0 0
  %7562 = vmatprep.subr.bf16.mxu0 0
  %7563 = vmatpush1.bf16.msra.mxu0 0
  %7564 = vmatprep.subr.bf16.mxu0 0
  %7565 = vmatpush1.bf16.msra.mxu0 0
  %7566 = vmatprep.subr.bf16.mxu0 0
  %7567 = vmatpush1.bf16.msra.mxu0 0
  %7568 = vmatprep.mubr.bf16.mxu0 0
  %7569 = vmatmul.mubr.bf16.gmra.mrb[0].mxu0 %v6851
  %v7570 = vpop.f32.mrb[0].mxu0
  %v7571 = vadd.f32 0.0, %v7570
  %v7572 = vpop.f32.mrb[0].mxu0
  %v7573 = vpop.f32.mrb[0].mxu0
  %v7574 = vadd.f32 0.0, %v7573
  %v7575 = vpop.f32.mrb[0].mxu0
  %7576 = vmatprep.mubr.bf16.mxu0 0
  %7577 = vmatmul.mubr.bf16.gmra.mrb[0].mxu0 %v6854
  %v7578 = vpop.f32.mrb[0].mxu0
  %v7579 = vadd.f32 0.0, %v7578
  %v7580 = vpop.f32.mrb[0].mxu0
  %v7581 = vpop.f32.mrb[0].mxu0
  %v7582 = vadd.f32 0.0, %v7581
  %v7583 = vpop.f32.mrb[0].mxu0
  %7584 = vdwg.mxu0
  %7585 = vst.msk [vmem:[#allocation3 + $0x100] sm:$0xff] %vm1789, %v7571
  %7586 = vst.msk [vmem:[#allocation3 + $0x108] sm:$0xff] %vm1789, %v7574
  %7587 = vst.msk [vmem:[#allocation3 + $0x110] sm:$0xff] %vm1789, %v7579
  %7588 = vst.msk [vmem:[#allocation3 + $0x118] sm:$0xff] %vm1789, %v7582
  %v7589 = vld [vmem:[%s4] sm:$0xff]
  %v7590 = vld [vmem:[%s4 + $0x8] sm:$0xf]
  %v7591 = vld [vmem:[%s4 + $0xc] sm:$0xff]
  %v7592 = vld [vmem:[%s4 + $0x14] sm:$0xf]
  %v7593 = vld [vmem:[%s4 + $0x18] sm:$0xff]
  %v7594 = vld [vmem:[%s4 + $0x20] sm:$0xf]
  %v7595 = vld [vmem:[%s4 + $0x24] sm:$0xff]
  %v7596 = vld [vmem:[%s4 + $0x2c] sm:$0xf]
  %v7597 = vld [vmem:[%s4 + $0x30] sm:$0xff]
  %v7598 = vld [vmem:[%s4 + $0x38] sm:$0xf]
  %v7599 = vld [vmem:[%s4 + $0x3c] sm:$0xff]
  %v7600 = vld [vmem:[%s4 + $0x44] sm:$0xf]
  %v7601 = vld [vmem:[%s4 + $0x48] sm:$0xff]
  %v7602 = vld [vmem:[%s4 + $0x50] sm:$0xf]
  %v7603 = vld [vmem:[%s4 + $0x54] sm:$0xff]
  %v7604 = vld [vmem:[%s4 + $0x5c] sm:$0xf]
  %v7605 = vld [vmem:[#allocation3] sm:$0xff]
  %v7606 = vld [vmem:[#allocation3 + $0x8] sm:$0xff]
  %v7607 = vld [vmem:[#allocation3 + $0x10] sm:$0xff]
  %v7608 = vld [vmem:[#allocation3 + $0x18] sm:$0xff]
  %v7609 = vld [vmem:[#allocation3 + $0x20] sm:$0xff]
  %v7610 = vld [vmem:[#allocation3 + $0x28] sm:$0xff]
  %v7611 = vld [vmem:[#allocation3 + $0x30] sm:$0xff]
  %v7612 = vld [vmem:[#allocation3 + $0x38] sm:$0xff]
  %v7613 = vld [vmem:[#allocation3 + $0x40] sm:$0xff]
  %v7614 = vld [vmem:[#allocation3 + $0x48] sm:$0xff]
  %v7615 = vld [vmem:[#allocation3 + $0x50] sm:$0xff]
  %v7616 = vld [vmem:[#allocation3 + $0x58] sm:$0xff]
  %v7617 = vld [vmem:[#allocation3 + $0x60] sm:$0xff]
  %v7618 = vld [vmem:[#allocation3 + $0x68] sm:$0xff]
  %v7619 = vld [vmem:[#allocation3 + $0x70] sm:$0xff]
  %v7620 = vld [vmem:[#allocation3 + $0x78] sm:$0xff]
  %v7621 = vld [vmem:[#allocation3 + $0x80] sm:$0xff]
  %v7622 = vld [vmem:[#allocation3 + $0x88] sm:$0xff]
  %v7623 = vld [vmem:[#allocation3 + $0x90] sm:$0xff]
  %v7624 = vld [vmem:[#allocation3 + $0x98] sm:$0xff]
  %v7625 = vld [vmem:[#allocation3 + $0xa0] sm:$0xff]
  %v7626 = vld [vmem:[#allocation3 + $0xa8] sm:$0xff]
  %v7627 = vld [vmem:[#allocation3 + $0xb0] sm:$0xff]
  %v7628 = vld [vmem:[#allocation3 + $0xb8] sm:$0xff]
  %v7629 = vld [vmem:[#allocation3 + $0xc0] sm:$0xff]
  %v7630 = vld [vmem:[#allocation3 + $0xc8] sm:$0xff]
  %v7631 = vld [vmem:[#allocation3 + $0xd0] sm:$0xff]
  %v7632 = vld [vmem:[#allocation3 + $0xd8] sm:$0xff]
  %v7633 = vld [vmem:[#allocation3 + $0xe0] sm:$0xff]
  %v7634 = vld [vmem:[#allocation3 + $0xe8] sm:$0xff]
  %v7635 = vld [vmem:[#allocation3 + $0xf0] sm:$0xff]
  %v7636 = vld [vmem:[#allocation3 + $0xf8] sm:$0xff]
  %v7637 = vld [vmem:[#allocation3 + $0x100] sm:$0xff]
  %v7638 = vld [vmem:[#allocation3 + $0x108] sm:$0xff]
  %v7639 = vld [vmem:[#allocation3 + $0x110] sm:$0xff]
  %v7640 = vld [vmem:[#allocation3 + $0x118] sm:$0xff]
  %v7641 = vpack.c.bf16 %v7606, %v7605
  %v7642 = vpack.c.bf16 %v7608, %v7607
  %v7643 = vpack.c.bf16 %v7610, %v7609
  %v7644 = vpack.c.bf16 %v7612, %v7611
  %v7645 = vpack.c.bf16 %v7614, %v7613
  %v7646 = vpack.c.bf16 %v7616, %v7615
  %v7647 = vpack.c.bf16 %v7618, %v7617
  %v7648 = vpack.c.bf16 %v7620, %v7619
  %v7649 = vpack.c.bf16 %v7622, %v7621
  %v7650 = vpack.c.bf16 %v7624, %v7623
  %v7651 = vpack.c.bf16 %v7626, %v7625
  %v7652 = vpack.c.bf16 %v7628, %v7627
  %v7653 = vpack.c.bf16 %v7630, %v7629
  %v7654 = vpack.c.bf16 %v7632, %v7631
  %v7655 = vpack.c.bf16 %v7634, %v7633
  %v7656 = vpack.c.bf16 %v7636, %v7635
  %v7657 = vpack.c.bf16 %v7638, %v7637
  %v7658 = vpack.c.bf16 %v7640, %v7639
  %v7659 = vld [vmem:[%s5] sm:$0xff]
  %v7660 = vld [vmem:[%s5 + $0x8] sm:$0xff]
  %v7661 = vld [vmem:[%s5 + $0x10] sm:$0xff]
  %v7662 = vld [vmem:[%s5 + $0x18] sm:$0xff]
  %v7663 = vld [vmem:[%s5 + $0x20] sm:$0xff]
  %v7664 = vld [vmem:[%s5 + $0x28] sm:$0xff]
  %v7665 = vld [vmem:[%s5 + $0x30] sm:$0xff]
  %v7666 = vld [vmem:[%s5 + $0x38] sm:$0xff]
  %7668 = vset.pattern.permute.xlu0 0
  %7669 = vperm.xlu0 %7668, %v7659
  %v7670 = vpop.permute.xlu0 %7669
  %7673 = vset.pattern.permute.xlu0 0
  %7674 = vperm.xlu0 %7673, %v7660
  %v7675 = vpop.permute.xlu0 %7674
  %7678 = vset.pattern.permute.xlu0 0
  %7679 = vperm.xlu0 %7678, %v7661
  %v7680 = vpop.permute.xlu0 %7679
  %7683 = vset.pattern.permute.xlu0 0
  %7684 = vperm.xlu0 %7683, %v7662
  %v7685 = vpop.permute.xlu0 %7684
  %7688 = vset.pattern.permute.xlu0 0
  %7689 = vperm.xlu0 %7688, %v7663
  %v7690 = vpop.permute.xlu0 %7689
  %7693 = vset.pattern.permute.xlu0 0
  %7694 = vperm.xlu0 %7693, %v7664
  %v7695 = vpop.permute.xlu0 %7694
  %7698 = vset.pattern.permute.xlu0 0
  %7699 = vperm.xlu0 %7698, %v7665
  %v7700 = vpop.permute.xlu0 %7699
  %7703 = vset.pattern.permute.xlu0 0
  %7704 = vperm.xlu0 %7703, %v7666
  %v7705 = vpop.permute.xlu0 %7704
  %v7723 = vunpack.c.l.b16 %v7589
  %v7724 = vunpack.c.h.b16 %v7589
  %v7725 = vunpack.c.l.b16 %v7590
  %v7726 = vunpack.c.l.b16 %v7591
  %v7727 = vunpack.c.h.b16 %v7591
  %v7728 = vunpack.c.l.b16 %v7592
  %v7729 = vunpack.c.l.b16 %v7593
  %v7730 = vunpack.c.h.b16 %v7593
  %v7731 = vunpack.c.l.b16 %v7594
  %v7732 = vunpack.c.l.b16 %v7595
  %v7733 = vunpack.c.h.b16 %v7595
  %v7734 = vunpack.c.l.b16 %v7596
  %v7735 = vunpack.c.l.b16 %v7597
  %v7736 = vunpack.c.h.b16 %v7597
  %v7737 = vunpack.c.l.b16 %v7598
  %v7738 = vunpack.c.l.b16 %v7599
  %v7739 = vunpack.c.h.b16 %v7599
  %v7740 = vunpack.c.l.b16 %v7600
  %v7741 = vunpack.c.l.b16 %v7601
  %v7742 = vunpack.c.h.b16 %v7601
  %v7743 = vunpack.c.l.b16 %v7602
  %v7744 = vunpack.c.l.b16 %v7603
  %v7745 = vunpack.c.h.b16 %v7603
  %v7746 = vunpack.c.l.b16 %v7604
  %v7747 = vpack.c.b16 %v7726, %v7723
  %v7748 = vpack.c.b16 %v7727, %v7724
  %v7749 = vpack.c.b16 %v7728, %v7725
  %v7750 = vpack.c.b16 %v7732, %v7729
  %v7751 = vpack.c.b16 %v7733, %v7730
  %v7752 = vpack.c.b16 %v7734, %v7731
  %v7753 = vpack.c.b16 %v7738, %v7735
  %v7754 = vpack.c.b16 %v7739, %v7736
  %v7755 = vpack.c.b16 %v7740, %v7737
  %v7756 = vpack.c.b16 %v7744, %v7741
  %v7757 = vpack.c.b16 %v7745, %v7742
  %v7758 = vpack.c.b16 %v7746, %v7743
  %v7768 = vsel %vm2660, %v7749, 0
  %v7771 = vsel %vm2660, %v7752, 0
  %v7774 = vsel %vm2660, %v7755, 0
  %v7777 = vsel %vm2660, %v7758, 0
  %7779 = vmatprep.subr.bf16.mxu0 0
  %7780 = vmatpush1.bf16.msra.mxu0 %v7641
  %7781 = vmatprep.subr.bf16.mxu0 0
  %7782 = vmatpush1.bf16.msra.mxu0 %v7642
  %7783 = vmatprep.subr.bf16.mxu0 0
  %7784 = vmatpush1.bf16.msra.mxu0 %v7643
  %7785 = vmatprep.subr.bf16.mxu0 0
  %7786 = vmatpush1.bf16.msra.mxu0 %v7644
  %7787 = vmatprep.subr.bf16.mxu0 0
  %7788 = vmatpush1.bf16.msra.mxu0 %v7645
  %7789 = vmatprep.subr.bf16.mxu0 0
  %7790 = vmatpush1.bf16.msra.mxu0 %v7646
  %7791 = vmatprep.subr.bf16.mxu0 0
  %7792 = vmatpush1.bf16.msra.mxu0 %v7647
  %7793 = vmatprep.subr.bf16.mxu0 0
  %7794 = vmatpush1.bf16.msra.mxu0 %v7648
  %7795 = vmatprep.subr.bf16.mxu0 0
  %7796 = vmatpush1.bf16.msra.mxu0 %v7649
  %7797 = vmatprep.subr.bf16.mxu0 0
  %7798 = vmatpush1.bf16.msra.mxu0 %v7650
  %7799 = vmatprep.subr.bf16.mxu0 0
  %7800 = vmatpush1.bf16.msra.mxu0 %v7651
  %7801 = vmatprep.subr.bf16.mxu0 0
  %7802 = vmatpush1.bf16.msra.mxu0 %v7652
  %7803 = vmatprep.subr.bf16.mxu0 0
  %7804 = vmatpush1.bf16.msra.mxu0 %v7653
  %7805 = vmatprep.subr.bf16.mxu0 0
  %7806 = vmatpush1.bf16.msra.mxu0 %v7654
  %7807 = vmatprep.subr.bf16.mxu0 0
  %7808 = vmatpush1.bf16.msra.mxu0 %v7655
  %7809 = vmatprep.subr.bf16.mxu0 0
  %7810 = vmatpush1.bf16.msra.mxu0 %v7656
  %7811 = vmatprep.mubr.bf16.mxu0 %v7748
  %7812 = vmatmul.mubr.bf16.gmra.mrb[0].mxu0 %v7747
  %v7813 = vpop.f32.mrb[0].mxu0
  %v7814 = vadd.f32 %v7670, %v7813
  %v7815 = vpop.f32.mrb[0].mxu0
  %v7816 = vpop.f32.mrb[0].mxu0
  %v7817 = vadd.f32 %v7675, %v7816
  %v7818 = vpop.f32.mrb[0].mxu0
  %7819 = vmatprep.mubr.bf16.mxu0 %v7751
  %7820 = vmatmul.mubr.bf16.gmra.mrb[0].mxu0 %v7750
  %v7821 = vpop.f32.mrb[0].mxu0
  %v7822 = vadd.f32 %v7680, %v7821
  %v7823 = vpop.f32.mrb[0].mxu0
  %v7824 = vpop.f32.mrb[0].mxu0
  %v7825 = vadd.f32 %v7685, %v7824
  %v7826 = vpop.f32.mrb[0].mxu0
  %7827 = vmatprep.mubr.bf16.mxu0 %v7754
  %7828 = vmatmul.mubr.bf16.gmra.mrb[0].mxu0 %v7753
  %v7829 = vpop.f32.mrb[0].mxu0
  %v7830 = vadd.f32 %v7690, %v7829
  %v7831 = vpop.f32.mrb[0].mxu0
  %v7832 = vpop.f32.mrb[0].mxu0
  %v7833 = vadd.f32 %v7695, %v7832
  %v7834 = vpop.f32.mrb[0].mxu0
  %7835 = vmatprep.mubr.bf16.mxu0 %v7757
  %7836 = vmatmul.mubr.bf16.gmra.mrb[0].mxu0 %v7756
  %v7837 = vpop.f32.mrb[0].mxu0
  %v7838 = vadd.f32 %v7700, %v7837
  %v7839 = vpop.f32.mrb[0].mxu0
  %v7840 = vpop.f32.mrb[0].mxu0
  %v7841 = vadd.f32 %v7705, %v7840
  %v7842 = vpop.f32.mrb[0].mxu0
  %7843 = vdwg.mxu0
  %7844 = vmatprep.subr.bf16.mxu0 0
  %7845 = vmatpush1.bf16.msra.mxu0 %v7657
  %7846 = vmatprep.subr.bf16.mxu0 0
  %7847 = vmatpush1.bf16.msra.mxu0 %v7658
  %7848 = vmatprep.subr.bf16.mxu0 0
  %7849 = vmatpush1.bf16.msra.mxu0 0
  %7850 = vmatprep.subr.bf16.mxu0 0
  %7851 = vmatpush1.bf16.msra.mxu0 0
  %7852 = vmatprep.subr.bf16.mxu0 0
  %7853 = vmatpush1.bf16.msra.mxu0 0
  %7854 = vmatprep.subr.bf16.mxu0 0
  %7855 = vmatpush1.bf16.msra.mxu0 0
  %7856 = vmatprep.subr.bf16.mxu0 0
  %7857 = vmatpush1.bf16.msra.mxu0 0
  %7858 = vmatprep.subr.bf16.mxu0 0
  %7859 = vmatpush1.bf16.msra.mxu0 0
  %7860 = vmatprep.subr.bf16.mxu0 0
  %7861 = vmatpush1.bf16.msra.mxu0 0
  %7862 = vmatprep.subr.bf16.mxu0 0
  %7863 = vmatpush1.bf16.msra.mxu0 0
  %7864 = vmatprep.subr.bf16.mxu0 0
  %7865 = vmatpush1.bf16.msra.mxu0 0
  %7866 = vmatprep.subr.bf16.mxu0 0
  %7867 = vmatpush1.bf16.msra.mxu0 0
  %7868 = vmatprep.subr.bf16.mxu0 0
  %7869 = vmatpush1.bf16.msra.mxu0 0
  %7870 = vmatprep.subr.bf16.mxu0 0
  %7871 = vmatpush1.bf16.msra.mxu0 0
  %7872 = vmatprep.subr.bf16.mxu0 0
  %7873 = vmatpush1.bf16.msra.mxu0 0
  %7874 = vmatprep.subr.bf16.mxu0 0
  %7875 = vmatpush1.bf16.msra.mxu0 0
  %7876 = vmatprep.mubr.bf16.mxu0 0
  %7877 = vmatmul.mubr.bf16.gmra.mrb[0].mxu0 %v7768
  %v7878 = vpop.f32.mrb[0].mxu0
  %v7879 = vadd.f32 %v7814, %v7878
  %v7880 = vpop.f32.mrb[0].mxu0
  %v7881 = vpop.f32.mrb[0].mxu0
  %v7882 = vadd.f32 %v7817, %v7881
  %v7883 = vpop.f32.mrb[0].mxu0
  %7884 = vmatprep.mubr.bf16.mxu0 0
  %7885 = vmatmul.mubr.bf16.gmra.mrb[0].mxu0 %v7771
  %v7886 = vpop.f32.mrb[0].mxu0
  %v7887 = vadd.f32 %v7822, %v7886
  %v7888 = vpop.f32.mrb[0].mxu0
  %v7889 = vpop.f32.mrb[0].mxu0
  %v7890 = vadd.f32 %v7825, %v7889
  %v7891 = vpop.f32.mrb[0].mxu0
  %7892 = vmatprep.mubr.bf16.mxu0 0
  %7893 = vmatmul.mubr.bf16.gmra.mrb[0].mxu0 %v7774
  %v7894 = vpop.f32.mrb[0].mxu0
  %v7895 = vadd.f32 %v7830, %v7894
  %v7896 = vpop.f32.mrb[0].mxu0
  %v7897 = vpop.f32.mrb[0].mxu0
  %v7898 = vadd.f32 %v7833, %v7897
  %v7899 = vpop.f32.mrb[0].mxu0
  %7900 = vmatprep.mubr.bf16.mxu0 0
  %7901 = vmatmul.mubr.bf16.gmra.mrb[0].mxu0 %v7777
  %v7902 = vpop.f32.mrb[0].mxu0
  %v7903 = vadd.f32 %v7838, %v7902
  %v7904 = vpop.f32.mrb[0].mxu0
  %v7905 = vpop.f32.mrb[0].mxu0
  %v7906 = vadd.f32 %v7841, %v7905
  %v7907 = vpop.f32.mrb[0].mxu0
  %7908 = vdwg.mxu0
  %v7909 = vmax.f32 %v7879, 0.0
  %v7910 = vmax.f32 %v7882, 0.0
  %v7911 = vmax.f32 %v7887, 0.0
  %v7912 = vmax.f32 %v7890, 0.0
  %v7913 = vmax.f32 %v7895, 0.0
  %v7914 = vmax.f32 %v7898, 0.0
  %v7915 = vmax.f32 %v7903, 0.0
  %v7916 = vmax.f32 %v7906, 0.0
  %v7917 = vpack.c.bf16 %v7910, %v7909
  %v7918 = vpack.c.bf16 %v7912, %v7911
  %v7919 = vpack.c.bf16 %v7914, %v7913
  %v7920 = vpack.c.bf16 %v7916, %v7915
  %v7921 = vld [vmem:[%s9] sm:$0xf]
  %v7922 = vld [vmem:[%s9 + $0x4] sm:$0xf]
  %v7925 = vunpack.c.l.b16 %v7921
  %v7926 = vunpack.c.l.b16 %v7922
  %v7927 = vpack.c.b16 %v7926, %v7925
  %v7930 = vsel %vm1789, %v7917, 0
  %v7933 = vsel %vm1789, %v7918, 0
  %v7936 = vsel %vm1789, %v7919, 0
  %v7939 = vsel %vm1789, %v7920, 0
  %7941 = vmatprep.subr.bf16.mxu0 0
  %7942 = vmatpush1.bf16.msra.mxu0 %v7927
  %7943 = vmatprep.subr.bf16.mxu0 0
  %7944 = vmatpush1.bf16.msra.mxu0 0
  %7945 = vmatprep.subr.bf16.mxu0 0
  %7946 = vmatpush1.bf16.msra.mxu0 0
  %7947 = vmatprep.subr.bf16.mxu0 0
  %7948 = vmatpush1.bf16.msra.mxu0 0
  %7949 = vmatprep.subr.bf16.mxu0 0
  %7950 = vmatpush1.bf16.msra.mxu0 0
  %7951 = vmatprep.subr.bf16.mxu0 0
  %7952 = vmatpush1.bf16.msra.mxu0 0
  %7953 = vmatprep.subr.bf16.mxu0 0
  %7954 = vmatpush1.bf16.msra.mxu0 0
  %7955 = vmatprep.subr.bf16.mxu0 0
  %7956 = vmatpush1.bf16.msra.mxu0 0
  %7957 = vmatprep.subr.bf16.mxu0 0
  %7958 = vmatpush1.bf16.msra.mxu0 0
  %7959 = vmatprep.subr.bf16.mxu0 0
  %7960 = vmatpush1.bf16.msra.mxu0 0
  %7961 = vmatprep.subr.bf16.mxu0 0
  %7962 = vmatpush1.bf16.msra.mxu0 0
  %7963 = vmatprep.subr.bf16.mxu0 0
  %7964 = vmatpush1.bf16.msra.mxu0 0
  %7965 = vmatprep.subr.bf16.mxu0 0
  %7966 = vmatpush1.bf16.msra.mxu0 0
  %7967 = vmatprep.subr.bf16.mxu0 0
  %7968 = vmatpush1.bf16.msra.mxu0 0
  %7969 = vmatprep.subr.bf16.mxu0 0
  %7970 = vmatpush1.bf16.msra.mxu0 0
  %7971 = vmatprep.subr.bf16.mxu0 0
  %7972 = vmatpush1.bf16.msra.mxu0 0
  %7973 = vmatprep.mubr.bf16.mxu0 0
  %7974 = vmatmul.mubr.bf16.gmra.mrb[0].mxu0 %v7930
  %v7975 = vpop.f32.mrb[0].mxu0
  %v7976 = vadd.f32 0.0, %v7975
  %v7977 = vpop.f32.mrb[0].mxu0
  %v7978 = vpop.f32.mrb[0].mxu0
  %v7979 = vadd.f32 0.0, %v7978
  %v7980 = vpop.f32.mrb[0].mxu0
  %7981 = vmatprep.mubr.bf16.mxu0 0
  %7982 = vmatmul.mubr.bf16.gmra.mrb[0].mxu0 %v7933
  %v7983 = vpop.f32.mrb[0].mxu0
  %v7984 = vadd.f32 0.0, %v7983
  %v7985 = vpop.f32.mrb[0].mxu0
  %v7986 = vpop.f32.mrb[0].mxu0
  %v7987 = vadd.f32 0.0, %v7986
  %v7988 = vpop.f32.mrb[0].mxu0
  %7989 = vmatprep.mubr.bf16.mxu0 0
  %7990 = vmatmul.mubr.bf16.gmra.mrb[0].mxu0 %v7936
  %v7991 = vpop.f32.mrb[0].mxu0
  %v7992 = vadd.f32 0.0, %v7991
  %v7993 = vpop.f32.mrb[0].mxu0
  %v7994 = vpop.f32.mrb[0].mxu0
  %v7995 = vadd.f32 0.0, %v7994
  %v7996 = vpop.f32.mrb[0].mxu0
  %7997 = vmatprep.mubr.bf16.mxu0 0
  %7998 = vmatmul.mubr.bf16.gmra.mrb[0].mxu0 %v7939
  %v7999 = vpop.f32.mrb[0].mxu0
  %v8000 = vadd.f32 0.0, %v7999
  %v8001 = vpop.f32.mrb[0].mxu0
  %v8002 = vpop.f32.mrb[0].mxu0
  %v8003 = vadd.f32 0.0, %v8002
  %v8004 = vpop.f32.mrb[0].mxu0
  %8005 = vdwg.mxu0
  %8006 = vst.msk [vmem:[#allocation4] sm:$0xff] %vm1733, %v7976
  %8007 = vst.msk [vmem:[#allocation4 + $0x8] sm:$0xff] %vm1733, %v7979
  %8008 = vst.msk [vmem:[#allocation4 + $0x10] sm:$0xff] %vm1733, %v7984
  %8009 = vst.msk [vmem:[#allocation4 + $0x18] sm:$0xff] %vm1733, %v7987
  %8010 = vst.msk [vmem:[#allocation4 + $0x20] sm:$0xff] %vm1733, %v7992
  %8011 = vst.msk [vmem:[#allocation4 + $0x28] sm:$0xff] %vm1733, %v7995
  %8012 = vst.msk [vmem:[#allocation4 + $0x30] sm:$0xff] %vm1733, %v8000
  %8013 = vst.msk [vmem:[#allocation4 + $0x38] sm:$0xff] %vm1733, %v8003
  %v8014 = vld [vmem:[%s2908] sm:$0xf]
  %v8015 = vld [vmem:[%s2908 + $0x4] sm:$0xf]
  %v8018 = vunpack.c.l.b16 %v8014
  %v8019 = vunpack.c.l.b16 %v8015
  %v8020 = vpack.c.b16 %v8019, %v8018
  %8022 = vmatprep.subr.bf16.mxu0 0
  %8023 = vmatpush1.bf16.msra.mxu0 %v8020
  %8024 = vmatprep.subr.bf16.mxu0 0
  %8025 = vmatpush1.bf16.msra.mxu0 0
  %8026 = vmatprep.subr.bf16.mxu0 0
  %8027 = vmatpush1.bf16.msra.mxu0 0
  %8028 = vmatprep.subr.bf16.mxu0 0
  %8029 = vmatpush1.bf16.msra.mxu0 0
  %8030 = vmatprep.subr.bf16.mxu0 0
  %8031 = vmatpush1.bf16.msra.mxu0 0
  %8032 = vmatprep.subr.bf16.mxu0 0
  %8033 = vmatpush1.bf16.msra.mxu0 0
  %8034 = vmatprep.subr.bf16.mxu0 0
  %8035 = vmatpush1.bf16.msra.mxu0 0
  %8036 = vmatprep.subr.bf16.mxu0 0
  %8037 = vmatpush1.bf16.msra.mxu0 0
  %8038 = vmatprep.subr.bf16.mxu0 0
  %8039 = vmatpush1.bf16.msra.mxu0 0
  %8040 = vmatprep.subr.bf16.mxu0 0
  %8041 = vmatpush1.bf16.msra.mxu0 0
  %8042 = vmatprep.subr.bf16.mxu0 0
  %8043 = vmatpush1.bf16.msra.mxu0 0
  %8044 = vmatprep.subr.bf16.mxu0 0
  %8045 = vmatpush1.bf16.msra.mxu0 0
  %8046 = vmatprep.subr.bf16.mxu0 0
  %8047 = vmatpush1.bf16.msra.mxu0 0
  %8048 = vmatprep.subr.bf16.mxu0 0
  %8049 = vmatpush1.bf16.msra.mxu0 0
  %8050 = vmatprep.subr.bf16.mxu0 0
  %8051 = vmatpush1.bf16.msra.mxu0 0
  %8052 = vmatprep.subr.bf16.mxu0 0
  %8053 = vmatpush1.bf16.msra.mxu0 0
  %8054 = vmatprep.mubr.bf16.mxu0 0
  %8055 = vmatmul.mubr.bf16.gmra.mrb[0].mxu0 %v7930
  %v8056 = vpop.f32.mrb[0].mxu0
  %v8057 = vadd.f32 0.0, %v8056
  %v8058 = vpop.f32.mrb[0].mxu0
  %v8059 = vpop.f32.mrb[0].mxu0
  %v8060 = vadd.f32 0.0, %v8059
  %v8061 = vpop.f32.mrb[0].mxu0
  %8062 = vmatprep.mubr.bf16.mxu0 0
  %8063 = vmatmul.mubr.bf16.gmra.mrb[0].mxu0 %v7933
  %v8064 = vpop.f32.mrb[0].mxu0
  %v8065 = vadd.f32 0.0, %v8064
  %v8066 = vpop.f32.mrb[0].mxu0
  %v8067 = vpop.f32.mrb[0].mxu0
  %v8068 = vadd.f32 0.0, %v8067
  %v8069 = vpop.f32.mrb[0].mxu0
  %8070 = vmatprep.mubr.bf16.mxu0 0
  %8071 = vmatmul.mubr.bf16.gmra.mrb[0].mxu0 %v7936
  %v8072 = vpop.f32.mrb[0].mxu0
  %v8073 = vadd.f32 0.0, %v8072
  %v8074 = vpop.f32.mrb[0].mxu0
  %v8075 = vpop.f32.mrb[0].mxu0
  %v8076 = vadd.f32 0.0, %v8075
  %v8077 = vpop.f32.mrb[0].mxu0
  %8078 = vmatprep.mubr.bf16.mxu0 0
  %8079 = vmatmul.mubr.bf16.gmra.mrb[0].mxu0 %v7939
  %v8080 = vpop.f32.mrb[0].mxu0
  %v8081 = vadd.f32 0.0, %v8080
  %v8082 = vpop.f32.mrb[0].mxu0
  %v8083 = vpop.f32.mrb[0].mxu0
  %v8084 = vadd.f32 0.0, %v8083
  %v8085 = vpop.f32.mrb[0].mxu0
  %8086 = vdwg.mxu0
  %8087 = vst.msk [vmem:[#allocation4 + $0x40] sm:$0xff] %vm1733, %v8057
  %8088 = vst.msk [vmem:[#allocation4 + $0x48] sm:$0xff] %vm1733, %v8060
  %8089 = vst.msk [vmem:[#allocation4 + $0x50] sm:$0xff] %vm1733, %v8065
  %8090 = vst.msk [vmem:[#allocation4 + $0x58] sm:$0xff] %vm1733, %v8068
  %8091 = vst.msk [vmem:[#allocation4 + $0x60] sm:$0xff] %vm1733, %v8073
  %8092 = vst.msk [vmem:[#allocation4 + $0x68] sm:$0xff] %vm1733, %v8076
  %8093 = vst.msk [vmem:[#allocation4 + $0x70] sm:$0xff] %vm1733, %v8081
  %8094 = vst.msk [vmem:[#allocation4 + $0x78] sm:$0xff] %vm1733, %v8084
  %v8095 = vld [vmem:[%s2990] sm:$0xf]
  %v8096 = vld [vmem:[%s2990 + $0x4] sm:$0xf]
  %v8099 = vunpack.c.l.b16 %v8095
  %v8100 = vunpack.c.l.b16 %v8096
  %v8101 = vpack.c.b16 %v8100, %v8099
  %8103 = vmatprep.subr.bf16.mxu0 0
  %8104 = vmatpush1.bf16.msra.mxu0 %v8101
  %8105 = vmatprep.subr.bf16.mxu0 0
  %8106 = vmatpush1.bf16.msra.mxu0 0
  %8107 = vmatprep.subr.bf16.mxu0 0
  %8108 = vmatpush1.bf16.msra.mxu0 0
  %8109 = vmatprep.subr.bf16.mxu0 0
  %8110 = vmatpush1.bf16.msra.mxu0 0
  %8111 = vmatprep.subr.bf16.mxu0 0
  %8112 = vmatpush1.bf16.msra.mxu0 0
  %8113 = vmatprep.subr.bf16.mxu0 0
  %8114 = vmatpush1.bf16.msra.mxu0 0
  %8115 = vmatprep.subr.bf16.mxu0 0
  %8116 = vmatpush1.bf16.msra.mxu0 0
  %8117 = vmatprep.subr.bf16.mxu0 0
  %8118 = vmatpush1.bf16.msra.mxu0 0
  %8119 = vmatprep.subr.bf16.mxu0 0
  %8120 = vmatpush1.bf16.msra.mxu0 0
  %8121 = vmatprep.subr.bf16.mxu0 0
  %8122 = vmatpush1.bf16.msra.mxu0 0
  %8123 = vmatprep.subr.bf16.mxu0 0
  %8124 = vmatpush1.bf16.msra.mxu0 0
  %8125 = vmatprep.subr.bf16.mxu0 0
  %8126 = vmatpush1.bf16.msra.mxu0 0
  %8127 = vmatprep.subr.bf16.mxu0 0
  %8128 = vmatpush1.bf16.msra.mxu0 0
  %8129 = vmatprep.subr.bf16.mxu0 0
  %8130 = vmatpush1.bf16.msra.mxu0 0
  %8131 = vmatprep.subr.bf16.mxu0 0
  %8132 = vmatpush1.bf16.msra.mxu0 0
  %8133 = vmatprep.subr.bf16.mxu0 0
  %8134 = vmatpush1.bf16.msra.mxu0 0
  %8135 = vmatprep.mubr.bf16.mxu0 0
  %8136 = vmatmul.mubr.bf16.gmra.mrb[0].mxu0 %v7930
  %v8137 = vpop.f32.mrb[0].mxu0
  %v8138 = vadd.f32 0.0, %v8137
  %v8139 = vpop.f32.mrb[0].mxu0
  %v8140 = vpop.f32.mrb[0].mxu0
  %v8141 = vadd.f32 0.0, %v8140
  %v8142 = vpop.f32.mrb[0].mxu0
  %8143 = vmatprep.mubr.bf16.mxu0 0
  %8144 = vmatmul.mubr.bf16.gmra.mrb[0].mxu0 %v7933
  %v8145 = vpop.f32.mrb[0].mxu0
  %v8146 = vadd.f32 0.0, %v8145
  %v8147 = vpop.f32.mrb[0].mxu0
  %v8148 = vpop.f32.mrb[0].mxu0
  %v8149 = vadd.f32 0.0, %v8148
  %v8150 = vpop.f32.mrb[0].mxu0
  %8151 = vmatprep.mubr.bf16.mxu0 0
  %8152 = vmatmul.mubr.bf16.gmra.mrb[0].mxu0 %v7936
  %v8153 = vpop.f32.mrb[0].mxu0
  %v8154 = vadd.f32 0.0, %v8153
  %v8155 = vpop.f32.mrb[0].mxu0
  %v8156 = vpop.f32.mrb[0].mxu0
  %v8157 = vadd.f32 0.0, %v8156
  %v8158 = vpop.f32.mrb[0].mxu0
  %8159 = vmatprep.mubr.bf16.mxu0 0
  %8160 = vmatmul.mubr.bf16.gmra.mrb[0].mxu0 %v7939
  %v8161 = vpop.f32.mrb[0].mxu0
  %v8162 = vadd.f32 0.0, %v8161
  %v8163 = vpop.f32.mrb[0].mxu0
  %v8164 = vpop.f32.mrb[0].mxu0
  %v8165 = vadd.f32 0.0, %v8164
  %v8166 = vpop.f32.mrb[0].mxu0
  %8167 = vdwg.mxu0
  %8168 = vst.msk [vmem:[#allocation4 + $0x80] sm:$0xff] %vm1733, %v8138
  %8169 = vst.msk [vmem:[#allocation4 + $0x88] sm:$0xff] %vm1733, %v8141
  %8170 = vst.msk [vmem:[#allocation4 + $0x90] sm:$0xff] %vm1733, %v8146
  %8171 = vst.msk [vmem:[#allocation4 + $0x98] sm:$0xff] %vm1733, %v8149
  %8172 = vst.msk [vmem:[#allocation4 + $0xa0] sm:$0xff] %vm1733, %v8154
  %8173 = vst.msk [vmem:[#allocation4 + $0xa8] sm:$0xff] %vm1733, %v8157
  %8174 = vst.msk [vmem:[#allocation4 + $0xb0] sm:$0xff] %vm1733, %v8162
  %8175 = vst.msk [vmem:[#allocation4 + $0xb8] sm:$0xff] %vm1733, %v8165
  %v8176 = vld [vmem:[%s3072] sm:$0xf]
  %v8177 = vld [vmem:[%s3072 + $0x4] sm:$0xf]
  %v8180 = vunpack.c.l.b16 %v8176
  %v8181 = vunpack.c.l.b16 %v8177
  %v8182 = vpack.c.b16 %v8181, %v8180
  %8184 = vmatprep.subr.bf16.mxu0 0
  %8185 = vmatpush1.bf16.msra.mxu0 %v8182
  %8186 = vmatprep.subr.bf16.mxu0 0
  %8187 = vmatpush1.bf16.msra.mxu0 0
  %8188 = vmatprep.subr.bf16.mxu0 0
  %8189 = vmatpush1.bf16.msra.mxu0 0
  %8190 = vmatprep.subr.bf16.mxu0 0
  %8191 = vmatpush1.bf16.msra.mxu0 0
  %8192 = vmatprep.subr.bf16.mxu0 0
  %8193 = vmatpush1.bf16.msra.mxu0 0
  %8194 = vmatprep.subr.bf16.mxu0 0
  %8195 = vmatpush1.bf16.msra.mxu0 0
  %8196 = vmatprep.subr.bf16.mxu0 0
  %8197 = vmatpush1.bf16.msra.mxu0 0
  %8198 = vmatprep.subr.bf16.mxu0 0
  %8199 = vmatpush1.bf16.msra.mxu0 0
  %8200 = vmatprep.subr.bf16.mxu0 0
  %8201 = vmatpush1.bf16.msra.mxu0 0
  %8202 = vmatprep.subr.bf16.mxu0 0
  %8203 = vmatpush1.bf16.msra.mxu0 0
  %8204 = vmatprep.subr.bf16.mxu0 0
  %8205 = vmatpush1.bf16.msra.mxu0 0
  %8206 = vmatprep.subr.bf16.mxu0 0
  %8207 = vmatpush1.bf16.msra.mxu0 0
  %8208 = vmatprep.subr.bf16.mxu0 0
  %8209 = vmatpush1.bf16.msra.mxu0 0
  %8210 = vmatprep.subr.bf16.mxu0 0
  %8211 = vmatpush1.bf16.msra.mxu0 0
  %8212 = vmatprep.subr.bf16.mxu0 0
  %8213 = vmatpush1.bf16.msra.mxu0 0
  %8214 = vmatprep.subr.bf16.mxu0 0
  %8215 = vmatpush1.bf16.msra.mxu0 0
  %8216 = vmatprep.mubr.bf16.mxu0 0
  %8217 = vmatmul.mubr.bf16.gmra.mrb[0].mxu0 %v7930
  %v8218 = vpop.f32.mrb[0].mxu0
  %v8219 = vadd.f32 0.0, %v8218
  %v8220 = vpop.f32.mrb[0].mxu0
  %v8221 = vpop.f32.mrb[0].mxu0
  %v8222 = vadd.f32 0.0, %v8221
  %v8223 = vpop.f32.mrb[0].mxu0
  %8224 = vmatprep.mubr.bf16.mxu0 0
  %8225 = vmatmul.mubr.bf16.gmra.mrb[0].mxu0 %v7933
  %v8226 = vpop.f32.mrb[0].mxu0
  %v8227 = vadd.f32 0.0, %v8226
  %v8228 = vpop.f32.mrb[0].mxu0
  %v8229 = vpop.f32.mrb[0].mxu0
  %v8230 = vadd.f32 0.0, %v8229
  %v8231 = vpop.f32.mrb[0].mxu0
  %8232 = vmatprep.mubr.bf16.mxu0 0
  %8233 = vmatmul.mubr.bf16.gmra.mrb[0].mxu0 %v7936
  %v8234 = vpop.f32.mrb[0].mxu0
  %v8235 = vadd.f32 0.0, %v8234
  %v8236 = vpop.f32.mrb[0].mxu0
  %v8237 = vpop.f32.mrb[0].mxu0
  %v8238 = vadd.f32 0.0, %v8237
  %v8239 = vpop.f32.mrb[0].mxu0
  %8240 = vmatprep.mubr.bf16.mxu0 0
  %8241 = vmatmul.mubr.bf16.gmra.mrb[0].mxu0 %v7939
  %v8242 = vpop.f32.mrb[0].mxu0
  %v8243 = vadd.f32 0.0, %v8242
  %v8244 = vpop.f32.mrb[0].mxu0
  %v8245 = vpop.f32.mrb[0].mxu0
  %v8246 = vadd.f32 0.0, %v8245
  %v8247 = vpop.f32.mrb[0].mxu0
  %8248 = vdwg.mxu0
  %8249 = vst.msk [vmem:[#allocation4 + $0xc0] sm:$0xff] %vm1733, %v8219
  %8250 = vst.msk [vmem:[#allocation4 + $0xc8] sm:$0xff] %vm1733, %v8222
  %8251 = vst.msk [vmem:[#allocation4 + $0xd0] sm:$0xff] %vm1733, %v8227
  %8252 = vst.msk [vmem:[#allocation4 + $0xd8] sm:$0xff] %vm1733, %v8230
  %8253 = vst.msk [vmem:[#allocation4 + $0xe0] sm:$0xff] %vm1733, %v8235
  %8254 = vst.msk [vmem:[#allocation4 + $0xe8] sm:$0xff] %vm1733, %v8238
  %8255 = vst.msk [vmem:[#allocation4 + $0xf0] sm:$0xff] %vm1733, %v8243
  %8256 = vst.msk [vmem:[#allocation4 + $0xf8] sm:$0xff] %vm1733, %v8246
  %v8257 = vld [vmem:[%s3154] sm:$0xf]
  %v8258 = vld [vmem:[%s3154 + $0x4] sm:$0xf]
  %v8261 = vunpack.c.l.b16 %v8257
  %v8262 = vunpack.c.l.b16 %v8258
  %v8263 = vpack.c.b16 %v8262, %v8261
  %8265 = vmatprep.subr.bf16.mxu0 0
  %8266 = vmatpush1.bf16.msra.mxu0 %v8263
  %8267 = vmatprep.subr.bf16.mxu0 0
  %8268 = vmatpush1.bf16.msra.mxu0 0
  %8269 = vmatprep.subr.bf16.mxu0 0
  %8270 = vmatpush1.bf16.msra.mxu0 0
  %8271 = vmatprep.subr.bf16.mxu0 0
  %8272 = vmatpush1.bf16.msra.mxu0 0
  %8273 = vmatprep.subr.bf16.mxu0 0
  %8274 = vmatpush1.bf16.msra.mxu0 0
  %8275 = vmatprep.subr.bf16.mxu0 0
  %8276 = vmatpush1.bf16.msra.mxu0 0
  %8277 = vmatprep.subr.bf16.mxu0 0
  %8278 = vmatpush1.bf16.msra.mxu0 0
  %8279 = vmatprep.subr.bf16.mxu0 0
  %8280 = vmatpush1.bf16.msra.mxu0 0
  %8281 = vmatprep.subr.bf16.mxu0 0
  %8282 = vmatpush1.bf16.msra.mxu0 0
  %8283 = vmatprep.subr.bf16.mxu0 0
  %8284 = vmatpush1.bf16.msra.mxu0 0
  %8285 = vmatprep.subr.bf16.mxu0 0
  %8286 = vmatpush1.bf16.msra.mxu0 0
  %8287 = vmatprep.subr.bf16.mxu0 0
  %8288 = vmatpush1.bf16.msra.mxu0 0
  %8289 = vmatprep.subr.bf16.mxu0 0
  %8290 = vmatpush1.bf16.msra.mxu0 0
  %8291 = vmatprep.subr.bf16.mxu0 0
  %8292 = vmatpush1.bf16.msra.mxu0 0
  %8293 = vmatprep.subr.bf16.mxu0 0
  %8294 = vmatpush1.bf16.msra.mxu0 0
  %8295 = vmatprep.subr.bf16.mxu0 0
  %8296 = vmatpush1.bf16.msra.mxu0 0
  %8297 = vmatprep.mubr.bf16.mxu0 0
  %8298 = vmatmul.mubr.bf16.gmra.mrb[0].mxu0 %v7930
  %v8299 = vpop.f32.mrb[0].mxu0
  %v8300 = vadd.f32 0.0, %v8299
  %v8301 = vpop.f32.mrb[0].mxu0
  %v8302 = vpop.f32.mrb[0].mxu0
  %v8303 = vadd.f32 0.0, %v8302
  %v8304 = vpop.f32.mrb[0].mxu0
  %8305 = vmatprep.mubr.bf16.mxu0 0
  %8306 = vmatmul.mubr.bf16.gmra.mrb[0].mxu0 %v7933
  %v8307 = vpop.f32.mrb[0].mxu0
  %v8308 = vadd.f32 0.0, %v8307
  %v8309 = vpop.f32.mrb[0].mxu0
  %v8310 = vpop.f32.mrb[0].mxu0
  %v8311 = vadd.f32 0.0, %v8310
  %v8312 = vpop.f32.mrb[0].mxu0
  %8313 = vmatprep.mubr.bf16.mxu0 0
  %8314 = vmatmul.mubr.bf16.gmra.mrb[0].mxu0 %v7936
  %v8315 = vpop.f32.mrb[0].mxu0
  %v8316 = vadd.f32 0.0, %v8315
  %v8317 = vpop.f32.mrb[0].mxu0
  %v8318 = vpop.f32.mrb[0].mxu0
  %v8319 = vadd.f32 0.0, %v8318
  %v8320 = vpop.f32.mrb[0].mxu0
  %8321 = vmatprep.mubr.bf16.mxu0 0
  %8322 = vmatmul.mubr.bf16.gmra.mrb[0].mxu0 %v7939
  %v8323 = vpop.f32.mrb[0].mxu0
  %v8324 = vadd.f32 0.0, %v8323
  %v8325 = vpop.f32.mrb[0].mxu0
  %v8326 = vpop.f32.mrb[0].mxu0
  %v8327 = vadd.f32 0.0, %v8326
  %v8328 = vpop.f32.mrb[0].mxu0
  %8329 = vdwg.mxu0
  %8330 = vst.msk [vmem:[#allocation4 + $0x100] sm:$0xff] %vm1733, %v8300
  %8331 = vst.msk [vmem:[#allocation4 + $0x108] sm:$0xff] %vm1733, %v8303
  %8332 = vst.msk [vmem:[#allocation4 + $0x110] sm:$0xff] %vm1733, %v8308
  %8333 = vst.msk [vmem:[#allocation4 + $0x118] sm:$0xff] %vm1733, %v8311
  %8334 = vst.msk [vmem:[#allocation4 + $0x120] sm:$0xff] %vm1733, %v8316
  %8335 = vst.msk [vmem:[#allocation4 + $0x128] sm:$0xff] %vm1733, %v8319
  %8336 = vst.msk [vmem:[#allocation4 + $0x130] sm:$0xff] %vm1733, %v8324
  %8337 = vst.msk [vmem:[#allocation4 + $0x138] sm:$0xff] %vm1733, %v8327
  %v8338 = vld [vmem:[%s3236] sm:$0xf]
  %v8339 = vld [vmem:[%s3236 + $0x4] sm:$0xf]
  %v8342 = vunpack.c.l.b16 %v8338
  %v8343 = vunpack.c.l.b16 %v8339
  %v8344 = vpack.c.b16 %v8343, %v8342
  %8346 = vmatprep.subr.bf16.mxu0 0
  %8347 = vmatpush1.bf16.msra.mxu0 %v8344
  %8348 = vmatprep.subr.bf16.mxu0 0
  %8349 = vmatpush1.bf16.msra.mxu0 0
  %8350 = vmatprep.subr.bf16.mxu0 0
  %8351 = vmatpush1.bf16.msra.mxu0 0
  %8352 = vmatprep.subr.bf16.mxu0 0
  %8353 = vmatpush1.bf16.msra.mxu0 0
  %8354 = vmatprep.subr.bf16.mxu0 0
  %8355 = vmatpush1.bf16.msra.mxu0 0
  %8356 = vmatprep.subr.bf16.mxu0 0
  %8357 = vmatpush1.bf16.msra.mxu0 0
  %8358 = vmatprep.subr.bf16.mxu0 0
  %8359 = vmatpush1.bf16.msra.mxu0 0
  %8360 = vmatprep.subr.bf16.mxu0 0
  %8361 = vmatpush1.bf16.msra.mxu0 0
  %8362 = vmatprep.subr.bf16.mxu0 0
  %8363 = vmatpush1.bf16.msra.mxu0 0
  %8364 = vmatprep.subr.bf16.mxu0 0
  %8365 = vmatpush1.bf16.msra.mxu0 0
  %8366 = vmatprep.subr.bf16.mxu0 0
  %8367 = vmatpush1.bf16.msra.mxu0 0
  %8368 = vmatprep.subr.bf16.mxu0 0
  %8369 = vmatpush1.bf16.msra.mxu0 0
  %8370 = vmatprep.subr.bf16.mxu0 0
  %8371 = vmatpush1.bf16.msra.mxu0 0
  %8372 = vmatprep.subr.bf16.mxu0 0
  %8373 = vmatpush1.bf16.msra.mxu0 0
  %8374 = vmatprep.subr.bf16.mxu0 0
  %8375 = vmatpush1.bf16.msra.mxu0 0
  %8376 = vmatprep.subr.bf16.mxu0 0
  %8377 = vmatpush1.bf16.msra.mxu0 0
  %8378 = vmatprep.mubr.bf16.mxu0 0
  %8379 = vmatmul.mubr.bf16.gmra.mrb[0].mxu0 %v7930
  %v8380 = vpop.f32.mrb[0].mxu0
  %v8381 = vadd.f32 0.0, %v8380
  %v8382 = vpop.f32.mrb[0].mxu0
  %v8383 = vpop.f32.mrb[0].mxu0
  %v8384 = vadd.f32 0.0, %v8383
  %v8385 = vpop.f32.mrb[0].mxu0
  %8386 = vmatprep.mubr.bf16.mxu0 0
  %8387 = vmatmul.mubr.bf16.gmra.mrb[0].mxu0 %v7933
  %v8388 = vpop.f32.mrb[0].mxu0
  %v8389 = vadd.f32 0.0, %v8388
  %v8390 = vpop.f32.mrb[0].mxu0
  %v8391 = vpop.f32.mrb[0].mxu0
  %v8392 = vadd.f32 0.0, %v8391
  %v8393 = vpop.f32.mrb[0].mxu0
  %8394 = vmatprep.mubr.bf16.mxu0 0
  %8395 = vmatmul.mubr.bf16.gmra.mrb[0].mxu0 %v7936
  %v8396 = vpop.f32.mrb[0].mxu0
  %v8397 = vadd.f32 0.0, %v8396
  %v8398 = vpop.f32.mrb[0].mxu0
  %v8399 = vpop.f32.mrb[0].mxu0
  %v8400 = vadd.f32 0.0, %v8399
  %v8401 = vpop.f32.mrb[0].mxu0
  %8402 = vmatprep.mubr.bf16.mxu0 0
  %8403 = vmatmul.mubr.bf16.gmra.mrb[0].mxu0 %v7939
  %v8404 = vpop.f32.mrb[0].mxu0
  %v8405 = vadd.f32 0.0, %v8404
  %v8406 = vpop.f32.mrb[0].mxu0
  %v8407 = vpop.f32.mrb[0].mxu0
  %v8408 = vadd.f32 0.0, %v8407
  %v8409 = vpop.f32.mrb[0].mxu0
  %8410 = vdwg.mxu0
  %8411 = vst.msk [vmem:[#allocation4 + $0x140] sm:$0xff] %vm1733, %v8381
  %8412 = vst.msk [vmem:[#allocation4 + $0x148] sm:$0xff] %vm1733, %v8384
  %8413 = vst.msk [vmem:[#allocation4 + $0x150] sm:$0xff] %vm1733, %v8389
  %8414 = vst.msk [vmem:[#allocation4 + $0x158] sm:$0xff] %vm1733, %v8392
  %8415 = vst.msk [vmem:[#allocation4 + $0x160] sm:$0xff] %vm1733, %v8397
  %8416 = vst.msk [vmem:[#allocation4 + $0x168] sm:$0xff] %vm1733, %v8400
  %8417 = vst.msk [vmem:[#allocation4 + $0x170] sm:$0xff] %vm1733, %v8405
  %8418 = vst.msk [vmem:[#allocation4 + $0x178] sm:$0xff] %vm1733, %v8408
  %v8419 = vld [vmem:[%s3318] sm:$0xf]
  %v8420 = vld [vmem:[%s3318 + $0x4] sm:$0xf]
  %v8423 = vunpack.c.l.b16 %v8419
  %v8424 = vunpack.c.l.b16 %v8420
  %v8425 = vpack.c.b16 %v8424, %v8423
  %8427 = vmatprep.subr.bf16.mxu0 0
  %8428 = vmatpush1.bf16.msra.mxu0 %v8425
  %8429 = vmatprep.subr.bf16.mxu0 0
  %8430 = vmatpush1.bf16.msra.mxu0 0
  %8431 = vmatprep.subr.bf16.mxu0 0
  %8432 = vmatpush1.bf16.msra.mxu0 0
  %8433 = vmatprep.subr.bf16.mxu0 0
  %8434 = vmatpush1.bf16.msra.mxu0 0
  %8435 = vmatprep.subr.bf16.mxu0 0
  %8436 = vmatpush1.bf16.msra.mxu0 0
  %8437 = vmatprep.subr.bf16.mxu0 0
  %8438 = vmatpush1.bf16.msra.mxu0 0
  %8439 = vmatprep.subr.bf16.mxu0 0
  %8440 = vmatpush1.bf16.msra.mxu0 0
  %8441 = vmatprep.subr.bf16.mxu0 0
  %8442 = vmatpush1.bf16.msra.mxu0 0
  %8443 = vmatprep.subr.bf16.mxu0 0
  %8444 = vmatpush1.bf16.msra.mxu0 0
  %8445 = vmatprep.subr.bf16.mxu0 0
  %8446 = vmatpush1.bf16.msra.mxu0 0
  %8447 = vmatprep.subr.bf16.mxu0 0
  %8448 = vmatpush1.bf16.msra.mxu0 0
  %8449 = vmatprep.subr.bf16.mxu0 0
  %8450 = vmatpush1.bf16.msra.mxu0 0
  %8451 = vmatprep.subr.bf16.mxu0 0
  %8452 = vmatpush1.bf16.msra.mxu0 0
  %8453 = vmatprep.subr.bf16.mxu0 0
  %8454 = vmatpush1.bf16.msra.mxu0 0
  %8455 = vmatprep.subr.bf16.mxu0 0
  %8456 = vmatpush1.bf16.msra.mxu0 0
  %8457 = vmatprep.subr.bf16.mxu0 0
  %8458 = vmatpush1.bf16.msra.mxu0 0
  %8459 = vmatprep.mubr.bf16.mxu0 0
  %8460 = vmatmul.mubr.bf16.gmra.mrb[0].mxu0 %v7930
  %v8461 = vpop.f32.mrb[0].mxu0
  %v8462 = vadd.f32 0.0, %v8461
  %v8463 = vpop.f32.mrb[0].mxu0
  %v8464 = vpop.f32.mrb[0].mxu0
  %v8465 = vadd.f32 0.0, %v8464
  %v8466 = vpop.f32.mrb[0].mxu0
  %8467 = vmatprep.mubr.bf16.mxu0 0
  %8468 = vmatmul.mubr.bf16.gmra.mrb[0].mxu0 %v7933
  %v8469 = vpop.f32.mrb[0].mxu0
  %v8470 = vadd.f32 0.0, %v8469
  %v8471 = vpop.f32.mrb[0].mxu0
  %v8472 = vpop.f32.mrb[0].mxu0
  %v8473 = vadd.f32 0.0, %v8472
  %v8474 = vpop.f32.mrb[0].mxu0
  %8475 = vmatprep.mubr.bf16.mxu0 0
  %8476 = vmatmul.mubr.bf16.gmra.mrb[0].mxu0 %v7936
  %v8477 = vpop.f32.mrb[0].mxu0
  %v8478 = vadd.f32 0.0, %v8477
  %v8479 = vpop.f32.mrb[0].mxu0
  %v8480 = vpop.f32.mrb[0].mxu0
  %v8481 = vadd.f32 0.0, %v8480
  %v8482 = vpop.f32.mrb[0].mxu0
  %8483 = vmatprep.mubr.bf16.mxu0 0
  %8484 = vmatmul.mubr.bf16.gmra.mrb[0].mxu0 %v7939
  %v8485 = vpop.f32.mrb[0].mxu0
  %v8486 = vadd.f32 0.0, %v8485
  %v8487 = vpop.f32.mrb[0].mxu0
  %v8488 = vpop.f32.mrb[0].mxu0
  %v8489 = vadd.f32 0.0, %v8488
  %v8490 = vpop.f32.mrb[0].mxu0
  %8491 = vdwg.mxu0
  %8492 = vst.msk [vmem:[#allocation4 + $0x180] sm:$0xff] %vm1733, %v8462
  %8493 = vst.msk [vmem:[#allocation4 + $0x188] sm:$0xff] %vm1733, %v8465
  %8494 = vst.msk [vmem:[#allocation4 + $0x190] sm:$0xff] %vm1733, %v8470
  %8495 = vst.msk [vmem:[#allocation4 + $0x198] sm:$0xff] %vm1733, %v8473
  %8496 = vst.msk [vmem:[#allocation4 + $0x1a0] sm:$0xff] %vm1733, %v8478
  %8497 = vst.msk [vmem:[#allocation4 + $0x1a8] sm:$0xff] %vm1733, %v8481
  %8498 = vst.msk [vmem:[#allocation4 + $0x1b0] sm:$0xff] %vm1733, %v8486
  %8499 = vst.msk [vmem:[#allocation4 + $0x1b8] sm:$0xff] %vm1733, %v8489
  %v8500 = vld [vmem:[%s3400] sm:$0xf]
  %v8501 = vld [vmem:[%s3400 + $0x4] sm:$0xf]
  %v8504 = vunpack.c.l.b16 %v8500
  %v8505 = vunpack.c.l.b16 %v8501
  %v8506 = vpack.c.b16 %v8505, %v8504
  %8508 = vmatprep.subr.bf16.mxu0 0
  %8509 = vmatpush1.bf16.msra.mxu0 %v8506
  %8510 = vmatprep.subr.bf16.mxu0 0
  %8511 = vmatpush1.bf16.msra.mxu0 0
  %8512 = vmatprep.subr.bf16.mxu0 0
  %8513 = vmatpush1.bf16.msra.mxu0 0
  %8514 = vmatprep.subr.bf16.mxu0 0
  %8515 = vmatpush1.bf16.msra.mxu0 0
  %8516 = vmatprep.subr.bf16.mxu0 0
  %8517 = vmatpush1.bf16.msra.mxu0 0
  %8518 = vmatprep.subr.bf16.mxu0 0
  %8519 = vmatpush1.bf16.msra.mxu0 0
  %8520 = vmatprep.subr.bf16.mxu0 0
  %8521 = vmatpush1.bf16.msra.mxu0 0
  %8522 = vmatprep.subr.bf16.mxu0 0
  %8523 = vmatpush1.bf16.msra.mxu0 0
  %8524 = vmatprep.subr.bf16.mxu0 0
  %8525 = vmatpush1.bf16.msra.mxu0 0
  %8526 = vmatprep.subr.bf16.mxu0 0
  %8527 = vmatpush1.bf16.msra.mxu0 0
  %8528 = vmatprep.subr.bf16.mxu0 0
  %8529 = vmatpush1.bf16.msra.mxu0 0
  %8530 = vmatprep.subr.bf16.mxu0 0
  %8531 = vmatpush1.bf16.msra.mxu0 0
  %8532 = vmatprep.subr.bf16.mxu0 0
  %8533 = vmatpush1.bf16.msra.mxu0 0
  %8534 = vmatprep.subr.bf16.mxu0 0
  %8535 = vmatpush1.bf16.msra.mxu0 0
  %8536 = vmatprep.subr.bf16.mxu0 0
  %8537 = vmatpush1.bf16.msra.mxu0 0
  %8538 = vmatprep.subr.bf16.mxu0 0
  %8539 = vmatpush1.bf16.msra.mxu0 0
  %8540 = vmatprep.mubr.bf16.mxu0 0
  %8541 = vmatmul.mubr.bf16.gmra.mrb[0].mxu0 %v7930
  %v8542 = vpop.f32.mrb[0].mxu0
  %v8543 = vadd.f32 0.0, %v8542
  %v8544 = vpop.f32.mrb[0].mxu0
  %v8545 = vpop.f32.mrb[0].mxu0
  %v8546 = vadd.f32 0.0, %v8545
  %v8547 = vpop.f32.mrb[0].mxu0
  %8548 = vmatprep.mubr.bf16.mxu0 0
  %8549 = vmatmul.mubr.bf16.gmra.mrb[0].mxu0 %v7933
  %v8550 = vpop.f32.mrb[0].mxu0
  %v8551 = vadd.f32 0.0, %v8550
  %v8552 = vpop.f32.mrb[0].mxu0
  %v8553 = vpop.f32.mrb[0].mxu0
  %v8554 = vadd.f32 0.0, %v8553
  %v8555 = vpop.f32.mrb[0].mxu0
  %8556 = vmatprep.mubr.bf16.mxu0 0
  %8557 = vmatmul.mubr.bf16.gmra.mrb[0].mxu0 %v7936
  %v8558 = vpop.f32.mrb[0].mxu0
  %v8559 = vadd.f32 0.0, %v8558
  %v8560 = vpop.f32.mrb[0].mxu0
  %v8561 = vpop.f32.mrb[0].mxu0
  %v8562 = vadd.f32 0.0, %v8561
  %v8563 = vpop.f32.mrb[0].mxu0
  %8564 = vmatprep.mubr.bf16.mxu0 0
  %8565 = vmatmul.mubr.bf16.gmra.mrb[0].mxu0 %v7939
  %v8566 = vpop.f32.mrb[0].mxu0
  %v8567 = vadd.f32 0.0, %v8566
  %v8568 = vpop.f32.mrb[0].mxu0
  %v8569 = vpop.f32.mrb[0].mxu0
  %v8570 = vadd.f32 0.0, %v8569
  %v8571 = vpop.f32.mrb[0].mxu0
  %8572 = vdwg.mxu0
  %8573 = vst.msk [vmem:[#allocation4 + $0x1c0] sm:$0xff] %vm1733, %v8543
  %8574 = vst.msk [vmem:[#allocation4 + $0x1c8] sm:$0xff] %vm1733, %v8546
  %8575 = vst.msk [vmem:[#allocation4 + $0x1d0] sm:$0xff] %vm1733, %v8551
  %8576 = vst.msk [vmem:[#allocation4 + $0x1d8] sm:$0xff] %vm1733, %v8554
  %8577 = vst.msk [vmem:[#allocation4 + $0x1e0] sm:$0xff] %vm1733, %v8559
  %8578 = vst.msk [vmem:[#allocation4 + $0x1e8] sm:$0xff] %vm1733, %v8562
  %8579 = vst.msk [vmem:[#allocation4 + $0x1f0] sm:$0xff] %vm1733, %v8567
  %8580 = vst.msk [vmem:[#allocation4 + $0x1f8] sm:$0xff] %vm1733, %v8570
  %v8581 = vld [vmem:[%s3482] sm:$0xf]
  %v8582 = vld [vmem:[%s3482 + $0x4] sm:$0xf]
  %v8585 = vunpack.c.l.b16 %v8581
  %v8586 = vunpack.c.l.b16 %v8582
  %v8587 = vpack.c.b16 %v8586, %v8585
  %8589 = vmatprep.subr.bf16.mxu0 0
  %8590 = vmatpush1.bf16.msra.mxu0 %v8587
  %8591 = vmatprep.subr.bf16.mxu0 0
  %8592 = vmatpush1.bf16.msra.mxu0 0
  %8593 = vmatprep.subr.bf16.mxu0 0
  %8594 = vmatpush1.bf16.msra.mxu0 0
  %8595 = vmatprep.subr.bf16.mxu0 0
  %8596 = vmatpush1.bf16.msra.mxu0 0
  %8597 = vmatprep.subr.bf16.mxu0 0
  %8598 = vmatpush1.bf16.msra.mxu0 0
  %8599 = vmatprep.subr.bf16.mxu0 0
  %8600 = vmatpush1.bf16.msra.mxu0 0
  %8601 = vmatprep.subr.bf16.mxu0 0
  %8602 = vmatpush1.bf16.msra.mxu0 0
  %8603 = vmatprep.subr.bf16.mxu0 0
  %8604 = vmatpush1.bf16.msra.mxu0 0
  %8605 = vmatprep.subr.bf16.mxu0 0
  %8606 = vmatpush1.bf16.msra.mxu0 0
  %8607 = vmatprep.subr.bf16.mxu0 0
  %8608 = vmatpush1.bf16.msra.mxu0 0
  %8609 = vmatprep.subr.bf16.mxu0 0
  %8610 = vmatpush1.bf16.msra.mxu0 0
  %8611 = vmatprep.subr.bf16.mxu0 0
  %8612 = vmatpush1.bf16.msra.mxu0 0
  %8613 = vmatprep.subr.bf16.mxu0 0
  %8614 = vmatpush1.bf16.msra.mxu0 0
  %8615 = vmatprep.subr.bf16.mxu0 0
  %8616 = vmatpush1.bf16.msra.mxu0 0
  %8617 = vmatprep.subr.bf16.mxu0 0
  %8618 = vmatpush1.bf16.msra.mxu0 0
  %8619 = vmatprep.subr.bf16.mxu0 0
  %8620 = vmatpush1.bf16.msra.mxu0 0
  %8621 = vmatprep.mubr.bf16.mxu0 0
  %8622 = vmatmul.mubr.bf16.gmra.mrb[0].mxu0 %v7930
  %v8623 = vpop.f32.mrb[0].mxu0
  %v8624 = vadd.f32 0.0, %v8623
  %v8625 = vpop.f32.mrb[0].mxu0
  %v8626 = vpop.f32.mrb[0].mxu0
  %v8627 = vadd.f32 0.0, %v8626
  %v8628 = vpop.f32.mrb[0].mxu0
  %8629 = vmatprep.mubr.bf16.mxu0 0
  %8630 = vmatmul.mubr.bf16.gmra.mrb[0].mxu0 %v7933
  %v8631 = vpop.f32.mrb[0].mxu0
  %v8632 = vadd.f32 0.0, %v8631
  %v8633 = vpop.f32.mrb[0].mxu0
  %v8634 = vpop.f32.mrb[0].mxu0
  %v8635 = vadd.f32 0.0, %v8634
  %v8636 = vpop.f32.mrb[0].mxu0
  %8637 = vmatprep.mubr.bf16.mxu0 0
  %8638 = vmatmul.mubr.bf16.gmra.mrb[0].mxu0 %v7936
  %v8639 = vpop.f32.mrb[0].mxu0
  %v8640 = vadd.f32 0.0, %v8639
  %v8641 = vpop.f32.mrb[0].mxu0
  %v8642 = vpop.f32.mrb[0].mxu0
  %v8643 = vadd.f32 0.0, %v8642
  %v8644 = vpop.f32.mrb[0].mxu0
  %8645 = vmatprep.mubr.bf16.mxu0 0
  %8646 = vmatmul.mubr.bf16.gmra.mrb[0].mxu0 %v7939
  %v8647 = vpop.f32.mrb[0].mxu0
  %v8648 = vadd.f32 0.0, %v8647
  %v8649 = vpop.f32.mrb[0].mxu0
  %v8650 = vpop.f32.mrb[0].mxu0
  %v8651 = vadd.f32 0.0, %v8650
  %v8652 = vpop.f32.mrb[0].mxu0
  %8653 = vdwg.mxu0
  %8654 = vst.msk [vmem:[#allocation4 + $0x200] sm:$0xff] %vm1733, %v8624
  %8655 = vst.msk [vmem:[#allocation4 + $0x208] sm:$0xff] %vm1733, %v8627
  %8656 = vst.msk [vmem:[#allocation4 + $0x210] sm:$0xff] %vm1733, %v8632
  %8657 = vst.msk [vmem:[#allocation4 + $0x218] sm:$0xff] %vm1733, %v8635
  %8658 = vst.msk [vmem:[#allocation4 + $0x220] sm:$0xff] %vm1733, %v8640
  %8659 = vst.msk [vmem:[#allocation4 + $0x228] sm:$0xff] %vm1733, %v8643
  %8660 = vst.msk [vmem:[#allocation4 + $0x230] sm:$0xff] %vm1733, %v8648
  %8661 = vst.msk [vmem:[#allocation4 + $0x238] sm:$0xff] %vm1733, %v8651
  %v8662 = vld [vmem:[%s7] sm:$0xff]
  %v8663 = vld [vmem:[%s7 + $0x8] sm:$0xff]
  %v8664 = vld [vmem:[%s7 + $0x10] sm:$0xf]
  %v8665 = vld [vmem:[%s7 + $0x14] sm:$0xff]
  %v8666 = vld [vmem:[%s7 + $0x1c] sm:$0xff]
  %v8667 = vld [vmem:[%s7 + $0x24] sm:$0xf]
  %v8668 = vld [vmem:[%s7 + $0x28] sm:$0xff]
  %v8669 = vld [vmem:[%s7 + $0x30] sm:$0xff]
  %v8670 = vld [vmem:[%s7 + $0x38] sm:$0xf]
  %v8671 = vld [vmem:[%s7 + $0x3c] sm:$0xff]
  %v8672 = vld [vmem:[%s7 + $0x44] sm:$0xff]
  %v8673 = vld [vmem:[%s7 + $0x4c] sm:$0xf]
  %v8674 = vld [vmem:[#allocation4] sm:$0xff]
  %v8675 = vld [vmem:[#allocation4 + $0x8] sm:$0xff]
  %v8676 = vld [vmem:[#allocation4 + $0x10] sm:$0xff]
  %v8677 = vld [vmem:[#allocation4 + $0x18] sm:$0xff]
  %v8678 = vld [vmem:[#allocation4 + $0x20] sm:$0xff]
  %v8679 = vld [vmem:[#allocation4 + $0x28] sm:$0xff]
  %v8680 = vld [vmem:[#allocation4 + $0x30] sm:$0xff]
  %v8681 = vld [vmem:[#allocation4 + $0x38] sm:$0xff]
  %v8682 = vld [vmem:[#allocation4 + $0x40] sm:$0xff]
  %v8683 = vld [vmem:[#allocation4 + $0x48] sm:$0xff]
  %v8684 = vld [vmem:[#allocation4 + $0x50] sm:$0xff]
  %v8685 = vld [vmem:[#allocation4 + $0x58] sm:$0xff]
  %v8686 = vld [vmem:[#allocation4 + $0x60] sm:$0xff]
  %v8687 = vld [vmem:[#allocation4 + $0x68] sm:$0xff]
  %v8688 = vld [vmem:[#allocation4 + $0x70] sm:$0xff]
  %v8689 = vld [vmem:[#allocation4 + $0x78] sm:$0xff]
  %v8690 = vld [vmem:[#allocation4 + $0x80] sm:$0xff]
  %v8691 = vld [vmem:[#allocation4 + $0x88] sm:$0xff]
  %v8692 = vld [vmem:[#allocation4 + $0x90] sm:$0xff]
  %v8693 = vld [vmem:[#allocation4 + $0x98] sm:$0xff]
  %v8694 = vld [vmem:[#allocation4 + $0xa0] sm:$0xff]
  %v8695 = vld [vmem:[#allocation4 + $0xa8] sm:$0xff]
  %v8696 = vld [vmem:[#allocation4 + $0xb0] sm:$0xff]
  %v8697 = vld [vmem:[#allocation4 + $0xb8] sm:$0xff]
  %v8698 = vld [vmem:[#allocation4 + $0xc0] sm:$0xff]
  %v8699 = vld [vmem:[#allocation4 + $0xc8] sm:$0xff]
  %v8700 = vld [vmem:[#allocation4 + $0xd0] sm:$0xff]
  %v8701 = vld [vmem:[#allocation4 + $0xd8] sm:$0xff]
  %v8702 = vld [vmem:[#allocation4 + $0xe0] sm:$0xff]
  %v8703 = vld [vmem:[#allocation4 + $0xe8] sm:$0xff]
  %v8704 = vld [vmem:[#allocation4 + $0xf0] sm:$0xff]
  %v8705 = vld [vmem:[#allocation4 + $0xf8] sm:$0xff]
  %v8706 = vld [vmem:[#allocation4 + $0x100] sm:$0xff]
  %v8707 = vld [vmem:[#allocation4 + $0x108] sm:$0xff]
  %v8708 = vld [vmem:[#allocation4 + $0x110] sm:$0xff]
  %v8709 = vld [vmem:[#allocation4 + $0x118] sm:$0xff]
  %v8710 = vld [vmem:[#allocation4 + $0x120] sm:$0xff]
  %v8711 = vld [vmem:[#allocation4 + $0x128] sm:$0xff]
  %v8712 = vld [vmem:[#allocation4 + $0x130] sm:$0xff]
  %v8713 = vld [vmem:[#allocation4 + $0x138] sm:$0xff]
  %v8714 = vld [vmem:[#allocation4 + $0x140] sm:$0xff]
  %v8715 = vld [vmem:[#allocation4 + $0x148] sm:$0xff]
  %v8716 = vld [vmem:[#allocation4 + $0x150] sm:$0xff]
  %v8717 = vld [vmem:[#allocation4 + $0x158] sm:$0xff]
  %v8718 = vld [vmem:[#allocation4 + $0x160] sm:$0xff]
  %v8719 = vld [vmem:[#allocation4 + $0x168] sm:$0xff]
  %v8720 = vld [vmem:[#allocation4 + $0x170] sm:$0xff]
  %v8721 = vld [vmem:[#allocation4 + $0x178] sm:$0xff]
  %v8722 = vld [vmem:[#allocation4 + $0x180] sm:$0xff]
  %v8723 = vld [vmem:[#allocation4 + $0x188] sm:$0xff]
  %v8724 = vld [vmem:[#allocation4 + $0x190] sm:$0xff]
  %v8725 = vld [vmem:[#allocation4 + $0x198] sm:$0xff]
  %v8726 = vld [vmem:[#allocation4 + $0x1a0] sm:$0xff]
  %v8727 = vld [vmem:[#allocation4 + $0x1a8] sm:$0xff]
  %v8728 = vld [vmem:[#allocation4 + $0x1b0] sm:$0xff]
  %v8729 = vld [vmem:[#allocation4 + $0x1b8] sm:$0xff]
  %v8730 = vld [vmem:[#allocation4 + $0x1c0] sm:$0xff]
  %v8731 = vld [vmem:[#allocation4 + $0x1c8] sm:$0xff]
  %v8732 = vld [vmem:[#allocation4 + $0x1d0] sm:$0xff]
  %v8733 = vld [vmem:[#allocation4 + $0x1d8] sm:$0xff]
  %v8734 = vld [vmem:[#allocation4 + $0x1e0] sm:$0xff]
  %v8735 = vld [vmem:[#allocation4 + $0x1e8] sm:$0xff]
  %v8736 = vld [vmem:[#allocation4 + $0x1f0] sm:$0xff]
  %v8737 = vld [vmem:[#allocation4 + $0x1f8] sm:$0xff]
  %v8738 = vld [vmem:[#allocation4 + $0x200] sm:$0xff]
  %v8739 = vld [vmem:[#allocation4 + $0x208] sm:$0xff]
  %v8740 = vld [vmem:[#allocation4 + $0x210] sm:$0xff]
  %v8741 = vld [vmem:[#allocation4 + $0x218] sm:$0xff]
  %v8742 = vld [vmem:[#allocation4 + $0x220] sm:$0xff]
  %v8743 = vld [vmem:[#allocation4 + $0x228] sm:$0xff]
  %v8744 = vld [vmem:[#allocation4 + $0x230] sm:$0xff]
  %v8745 = vld [vmem:[#allocation4 + $0x238] sm:$0xff]
  %v8746 = vpack.c.bf16 %v8675, %v8674
  %v8747 = vpack.c.bf16 %v8677, %v8676
  %v8748 = vpack.c.bf16 %v8679, %v8678
  %v8749 = vpack.c.bf16 %v8681, %v8680
  %v8750 = vpack.c.bf16 %v8683, %v8682
  %v8751 = vpack.c.bf16 %v8685, %v8684
  %v8752 = vpack.c.bf16 %v8687, %v8686
  %v8753 = vpack.c.bf16 %v8689, %v8688
  %v8754 = vpack.c.bf16 %v8691, %v8690
  %v8755 = vpack.c.bf16 %v8693, %v8692
  %v8756 = vpack.c.bf16 %v8695, %v8694
  %v8757 = vpack.c.bf16 %v8697, %v8696
  %v8758 = vpack.c.bf16 %v8699, %v8698
  %v8759 = vpack.c.bf16 %v8701, %v8700
  %v8760 = vpack.c.bf16 %v8703, %v8702
  %v8761 = vpack.c.bf16 %v8705, %v8704
  %v8762 = vpack.c.bf16 %v8707, %v8706
  %v8763 = vpack.c.bf16 %v8709, %v8708
  %v8764 = vpack.c.bf16 %v8711, %v8710
  %v8765 = vpack.c.bf16 %v8713, %v8712
  %v8766 = vpack.c.bf16 %v8715, %v8714
  %v8767 = vpack.c.bf16 %v8717, %v8716
  %v8768 = vpack.c.bf16 %v8719, %v8718
  %v8769 = vpack.c.bf16 %v8721, %v8720
  %v8770 = vpack.c.bf16 %v8723, %v8722
  %v8771 = vpack.c.bf16 %v8725, %v8724
  %v8772 = vpack.c.bf16 %v8727, %v8726
  %v8773 = vpack.c.bf16 %v8729, %v8728
  %v8774 = vpack.c.bf16 %v8731, %v8730
  %v8775 = vpack.c.bf16 %v8733, %v8732
  %v8776 = vpack.c.bf16 %v8735, %v8734
  %v8777 = vpack.c.bf16 %v8737, %v8736
  %v8778 = vpack.c.bf16 %v8739, %v8738
  %v8779 = vpack.c.bf16 %v8741, %v8740
  %v8780 = vpack.c.bf16 %v8743, %v8742
  %v8781 = vpack.c.bf16 %v8745, %v8744
  %v8782 = vld [vmem:[%s8] sm:$0xff]
  %v8783 = vld [vmem:[%s8 + $0x8] sm:$0xff]
  %v8784 = vld [vmem:[%s8 + $0x10] sm:$0xff]
  %v8785 = vld [vmem:[%s8 + $0x18] sm:$0xff]
  %8787 = vset.pattern.permute.xlu0 0
  %8788 = vperm.xlu0 %8787, %v8782
  %v8789 = vpop.permute.xlu0 %8788
  %8792 = vset.pattern.permute.xlu0 0
  %8793 = vperm.xlu0 %8792, %v8783
  %v8794 = vpop.permute.xlu0 %8793
  %8797 = vset.pattern.permute.xlu0 0
  %8798 = vperm.xlu0 %8797, %v8784
  %v8799 = vpop.permute.xlu0 %8798
  %8802 = vset.pattern.permute.xlu0 0
  %8803 = vperm.xlu0 %8802, %v8785
  %v8804 = vpop.permute.xlu0 %8803
  %v8818 = vunpack.c.l.b16 %v8662
  %v8819 = vunpack.c.h.b16 %v8662
  %v8820 = vunpack.c.l.b16 %v8663
  %v8821 = vunpack.c.h.b16 %v8663
  %v8822 = vunpack.c.l.b16 %v8664
  %v8823 = vunpack.c.l.b16 %v8665
  %v8824 = vunpack.c.h.b16 %v8665
  %v8825 = vunpack.c.l.b16 %v8666
  %v8826 = vunpack.c.h.b16 %v8666
  %v8827 = vunpack.c.l.b16 %v8667
  %v8828 = vunpack.c.l.b16 %v8668
  %v8829 = vunpack.c.h.b16 %v8668
  %v8830 = vunpack.c.l.b16 %v8669
  %v8831 = vunpack.c.h.b16 %v8669
  %v8832 = vunpack.c.l.b16 %v8670
  %v8833 = vunpack.c.l.b16 %v8671
  %v8834 = vunpack.c.h.b16 %v8671
  %v8835 = vunpack.c.l.b16 %v8672
  %v8836 = vunpack.c.h.b16 %v8672
  %v8837 = vunpack.c.l.b16 %v8673
  %v8838 = vpack.c.b16 %v8823, %v8818
  %v8839 = vpack.c.b16 %v8824, %v8819
  %v8840 = vpack.c.b16 %v8825, %v8820
  %v8841 = vpack.c.b16 %v8826, %v8821
  %v8842 = vpack.c.b16 %v8827, %v8822
  %v8843 = vpack.c.b16 %v8833, %v8828
  %v8844 = vpack.c.b16 %v8834, %v8829
  %v8845 = vpack.c.b16 %v8835, %v8830
  %v8846 = vpack.c.b16 %v8836, %v8831
  %v8847 = vpack.c.b16 %v8837, %v8832
  %v8857 = vsel %vm1733, %v8842, 0
  %v8860 = vsel %vm1733, %v8847, 0
  %8862 = vmatprep.subr.bf16.mxu0 0
  %8863 = vmatpush1.bf16.msra.mxu0 %v8746
  %8864 = vmatprep.subr.bf16.mxu0 0
  %8865 = vmatpush1.bf16.msra.mxu0 %v8747
  %8866 = vmatprep.subr.bf16.mxu0 0
  %8867 = vmatpush1.bf16.msra.mxu0 %v8748
  %8868 = vmatprep.subr.bf16.mxu0 0
  %8869 = vmatpush1.bf16.msra.mxu0 %v8749
  %8870 = vmatprep.subr.bf16.mxu0 0
  %8871 = vmatpush1.bf16.msra.mxu0 %v8750
  %8872 = vmatprep.subr.bf16.mxu0 0
  %8873 = vmatpush1.bf16.msra.mxu0 %v8751
  %8874 = vmatprep.subr.bf16.mxu0 0
  %8875 = vmatpush1.bf16.msra.mxu0 %v8752
  %8876 = vmatprep.subr.bf16.mxu0 0
  %8877 = vmatpush1.bf16.msra.mxu0 %v8753
  %8878 = vmatprep.subr.bf16.mxu0 0
  %8879 = vmatpush1.bf16.msra.mxu0 %v8754
  %8880 = vmatprep.subr.bf16.mxu0 0
  %8881 = vmatpush1.bf16.msra.mxu0 %v8755
  %8882 = vmatprep.subr.bf16.mxu0 0
  %8883 = vmatpush1.bf16.msra.mxu0 %v8756
  %8884 = vmatprep.subr.bf16.mxu0 0
  %8885 = vmatpush1.bf16.msra.mxu0 %v8757
  %8886 = vmatprep.subr.bf16.mxu0 0
  %8887 = vmatpush1.bf16.msra.mxu0 %v8758
  %8888 = vmatprep.subr.bf16.mxu0 0
  %8889 = vmatpush1.bf16.msra.mxu0 %v8759
  %8890 = vmatprep.subr.bf16.mxu0 0
  %8891 = vmatpush1.bf16.msra.mxu0 %v8760
  %8892 = vmatprep.subr.bf16.mxu0 0
  %8893 = vmatpush1.bf16.msra.mxu0 %v8761
  %8894 = vmatprep.mubr.bf16.mxu0 %v8839
  %8895 = vmatmul.mubr.bf16.gmra.mrb[0].mxu0 %v8838
  %v8896 = vpop.f32.mrb[0].mxu0
  %v8897 = vadd.f32 %v8789, %v8896
  %v8898 = vpop.f32.mrb[0].mxu0
  %v8899 = vpop.f32.mrb[0].mxu0
  %v8900 = vadd.f32 %v8794, %v8899
  %v8901 = vpop.f32.mrb[0].mxu0
  %8902 = vmatprep.mubr.bf16.mxu0 %v8844
  %8903 = vmatmul.mubr.bf16.gmra.mrb[0].mxu0 %v8843
  %v8904 = vpop.f32.mrb[0].mxu0
  %v8905 = vadd.f32 %v8799, %v8904
  %v8906 = vpop.f32.mrb[0].mxu0
  %v8907 = vpop.f32.mrb[0].mxu0
  %v8908 = vadd.f32 %v8804, %v8907
  %v8909 = vpop.f32.mrb[0].mxu0
  %8910 = vdwg.mxu0
  %8911 = vmatprep.subr.bf16.mxu0 0
  %8912 = vmatpush1.bf16.msra.mxu0 %v8762
  %8913 = vmatprep.subr.bf16.mxu0 0
  %8914 = vmatpush1.bf16.msra.mxu0 %v8763
  %8915 = vmatprep.subr.bf16.mxu0 0
  %8916 = vmatpush1.bf16.msra.mxu0 %v8764
  %8917 = vmatprep.subr.bf16.mxu0 0
  %8918 = vmatpush1.bf16.msra.mxu0 %v8765
  %8919 = vmatprep.subr.bf16.mxu0 0
  %8920 = vmatpush1.bf16.msra.mxu0 %v8766
  %8921 = vmatprep.subr.bf16.mxu0 0
  %8922 = vmatpush1.bf16.msra.mxu0 %v8767
  %8923 = vmatprep.subr.bf16.mxu0 0
  %8924 = vmatpush1.bf16.msra.mxu0 %v8768
  %8925 = vmatprep.subr.bf16.mxu0 0
  %8926 = vmatpush1.bf16.msra.mxu0 %v8769
  %8927 = vmatprep.subr.bf16.mxu0 0
  %8928 = vmatpush1.bf16.msra.mxu0 %v8770
  %8929 = vmatprep.subr.bf16.mxu0 0
  %8930 = vmatpush1.bf16.msra.mxu0 %v8771
  %8931 = vmatprep.subr.bf16.mxu0 0
  %8932 = vmatpush1.bf16.msra.mxu0 %v8772
  %8933 = vmatprep.subr.bf16.mxu0 0
  %8934 = vmatpush1.bf16.msra.mxu0 %v8773
  %8935 = vmatprep.subr.bf16.mxu0 0
  %8936 = vmatpush1.bf16.msra.mxu0 %v8774
  %8937 = vmatprep.subr.bf16.mxu0 0
  %8938 = vmatpush1.bf16.msra.mxu0 %v8775
  %8939 = vmatprep.subr.bf16.mxu0 0
  %8940 = vmatpush1.bf16.msra.mxu0 %v8776
  %8941 = vmatprep.subr.bf16.mxu0 0
  %8942 = vmatpush1.bf16.msra.mxu0 %v8777
  %8943 = vmatprep.mubr.bf16.mxu0 %v8841
  %8944 = vmatmul.mubr.bf16.gmra.mrb[0].mxu0 %v8840
  %v8945 = vpop.f32.mrb[0].mxu0
  %v8946 = vadd.f32 %v8897, %v8945
  %v8947 = vpop.f32.mrb[0].mxu0
  %v8948 = vpop.f32.mrb[0].mxu0
  %v8949 = vadd.f32 %v8900, %v8948
  %v8950 = vpop.f32.mrb[0].mxu0
  %8951 = vmatprep.mubr.bf16.mxu0 %v8846
  %8952 = vmatmul.mubr.bf16.gmra.mrb[0].mxu0 %v8845
  %v8953 = vpop.f32.mrb[0].mxu0
  %v8954 = vadd.f32 %v8905, %v8953
  %v8955 = vpop.f32.mrb[0].mxu0
  %v8956 = vpop.f32.mrb[0].mxu0
  %v8957 = vadd.f32 %v8908, %v8956
  %v8958 = vpop.f32.mrb[0].mxu0
  %8959 = vdwg.mxu0
  %8960 = vmatprep.subr.bf16.mxu0 0
  %8961 = vmatpush1.bf16.msra.mxu0 %v8778
  %8962 = vmatprep.subr.bf16.mxu0 0
  %8963 = vmatpush1.bf16.msra.mxu0 %v8779
  %8964 = vmatprep.subr.bf16.mxu0 0
  %8965 = vmatpush1.bf16.msra.mxu0 %v8780
  %8966 = vmatprep.subr.bf16.mxu0 0
  %8967 = vmatpush1.bf16.msra.mxu0 %v8781
  %8968 = vmatprep.subr.bf16.mxu0 0
  %8969 = vmatpush1.bf16.msra.mxu0 0
  %8970 = vmatprep.subr.bf16.mxu0 0
  %8971 = vmatpush1.bf16.msra.mxu0 0
  %8972 = vmatprep.subr.bf16.mxu0 0
  %8973 = vmatpush1.bf16.msra.mxu0 0
  %8974 = vmatprep.subr.bf16.mxu0 0
  %8975 = vmatpush1.bf16.msra.mxu0 0
  %8976 = vmatprep.subr.bf16.mxu0 0
  %8977 = vmatpush1.bf16.msra.mxu0 0
  %8978 = vmatprep.subr.bf16.mxu0 0
  %8979 = vmatpush1.bf16.msra.mxu0 0
  %8980 = vmatprep.subr.bf16.mxu0 0
  %8981 = vmatpush1.bf16.msra.mxu0 0
  %8982 = vmatprep.subr.bf16.mxu0 0
  %8983 = vmatpush1.bf16.msra.mxu0 0
  %8984 = vmatprep.subr.bf16.mxu0 0
  %8985 = vmatpush1.bf16.msra.mxu0 0
  %8986 = vmatprep.subr.bf16.mxu0 0
  %8987 = vmatpush1.bf16.msra.mxu0 0
  %8988 = vmatprep.subr.bf16.mxu0 0
  %8989 = vmatpush1.bf16.msra.mxu0 0
  %8990 = vmatprep.subr.bf16.mxu0 0
  %8991 = vmatpush1.bf16.msra.mxu0 0
  %8992 = vmatprep.mubr.bf16.mxu0 0
  %8993 = vmatmul.mubr.bf16.gmra.mrb[0].mxu0 %v8857
  %v8994 = vpop.f32.mrb[0].mxu0
  %v8995 = vadd.f32 %v8946, %v8994
  %v8996 = vpop.f32.mrb[0].mxu0
  %v8997 = vpop.f32.mrb[0].mxu0
  %v8998 = vadd.f32 %v8949, %v8997
  %v8999 = vpop.f32.mrb[0].mxu0
  %9000 = vmatprep.mubr.bf16.mxu0 0
  %9001 = vmatmul.mubr.bf16.gmra.mrb[0].mxu0 %v8860
  %v9002 = vpop.f32.mrb[0].mxu0
  %v9003 = vadd.f32 %v8954, %v9002
  %v9004 = vpop.f32.mrb[0].mxu0
  %v9005 = vpop.f32.mrb[0].mxu0
  %v9006 = vadd.f32 %v8957, %v9005
  %v9007 = vpop.f32.mrb[0].mxu0
  %9008 = vdwg.mxu0
  %v9009 = vmax.f32 %v8995, 0.0
  %v9010 = vmax.f32 %v8998, 0.0
  %v9011 = vmax.f32 %v9003, 0.0
  %v9012 = vmax.f32 %v9006, 0.0
  %v9013 = vpack.c.bf16 %v9010, %v9009
  %v9014 = vpack.c.bf16 %v9012, %v9011
  %v9015 = vld [vmem:[%s12] sm:$0xff]
  %v9016 = vld [vmem:[%s12 + $0x8] sm:$0xff]
  %v9017 = vld [vmem:[%s12 + $0x10] sm:$0xff]
  %v9018 = vld [vmem:[%s12 + $0x18] sm:$0xff]
  %v9019 = vld [vmem:[%s12 + $0x20] sm:$0xff]
  %v9020 = vld [vmem:[%s12 + $0x28] sm:$0xff]
  %v9021 = vld [vmem:[%s12 + $0x30] sm:$0xff]
  %v9022 = vld [vmem:[%s12 + $0x38] sm:$0xff]
  %v9031 = vunpack.c.l.b16 %v9015
  %v9032 = vunpack.c.h.b16 %v9015
  %v9033 = vunpack.c.l.b16 %v9016
  %v9034 = vunpack.c.h.b16 %v9016
  %v9035 = vunpack.c.l.b16 %v9017
  %v9036 = vunpack.c.h.b16 %v9017
  %v9037 = vunpack.c.l.b16 %v9018
  %v9038 = vunpack.c.h.b16 %v9018
  %v9039 = vunpack.c.l.b16 %v9019
  %v9040 = vunpack.c.h.b16 %v9019
  %v9041 = vunpack.c.l.b16 %v9020
  %v9042 = vunpack.c.h.b16 %v9020
  %v9043 = vunpack.c.l.b16 %v9021
  %v9044 = vunpack.c.h.b16 %v9021
  %v9045 = vunpack.c.l.b16 %v9022
  %v9046 = vunpack.c.h.b16 %v9022
  %v9047 = vpack.c.b16 %v9033, %v9031
  %v9048 = vpack.c.b16 %v9034, %v9032
  %v9049 = vpack.c.b16 %v9037, %v9035
  %v9050 = vpack.c.b16 %v9038, %v9036
  %v9051 = vpack.c.b16 %v9041, %v9039
  %v9052 = vpack.c.b16 %v9042, %v9040
  %v9053 = vpack.c.b16 %v9045, %v9043
  %v9054 = vpack.c.b16 %v9046, %v9044
  %v9064 = vsel %vm1733, %v9013, 0
  %v9067 = vsel %vm1733, %v9014, 0
  %9069 = vmatprep.subr.bf16.mxu0 %v9048
  %9070 = vmatpush1.bf16.msra.mxu0 %v9047
  %9071 = vmatprep.subr.bf16.mxu0 %v9050
  %9072 = vmatpush1.bf16.msra.mxu0 %v9049
  %9073 = vmatprep.subr.bf16.mxu0 %v9052
  %9074 = vmatpush1.bf16.msra.mxu0 %v9051
  %9075 = vmatprep.subr.bf16.mxu0 %v9054
  %9076 = vmatpush1.bf16.msra.mxu0 %v9053
  %9077 = vmatprep.subr.bf16.mxu0 0
  %9078 = vmatpush1.bf16.msra.mxu0 0
  %9079 = vmatprep.subr.bf16.mxu0 0
  %9080 = vmatpush1.bf16.msra.mxu0 0
  %9081 = vmatprep.subr.bf16.mxu0 0
  %9082 = vmatpush1.bf16.msra.mxu0 0
  %9083 = vmatprep.subr.bf16.mxu0 0
  %9084 = vmatpush1.bf16.msra.mxu0 0
  %9085 = vmatprep.subr.bf16.mxu0 0
  %9086 = vmatpush1.bf16.msra.mxu0 0
  %9087 = vmatprep.subr.bf16.mxu0 0
  %9088 = vmatpush1.bf16.msra.mxu0 0
  %9089 = vmatprep.subr.bf16.mxu0 0
  %9090 = vmatpush1.bf16.msra.mxu0 0
  %9091 = vmatprep.subr.bf16.mxu0 0
  %9092 = vmatpush1.bf16.msra.mxu0 0
  %9093 = vmatprep.subr.bf16.mxu0 0
  %9094 = vmatpush1.bf16.msra.mxu0 0
  %9095 = vmatprep.subr.bf16.mxu0 0
  %9096 = vmatpush1.bf16.msra.mxu0 0
  %9097 = vmatprep.subr.bf16.mxu0 0
  %9098 = vmatpush1.bf16.msra.mxu0 0
  %9099 = vmatprep.subr.bf16.mxu0 0
  %9100 = vmatpush1.bf16.msra.mxu0 0
  %9101 = vmatprep.mubr.bf16.mxu0 0
  %9102 = vmatmul.mubr.bf16.gmra.mrb[0].mxu0 %v9064
  %v9103 = vpop.f32.mrb[0].mxu0
  %v9104 = vadd.f32 0.0, %v9103
  %v9105 = vpop.f32.mrb[0].mxu0
  %v9106 = vadd.f32 0.0, %v9105
  %v9107 = vpop.f32.mrb[0].mxu0
  %v9108 = vadd.f32 0.0, %v9107
  %v9109 = vpop.f32.mrb[0].mxu0
  %v9110 = vadd.f32 0.0, %v9109
  %9111 = vmatprep.mubr.bf16.mxu0 0
  %9112 = vmatmul.mubr.bf16.gmra.mrb[0].mxu0 %v9067
  %v9113 = vpop.f32.mrb[0].mxu0
  %v9114 = vadd.f32 0.0, %v9113
  %v9115 = vpop.f32.mrb[0].mxu0
  %v9116 = vadd.f32 0.0, %v9115
  %v9117 = vpop.f32.mrb[0].mxu0
  %v9118 = vadd.f32 0.0, %v9117
  %v9119 = vpop.f32.mrb[0].mxu0
  %v9120 = vadd.f32 0.0, %v9119
  %9121 = vdwg.mxu0
  %9122 = vst [vmem:[#allocation5] sm:$0xff] %v9104
  %9123 = vst [vmem:[#allocation5 + $0x8] sm:$0xff] %v9106
  %9124 = vst [vmem:[#allocation5 + $0x10] sm:$0xff] %v9108
  %9125 = vst [vmem:[#allocation5 + $0x18] sm:$0xff] %v9110
  %9126 = vst [vmem:[#allocation5 + $0x20] sm:$0xff] %v9114
  %9127 = vst [vmem:[#allocation5 + $0x28] sm:$0xff] %v9116
  %9128 = vst [vmem:[#allocation5 + $0x30] sm:$0xff] %v9118
  %9129 = vst [vmem:[#allocation5 + $0x38] sm:$0xff] %v9120
  %v9130 = vld [vmem:[%s4032] sm:$0xff]
  %v9131 = vld [vmem:[%s4032 + $0x8] sm:$0xff]
  %v9132 = vld [vmem:[%s4032 + $0x10] sm:$0xff]
  %v9133 = vld [vmem:[%s4032 + $0x18] sm:$0xff]
  %v9134 = vld [vmem:[%s4032 + $0x20] sm:$0xff]
  %v9135 = vld [vmem:[%s4032 + $0x28] sm:$0xff]
  %v9136 = vld [vmem:[%s4032 + $0x30] sm:$0xff]
  %v9137 = vld [vmem:[%s4032 + $0x38] sm:$0xff]
  %v9146 = vunpack.c.l.b16 %v9130
  %v9147 = vunpack.c.h.b16 %v9130
  %v9148 = vunpack.c.l.b16 %v9131
  %v9149 = vunpack.c.h.b16 %v9131
  %v9150 = vunpack.c.l.b16 %v9132
  %v9151 = vunpack.c.h.b16 %v9132
  %v9152 = vunpack.c.l.b16 %v9133
  %v9153 = vunpack.c.h.b16 %v9133
  %v9154 = vunpack.c.l.b16 %v9134
  %v9155 = vunpack.c.h.b16 %v9134
  %v9156 = vunpack.c.l.b16 %v9135
  %v9157 = vunpack.c.h.b16 %v9135
  %v9158 = vunpack.c.l.b16 %v9136
  %v9159 = vunpack.c.h.b16 %v9136
  %v9160 = vunpack.c.l.b16 %v9137
  %v9161 = vunpack.c.h.b16 %v9137
  %v9162 = vpack.c.b16 %v9148, %v9146
  %v9163 = vpack.c.b16 %v9149, %v9147
  %v9164 = vpack.c.b16 %v9152, %v9150
  %v9165 = vpack.c.b16 %v9153, %v9151
  %v9166 = vpack.c.b16 %v9156, %v9154
  %v9167 = vpack.c.b16 %v9157, %v9155
  %v9168 = vpack.c.b16 %v9160, %v9158
  %v9169 = vpack.c.b16 %v9161, %v9159
  %9178 = vmatprep.subr.bf16.mxu0 %v9163
  %9179 = vmatpush1.bf16.msra.mxu0 %v9162
  %9180 = vmatprep.subr.bf16.mxu0 %v9165
  %9181 = vmatpush1.bf16.msra.mxu0 %v9164
  %9182 = vmatprep.subr.bf16.mxu0 %v9167
  %9183 = vmatpush1.bf16.msra.mxu0 %v9166
  %9184 = vmatprep.subr.bf16.mxu0 %v9169
  %9185 = vmatpush1.bf16.msra.mxu0 %v9168
  %9186 = vmatprep.subr.bf16.mxu0 0
  %9187 = vmatpush1.bf16.msra.mxu0 0
  %9188 = vmatprep.subr.bf16.mxu0 0
  %9189 = vmatpush1.bf16.msra.mxu0 0
  %9190 = vmatprep.subr.bf16.mxu0 0
  %9191 = vmatpush1.bf16.msra.mxu0 0
  %9192 = vmatprep.subr.bf16.mxu0 0
  %9193 = vmatpush1.bf16.msra.mxu0 0
  %9194 = vmatprep.subr.bf16.mxu0 0
  %9195 = vmatpush1.bf16.msra.mxu0 0
  %9196 = vmatprep.subr.bf16.mxu0 0
  %9197 = vmatpush1.bf16.msra.mxu0 0
  %9198 = vmatprep.subr.bf16.mxu0 0
  %9199 = vmatpush1.bf16.msra.mxu0 0
  %9200 = vmatprep.subr.bf16.mxu0 0
  %9201 = vmatpush1.bf16.msra.mxu0 0
  %9202 = vmatprep.subr.bf16.mxu0 0
  %9203 = vmatpush1.bf16.msra.mxu0 0
  %9204 = vmatprep.subr.bf16.mxu0 0
  %9205 = vmatpush1.bf16.msra.mxu0 0
  %9206 = vmatprep.subr.bf16.mxu0 0
  %9207 = vmatpush1.bf16.msra.mxu0 0
  %9208 = vmatprep.subr.bf16.mxu0 0
  %9209 = vmatpush1.bf16.msra.mxu0 0
  %9210 = vmatprep.mubr.bf16.mxu0 0
  %9211 = vmatmul.mubr.bf16.gmra.mrb[0].mxu0 %v9064
  %v9212 = vpop.f32.mrb[0].mxu0
  %v9213 = vadd.f32 0.0, %v9212
  %v9214 = vpop.f32.mrb[0].mxu0
  %v9215 = vadd.f32 0.0, %v9214
  %v9216 = vpop.f32.mrb[0].mxu0
  %v9217 = vadd.f32 0.0, %v9216
  %v9218 = vpop.f32.mrb[0].mxu0
  %v9219 = vadd.f32 0.0, %v9218
  %9220 = vmatprep.mubr.bf16.mxu0 0
  %9221 = vmatmul.mubr.bf16.gmra.mrb[0].mxu0 %v9067
  %v9222 = vpop.f32.mrb[0].mxu0
  %v9223 = vadd.f32 0.0, %v9222
  %v9224 = vpop.f32.mrb[0].mxu0
  %v9225 = vadd.f32 0.0, %v9224
  %v9226 = vpop.f32.mrb[0].mxu0
  %v9227 = vadd.f32 0.0, %v9226
  %v9228 = vpop.f32.mrb[0].mxu0
  %v9229 = vadd.f32 0.0, %v9228
  %9230 = vdwg.mxu0
  %9231 = vst [vmem:[#allocation5 + $0x40] sm:$0xff] %v9213
  %9232 = vst [vmem:[#allocation5 + $0x48] sm:$0xff] %v9215
  %9233 = vst [vmem:[#allocation5 + $0x50] sm:$0xff] %v9217
  %9234 = vst [vmem:[#allocation5 + $0x58] sm:$0xff] %v9219
  %9235 = vst [vmem:[#allocation5 + $0x60] sm:$0xff] %v9223
  %9236 = vst [vmem:[#allocation5 + $0x68] sm:$0xff] %v9225
  %9237 = vst [vmem:[#allocation5 + $0x70] sm:$0xff] %v9227
  %9238 = vst [vmem:[#allocation5 + $0x78] sm:$0xff] %v9229
  %v9239 = vld [vmem:[%s4142] sm:$0xff]
  %v9240 = vld [vmem:[%s4142 + $0x8] sm:$0xff]
  %v9241 = vld [vmem:[%s4142 + $0x10] sm:$0xff]
  %v9242 = vld [vmem:[%s4142 + $0x18] sm:$0xff]
  %v9243 = vld [vmem:[%s4142 + $0x20] sm:$0xff]
  %v9244 = vld [vmem:[%s4142 + $0x28] sm:$0xff]
  %v9245 = vld [vmem:[%s4142 + $0x30] sm:$0xff]
  %v9246 = vld [vmem:[%s4142 + $0x38] sm:$0xff]
  %v9255 = vunpack.c.l.b16 %v9239
  %v9256 = vunpack.c.h.b16 %v9239
  %v9257 = vunpack.c.l.b16 %v9240
  %v9258 = vunpack.c.h.b16 %v9240
  %v9259 = vunpack.c.l.b16 %v9241
  %v9260 = vunpack.c.h.b16 %v9241
  %v9261 = vunpack.c.l.b16 %v9242
  %v9262 = vunpack.c.h.b16 %v9242
  %v9263 = vunpack.c.l.b16 %v9243
  %v9264 = vunpack.c.h.b16 %v9243
  %v9265 = vunpack.c.l.b16 %v9244
  %v9266 = vunpack.c.h.b16 %v9244
  %v9267 = vunpack.c.l.b16 %v9245
  %v9268 = vunpack.c.h.b16 %v9245
  %v9269 = vunpack.c.l.b16 %v9246
  %v9270 = vunpack.c.h.b16 %v9246
  %v9271 = vpack.c.b16 %v9257, %v9255
  %v9272 = vpack.c.b16 %v9258, %v9256
  %v9273 = vpack.c.b16 %v9261, %v9259
  %v9274 = vpack.c.b16 %v9262, %v9260
  %v9275 = vpack.c.b16 %v9265, %v9263
  %v9276 = vpack.c.b16 %v9266, %v9264
  %v9277 = vpack.c.b16 %v9269, %v9267
  %v9278 = vpack.c.b16 %v9270, %v9268
  %9287 = vmatprep.subr.bf16.mxu0 %v9272
  %9288 = vmatpush1.bf16.msra.mxu0 %v9271
  %9289 = vmatprep.subr.bf16.mxu0 %v9274
  %9290 = vmatpush1.bf16.msra.mxu0 %v9273
  %9291 = vmatprep.subr.bf16.mxu0 %v9276
  %9292 = vmatpush1.bf16.msra.mxu0 %v9275
  %9293 = vmatprep.subr.bf16.mxu0 %v9278
  %9294 = vmatpush1.bf16.msra.mxu0 %v9277
  %9295 = vmatprep.subr.bf16.mxu0 0
  %9296 = vmatpush1.bf16.msra.mxu0 0
  %9297 = vmatprep.subr.bf16.mxu0 0
  %9298 = vmatpush1.bf16.msra.mxu0 0
  %9299 = vmatprep.subr.bf16.mxu0 0
  %9300 = vmatpush1.bf16.msra.mxu0 0
  %9301 = vmatprep.subr.bf16.mxu0 0
  %9302 = vmatpush1.bf16.msra.mxu0 0
  %9303 = vmatprep.subr.bf16.mxu0 0
  %9304 = vmatpush1.bf16.msra.mxu0 0
  %9305 = vmatprep.subr.bf16.mxu0 0
  %9306 = vmatpush1.bf16.msra.mxu0 0
  %9307 = vmatprep.subr.bf16.mxu0 0
  %9308 = vmatpush1.bf16.msra.mxu0 0
  %9309 = vmatprep.subr.bf16.mxu0 0
  %9310 = vmatpush1.bf16.msra.mxu0 0
  %9311 = vmatprep.subr.bf16.mxu0 0
  %9312 = vmatpush1.bf16.msra.mxu0 0
  %9313 = vmatprep.subr.bf16.mxu0 0
  %9314 = vmatpush1.bf16.msra.mxu0 0
  %9315 = vmatprep.subr.bf16.mxu0 0
  %9316 = vmatpush1.bf16.msra.mxu0 0
  %9317 = vmatprep.subr.bf16.mxu0 0
  %9318 = vmatpush1.bf16.msra.mxu0 0
  %9319 = vmatprep.mubr.bf16.mxu0 0
  %9320 = vmatmul.mubr.bf16.gmra.mrb[0].mxu0 %v9064
  %v9321 = vpop.f32.mrb[0].mxu0
  %v9322 = vadd.f32 0.0, %v9321
  %v9323 = vpop.f32.mrb[0].mxu0
  %v9324 = vadd.f32 0.0, %v9323
  %v9325 = vpop.f32.mrb[0].mxu0
  %v9326 = vadd.f32 0.0, %v9325
  %v9327 = vpop.f32.mrb[0].mxu0
  %v9328 = vadd.f32 0.0, %v9327
  %9329 = vmatprep.mubr.bf16.mxu0 0
  %9330 = vmatmul.mubr.bf16.gmra.mrb[0].mxu0 %v9067
  %v9331 = vpop.f32.mrb[0].mxu0
  %v9332 = vadd.f32 0.0, %v9331
  %v9333 = vpop.f32.mrb[0].mxu0
  %v9334 = vadd.f32 0.0, %v9333
  %v9335 = vpop.f32.mrb[0].mxu0
  %v9336 = vadd.f32 0.0, %v9335
  %v9337 = vpop.f32.mrb[0].mxu0
  %v9338 = vadd.f32 0.0, %v9337
  %9339 = vdwg.mxu0
  %9340 = vst [vmem:[#allocation5 + $0x80] sm:$0xff] %v9322
  %9341 = vst [vmem:[#allocation5 + $0x88] sm:$0xff] %v9324
  %9342 = vst [vmem:[#allocation5 + $0x90] sm:$0xff] %v9326
  %9343 = vst [vmem:[#allocation5 + $0x98] sm:$0xff] %v9328
  %9344 = vst [vmem:[#allocation5 + $0xa0] sm:$0xff] %v9332
  %9345 = vst [vmem:[#allocation5 + $0xa8] sm:$0xff] %v9334
  %9346 = vst [vmem:[#allocation5 + $0xb0] sm:$0xff] %v9336
  %9347 = vst [vmem:[#allocation5 + $0xb8] sm:$0xff] %v9338
  %v9348 = vld [vmem:[%s4252] sm:$0xff]
  %v9349 = vld [vmem:[%s4252 + $0x8] sm:$0xff]
  %v9350 = vld [vmem:[%s4252 + $0x10] sm:$0xff]
  %v9351 = vld [vmem:[%s4252 + $0x18] sm:$0xff]
  %v9352 = vld [vmem:[%s4252 + $0x20] sm:$0xff]
  %v9353 = vld [vmem:[%s4252 + $0x28] sm:$0xff]
  %v9354 = vld [vmem:[%s4252 + $0x30] sm:$0xff]
  %v9355 = vld [vmem:[%s4252 + $0x38] sm:$0xff]
  %v9364 = vunpack.c.l.b16 %v9348
  %v9365 = vunpack.c.h.b16 %v9348
  %v9366 = vunpack.c.l.b16 %v9349
  %v9367 = vunpack.c.h.b16 %v9349
  %v9368 = vunpack.c.l.b16 %v9350
  %v9369 = vunpack.c.h.b16 %v9350
  %v9370 = vunpack.c.l.b16 %v9351
  %v9371 = vunpack.c.h.b16 %v9351
  %v9372 = vunpack.c.l.b16 %v9352
  %v9373 = vunpack.c.h.b16 %v9352
  %v9374 = vunpack.c.l.b16 %v9353
  %v9375 = vunpack.c.h.b16 %v9353
  %v9376 = vunpack.c.l.b16 %v9354
  %v9377 = vunpack.c.h.b16 %v9354
  %v9378 = vunpack.c.l.b16 %v9355
  %v9379 = vunpack.c.h.b16 %v9355
  %v9380 = vpack.c.b16 %v9366, %v9364
  %v9381 = vpack.c.b16 %v9367, %v9365
  %v9382 = vpack.c.b16 %v9370, %v9368
  %v9383 = vpack.c.b16 %v9371, %v9369
  %v9384 = vpack.c.b16 %v9374, %v9372
  %v9385 = vpack.c.b16 %v9375, %v9373
  %v9386 = vpack.c.b16 %v9378, %v9376
  %v9387 = vpack.c.b16 %v9379, %v9377
  %9396 = vmatprep.subr.bf16.mxu0 %v9381
  %9397 = vmatpush1.bf16.msra.mxu0 %v9380
  %9398 = vmatprep.subr.bf16.mxu0 %v9383
  %9399 = vmatpush1.bf16.msra.mxu0 %v9382
  %9400 = vmatprep.subr.bf16.mxu0 %v9385
  %9401 = vmatpush1.bf16.msra.mxu0 %v9384
  %9402 = vmatprep.subr.bf16.mxu0 %v9387
  %9403 = vmatpush1.bf16.msra.mxu0 %v9386
  %9404 = vmatprep.subr.bf16.mxu0 0
  %9405 = vmatpush1.bf16.msra.mxu0 0
  %9406 = vmatprep.subr.bf16.mxu0 0
  %9407 = vmatpush1.bf16.msra.mxu0 0
  %9408 = vmatprep.subr.bf16.mxu0 0
  %9409 = vmatpush1.bf16.msra.mxu0 0
  %9410 = vmatprep.subr.bf16.mxu0 0
  %9411 = vmatpush1.bf16.msra.mxu0 0
  %9412 = vmatprep.subr.bf16.mxu0 0
  %9413 = vmatpush1.bf16.msra.mxu0 0
  %9414 = vmatprep.subr.bf16.mxu0 0
  %9415 = vmatpush1.bf16.msra.mxu0 0
  %9416 = vmatprep.subr.bf16.mxu0 0
  %9417 = vmatpush1.bf16.msra.mxu0 0
  %9418 = vmatprep.subr.bf16.mxu0 0
  %9419 = vmatpush1.bf16.msra.mxu0 0
  %9420 = vmatprep.subr.bf16.mxu0 0
  %9421 = vmatpush1.bf16.msra.mxu0 0
  %9422 = vmatprep.subr.bf16.mxu0 0
  %9423 = vmatpush1.bf16.msra.mxu0 0
  %9424 = vmatprep.subr.bf16.mxu0 0
  %9425 = vmatpush1.bf16.msra.mxu0 0
  %9426 = vmatprep.subr.bf16.mxu0 0
  %9427 = vmatpush1.bf16.msra.mxu0 0
  %9428 = vmatprep.mubr.bf16.mxu0 0
  %9429 = vmatmul.mubr.bf16.gmra.mrb[0].mxu0 %v9064
  %v9430 = vpop.f32.mrb[0].mxu0
  %v9431 = vadd.f32 0.0, %v9430
  %v9432 = vpop.f32.mrb[0].mxu0
  %v9433 = vadd.f32 0.0, %v9432
  %v9434 = vpop.f32.mrb[0].mxu0
  %v9435 = vadd.f32 0.0, %v9434
  %v9436 = vpop.f32.mrb[0].mxu0
  %v9437 = vadd.f32 0.0, %v9436
  %9438 = vmatprep.mubr.bf16.mxu0 0
  %9439 = vmatmul.mubr.bf16.gmra.mrb[0].mxu0 %v9067
  %v9440 = vpop.f32.mrb[0].mxu0
  %v9441 = vadd.f32 0.0, %v9440
  %v9442 = vpop.f32.mrb[0].mxu0
  %v9443 = vadd.f32 0.0, %v9442
  %v9444 = vpop.f32.mrb[0].mxu0
  %v9445 = vadd.f32 0.0, %v9444
  %v9446 = vpop.f32.mrb[0].mxu0
  %v9447 = vadd.f32 0.0, %v9446
  %9448 = vdwg.mxu0
  %9449 = vst [vmem:[#allocation5 + $0xc0] sm:$0xff] %v9431
  %9450 = vst [vmem:[#allocation5 + $0xc8] sm:$0xff] %v9433
  %9451 = vst [vmem:[#allocation5 + $0xd0] sm:$0xff] %v9435
  %9452 = vst [vmem:[#allocation5 + $0xd8] sm:$0xff] %v9437
  %9453 = vst [vmem:[#allocation5 + $0xe0] sm:$0xff] %v9441
  %9454 = vst [vmem:[#allocation5 + $0xe8] sm:$0xff] %v9443
  %9455 = vst [vmem:[#allocation5 + $0xf0] sm:$0xff] %v9445
  %9456 = vst [vmem:[#allocation5 + $0xf8] sm:$0xff] %v9447
  %v9457 = vld [vmem:[%s4362] sm:$0xff]
  %v9458 = vld [vmem:[%s4362 + $0x8] sm:$0xff]
  %v9459 = vld [vmem:[%s4362 + $0x10] sm:$0xff]
  %v9460 = vld [vmem:[%s4362 + $0x18] sm:$0xff]
  %v9461 = vld [vmem:[%s4362 + $0x20] sm:$0xff]
  %v9462 = vld [vmem:[%s4362 + $0x28] sm:$0xff]
  %v9463 = vld [vmem:[%s4362 + $0x30] sm:$0xff]
  %v9464 = vld [vmem:[%s4362 + $0x38] sm:$0xff]
  %v9473 = vunpack.c.l.b16 %v9457
  %v9474 = vunpack.c.h.b16 %v9457
  %v9475 = vunpack.c.l.b16 %v9458
  %v9476 = vunpack.c.h.b16 %v9458
  %v9477 = vunpack.c.l.b16 %v9459
  %v9478 = vunpack.c.h.b16 %v9459
  %v9479 = vunpack.c.l.b16 %v9460
  %v9480 = vunpack.c.h.b16 %v9460
  %v9481 = vunpack.c.l.b16 %v9461
  %v9482 = vunpack.c.h.b16 %v9461
  %v9483 = vunpack.c.l.b16 %v9462
  %v9484 = vunpack.c.h.b16 %v9462
  %v9485 = vunpack.c.l.b16 %v9463
  %v9486 = vunpack.c.h.b16 %v9463
  %v9487 = vunpack.c.l.b16 %v9464
  %v9488 = vunpack.c.h.b16 %v9464
  %v9489 = vpack.c.b16 %v9475, %v9473
  %v9490 = vpack.c.b16 %v9476, %v9474
  %v9491 = vpack.c.b16 %v9479, %v9477
  %v9492 = vpack.c.b16 %v9480, %v9478
  %v9493 = vpack.c.b16 %v9483, %v9481
  %v9494 = vpack.c.b16 %v9484, %v9482
  %v9495 = vpack.c.b16 %v9487, %v9485
  %v9496 = vpack.c.b16 %v9488, %v9486
  %9505 = vmatprep.subr.bf16.mxu0 %v9490
  %9506 = vmatpush1.bf16.msra.mxu0 %v9489
  %9507 = vmatprep.subr.bf16.mxu0 %v9492
  %9508 = vmatpush1.bf16.msra.mxu0 %v9491
  %9509 = vmatprep.subr.bf16.mxu0 %v9494
  %9510 = vmatpush1.bf16.msra.mxu0 %v9493
  %9511 = vmatprep.subr.bf16.mxu0 %v9496
  %9512 = vmatpush1.bf16.msra.mxu0 %v9495
  %9513 = vmatprep.subr.bf16.mxu0 0
  %9514 = vmatpush1.bf16.msra.mxu0 0
  %9515 = vmatprep.subr.bf16.mxu0 0
  %9516 = vmatpush1.bf16.msra.mxu0 0
  %9517 = vmatprep.subr.bf16.mxu0 0
  %9518 = vmatpush1.bf16.msra.mxu0 0
  %9519 = vmatprep.subr.bf16.mxu0 0
  %9520 = vmatpush1.bf16.msra.mxu0 0
  %9521 = vmatprep.subr.bf16.mxu0 0
  %9522 = vmatpush1.bf16.msra.mxu0 0
  %9523 = vmatprep.subr.bf16.mxu0 0
  %9524 = vmatpush1.bf16.msra.mxu0 0
  %9525 = vmatprep.subr.bf16.mxu0 0
  %9526 = vmatpush1.bf16.msra.mxu0 0
  %9527 = vmatprep.subr.bf16.mxu0 0
  %9528 = vmatpush1.bf16.msra.mxu0 0
  %9529 = vmatprep.subr.bf16.mxu0 0
  %9530 = vmatpush1.bf16.msra.mxu0 0
  %9531 = vmatprep.subr.bf16.mxu0 0
  %9532 = vmatpush1.bf16.msra.mxu0 0
  %9533 = vmatprep.subr.bf16.mxu0 0
  %9534 = vmatpush1.bf16.msra.mxu0 0
  %9535 = vmatprep.subr.bf16.mxu0 0
  %9536 = vmatpush1.bf16.msra.mxu0 0
  %9537 = vmatprep.mubr.bf16.mxu0 0
  %9538 = vmatmul.mubr.bf16.gmra.mrb[0].mxu0 %v9064
  %v9539 = vpop.f32.mrb[0].mxu0
  %v9540 = vadd.f32 0.0, %v9539
  %v9541 = vpop.f32.mrb[0].mxu0
  %v9542 = vadd.f32 0.0, %v9541
  %v9543 = vpop.f32.mrb[0].mxu0
  %v9544 = vadd.f32 0.0, %v9543
  %v9545 = vpop.f32.mrb[0].mxu0
  %v9546 = vadd.f32 0.0, %v9545
  %9547 = vmatprep.mubr.bf16.mxu0 0
  %9548 = vmatmul.mubr.bf16.gmra.mrb[0].mxu0 %v9067
  %v9549 = vpop.f32.mrb[0].mxu0
  %v9550 = vadd.f32 0.0, %v9549
  %v9551 = vpop.f32.mrb[0].mxu0
  %v9552 = vadd.f32 0.0, %v9551
  %v9553 = vpop.f32.mrb[0].mxu0
  %v9554 = vadd.f32 0.0, %v9553
  %v9555 = vpop.f32.mrb[0].mxu0
  %v9556 = vadd.f32 0.0, %v9555
  %9557 = vdwg.mxu0
  %9558 = vst [vmem:[#allocation5 + $0x100] sm:$0xff] %v9540
  %9559 = vst [vmem:[#allocation5 + $0x108] sm:$0xff] %v9542
  %9560 = vst [vmem:[#allocation5 + $0x110] sm:$0xff] %v9544
  %9561 = vst [vmem:[#allocation5 + $0x118] sm:$0xff] %v9546
  %9562 = vst [vmem:[#allocation5 + $0x120] sm:$0xff] %v9550
  %9563 = vst [vmem:[#allocation5 + $0x128] sm:$0xff] %v9552
  %9564 = vst [vmem:[#allocation5 + $0x130] sm:$0xff] %v9554
  %9565 = vst [vmem:[#allocation5 + $0x138] sm:$0xff] %v9556
  %v9566 = vld [vmem:[%s4472] sm:$0xff]
  %v9567 = vld [vmem:[%s4472 + $0x8] sm:$0xff]
  %v9568 = vld [vmem:[%s4472 + $0x10] sm:$0xff]
  %v9569 = vld [vmem:[%s4472 + $0x18] sm:$0xff]
  %v9570 = vld [vmem:[%s4472 + $0x20] sm:$0xff]
  %v9571 = vld [vmem:[%s4472 + $0x28] sm:$0xff]
  %v9572 = vld [vmem:[%s4472 + $0x30] sm:$0xff]
  %v9573 = vld [vmem:[%s4472 + $0x38] sm:$0xff]
  %v9582 = vunpack.c.l.b16 %v9566
  %v9583 = vunpack.c.h.b16 %v9566
  %v9584 = vunpack.c.l.b16 %v9567
  %v9585 = vunpack.c.h.b16 %v9567
  %v9586 = vunpack.c.l.b16 %v9568
  %v9587 = vunpack.c.h.b16 %v9568
  %v9588 = vunpack.c.l.b16 %v9569
  %v9589 = vunpack.c.h.b16 %v9569
  %v9590 = vunpack.c.l.b16 %v9570
  %v9591 = vunpack.c.h.b16 %v9570
  %v9592 = vunpack.c.l.b16 %v9571
  %v9593 = vunpack.c.h.b16 %v9571
  %v9594 = vunpack.c.l.b16 %v9572
  %v9595 = vunpack.c.h.b16 %v9572
  %v9596 = vunpack.c.l.b16 %v9573
  %v9597 = vunpack.c.h.b16 %v9573
  %v9598 = vpack.c.b16 %v9584, %v9582
  %v9599 = vpack.c.b16 %v9585, %v9583
  %v9600 = vpack.c.b16 %v9588, %v9586
  %v9601 = vpack.c.b16 %v9589, %v9587
  %v9602 = vpack.c.b16 %v9592, %v9590
  %v9603 = vpack.c.b16 %v9593, %v9591
  %v9604 = vpack.c.b16 %v9596, %v9594
  %v9605 = vpack.c.b16 %v9597, %v9595
  %9614 = vmatprep.subr.bf16.mxu0 %v9599
  %9615 = vmatpush1.bf16.msra.mxu0 %v9598
  %9616 = vmatprep.subr.bf16.mxu0 %v9601
  %9617 = vmatpush1.bf16.msra.mxu0 %v9600
  %9618 = vmatprep.subr.bf16.mxu0 %v9603
  %9619 = vmatpush1.bf16.msra.mxu0 %v9602
  %9620 = vmatprep.subr.bf16.mxu0 %v9605
  %9621 = vmatpush1.bf16.msra.mxu0 %v9604
  %9622 = vmatprep.subr.bf16.mxu0 0
  %9623 = vmatpush1.bf16.msra.mxu0 0
  %9624 = vmatprep.subr.bf16.mxu0 0
  %9625 = vmatpush1.bf16.msra.mxu0 0
  %9626 = vmatprep.subr.bf16.mxu0 0
  %9627 = vmatpush1.bf16.msra.mxu0 0
  %9628 = vmatprep.subr.bf16.mxu0 0
  %9629 = vmatpush1.bf16.msra.mxu0 0
  %9630 = vmatprep.subr.bf16.mxu0 0
  %9631 = vmatpush1.bf16.msra.mxu0 0
  %9632 = vmatprep.subr.bf16.mxu0 0
  %9633 = vmatpush1.bf16.msra.mxu0 0
  %9634 = vmatprep.subr.bf16.mxu0 0
  %9635 = vmatpush1.bf16.msra.mxu0 0
  %9636 = vmatprep.subr.bf16.mxu0 0
  %9637 = vmatpush1.bf16.msra.mxu0 0
  %9638 = vmatprep.subr.bf16.mxu0 0
  %9639 = vmatpush1.bf16.msra.mxu0 0
  %9640 = vmatprep.subr.bf16.mxu0 0
  %9641 = vmatpush1.bf16.msra.mxu0 0
  %9642 = vmatprep.subr.bf16.mxu0 0
  %9643 = vmatpush1.bf16.msra.mxu0 0
  %9644 = vmatprep.subr.bf16.mxu0 0
  %9645 = vmatpush1.bf16.msra.mxu0 0
  %9646 = vmatprep.mubr.bf16.mxu0 0
  %9647 = vmatmul.mubr.bf16.gmra.mrb[0].mxu0 %v9064
  %v9648 = vpop.f32.mrb[0].mxu0
  %v9649 = vadd.f32 0.0, %v9648
  %v9650 = vpop.f32.mrb[0].mxu0
  %v9651 = vadd.f32 0.0, %v9650
  %v9652 = vpop.f32.mrb[0].mxu0
  %v9653 = vadd.f32 0.0, %v9652
  %v9654 = vpop.f32.mrb[0].mxu0
  %v9655 = vadd.f32 0.0, %v9654
  %9656 = vmatprep.mubr.bf16.mxu0 0
  %9657 = vmatmul.mubr.bf16.gmra.mrb[0].mxu0 %v9067
  %v9658 = vpop.f32.mrb[0].mxu0
  %v9659 = vadd.f32 0.0, %v9658
  %v9660 = vpop.f32.mrb[0].mxu0
  %v9661 = vadd.f32 0.0, %v9660
  %v9662 = vpop.f32.mrb[0].mxu0
  %v9663 = vadd.f32 0.0, %v9662
  %v9664 = vpop.f32.mrb[0].mxu0
  %v9665 = vadd.f32 0.0, %v9664
  %9666 = vdwg.mxu0
  %9667 = vst [vmem:[#allocation5 + $0x140] sm:$0xff] %v9649
  %9668 = vst [vmem:[#allocation5 + $0x148] sm:$0xff] %v9651
  %9669 = vst [vmem:[#allocation5 + $0x150] sm:$0xff] %v9653
  %9670 = vst [vmem:[#allocation5 + $0x158] sm:$0xff] %v9655
  %9671 = vst [vmem:[#allocation5 + $0x160] sm:$0xff] %v9659
  %9672 = vst [vmem:[#allocation5 + $0x168] sm:$0xff] %v9661
  %9673 = vst [vmem:[#allocation5 + $0x170] sm:$0xff] %v9663
  %9674 = vst [vmem:[#allocation5 + $0x178] sm:$0xff] %v9665
  %v9675 = vld [vmem:[%s4582] sm:$0xff]
  %v9676 = vld [vmem:[%s4582 + $0x8] sm:$0xff]
  %v9677 = vld [vmem:[%s4582 + $0x10] sm:$0xff]
  %v9678 = vld [vmem:[%s4582 + $0x18] sm:$0xff]
  %v9679 = vld [vmem:[%s4582 + $0x20] sm:$0xff]
  %v9680 = vld [vmem:[%s4582 + $0x28] sm:$0xff]
  %v9681 = vld [vmem:[%s4582 + $0x30] sm:$0xff]
  %v9682 = vld [vmem:[%s4582 + $0x38] sm:$0xff]
  %v9691 = vunpack.c.l.b16 %v9675
  %v9692 = vunpack.c.h.b16 %v9675
  %v9693 = vunpack.c.l.b16 %v9676
  %v9694 = vunpack.c.h.b16 %v9676
  %v9695 = vunpack.c.l.b16 %v9677
  %v9696 = vunpack.c.h.b16 %v9677
  %v9697 = vunpack.c.l.b16 %v9678
  %v9698 = vunpack.c.h.b16 %v9678
  %v9699 = vunpack.c.l.b16 %v9679
  %v9700 = vunpack.c.h.b16 %v9679
  %v9701 = vunpack.c.l.b16 %v9680
  %v9702 = vunpack.c.h.b16 %v9680
  %v9703 = vunpack.c.l.b16 %v9681
  %v9704 = vunpack.c.h.b16 %v9681
  %v9705 = vunpack.c.l.b16 %v9682
  %v9706 = vunpack.c.h.b16 %v9682
  %v9707 = vpack.c.b16 %v9693, %v9691
  %v9708 = vpack.c.b16 %v9694, %v9692
  %v9709 = vpack.c.b16 %v9697, %v9695
  %v9710 = vpack.c.b16 %v9698, %v9696
  %v9711 = vpack.c.b16 %v9701, %v9699
  %v9712 = vpack.c.b16 %v9702, %v9700
  %v9713 = vpack.c.b16 %v9705, %v9703
  %v9714 = vpack.c.b16 %v9706, %v9704
  %9723 = vmatprep.subr.bf16.mxu0 %v9708
  %9724 = vmatpush1.bf16.msra.mxu0 %v9707
  %9725 = vmatprep.subr.bf16.mxu0 %v9710
  %9726 = vmatpush1.bf16.msra.mxu0 %v9709
  %9727 = vmatprep.subr.bf16.mxu0 %v9712
  %9728 = vmatpush1.bf16.msra.mxu0 %v9711
  %9729 = vmatprep.subr.bf16.mxu0 %v9714
  %9730 = vmatpush1.bf16.msra.mxu0 %v9713
  %9731 = vmatprep.subr.bf16.mxu0 0
  %9732 = vmatpush1.bf16.msra.mxu0 0
  %9733 = vmatprep.subr.bf16.mxu0 0
  %9734 = vmatpush1.bf16.msra.mxu0 0
  %9735 = vmatprep.subr.bf16.mxu0 0
  %9736 = vmatpush1.bf16.msra.mxu0 0
  %9737 = vmatprep.subr.bf16.mxu0 0
  %9738 = vmatpush1.bf16.msra.mxu0 0
  %9739 = vmatprep.subr.bf16.mxu0 0
  %9740 = vmatpush1.bf16.msra.mxu0 0
  %9741 = vmatprep.subr.bf16.mxu0 0
  %9742 = vmatpush1.bf16.msra.mxu0 0
  %9743 = vmatprep.subr.bf16.mxu0 0
  %9744 = vmatpush1.bf16.msra.mxu0 0
  %9745 = vmatprep.subr.bf16.mxu0 0
  %9746 = vmatpush1.bf16.msra.mxu0 0
  %9747 = vmatprep.subr.bf16.mxu0 0
  %9748 = vmatpush1.bf16.msra.mxu0 0
  %9749 = vmatprep.subr.bf16.mxu0 0
  %9750 = vmatpush1.bf16.msra.mxu0 0
  %9751 = vmatprep.subr.bf16.mxu0 0
  %9752 = vmatpush1.bf16.msra.mxu0 0
  %9753 = vmatprep.subr.bf16.mxu0 0
  %9754 = vmatpush1.bf16.msra.mxu0 0
  %9755 = vmatprep.mubr.bf16.mxu0 0
  %9756 = vmatmul.mubr.bf16.gmra.mrb[0].mxu0 %v9064
  %v9757 = vpop.f32.mrb[0].mxu0
  %v9758 = vadd.f32 0.0, %v9757
  %v9759 = vpop.f32.mrb[0].mxu0
  %v9760 = vadd.f32 0.0, %v9759
  %v9761 = vpop.f32.mrb[0].mxu0
  %v9762 = vadd.f32 0.0, %v9761
  %v9763 = vpop.f32.mrb[0].mxu0
  %v9764 = vadd.f32 0.0, %v9763
  %9765 = vmatprep.mubr.bf16.mxu0 0
  %9766 = vmatmul.mubr.bf16.gmra.mrb[0].mxu0 %v9067
  %v9767 = vpop.f32.mrb[0].mxu0
  %v9768 = vadd.f32 0.0, %v9767
  %v9769 = vpop.f32.mrb[0].mxu0
  %v9770 = vadd.f32 0.0, %v9769
  %v9771 = vpop.f32.mrb[0].mxu0
  %v9772 = vadd.f32 0.0, %v9771
  %v9773 = vpop.f32.mrb[0].mxu0
  %v9774 = vadd.f32 0.0, %v9773
  %9775 = vdwg.mxu0
  %9776 = vst [vmem:[#allocation5 + $0x180] sm:$0xff] %v9758
  %9777 = vst [vmem:[#allocation5 + $0x188] sm:$0xff] %v9760
  %9778 = vst [vmem:[#allocation5 + $0x190] sm:$0xff] %v9762
  %9779 = vst [vmem:[#allocation5 + $0x198] sm:$0xff] %v9764
  %9780 = vst [vmem:[#allocation5 + $0x1a0] sm:$0xff] %v9768
  %9781 = vst [vmem:[#allocation5 + $0x1a8] sm:$0xff] %v9770
  %9782 = vst [vmem:[#allocation5 + $0x1b0] sm:$0xff] %v9772
  %9783 = vst [vmem:[#allocation5 + $0x1b8] sm:$0xff] %v9774
  %v9784 = vld [vmem:[%s4692] sm:$0xff]
  %v9785 = vld [vmem:[%s4692 + $0x8] sm:$0xff]
  %v9786 = vld [vmem:[%s4692 + $0x10] sm:$0xff]
  %v9787 = vld [vmem:[%s4692 + $0x18] sm:$0xff]
  %v9788 = vld [vmem:[%s4692 + $0x20] sm:$0xff]
  %v9789 = vld [vmem:[%s4692 + $0x28] sm:$0xff]
  %v9790 = vld [vmem:[%s4692 + $0x30] sm:$0xff]
  %v9791 = vld [vmem:[%s4692 + $0x38] sm:$0xff]
  %v9800 = vunpack.c.l.b16 %v9784
  %v9801 = vunpack.c.h.b16 %v9784
  %v9802 = vunpack.c.l.b16 %v9785
  %v9803 = vunpack.c.h.b16 %v9785
  %v9804 = vunpack.c.l.b16 %v9786
  %v9805 = vunpack.c.h.b16 %v9786
  %v9806 = vunpack.c.l.b16 %v9787
  %v9807 = vunpack.c.h.b16 %v9787
  %v9808 = vunpack.c.l.b16 %v9788
  %v9809 = vunpack.c.h.b16 %v9788
  %v9810 = vunpack.c.l.b16 %v9789
  %v9811 = vunpack.c.h.b16 %v9789
  %v9812 = vunpack.c.l.b16 %v9790
  %v9813 = vunpack.c.h.b16 %v9790
  %v9814 = vunpack.c.l.b16 %v9791
  %v9815 = vunpack.c.h.b16 %v9791
  %v9816 = vpack.c.b16 %v9802, %v9800
  %v9817 = vpack.c.b16 %v9803, %v9801
  %v9818 = vpack.c.b16 %v9806, %v9804
  %v9819 = vpack.c.b16 %v9807, %v9805
  %v9820 = vpack.c.b16 %v9810, %v9808
  %v9821 = vpack.c.b16 %v9811, %v9809
  %v9822 = vpack.c.b16 %v9814, %v9812
  %v9823 = vpack.c.b16 %v9815, %v9813
  %9832 = vmatprep.subr.bf16.mxu0 %v9817
  %9833 = vmatpush1.bf16.msra.mxu0 %v9816
  %9834 = vmatprep.subr.bf16.mxu0 %v9819
  %9835 = vmatpush1.bf16.msra.mxu0 %v9818
  %9836 = vmatprep.subr.bf16.mxu0 %v9821
  %9837 = vmatpush1.bf16.msra.mxu0 %v9820
  %9838 = vmatprep.subr.bf16.mxu0 %v9823
  %9839 = vmatpush1.bf16.msra.mxu0 %v9822
  %9840 = vmatprep.subr.bf16.mxu0 0
  %9841 = vmatpush1.bf16.msra.mxu0 0
  %9842 = vmatprep.subr.bf16.mxu0 0
  %9843 = vmatpush1.bf16.msra.mxu0 0
  %9844 = vmatprep.subr.bf16.mxu0 0
  %9845 = vmatpush1.bf16.msra.mxu0 0
  %9846 = vmatprep.subr.bf16.mxu0 0
  %9847 = vmatpush1.bf16.msra.mxu0 0
  %9848 = vmatprep.subr.bf16.mxu0 0
  %9849 = vmatpush1.bf16.msra.mxu0 0
  %9850 = vmatprep.subr.bf16.mxu0 0
  %9851 = vmatpush1.bf16.msra.mxu0 0
  %9852 = vmatprep.subr.bf16.mxu0 0
  %9853 = vmatpush1.bf16.msra.mxu0 0
  %9854 = vmatprep.subr.bf16.mxu0 0
  %9855 = vmatpush1.bf16.msra.mxu0 0
  %9856 = vmatprep.subr.bf16.mxu0 0
  %9857 = vmatpush1.bf16.msra.mxu0 0
  %9858 = vmatprep.subr.bf16.mxu0 0
  %9859 = vmatpush1.bf16.msra.mxu0 0
  %9860 = vmatprep.subr.bf16.mxu0 0
  %9861 = vmatpush1.bf16.msra.mxu0 0
  %9862 = vmatprep.subr.bf16.mxu0 0
  %9863 = vmatpush1.bf16.msra.mxu0 0
  %9864 = vmatprep.mubr.bf16.mxu0 0
  %9865 = vmatmul.mubr.bf16.gmra.mrb[0].mxu0 %v9064
  %v9866 = vpop.f32.mrb[0].mxu0
  %v9867 = vadd.f32 0.0, %v9866
  %v9868 = vpop.f32.mrb[0].mxu0
  %v9869 = vadd.f32 0.0, %v9868
  %v9870 = vpop.f32.mrb[0].mxu0
  %v9871 = vadd.f32 0.0, %v9870
  %v9872 = vpop.f32.mrb[0].mxu0
  %v9873 = vadd.f32 0.0, %v9872
  %9874 = vmatprep.mubr.bf16.mxu0 0
  %9875 = vmatmul.mubr.bf16.gmra.mrb[0].mxu0 %v9067
  %v9876 = vpop.f32.mrb[0].mxu0
  %v9877 = vadd.f32 0.0, %v9876
  %v9878 = vpop.f32.mrb[0].mxu0
  %v9879 = vadd.f32 0.0, %v9878
  %v9880 = vpop.f32.mrb[0].mxu0
  %v9881 = vadd.f32 0.0, %v9880
  %v9882 = vpop.f32.mrb[0].mxu0
  %v9883 = vadd.f32 0.0, %v9882
  %9884 = vdwg.mxu0
  %9885 = vst [vmem:[#allocation5 + $0x1c0] sm:$0xff] %v9867
  %9886 = vst [vmem:[#allocation5 + $0x1c8] sm:$0xff] %v9869
  %9887 = vst [vmem:[#allocation5 + $0x1d0] sm:$0xff] %v9871
  %9888 = vst [vmem:[#allocation5 + $0x1d8] sm:$0xff] %v9873
  %9889 = vst [vmem:[#allocation5 + $0x1e0] sm:$0xff] %v9877
  %9890 = vst [vmem:[#allocation5 + $0x1e8] sm:$0xff] %v9879
  %9891 = vst [vmem:[#allocation5 + $0x1f0] sm:$0xff] %v9881
  %9892 = vst [vmem:[#allocation5 + $0x1f8] sm:$0xff] %v9883
  %v9893 = vld [vmem:[%s4802] sm:$0xff]
  %v9894 = vld [vmem:[%s4802 + $0x8] sm:$0xff]
  %v9895 = vld [vmem:[%s4802 + $0x10] sm:$0xff]
  %v9896 = vld [vmem:[%s4802 + $0x18] sm:$0xff]
  %v9897 = vld [vmem:[%s4802 + $0x20] sm:$0xff]
  %v9898 = vld [vmem:[%s4802 + $0x28] sm:$0xff]
  %v9899 = vld [vmem:[%s4802 + $0x30] sm:$0xff]
  %v9900 = vld [vmem:[%s4802 + $0x38] sm:$0xff]
  %v9909 = vunpack.c.l.b16 %v9893
  %v9910 = vunpack.c.h.b16 %v9893
  %v9911 = vunpack.c.l.b16 %v9894
  %v9912 = vunpack.c.h.b16 %v9894
  %v9913 = vunpack.c.l.b16 %v9895
  %v9914 = vunpack.c.h.b16 %v9895
  %v9915 = vunpack.c.l.b16 %v9896
  %v9916 = vunpack.c.h.b16 %v9896
  %v9917 = vunpack.c.l.b16 %v9897
  %v9918 = vunpack.c.h.b16 %v9897
  %v9919 = vunpack.c.l.b16 %v9898
  %v9920 = vunpack.c.h.b16 %v9898
  %v9921 = vunpack.c.l.b16 %v9899
  %v9922 = vunpack.c.h.b16 %v9899
  %v9923 = vunpack.c.l.b16 %v9900
  %v9924 = vunpack.c.h.b16 %v9900
  %v9925 = vpack.c.b16 %v9911, %v9909
  %v9926 = vpack.c.b16 %v9912, %v9910
  %v9927 = vpack.c.b16 %v9915, %v9913
  %v9928 = vpack.c.b16 %v9916, %v9914
  %v9929 = vpack.c.b16 %v9919, %v9917
  %v9930 = vpack.c.b16 %v9920, %v9918
  %v9931 = vpack.c.b16 %v9923, %v9921
  %v9932 = vpack.c.b16 %v9924, %v9922
  %9941 = vmatprep.subr.bf16.mxu0 %v9926
  %9942 = vmatpush1.bf16.msra.mxu0 %v9925
  %9943 = vmatprep.subr.bf16.mxu0 %v9928
  %9944 = vmatpush1.bf16.msra.mxu0 %v9927
  %9945 = vmatprep.subr.bf16.mxu0 %v9930
  %9946 = vmatpush1.bf16.msra.mxu0 %v9929
  %9947 = vmatprep.subr.bf16.mxu0 %v9932
  %9948 = vmatpush1.bf16.msra.mxu0 %v9931
  %9949 = vmatprep.subr.bf16.mxu0 0
  %9950 = vmatpush1.bf16.msra.mxu0 0
  %9951 = vmatprep.subr.bf16.mxu0 0
  %9952 = vmatpush1.bf16.msra.mxu0 0
  %9953 = vmatprep.subr.bf16.mxu0 0
  %9954 = vmatpush1.bf16.msra.mxu0 0
  %9955 = vmatprep.subr.bf16.mxu0 0
  %9956 = vmatpush1.bf16.msra.mxu0 0
  %9957 = vmatprep.subr.bf16.mxu0 0
  %9958 = vmatpush1.bf16.msra.mxu0 0
  %9959 = vmatprep.subr.bf16.mxu0 0
  %9960 = vmatpush1.bf16.msra.mxu0 0
  %9961 = vmatprep.subr.bf16.mxu0 0
  %9962 = vmatpush1.bf16.msra.mxu0 0
  %9963 = vmatprep.subr.bf16.mxu0 0
  %9964 = vmatpush1.bf16.msra.mxu0 0
  %9965 = vmatprep.subr.bf16.mxu0 0
  %9966 = vmatpush1.bf16.msra.mxu0 0
  %9967 = vmatprep.subr.bf16.mxu0 0
  %9968 = vmatpush1.bf16.msra.mxu0 0
  %9969 = vmatprep.subr.bf16.mxu0 0
  %9970 = vmatpush1.bf16.msra.mxu0 0
  %9971 = vmatprep.subr.bf16.mxu0 0
  %9972 = vmatpush1.bf16.msra.mxu0 0
  %9973 = vmatprep.mubr.bf16.mxu0 0
  %9974 = vmatmul.mubr.bf16.gmra.mrb[0].mxu0 %v9064
  %v9975 = vpop.f32.mrb[0].mxu0
  %v9976 = vadd.f32 0.0, %v9975
  %v9977 = vpop.f32.mrb[0].mxu0
  %v9978 = vadd.f32 0.0, %v9977
  %v9979 = vpop.f32.mrb[0].mxu0
  %v9980 = vadd.f32 0.0, %v9979
  %v9981 = vpop.f32.mrb[0].mxu0
  %v9982 = vadd.f32 0.0, %v9981
  %9983 = vmatprep.mubr.bf16.mxu0 0
  %9984 = vmatmul.mubr.bf16.gmra.mrb[0].mxu0 %v9067
  %v9985 = vpop.f32.mrb[0].mxu0
  %v9986 = vadd.f32 0.0, %v9985
  %v9987 = vpop.f32.mrb[0].mxu0
  %v9988 = vadd.f32 0.0, %v9987
  %v9989 = vpop.f32.mrb[0].mxu0
  %v9990 = vadd.f32 0.0, %v9989
  %v9991 = vpop.f32.mrb[0].mxu0
  %v9992 = vadd.f32 0.0, %v9991
  %9993 = vdwg.mxu0
  %9994 = vst [vmem:[#allocation5 + $0x200] sm:$0xff] %v9976
  %9995 = vst [vmem:[#allocation5 + $0x208] sm:$0xff] %v9978
  %9996 = vst [vmem:[#allocation5 + $0x210] sm:$0xff] %v9980
  %9997 = vst [vmem:[#allocation5 + $0x218] sm:$0xff] %v9982
  %9998 = vst [vmem:[#allocation5 + $0x220] sm:$0xff] %v9986
  %9999 = vst [vmem:[#allocation5 + $0x228] sm:$0xff] %v9988
  %10000 = vst [vmem:[#allocation5 + $0x230] sm:$0xff] %v9990
  %10001 = vst [vmem:[#allocation5 + $0x238] sm:$0xff] %v9992
  %v10002 = vld [vmem:[%s10] sm:$0x7]
  %v10003 = vld [vmem:[#allocation5] sm:$0xff]
  %v10004 = vld [vmem:[#allocation5 + $0x8] sm:$0xff]
  %v10005 = vld [vmem:[#allocation5 + $0x10] sm:$0xff]
  %v10006 = vld [vmem:[#allocation5 + $0x18] sm:$0xff]
  %v10007 = vld [vmem:[#allocation5 + $0x20] sm:$0xff]
  %v10008 = vld [vmem:[#allocation5 + $0x28] sm:$0xff]
  %v10009 = vld [vmem:[#allocation5 + $0x30] sm:$0xff]
  %v10010 = vld [vmem:[#allocation5 + $0x38] sm:$0xff]
  %v10011 = vld [vmem:[#allocation5 + $0x40] sm:$0xff]
  %v10012 = vld [vmem:[#allocation5 + $0x48] sm:$0xff]
  %v10013 = vld [vmem:[#allocation5 + $0x50] sm:$0xff]
  %v10014 = vld [vmem:[#allocation5 + $0x58] sm:$0xff]
  %v10015 = vld [vmem:[#allocation5 + $0x60] sm:$0xff]
  %v10016 = vld [vmem:[#allocation5 + $0x68] sm:$0xff]
  %v10017 = vld [vmem:[#allocation5 + $0x70] sm:$0xff]
  %v10018 = vld [vmem:[#allocation5 + $0x78] sm:$0xff]
  %v10019 = vld [vmem:[#allocation5 + $0x80] sm:$0xff]
  %v10020 = vld [vmem:[#allocation5 + $0x88] sm:$0xff]
  %v10021 = vld [vmem:[#allocation5 + $0x90] sm:$0xff]
  %v10022 = vld [vmem:[#allocation5 + $0x98] sm:$0xff]
  %v10023 = vld [vmem:[#allocation5 + $0xa0] sm:$0xff]
  %v10024 = vld [vmem:[#allocation5 + $0xa8] sm:$0xff]
  %v10025 = vld [vmem:[#allocation5 + $0xb0] sm:$0xff]
  %v10026 = vld [vmem:[#allocation5 + $0xb8] sm:$0xff]
  %v10027 = vld [vmem:[#allocation5 + $0xc0] sm:$0xff]
  %v10028 = vld [vmem:[#allocation5 + $0xc8] sm:$0xff]
  %v10029 = vld [vmem:[#allocation5 + $0xd0] sm:$0xff]
  %v10030 = vld [vmem:[#allocation5 + $0xd8] sm:$0xff]
  %v10031 = vld [vmem:[#allocation5 + $0xe0] sm:$0xff]
  %v10032 = vld [vmem:[#allocation5 + $0xe8] sm:$0xff]
  %v10033 = vld [vmem:[#allocation5 + $0xf0] sm:$0xff]
  %v10034 = vld [vmem:[#allocation5 + $0xf8] sm:$0xff]
  %v10035 = vld [vmem:[#allocation5 + $0x100] sm:$0xff]
  %v10036 = vld [vmem:[#allocation5 + $0x108] sm:$0xff]
  %v10037 = vld [vmem:[#allocation5 + $0x110] sm:$0xff]
  %v10038 = vld [vmem:[#allocation5 + $0x118] sm:$0xff]
  %v10039 = vld [vmem:[#allocation5 + $0x120] sm:$0xff]
  %v10040 = vld [vmem:[#allocation5 + $0x128] sm:$0xff]
  %v10041 = vld [vmem:[#allocation5 + $0x130] sm:$0xff]
  %v10042 = vld [vmem:[#allocation5 + $0x138] sm:$0xff]
  %v10043 = vld [vmem:[#allocation5 + $0x140] sm:$0xff]
  %v10044 = vld [vmem:[#allocation5 + $0x148] sm:$0xff]
  %v10045 = vld [vmem:[#allocation5 + $0x150] sm:$0xff]
  %v10046 = vld [vmem:[#allocation5 + $0x158] sm:$0xff]
  %v10047 = vld [vmem:[#allocation5 + $0x160] sm:$0xff]
  %v10048 = vld [vmem:[#allocation5 + $0x168] sm:$0xff]
  %v10049 = vld [vmem:[#allocation5 + $0x170] sm:$0xff]
  %v10050 = vld [vmem:[#allocation5 + $0x178] sm:$0xff]
  %v10051 = vld [vmem:[#allocation5 + $0x180] sm:$0xff]
  %v10052 = vld [vmem:[#allocation5 + $0x188] sm:$0xff]
  %v10053 = vld [vmem:[#allocation5 + $0x190] sm:$0xff]
  %v10054 = vld [vmem:[#allocation5 + $0x198] sm:$0xff]
  %v10055 = vld [vmem:[#allocation5 + $0x1a0] sm:$0xff]
  %v10056 = vld [vmem:[#allocation5 + $0x1a8] sm:$0xff]
  %v10057 = vld [vmem:[#allocation5 + $0x1b0] sm:$0xff]
  %v10058 = vld [vmem:[#allocation5 + $0x1b8] sm:$0xff]
  %v10059 = vld [vmem:[#allocation5 + $0x1c0] sm:$0xff]
  %v10060 = vld [vmem:[#allocation5 + $0x1c8] sm:$0xff]
  %v10061 = vld [vmem:[#allocation5 + $0x1d0] sm:$0xff]
  %v10062 = vld [vmem:[#allocation5 + $0x1d8] sm:$0xff]
  %v10063 = vld [vmem:[#allocation5 + $0x1e0] sm:$0xff]
  %v10064 = vld [vmem:[#allocation5 + $0x1e8] sm:$0xff]
  %v10065 = vld [vmem:[#allocation5 + $0x1f0] sm:$0xff]
  %v10066 = vld [vmem:[#allocation5 + $0x1f8] sm:$0xff]
  %v10067 = vld [vmem:[#allocation5 + $0x200] sm:$0xff]
  %v10068 = vld [vmem:[#allocation5 + $0x208] sm:$0xff]
  %v10069 = vld [vmem:[#allocation5 + $0x210] sm:$0xff]
  %v10070 = vld [vmem:[#allocation5 + $0x218] sm:$0xff]
  %v10071 = vld [vmem:[#allocation5 + $0x220] sm:$0xff]
  %v10072 = vld [vmem:[#allocation5 + $0x228] sm:$0xff]
  %v10073 = vld [vmem:[#allocation5 + $0x230] sm:$0xff]
  %v10074 = vld [vmem:[#allocation5 + $0x238] sm:$0xff]
  %v10075 = vpack.c.bf16 %v10005, %v10003
  %v10076 = vpack.c.bf16 %v10006, %v10004
  %v10077 = vpack.c.bf16 %v10009, %v10007
  %v10078 = vpack.c.bf16 %v10010, %v10008
  %v10079 = vpack.c.bf16 %v10013, %v10011
  %v10080 = vpack.c.bf16 %v10014, %v10012
  %v10081 = vpack.c.bf16 %v10017, %v10015
  %v10082 = vpack.c.bf16 %v10018, %v10016
  %v10083 = vpack.c.bf16 %v10021, %v10019
  %v10084 = vpack.c.bf16 %v10022, %v10020
  %v10085 = vpack.c.bf16 %v10025, %v10023
  %v10086 = vpack.c.bf16 %v10026, %v10024
  %v10087 = vpack.c.bf16 %v10029, %v10027
  %v10088 = vpack.c.bf16 %v10030, %v10028
  %v10089 = vpack.c.bf16 %v10033, %v10031
  %v10090 = vpack.c.bf16 %v10034, %v10032
  %v10091 = vpack.c.bf16 %v10037, %v10035
  %v10092 = vpack.c.bf16 %v10038, %v10036
  %v10093 = vpack.c.bf16 %v10041, %v10039
  %v10094 = vpack.c.bf16 %v10042, %v10040
  %v10095 = vpack.c.bf16 %v10045, %v10043
  %v10096 = vpack.c.bf16 %v10046, %v10044
  %v10097 = vpack.c.bf16 %v10049, %v10047
  %v10098 = vpack.c.bf16 %v10050, %v10048
  %v10099 = vpack.c.bf16 %v10053, %v10051
  %v10100 = vpack.c.bf16 %v10054, %v10052
  %v10101 = vpack.c.bf16 %v10057, %v10055
  %v10102 = vpack.c.bf16 %v10058, %v10056
  %v10103 = vpack.c.bf16 %v10061, %v10059
  %v10104 = vpack.c.bf16 %v10062, %v10060
  %v10105 = vpack.c.bf16 %v10065, %v10063
  %v10106 = vpack.c.bf16 %v10066, %v10064
  %v10107 = vpack.c.bf16 %v10069, %v10067
  %v10108 = vpack.c.bf16 %v10070, %v10068
  %v10109 = vpack.c.bf16 %v10073, %v10071
  %v10110 = vpack.c.bf16 %v10074, %v10072
  %v10111 = vld [vmem:[#allocation6] sm:$0x1]
  %10113 = vset.pattern.permute.xlu0 0
  %10114 = vperm.xlu0 %10113, %v10111
  %v10115 = vpop.permute.xlu0 %10114
  %v10117 = vlaneseq
  %v10118 = vshrl.u32 %v10117, 7
  %v10119 = vsub.s32 0, %v10118
  %v10120 = vrot.slane %v10115, %v10119
  %v10123 = vunpack.c.l.s4 1966171168
  %v10124 = vunpack.c.0.s8 %v10123
  %v10125 = vlaneseq
  %v10126 = vshrl.u32 %v10125, 7
  %v10127 = vsub.s32 %v10124, %v10126
  %v10128 = vrot.slane %v10002, %v10127
  %v10129 = vcombine.high %v10128, %v10128
  %v10131 = vunpack.c.l.s4 1966171168
  %v10132 = vunpack.c.0.s8 %v10131
  %v10133 = vlaneseq
  %v10134 = vshrl.u32 %v10133, 7
  %v10135 = vsub.s32 %v10132, %v10134
  %v10136 = vrot.slane %v10128, %v10135
  %v10138 = vunpack.c.l.s4 1966171168
  %v10139 = vunpack.c.0.s8 %v10138
  %v10140 = vlaneseq
  %v10141 = vshrl.u32 %v10140, 7
  %v10142 = vsub.s32 %v10139, %v10141
  %v10143 = vrot.slane %v10129, %v10142
  %v10144 = vcombine.high %v10136, %v10136
  %v10148 = vsel %vm2660, %v10144, 0
  %10150 = vmatprep.subr.bf16.mxu0 %v10076
  %10151 = vmatpush1.bf16.msra.mxu0 %v10075
  %10152 = vmatprep.subr.bf16.mxu0 %v10078
  %10153 = vmatpush1.bf16.msra.mxu0 %v10077
  %10154 = vmatprep.subr.bf16.mxu0 %v10080
  %10155 = vmatpush1.bf16.msra.mxu0 %v10079
  %10156 = vmatprep.subr.bf16.mxu0 %v10082
  %10157 = vmatpush1.bf16.msra.mxu0 %v10081
  %10158 = vmatprep.subr.bf16.mxu0 %v10084
  %10159 = vmatpush1.bf16.msra.mxu0 %v10083
  %10160 = vmatprep.subr.bf16.mxu0 %v10086
  %10161 = vmatpush1.bf16.msra.mxu0 %v10085
  %10162 = vmatprep.subr.bf16.mxu0 %v10088
  %10163 = vmatpush1.bf16.msra.mxu0 %v10087
  %10164 = vmatprep.subr.bf16.mxu0 %v10090
  %10165 = vmatpush1.bf16.msra.mxu0 %v10089
  %10166 = vmatprep.subr.bf16.mxu0 %v10092
  %10167 = vmatpush1.bf16.msra.mxu0 %v10091
  %10168 = vmatprep.subr.bf16.mxu0 %v10094
  %10169 = vmatpush1.bf16.msra.mxu0 %v10093
  %10170 = vmatprep.subr.bf16.mxu0 %v10096
  %10171 = vmatpush1.bf16.msra.mxu0 %v10095
  %10172 = vmatprep.subr.bf16.mxu0 %v10098
  %10173 = vmatpush1.bf16.msra.mxu0 %v10097
  %10174 = vmatprep.subr.bf16.mxu0 %v10100
  %10175 = vmatpush1.bf16.msra.mxu0 %v10099
  %10176 = vmatprep.subr.bf16.mxu0 %v10102
  %10177 = vmatpush1.bf16.msra.mxu0 %v10101
  %10178 = vmatprep.subr.bf16.mxu0 %v10104
  %10179 = vmatpush1.bf16.msra.mxu0 %v10103
  %10180 = vmatprep.subr.bf16.mxu0 %v10106
  %10181 = vmatpush1.bf16.msra.mxu0 %v10105
  %10182 = vmatprep.mubr.bf16.mxu0 %v10143
  %10183 = vmatmul.mubr.bf16.gmra.mrb[0].mxu0 %v10136
  %v10184 = vpop.f32.mrb[0].mxu0
  %v10185 = vadd.f32 %v10120, %v10184
  %v10186 = vpop.f32.mrb[0].mxu0
  %v10187 = vadd.f32 %v10120, %v10186
  %v10188 = vpop.f32.mrb[0].mxu0
  %v10189 = vpop.f32.mrb[0].mxu0
  %10190 = vdwg.mxu0
  %10191 = vmatprep.subr.bf16.mxu0 %v10108
  %10192 = vmatpush1.bf16.msra.mxu0 %v10107
  %10193 = vmatprep.subr.bf16.mxu0 %v10110
  %10194 = vmatpush1.bf16.msra.mxu0 %v10109
  %10195 = vmatprep.subr.bf16.mxu0 0
  %10196 = vmatpush1.bf16.msra.mxu0 0
  %10197 = vmatprep.subr.bf16.mxu0 0
  %10198 = vmatpush1.bf16.msra.mxu0 0
  %10199 = vmatprep.subr.bf16.mxu0 0
  %10200 = vmatpush1.bf16.msra.mxu0 0
  %10201 = vmatprep.subr.bf16.mxu0 0
  %10202 = vmatpush1.bf16.msra.mxu0 0
  %10203 = vmatprep.subr.bf16.mxu0 0
  %10204 = vmatpush1.bf16.msra.mxu0 0
  %10205 = vmatprep.subr.bf16.mxu0 0
  %10206 = vmatpush1.bf16.msra.mxu0 0
  %10207 = vmatprep.subr.bf16.mxu0 0
  %10208 = vmatpush1.bf16.msra.mxu0 0
  %10209 = vmatprep.subr.bf16.mxu0 0
  %10210 = vmatpush1.bf16.msra.mxu0 0
  %10211 = vmatprep.subr.bf16.mxu0 0
  %10212 = vmatpush1.bf16.msra.mxu0 0
  %10213 = vmatprep.subr.bf16.mxu0 0
  %10214 = vmatpush1.bf16.msra.mxu0 0
  %10215 = vmatprep.subr.bf16.mxu0 0
  %10216 = vmatpush1.bf16.msra.mxu0 0
  %10217 = vmatprep.subr.bf16.mxu0 0
  %10218 = vmatpush1.bf16.msra.mxu0 0
  %10219 = vmatprep.subr.bf16.mxu0 0
  %10220 = vmatpush1.bf16.msra.mxu0 0
  %10221 = vmatprep.subr.bf16.mxu0 0
  %10222 = vmatpush1.bf16.msra.mxu0 0
  %10223 = vmatprep.mubr.bf16.mxu0 0
  %10224 = vmatmul.mubr.bf16.gmra.mrb[0].mxu0 %v10148
  %v10225 = vpop.f32.mrb[0].mxu0
  %v10226 = vadd.f32 %v10185, %v10225
  %v10227 = vpop.f32.mrb[0].mxu0
  %v10228 = vadd.f32 %v10187, %v10227
  %v10229 = vpop.f32.mrb[0].mxu0
  %v10230 = vpop.f32.mrb[0].mxu0
  %10231 = vdwg.mxu0
  %v10232 = vsub.f32 0.0, %v10226
  %v10233 = vsub.f32 0.0, %v10228
  %v10234 = vmul.f32 %v10232, 1.442695
  %v10235 = vpow.pop %v10234
  %v10236 = vmul.f32 %v10233, 1.442695
  %v10237 = vpow.pop %v10236
  %v10238 = vadd.f32 %v10235, 1.0
  %v10239 = vadd.f32 %v10237, 1.0
  %v10240 = vrcp.pop %v10238
  %v10241 = vmul.f32 1.0, %v10240
  %v10242 = vrcp.pop %v10239
  %v10243 = vmul.f32 1.0, %v10242
  %v10246 = vcombine.low %v10241, %v10243
  %v10248 = vunpack.c.l.s4 1966171168
  %v10249 = vunpack.c.0.s8 %v10248
  %v10250 = vlaneseq
  %v10251 = vshrl.u32 %v10250, 7
  %v10252 = vsub.s32 %v10249, %v10251
  %v10253 = vrot.slane %v10246, %v10252
  %v10255 = vunpack.c.l.s4 1966171168
  %v10256 = vunpack.c.0.s8 %v10255
  %v10257 = vlaneseq
  %v10258 = vshrl.u32 %v10257, 7
  %v10259 = vsub.s32 %v10256, %v10258
  %v10260 = vrot.slane %v10253, %v10259
  %s10262 = scalar_lea.vmem %s13, 2
  %10263 = vst.msk [vmem:[%s10262] sm:$0x3] %vm5175, %v10260
  // Predicated region
  $region54: #{forward.1} parent=0 // pred_check
    _
  $region55: #{forward.1} parent=0 // pred_check_branch
    %10265 = sbr.rel (0) target = $region57
  $region56: #{forward.1} parent=0 // pred_region
    _
  $region57: #{forward.1} parent=0 // pred_fallthru
    _
  // Predicated region
  $region58: #{forward.1} parent=0 // pred_check
    _
  $region59: #{forward.1} parent=0 // pred_check_branch
    %10267 = sbr.rel (0) target = $region61
  $region60: #{forward.1} parent=0 // pred_region
    _
  $region61: #{forward.1} parent=0 // pred_fallthru
    _

</llo_original>
